<compile_context>
chip_gen: v7x
topology: tpu7x:2x2x1
jax: 0.10.0
libtpu: 0.0.40
codegen_flags: <defaults>
</compile_context>

<pallas_src>
import functools
import math

import jax
import jax.numpy as jnp
from jax import lax
from jax.experimental import pallas as pl
from jax.experimental.pallas import tpu as pltpu

NEG_INF = -1e9   # additive mask value; scores are f32 accumulations
EPS = 1e-5       # nn.LayerNorm default
F32 = jnp.float32
BF16 = jnp.bfloat16


# ----------------------------------------------------------------------------
# In-kernel helpers (operate on VMEM-resident values)
# ----------------------------------------------------------------------------
def _layer_norm(y, g, b):
    mean = jnp.mean(y, axis=-1, keepdims=True)
    yc = y - mean
    var = jnp.mean(yc * yc, axis=-1, keepdims=True)
    return yc * lax.rsqrt(var + EPS) * g + b


def _softmax_rows(s):
    m = jnp.max(s, axis=-1, keepdims=True)
    p = jnp.exp(s - m)
    return p * pl.reciprocal(jnp.sum(p, axis=-1, keepdims=True), approx=True)


def _mha(q3, k3, v3, bias, nhead, scale):
    """q3:(B,Lq,D)  k3/v3:(B,Lk,D) f32.  bias: None | (B,1,Lk) | (Lq,Lk) additive f32."""
    B, Lq, D = q3.shape
    dh = D // nhead
    heads = []
    for h in range(nhead):                                 # static unroll (nhead small)
        lo, hi = h * dh, (h + 1) * dh
        qh = (q3[:, :, lo:hi] * scale).astype(BF16)        # 1/sqrt(dh) folded into q
        kh = k3[:, :, lo:hi].astype(BF16)
        vh = v3[:, :, lo:hi].astype(BF16)
        s = jnp.einsum('bqd,bkd->bqk', qh, kh, preferred_element_type=F32)
        if bias is not None:
            s = s + bias
        p = _softmax_rows(s)
        heads.append(jnp.einsum('bqk,bkd->bqd', p.astype(BF16), vh,
                                preferred_element_type=F32))
    return jnp.concatenate(heads, axis=-1)                 # (B, Lq, D), heads in order


def _sa_sublayer(x2, B, L, wqkv, bqkv, wo, bo, g, b, bias, nhead, scale):
    """Self-attention sublayer on flattened rows: (B*L, D) -> (B*L, D)."""
    D = x2.shape[-1]
    qkv = jnp.dot(x2.astype(BF16), wqkv, preferred_element_type=F32) + bqkv   # (B*L, 3D)
    qkv3 = qkv.reshape(B, L, 3 * D)
    attn = _mha(qkv3[:, :, :D], qkv3[:, :, D:2 * D], qkv3[:, :, 2 * D:],
                bias, nhead, scale).reshape(B * L, D)
    o = jnp.dot(attn.astype(BF16), wo, preferred_element_type=F32) + bo        # single K=D out-proj
    return _layer_norm(x2 + o, g, b)


def _ca_sublayer(y2, mem2_bf, B, T, S, wq, bq, wkv, bkv, wo, bo, g, b, nhead, scale):
    """Cross-attention sublayer (no mask): (B*T, D) x (B*S, D) -> (B*T, D)."""
    D = y2.shape[-1]
    q = jnp.dot(y2.astype(BF16), wq, preferred_element_type=F32) + bq          # (B*T, D)
    kv = jnp.dot(mem2_bf, wkv, preferred_element_type=F32) + bkv               # (B*S, 2D)
    q3 = q.reshape(B, T, D)
    kv3 = kv.reshape(B, S, 2 * D)
    attn = _mha(q3, kv3[:, :, :D], kv3[:, :, D:], None, nhead, scale).reshape(B * T, D)
    o = jnp.dot(attn.astype(BF16), wo, preferred_element_type=F32) + bo
    return _layer_norm(y2 + o, g, b)


def _ffn_sublayer(x2, w1, b1, w2, b2, g, b):
    h = jnp.dot(x2.astype(BF16), w1, preferred_element_type=F32) + b1
    h = jnp.maximum(h, 0.0)                                                    # ReLU
    f = jnp.dot(h.astype(BF16), w2, preferred_element_type=F32) + b2
    return _layer_norm(x2 + f, g, b)


# ----------------------------------------------------------------------------
# Fused stack kernels: the grid axis iterates layers; the activation lives in an
# f32 VMEM carry scratch across all layers; stacked weights are pipelined per layer.
# ----------------------------------------------------------------------------
def _encoder_kernel(*refs, nhead, scale, B, S, mask_kind):
    if mask_kind == "pad":
        x_ref, mask_ref = refs[0], refs[1]
        rest = refs[2:]
    else:
        x_ref, mask_ref = refs[0], None
        rest = refs[1:]
    (sa_wqkv, sa_bqkv, sa_wo, sa_bo, sa_g, sa_b,
     ff_w1, ff_b1, ff_w2, ff_b2, ff_g, ff_b,
     encg, encb, mem_ref, carry) = rest

    layer = pl.program_id(0)

    @pl.when(layer == 0)
    def _():
        carry[...] = x_ref[...].astype(F32)

    x = carry[...]                                                   # (B*S, D) f32
    bias = mask_ref[...] * NEG_INF if mask_kind == "pad" else None   # (B, 1, S)

    x = _sa_sublayer(x, B, S, sa_wqkv[0], sa_bqkv[0], sa_wo[0], sa_bo[0],
                     sa_g[0], sa_b[0], bias, nhead, scale)
    x = _ffn_sublayer(x, ff_w1[0], ff_b1[0], ff_w2[0], ff_b2[0], ff_g[0], ff_b[0])
    carry[...] = x

    @pl.when(layer == pl.num_programs(0) - 1)
    def _():   # fused final encoder LayerNorm; only HBM write of the whole stack
        mem_ref[...] = _layer_norm(x, encg[...], encb[...]).astype(mem_ref.dtype)


def _decoder_kernel(*refs, nhead, scale, B, T, S, mask_kind):
    if mask_kind == "add":
        y0_ref, mem_ref, mask_ref = refs[0], refs[1], refs[2]
        rest = refs[3:]
    else:
        y0_ref, mem_ref, mask_ref = refs[0], refs[1], None
        rest = refs[2:]
    (sa_wqkv, sa_bqkv, sa_wo, sa_bo, sa_g, sa_b,
     ca_wq, ca_bq, ca_wkv, ca_bkv, ca_wo, ca_bo, ca_g, ca_b,
     ff_w1, ff_b1, ff_w2, ff_b2, ff_g, ff_b,
     decg, decb, out_ref, carry) = rest

    layer = pl.program_id(0)

    @pl.when(layer == 0)
    def _():
        carry[...] = y0_ref[...].astype(F32)

    y = carry[...]                                                   # (B*T, D) f32
    mem_bf = mem_ref[...]                                            # (B*S, D) bf16 (resident)
    bias = mask_ref[...] if mask_kind == "add" else None             # (T, T) additive

    y = _sa_sublayer(y, B, T, sa_wqkv[0], sa_bqkv[0], sa_wo[0], sa_bo[0],
                     sa_g[0], sa_b[0], bias, nhead, scale)
    y = _ca_sublayer(y, mem_bf, B, T, S, ca_wq[0], ca_bq[0], ca_wkv[0], ca_bkv[0],
                     ca_wo[0], ca_bo[0], ca_g[0], ca_b[0], nhead, scale)
    y = _ffn_sublayer(y, ff_w1[0], ff_b1[0], ff_w2[0], ff_b2[0], ff_g[0], ff_b[0])
    carry[...] = y

    @pl.when(layer == pl.num_programs(0) - 1)
    def _():   # fused final decoder LayerNorm
        out_ref[...] = _layer_norm(y, decg[...], decb[...]).astype(out_ref.dtype)


def _logits_kernel(y_ref, w_ref, b_ref, o_ref):
    """Plain tiled GEMM: (B*T, D) bf16 @ (D, TV) bf16 + bias -> f32 lane-dense block."""
    o_ref[...] = (jnp.dot(y_ref[...], w_ref[...], preferred_element_type=F32)
                  + b_ref[...]).astype(o_ref.dtype)


# ----------------------------------------------------------------------------
# pallas_call wrappers
# ----------------------------------------------------------------------------
def _const_spec(shape):
    nd = len(shape)
    return pl.BlockSpec(tuple(shape), lambda l, _nd=nd: (0,) * _nd)


def _layer_spec(shape):
    nd = len(shape)
    return pl.BlockSpec((1,) + tuple(shape[1:]),
                        lambda l, _nd=nd: (l,) + (0,) * (_nd - 1))


def encoder_stack(x2, pad_mask, ep, nhead, B, S):
    n_layers = ep["w_qkv"].shape[0]
    BL, D = x2.shape
    scale = 1.0 / math.sqrt(D // nhead)
    mask_kind = "pad" if pad_mask is not None else "none"
    kernel = functools.partial(_encoder_kernel, nhead=nhead, scale=scale,
                               B=B, S=S, mask_kind=mask_kind)

    args, specs = [x2], [_const_spec(x2.shape)]
    if mask_kind == "pad":
        args.append(pad_mask)
        specs.append(_const_spec(pad_mask.shape))
    layer_ws = (ep["w_qkv"], ep["b_qkv"], ep["wo"], ep["bo"], ep["ln1_g"], ep["ln1_b"],
                ep["w1"], ep["b1"], ep["w2"], ep["b2"], ep["ln2_g"], ep["ln2_b"])
    args.extend(layer_ws)
    specs.extend(_layer_spec(a.shape) for a in layer_ws)
    finals = (ep["norm_g"], ep["norm_b"])
    args.extend(finals)
    specs.extend(_const_spec(a.shape) for a in finals)

    return pl.pallas_call(
        kernel, grid=(n_layers,), in_specs=specs,
        out_specs=_const_spec((BL, D)),
        out_shape=jax.ShapeDtypeStruct((BL, D), BF16),
        scratch_shapes=[pltpu.VMEM((BL, D), F32)],        # activation carry across layers
        compiler_params=pltpu.CompilerParams(dimension_semantics=("arbitrary",)),
    )(*args)


def decoder_stack(y0, mem2, add_mask, dp, nhead, B, T, S):
    n_layers = dp["w_qkv"].shape[0]
    BT, D = y0.shape
    scale = 1.0 / math.sqrt(D // nhead)
    mask_kind = "add" if add_mask is not None else "none"
    kernel = functools.partial(_decoder_kernel, nhead=nhead, scale=scale,
                               B=B, T=T, S=S, mask_kind=mask_kind)

    args = [y0, mem2]
    specs = [_const_spec(y0.shape), _const_spec(mem2.shape)]
    if mask_kind == "add":
        args.append(add_mask)
        specs.append(_const_spec(add_mask.shape))
    layer_ws = (dp["w_qkv"], dp["b_qkv"], dp["wo"], dp["bo"], dp["ln1_g"], dp["ln1_b"],
                dp["ca_wq"], dp["ca_bq"], dp["ca_wkv"], dp["ca_bkv"],
                dp["ca_wo"], dp["ca_bo"], dp["ca_ln_g"], dp["ca_ln_b"],
                dp["w1"], dp["b1"], dp["w2"], dp["b2"], dp["ln2_g"], dp["ln2_b"])
    args.extend(layer_ws)
    specs.extend(_layer_spec(a.shape) for a in layer_ws)
    finals = (dp["norm_g"], dp["norm_b"])
    args.extend(finals)
    specs.extend(_const_spec(a.shape) for a in finals)

    return pl.pallas_call(
        kernel, grid=(n_layers,), in_specs=specs,
        out_specs=_const_spec((BT, D)),
        out_shape=jax.ShapeDtypeStruct((BT, D), BF16),
        scratch_shapes=[pltpu.VMEM((BT, D), F32)],
        compiler_params=pltpu.CompilerParams(dimension_semantics=("arbitrary",)),
    )(*args)


def output_proj(y2, w, b, tile_v=128):
    """Tiled (B*T, D) @ (D, Vp) GEMM over 128-lane vocab tiles (lane-dense blocks)."""
    BT, D = y2.shape
    Vp = w.shape[1]
    return pl.pallas_call(
        _logits_kernel, grid=(Vp // tile_v,),
        in_specs=[pl.BlockSpec((BT, D), lambda j: (0, 0)),
                  pl.BlockSpec((D, tile_v), lambda j: (0, j)),
                  pl.BlockSpec((1, tile_v), lambda j: (0, j))],
        out_specs=pl.BlockSpec((BT, tile_v), lambda j: (0, j)),
        out_shape=jax.ShapeDtypeStruct((BT, Vp), F32),
        compiler_params=pltpu.CompilerParams(dimension_semantics=("parallel",)),
    )(y2, w, b)


# ----------------------------------------------------------------------------
# Forward pass
# ----------------------------------------------------------------------------
def summarizer_transformer_forward(params, src_ids, tgt_ids,
                                   src_key_padding_mask=None, tgt_mask=None,
                                   nhead=4):
    emb = params["embedding"]
    vocab = emb.shape[0]
    # Embedding lookup is gather glue, kept in plain JAX; activations stored bf16.
    src = jnp.take(emb, src_ids, axis=0).astype(BF16)       # (B, S, D)
    tgt = jnp.take(emb, tgt_ids, axis=0).astype(BF16)       # (B, T, D)
    B, S, D = src.shape
    T = tgt.shape[1]

    pad_mask = None
    if src_key_padding_mask is not None:
        pad_mask = src_key_padding_mask.astype(F32).reshape(B, 1, S)   # 1.0 = pad
    add_mask = tgt_mask.astype(F32) if tgt_mask is not None else None  # (T, T) additive

    # Encoder stack (incl. final encoder LayerNorm), one pallas_call.
    mem2 = encoder_stack(src.reshape(B * S, D), pad_mask, params["enc"], nhead, B, S)
    # Decoder stack (incl. final decoder LayerNorm), one pallas_call.
    y2 = decoder_stack(tgt.reshape(B * T, D), mem2, add_mask, params["dec"], nhead, B, T, S)
    # Lane-dense padded vocab projection, sliced back to the true vocab outside.
    logits = output_proj(y2, params["out_w"], params["out_b"])
    return logits.reshape(B, T, -1)[:, :, :vocab]


# ----------------------------------------------------------------------------
# Deterministic parameter init (synthetic — not a checkpoint load)
# Per-layer weights are stacked along a leading layer axis for grid-axis pipelining.
# ----------------------------------------------------------------------------
def init_params(key, vocab_size, d_model, nhead, n_enc, n_dec, d_ff):
    keys = iter(jax.random.split(key, 64))
    s = 0.02

    def w(shape):      # matmul weights stored bf16 at rest
        return (s * jax.random.normal(next(keys), shape, F32)).astype(BF16)

    zeros = lambda shape: jnp.zeros(shape, F32)
    ones = lambda shape: jnp.ones(shape, F32)

    def sa_ffn_stack(n):
        return dict(
            w_qkv=w((n, d_model, 3 * d_model)), b_qkv=zeros((n, 1, 3 * d_model)),
            wo=w((n, d_model, d_model)), bo=zeros((n, 1, d_model)),
            ln1_g=ones((n, 1, d_model)), ln1_b=zeros((n, 1, d_model)),
            w1=w((n, d_model, d_ff)), b1=zeros((n, 1, d_ff)),
            w2=w((n, d_ff, d_model)), b2=zeros((n, 1, d_model)),
            ln2_g=ones((n, 1, d_model)), ln2_b=zeros((n, 1, d_model)),
            norm_g=ones((1, d_model)), norm_b=zeros((1, d_model)))

    enc = sa_ffn_stack(n_enc)
    dec = sa_ffn_stack(n_dec)
    dec.update(dict(
        ca_wq=w((n_dec, d_model, d_model)), ca_bq=zeros((n_dec, 1, d_model)),
        ca_wkv=w((n_dec, d_model, 2 * d_model)), ca_bkv=zeros((n_dec, 1, 2 * d_model)),
        ca_wo=w((n_dec, d_model, d_model)), ca_bo=zeros((n_dec, 1, d_model)),
        ca_ln_g=ones((n_dec, 1, d_model)), ca_ln_b=zeros((n_dec, 1, d_model))))

    # Lane-dense output projection: pad vocab to a multiple of 128.
    vocab_pad = ((vocab_size + 127) // 128) * 128
    out_w = jnp.zeros((d_model, vocab_pad), F32)
    out_w = out_w.at[:, :vocab_size].set(
        s * jax.random.normal(next(keys), (d_model, vocab_size), F32)).astype(BF16)

    return dict(
        embedding=s * jax.random.normal(next(keys), (vocab_size, d_model), F32),
        enc=enc, dec=dec,
        out_w=out_w, out_b=jnp.zeros((1, vocab_pad), F32))


# ----------------------------------------------------------------------------
if __name__ == "__main__":
    key = jax.random.PRNGKey(0)
    vocab_size, d_model, nhead = 64, 32, 4
    n_enc, n_dec, d_ff = 2, 2, 64
    B, S, T = 2, 8, 8

    pkey, skey, tkey = jax.random.split(key, 3)
    params = init_params(pkey, vocab_size, d_model, nhead, n_enc, n_dec, d_ff)

    src = jax.random.randint(skey, (B, S), 0, vocab_size)
    tgt = jax.random.randint(tkey, (B, T), 0, vocab_size)
    # padding mask: True = ignore that source position
    src_key_padding_mask = jnp.zeros((B, S), jnp.bool_).at[:, S - 2:].set(True)
    # additive causal mask (nn.Transformer.generate_square_subsequent_mask)
    tgt_mask = jnp.where(jnp.triu(jnp.ones((T, T), jnp.bool_), k=1), NEG_INF, 0.0)

    fwd = jax.jit(functools.partial(summarizer_transformer_forward, nhead=nhead))
    out = fwd(params, src, tgt, src_key_padding_mask, tgt_mask)
    out = jax.block_until_ready(out)
    assert out.shape == (B, T, vocab_size), out.shape
    assert bool(jnp.all(jnp.isfinite(out)))
    print("KERNEL_OK")
</pallas_src>

<mosaic_0001>
module attributes {stable_mosaic.version = 11 : i64} {
  func.func @_logits_kernel(%arg0: i32, %arg1: memref<16x32xbf16, #tpu.memory_space<vmem>>, %arg2: memref<32x128xbf16, #tpu.memory_space<vmem>>, %arg3: memref<1x128xf32, #tpu.memory_space<vmem>>, %arg4: memref<16x128xf32, #tpu.memory_space<vmem>>) attributes {dimension_semantics = [#tpu.dimension_semantics<parallel>], iteration_bounds = array<i64: 1>, scalar_prefetch = 0 : i64, scratch_operands = 0 : i64, tpu.core_type = #tpu.core_type<tc>, window_params = [{pipeline_mode = #tpu.pipeline_mode<synchronous>, transform_indices = @transform_0, window_bounds = array<i64: 16, 32>}, {transform_indices = @transform_1, window_bounds = array<i64: 32, 128>}, {transform_indices = @transform_2, window_bounds = array<i64: 1, 128>}, {transform_indices = @transform_3, window_bounds = array<i64: 16, 128>}]} {
    %c0 = arith.constant 0 : index
    %c0_0 = arith.constant 0 : index
    %0 = vector.load %arg1[%c0, %c0_0] : memref<16x32xbf16, #tpu.memory_space<vmem>>, vector<16x32xbf16>
    %c0_1 = arith.constant 0 : index
    %c0_2 = arith.constant 0 : index
    %1 = vector.load %arg2[%c0_1, %c0_2] : memref<32x128xbf16, #tpu.memory_space<vmem>>, vector<32x128xbf16>
    %cst = arith.constant dense<0.000000e+00> : vector<16x128xf32>
    %2 = tpu.matmul %0, %1, %cst {dimension_numbers = #tpu.dot_dimension_numbers<[1], [0], [0], [1], [0, 0, 1, 1], [], []>} : vector<16x32xbf16>, vector<32x128xbf16>, vector<16x128xf32> -> vector<16x128xf32>
    %c0_3 = arith.constant 0 : index
    %c0_4 = arith.constant 0 : index
    %3 = vector.load %arg3[%c0_3, %c0_4] : memref<1x128xf32, #tpu.memory_space<vmem>>, vector<1x128xf32>
    %4 = vector.broadcast %3 : vector<1x128xf32> to vector<16x128xf32>
    %5 = arith.addf %2, %4 : vector<16x128xf32>
    %c0_5 = arith.constant 0 : index
    %c0_6 = arith.constant 0 : index
    %6 = vector.load %arg4[%c0_5, %c0_6] : memref<16x128xf32, #tpu.memory_space<vmem>>, vector<16x128xf32>
    tpu.vector_store %arg4[%c0_5, %c0_6], %5 {strides = array<i32>} : memref<16x128xf32, #tpu.memory_space<vmem>>, vector<16x128xf32>,
    return
  }
  func.func @transform_0(%arg0: i32) -> (i32, i32) {
    %c0_i32 = arith.constant 0 : i32
    %c0_i32_0 = arith.constant 0 : i32
    %c0_i32_1 = arith.constant 0 : i32
    return %c0_i32, %c0_i32_0 : i32, i32
  }
  func.func @transform_1(%arg0: i32) -> (i32, i32) {
    %c0_i32 = arith.constant 0 : i32
    %c0_i32_0 = arith.constant 0 : i32
    return %c0_i32, %arg0 : i32, i32
  }
  func.func @transform_2(%arg0: i32) -> (i32, i32) {
    %c0_i32 = arith.constant 0 : i32
    %c0_i32_0 = arith.constant 0 : i32
    return %c0_i32, %arg0 : i32, i32
  }
  func.func @transform_3(%arg0: i32) -> (i32, i32) {
    %c0_i32 = arith.constant 0 : i32
    %c0_i32_0 = arith.constant 0 : i32
    return %c0_i32, %arg0 : i32, i32
  }
}

module attributes {stable_mosaic.version = 11 : i64} {
  func.func @_encoder_kernel(%arg0: i32, %arg1: memref<16x32xbf16, #tpu.memory_space<vmem>>, %arg2: memref<2x1x8xf32, #tpu.memory_space<vmem>>, %arg3: memref<1x32x96xbf16, #tpu.memory_space<vmem>>, %arg4: memref<1x1x96xf32, #tpu.memory_space<vmem>>, %arg5: memref<1x32x32xbf16, #tpu.memory_space<vmem>>, %arg6: memref<1x1x32xf32, #tpu.memory_space<vmem>>, %arg7: memref<1x1x32xf32, #tpu.memory_space<vmem>>, %arg8: memref<1x1x32xf32, #tpu.memory_space<vmem>>, %arg9: memref<1x32x64xbf16, #tpu.memory_space<vmem>>, %arg10: memref<1x1x64xf32, #tpu.memory_space<vmem>>, %arg11: memref<1x64x32xbf16, #tpu.memory_space<vmem>>, %arg12: memref<1x1x32xf32, #tpu.memory_space<vmem>>, %arg13: memref<1x1x32xf32, #tpu.memory_space<vmem>>, %arg14: memref<1x1x32xf32, #tpu.memory_space<vmem>>, %arg15: memref<1x32xf32, #tpu.memory_space<vmem>>, %arg16: memref<1x32xf32, #tpu.memory_space<vmem>>, %arg17: memref<16x32xbf16, #tpu.memory_space<vmem>>, %arg18: memref<16x32xf32, #tpu.memory_space<vmem>>) attributes {dimension_semantics = [#tpu.dimension_semantics<arbitrary>], iteration_bounds = array<i64: 2>, scalar_prefetch = 0 : i64, scratch_operands = 1 : i64, tpu.core_type = #tpu.core_type<tc>, window_params = [{pipeline_mode = #tpu.pipeline_mode<synchronous>, transform_indices = @transform_0, window_bounds = array<i64: 16, 32>}, {pipeline_mode = #tpu.pipeline_mode<synchronous>, transform_indices = @transform_1, window_bounds = array<i64: 2, 1, 8>}, {transform_indices = @transform_2, window_bounds = array<i64: 1, 32, 96>}, {transform_indices = @transform_3, window_bounds = array<i64: 1, 1, 96>}, {transform_indices = @transform_4, window_bounds = array<i64: 1, 32, 32>}, {transform_indices = @transform_5, window_bounds = array<i64: 1, 1, 32>}, {transform_indices = @transform_6, window_bounds = array<i64: 1, 1, 32>}, {transform_indices = @transform_7, window_bounds = array<i64: 1, 1, 32>}, {transform_indices = @transform_8, window_bounds = array<i64: 1, 32, 64>}, {transform_indices = @transform_9, window_bounds = array<i64: 1, 1, 64>}, {transform_indices = @transform_10, window_bounds = array<i64: 1, 64, 32>}, {transform_indices = @transform_11, window_bounds = array<i64: 1, 1, 32>}, {transform_indices = @transform_12, window_bounds = array<i64: 1, 1, 32>}, {transform_indices = @transform_13, window_bounds = array<i64: 1, 1, 32>}, {pipeline_mode = #tpu.pipeline_mode<synchronous>, transform_indices = @transform_14, window_bounds = array<i64: 1, 32>}, {pipeline_mode = #tpu.pipeline_mode<synchronous>, transform_indices = @transform_15, window_bounds = array<i64: 1, 32>}, {pipeline_mode = #tpu.pipeline_mode<synchronous>, transform_indices = @transform_16, window_bounds = array<i64: 16, 32>}]} {
    %c0_i32 = arith.constant 0 : i32
    %0 = arith.cmpi eq, %arg0, %c0_i32 : i32
    %1 = arith.extui %0 : i1 to i32
    %c0_i32_0 = arith.constant 0 : i32
    %2 = arith.cmpi ne, %1, %c0_i32_0 : i32
    scf.if %2 {
      %c0_79 = arith.constant 0 : index
      %c0_80 = arith.constant 0 : index
      %193 = vector.load %arg1[%c0_79, %c0_80] : memref<16x32xbf16, #tpu.memory_space<vmem>>, vector<16x32xbf16>
      %194 = arith.extf %193 : vector<16x32xbf16> to vector<16x32xf32>
      %c0_81 = arith.constant 0 : index
      %c0_82 = arith.constant 0 : index
      %195 = vector.load %arg18[%c0_81, %c0_82] : memref<16x32xf32, #tpu.memory_space<vmem>>, vector<16x32xf32>
      tpu.vector_store %arg18[%c0_81, %c0_82], %194 {strides = array<i32>} : memref<16x32xf32, #tpu.memory_space<vmem>>, vector<16x32xf32>,
    } else {
    }
    %c0 = arith.constant 0 : index
    %c0_1 = arith.constant 0 : index
    %3 = vector.load %arg18[%c0, %c0_1] : memref<16x32xf32, #tpu.memory_space<vmem>>, vector<16x32xf32>
    %c0_2 = arith.constant 0 : index
    %c0_3 = arith.constant 0 : index
    %c0_4 = arith.constant 0 : index
    %4 = vector.load %arg2[%c0_2, %c0_3, %c0_4] : memref<2x1x8xf32, #tpu.memory_space<vmem>>, vector<2x1x8xf32>
    %cst = arith.constant -1.000000e+09 : f32
    %5 = vector.broadcast %cst : f32 to vector<2x1x8xf32>
    %6 = arith.mulf %4, %5 : vector<2x1x8xf32>
    %c0_5 = arith.constant 0 : index
    %c0_6 = arith.constant 0 : index
    %c0_7 = arith.constant 0 : index
    %7 = vector.load %arg3[%c0_5, %c0_6, %c0_7] : memref<1x32x96xbf16, #tpu.memory_space<vmem>>, vector<1x32x96xbf16>
    %8 = vector.shape_cast %7 : vector<1x32x96xbf16> to vector<32x96xbf16>
    %c0_8 = arith.constant 0 : index
    %c0_9 = arith.constant 0 : index
    %c0_10 = arith.constant 0 : index
    %9 = vector.load %arg4[%c0_8, %c0_9, %c0_10] : memref<1x1x96xf32, #tpu.memory_space<vmem>>, vector<1x1x96xf32>
    %10 = vector.shape_cast %9 : vector<1x1x96xf32> to vector<1x96xf32>
    %c0_11 = arith.constant 0 : index
    %c0_12 = arith.constant 0 : index
    %c0_13 = arith.constant 0 : index
    %11 = vector.load %arg5[%c0_11, %c0_12, %c0_13] : memref<1x32x32xbf16, #tpu.memory_space<vmem>>, vector<1x32x32xbf16>
    %12 = vector.shape_cast %11 : vector<1x32x32xbf16> to vector<32x32xbf16>
    %c0_14 = arith.constant 0 : index
    %c0_15 = arith.constant 0 : index
    %c0_16 = arith.constant 0 : index
    %13 = vector.load %arg6[%c0_14, %c0_15, %c0_16] : memref<1x1x32xf32, #tpu.memory_space<vmem>>, vector<1x1x32xf32>
    %14 = vector.shape_cast %13 : vector<1x1x32xf32> to vector<1x32xf32>
    %c0_17 = arith.constant 0 : index
    %c0_18 = arith.constant 0 : index
    %c0_19 = arith.constant 0 : index
    %15 = vector.load %arg7[%c0_17, %c0_18, %c0_19] : memref<1x1x32xf32, #tpu.memory_space<vmem>>, vector<1x1x32xf32>
    %16 = vector.shape_cast %15 : vector<1x1x32xf32> to vector<1x32xf32>
    %c0_20 = arith.constant 0 : index
    %c0_21 = arith.constant 0 : index
    %c0_22 = arith.constant 0 : index
    %17 = vector.load %arg8[%c0_20, %c0_21, %c0_22] : memref<1x1x32xf32, #tpu.memory_space<vmem>>, vector<1x1x32xf32>
    %18 = vector.shape_cast %17 : vector<1x1x32xf32> to vector<1x32xf32>
    %19 = arith.truncf %3 : vector<16x32xf32> to vector<16x32xbf16>
    %cst_23 = arith.constant dense<0.000000e+00> : vector<16x96xf32>
    %20 = tpu.matmul %19, %8, %cst_23 {dimension_numbers = #tpu.dot_dimension_numbers<[1], [0], [0], [1], [0, 0, 1, 1], [], []>} : vector<16x32xbf16>, vector<32x96xbf16>, vector<16x96xf32> -> vector<16x96xf32>
    %21 = vector.broadcast %10 : vector<1x96xf32> to vector<16x96xf32>
    %22 = arith.addf %20, %21 : vector<16x96xf32>
    %23 = vector.shape_cast %22 : vector<16x96xf32> to vector<2x8x96xf32>
    %24 = vector.extract_strided_slice %23 {offsets = [0, 0, 0], sizes = [2, 8, 32], strides = [1, 1, 1]} : vector<2x8x96xf32> to vector<2x8x32xf32>
    %25 = vector.extract_strided_slice %23 {offsets = [0, 0, 32], sizes = [2, 8, 32], strides = [1, 1, 1]} : vector<2x8x96xf32> to vector<2x8x32xf32>
    %26 = vector.extract_strided_slice %23 {offsets = [0, 0, 64], sizes = [2, 8, 32], strides = [1, 1, 1]} : vector<2x8x96xf32> to vector<2x8x32xf32>
    %27 = vector.extract_strided_slice %24 {offsets = [0, 0, 0], sizes = [2, 8, 8], strides = [1, 1, 1]} : vector<2x8x32xf32> to vector<2x8x8xf32>
    %cst_24 = arith.constant 0.353553385 : f32
    %28 = vector.broadcast %cst_24 : f32 to vector<2x8x8xf32>
    %29 = arith.mulf %27, %28 : vector<2x8x8xf32>
    %30 = arith.truncf %29 : vector<2x8x8xf32> to vector<2x8x8xbf16>
    %31 = vector.extract_strided_slice %25 {offsets = [0, 0, 0], sizes = [2, 8, 8], strides = [1, 1, 1]} : vector<2x8x32xf32> to vector<2x8x8xf32>
    %32 = arith.truncf %31 : vector<2x8x8xf32> to vector<2x8x8xbf16>
    %33 = vector.extract_strided_slice %26 {offsets = [0, 0, 0], sizes = [2, 8, 8], strides = [1, 1, 1]} : vector<2x8x32xf32> to vector<2x8x8xf32>
    %34 = arith.truncf %33 : vector<2x8x8xf32> to vector<2x8x8xbf16>
    "tpu.trace_start"() <{level = 10 : i32, message = "bqd,bkd->bqk"}> : () -> ()
    %cst_25 = arith.constant dense<0.000000e+00> : vector<2x8x8xf32>
    %35 = tpu.matmul %30, %32, %cst_25 {dimension_numbers = #tpu.dot_dimension_numbers<[2], [2], [1], [1], [0, 0, 0, 1, 1, 1], [0], [0]>} : vector<2x8x8xbf16>, vector<2x8x8xbf16>, vector<2x8x8xf32> -> vector<2x8x8xf32>
    "tpu.trace_stop"() : () -> ()
    %36 = vector.broadcast %6 : vector<2x1x8xf32> to vector<2x8x8xf32>
    %37 = arith.addf %35, %36 : vector<2x8x8xf32>
    %cst_26 = arith.constant dense<0xFF800000> : vector<2x8xf32>
    %38 = vector.multi_reduction <maximumf>, %37, %cst_26 [2] : vector<2x8x8xf32> to vector<2x8xf32>
    %39 = vector.shape_cast %38 : vector<2x8xf32> to vector<2x8x1xf32>
    %40 = vector.broadcast %39 : vector<2x8x1xf32> to vector<2x8x8xf32>
    %41 = arith.subf %37, %40 : vector<2x8x8xf32>
    %42 = math.exp %41 : vector<2x8x8xf32>
    %cst_27 = arith.constant dense<0.000000e+00> : vector<2x8xf32>
    %43 = vector.multi_reduction <add>, %42, %cst_27 [2] : vector<2x8x8xf32> to vector<2x8xf32>
    %44 = vector.shape_cast %43 : vector<2x8xf32> to vector<2x8x1xf32>
    %45 = tpu.reciprocal %44 {approx = true} : vector<2x8x1xf32> -> vector<2x8x1xf32>
    %46 = vector.broadcast %45 : vector<2x8x1xf32> to vector<2x8x8xf32>
    %47 = arith.mulf %42, %46 : vector<2x8x8xf32>
    %48 = arith.truncf %47 : vector<2x8x8xf32> to vector<2x8x8xbf16>
    "tpu.trace_start"() <{level = 10 : i32, message = "bqk,bkd->bqd"}> : () -> ()
    %cst_28 = arith.constant dense<0.000000e+00> : vector<2x8x8xf32>
    %49 = tpu.matmul %48, %34, %cst_28 {dimension_numbers = #tpu.dot_dimension_numbers<[2], [1], [1], [2], [0, 0, 0, 1, 1, 2], [0], [0]>} : vector<2x8x8xbf16>, vector<2x8x8xbf16>, vector<2x8x8xf32> -> vector<2x8x8xf32>
    "tpu.trace_stop"() : () -> ()
    %50 = vector.extract_strided_slice %24 {offsets = [0, 0, 8], sizes = [2, 8, 8], strides = [1, 1, 1]} : vector<2x8x32xf32> to vector<2x8x8xf32>
    %cst_29 = arith.constant 0.353553385 : f32
    %51 = vector.broadcast %cst_29 : f32 to vector<2x8x8xf32>
    %52 = arith.mulf %50, %51 : vector<2x8x8xf32>
    %53 = arith.truncf %52 : vector<2x8x8xf32> to vector<2x8x8xbf16>
    %54 = vector.extract_strided_slice %25 {offsets = [0, 0, 8], sizes = [2, 8, 8], strides = [1, 1, 1]} : vector<2x8x32xf32> to vector<2x8x8xf32>
    %55 = arith.truncf %54 : vector<2x8x8xf32> to vector<2x8x8xbf16>
    %56 = vector.extract_strided_slice %26 {offsets = [0, 0, 8], sizes = [2, 8, 8], strides = [1, 1, 1]} : vector<2x8x32xf32> to vector<2x8x8xf32>
    %57 = arith.truncf %56 : vector<2x8x8xf32> to vector<2x8x8xbf16>
    "tpu.trace_start"() <{level = 10 : i32, message = "bqd,bkd->bqk"}> : () -> ()
    %cst_30 = arith.constant dense<0.000000e+00> : vector<2x8x8xf32>
    %58 = tpu.matmul %53, %55, %cst_30 {dimension_numbers = #tpu.dot_dimension_numbers<[2], [2], [1], [1], [0, 0, 0, 1, 1, 1], [0], [0]>} : vector<2x8x8xbf16>, vector<2x8x8xbf16>, vector<2x8x8xf32> -> vector<2x8x8xf32>
    "tpu.trace_stop"() : () -> ()
    %59 = vector.broadcast %6 : vector<2x1x8xf32> to vector<2x8x8xf32>
    %60 = arith.addf %58, %59 : vector<2x8x8xf32>
    %cst_31 = arith.constant dense<0xFF800000> : vector<2x8xf32>
    %61 = vector.multi_reduction <maximumf>, %60, %cst_31 [2] : vector<2x8x8xf32> to vector<2x8xf32>
    %62 = vector.shape_cast %61 : vector<2x8xf32> to vector<2x8x1xf32>
    %63 = vector.broadcast %62 : vector<2x8x1xf32> to vector<2x8x8xf32>
    %64 = arith.subf %60, %63 : vector<2x8x8xf32>
    %65 = math.exp %64 : vector<2x8x8xf32>
    %cst_32 = arith.constant dense<0.000000e+00> : vector<2x8xf32>
    %66 = vector.multi_reduction <add>, %65, %cst_32 [2] : vector<2x8x8xf32> to vector<2x8xf32>
    %67 = vector.shape_cast %66 : vector<2x8xf32> to vector<2x8x1xf32>
    %68 = tpu.reciprocal %67 {approx = true} : vector<2x8x1xf32> -> vector<2x8x1xf32>
    %69 = vector.broadcast %68 : vector<2x8x1xf32> to vector<2x8x8xf32>
    %70 = arith.mulf %65, %69 : vector<2x8x8xf32>
    %71 = arith.truncf %70 : vector<2x8x8xf32> to vector<2x8x8xbf16>
    "tpu.trace_start"() <{level = 10 : i32, message = "bqk,bkd->bqd"}> : () -> ()
    %cst_33 = arith.constant dense<0.000000e+00> : vector<2x8x8xf32>
    %72 = tpu.matmul %71, %57, %cst_33 {dimension_numbers = #tpu.dot_dimension_numbers<[2], [1], [1], [2], [0, 0, 0, 1, 1, 2], [0], [0]>} : vector<2x8x8xbf16>, vector<2x8x8xbf16>, vector<2x8x8xf32> -> vector<2x8x8xf32>
    "tpu.trace_stop"() : () -> ()
    %73 = vector.extract_strided_slice %24 {offsets = [0, 0, 16], sizes = [2, 8, 8], strides = [1, 1, 1]} : vector<2x8x32xf32> to vector<2x8x8xf32>
    %cst_34 = arith.constant 0.353553385 : f32
    %74 = vector.broadcast %cst_34 : f32 to vector<2x8x8xf32>
    %75 = arith.mulf %73, %74 : vector<2x8x8xf32>
    %76 = arith.truncf %75 : vector<2x8x8xf32> to vector<2x8x8xbf16>
    %77 = vector.extract_strided_slice %25 {offsets = [0, 0, 16], sizes = [2, 8, 8], strides = [1, 1, 1]} : vector<2x8x32xf32> to vector<2x8x8xf32>
    %78 = arith.truncf %77 : vector<2x8x8xf32> to vector<2x8x8xbf16>
    %79 = vector.extract_strided_slice %26 {offsets = [0, 0, 16], sizes = [2, 8, 8], strides = [1, 1, 1]} : vector<2x8x32xf32> to vector<2x8x8xf32>
    %80 = arith.truncf %79 : vector<2x8x8xf32> to vector<2x8x8xbf16>
    "tpu.trace_start"() <{level = 10 : i32, message = "bqd,bkd->bqk"}> : () -> ()
    %cst_35 = arith.constant dense<0.000000e+00> : vector<2x8x8xf32>
    %81 = tpu.matmul %76, %78, %cst_35 {dimension_numbers = #tpu.dot_dimension_numbers<[2], [2], [1], [1], [0, 0, 0, 1, 1, 1], [0], [0]>} : vector<2x8x8xbf16>, vector<2x8x8xbf16>, vector<2x8x8xf32> -> vector<2x8x8xf32>
    "tpu.trace_stop"() : () -> ()
    %82 = vector.broadcast %6 : vector<2x1x8xf32> to vector<2x8x8xf32>
    %83 = arith.addf %81, %82 : vector<2x8x8xf32>
    %cst_36 = arith.constant dense<0xFF800000> : vector<2x8xf32>
    %84 = vector.multi_reduction <maximumf>, %83, %cst_36 [2] : vector<2x8x8xf32> to vector<2x8xf32>
    %85 = vector.shape_cast %84 : vector<2x8xf32> to vector<2x8x1xf32>
    %86 = vector.broadcast %85 : vector<2x8x1xf32> to vector<2x8x8xf32>
    %87 = arith.subf %83, %86 : vector<2x8x8xf32>
    %88 = math.exp %87 : vector<2x8x8xf32>
    %cst_37 = arith.constant dense<0.000000e+00> : vector<2x8xf32>
    %89 = vector.multi_reduction <add>, %88, %cst_37 [2] : vector<2x8x8xf32> to vector<2x8xf32>
    %90 = vector.shape_cast %89 : vector<2x8xf32> to vector<2x8x1xf32>
    %91 = tpu.reciprocal %90 {approx = true} : vector<2x8x1xf32> -> vector<2x8x1xf32>
    %92 = vector.broadcast %91 : vector<2x8x1xf32> to vector<2x8x8xf32>
    %93 = arith.mulf %88, %92 : vector<2x8x8xf32>
    %94 = arith.truncf %93 : vector<2x8x8xf32> to vector<2x8x8xbf16>
    "tpu.trace_start"() <{level = 10 : i32, message = "bqk,bkd->bqd"}> : () -> ()
    %cst_38 = arith.constant dense<0.000000e+00> : vector<2x8x8xf32>
    %95 = tpu.matmul %94, %80, %cst_38 {dimension_numbers = #tpu.dot_dimension_numbers<[2], [1], [1], [2], [0, 0, 0, 1, 1, 2], [0], [0]>} : vector<2x8x8xbf16>, vector<2x8x8xbf16>, vector<2x8x8xf32> -> vector<2x8x8xf32>
    "tpu.trace_stop"() : () -> ()
    %96 = vector.extract_strided_slice %24 {offsets = [0, 0, 24], sizes = [2, 8, 8], strides = [1, 1, 1]} : vector<2x8x32xf32> to vector<2x8x8xf32>
    %cst_39 = arith.constant 0.353553385 : f32
    %97 = vector.broadcast %cst_39 : f32 to vector<2x8x8xf32>
    %98 = arith.mulf %96, %97 : vector<2x8x8xf32>
    %99 = arith.truncf %98 : vector<2x8x8xf32> to vector<2x8x8xbf16>
    %100 = vector.extract_strided_slice %25 {offsets = [0, 0, 24], sizes = [2, 8, 8], strides = [1, 1, 1]} : vector<2x8x32xf32> to vector<2x8x8xf32>
    %101 = arith.truncf %100 : vector<2x8x8xf32> to vector<2x8x8xbf16>
    %102 = vector.extract_strided_slice %26 {offsets = [0, 0, 24], sizes = [2, 8, 8], strides = [1, 1, 1]} : vector<2x8x32xf32> to vector<2x8x8xf32>
    %103 = arith.truncf %102 : vector<2x8x8xf32> to vector<2x8x8xbf16>
    "tpu.trace_start"() <{level = 10 : i32, message = "bqd,bkd->bqk"}> : () -> ()
    %cst_40 = arith.constant dense<0.000000e+00> : vector<2x8x8xf32>
    %104 = tpu.matmul %99, %101, %cst_40 {dimension_numbers = #tpu.dot_dimension_numbers<[2], [2], [1], [1], [0, 0, 0, 1, 1, 1], [0], [0]>} : vector<2x8x8xbf16>, vector<2x8x8xbf16>, vector<2x8x8xf32> -> vector<2x8x8xf32>
    "tpu.trace_stop"() : () -> ()
    %105 = vector.broadcast %6 : vector<2x1x8xf32> to vector<2x8x8xf32>
    %106 = arith.addf %104, %105 : vector<2x8x8xf32>
    %cst_41 = arith.constant dense<0xFF800000> : vector<2x8xf32>
    %107 = vector.multi_reduction <maximumf>, %106, %cst_41 [2] : vector<2x8x8xf32> to vector<2x8xf32>
    %108 = vector.shape_cast %107 : vector<2x8xf32> to vector<2x8x1xf32>
    %109 = vector.broadcast %108 : vector<2x8x1xf32> to vector<2x8x8xf32>
    %110 = arith.subf %106, %109 : vector<2x8x8xf32>
    %111 = math.exp %110 : vector<2x8x8xf32>
    %cst_42 = arith.constant dense<0.000000e+00> : vector<2x8xf32>
    %112 = vector.multi_reduction <add>, %111, %cst_42 [2] : vector<2x8x8xf32> to vector<2x8xf32>
    %113 = vector.shape_cast %112 : vector<2x8xf32> to vector<2x8x1xf32>
    %114 = tpu.reciprocal %113 {approx = true} : vector<2x8x1xf32> -> vector<2x8x1xf32>
    %115 = vector.broadcast %114 : vector<2x8x1xf32> to vector<2x8x8xf32>
    %116 = arith.mulf %111, %115 : vector<2x8x8xf32>
    %117 = arith.truncf %116 : vector<2x8x8xf32> to vector<2x8x8xbf16>
    "tpu.trace_start"() <{level = 10 : i32, message = "bqk,bkd->bqd"}> : () -> ()
    %cst_43 = arith.constant dense<0.000000e+00> : vector<2x8x8xf32>
    %118 = tpu.matmul %117, %103, %cst_43 {dimension_numbers = #tpu.dot_dimension_numbers<[2], [1], [1], [2], [0, 0, 0, 1, 1, 2], [0], [0]>} : vector<2x8x8xbf16>, vector<2x8x8xbf16>, vector<2x8x8xf32> -> vector<2x8x8xf32>
    "tpu.trace_stop"() : () -> ()
    %119 = tpu.concatenate %49, %72, %95, %118 in 2 : vector<2x8x8xf32>, vector<2x8x8xf32>, vector<2x8x8xf32>, vector<2x8x8xf32> -> vector<2x8x32xf32>
    %120 = vector.shape_cast %119 : vector<2x8x32xf32> to vector<16x32xf32>
    %121 = arith.truncf %120 : vector<16x32xf32> to vector<16x32xbf16>
    %cst_44 = arith.constant dense<0.000000e+00> : vector<16x32xf32>
    %122 = tpu.matmul %121, %12, %cst_44 {dimension_numbers = #tpu.dot_dimension_numbers<[1], [0], [0], [1], [0, 0, 1, 1], [], []>} : vector<16x32xbf16>, vector<32x32xbf16>, vector<16x32xf32> -> vector<16x32xf32>
    %123 = vector.broadcast %14 : vector<1x32xf32> to vector<16x32xf32>
    %124 = arith.addf %122, %123 : vector<16x32xf32>
    %125 = arith.addf %3, %124 : vector<16x32xf32>
    %cst_45 = arith.constant dense<0.000000e+00> : vector<16xf32>
    %126 = vector.multi_reduction <add>, %125, %cst_45 [1] : vector<16x32xf32> to vector<16xf32>
    %127 = vector.shape_cast %126 : vector<16xf32> to vector<16x1xf32>
    %cst_46 = arith.constant 3.200000e+01 : f32
    %128 = vector.broadcast %cst_46 : f32 to vector<16x1xf32>
    %129 = arith.divf %127, %128 : vector<16x1xf32>
    %130 = vector.broadcast %129 : vector<16x1xf32> to vector<16x32xf32>
    %131 = arith.subf %125, %130 : vector<16x32xf32>
    %132 = arith.mulf %131, %131 : vector<16x32xf32>
    %cst_47 = arith.constant dense<0.000000e+00> : vector<16xf32>
    %133 = vector.multi_reduction <add>, %132, %cst_47 [1] : vector<16x32xf32> to vector<16xf32>
    %134 = vector.shape_cast %133 : vector<16xf32> to vector<16x1xf32>
    %cst_48 = arith.constant 3.200000e+01 : f32
    %135 = vector.broadcast %cst_48 : f32 to vector<16x1xf32>
    %136 = arith.divf %134, %135 : vector<16x1xf32>
    %cst_49 = arith.constant 9.99999974E-6 : f32
    %137 = vector.broadcast %cst_49 : f32 to vector<16x1xf32>
    %138 = arith.addf %136, %137 : vector<16x1xf32>
    %139 = math.rsqrt %138 : vector<16x1xf32>
    %140 = vector.broadcast %139 : vector<16x1xf32> to vector<16x32xf32>
    %141 = arith.mulf %131, %140 : vector<16x32xf32>
    %142 = vector.broadcast %16 : vector<1x32xf32> to vector<16x32xf32>
    %143 = arith.mulf %141, %142 : vector<16x32xf32>
    %144 = vector.broadcast %18 : vector<1x32xf32> to vector<16x32xf32>
    %145 = arith.addf %143, %144 : vector<16x32xf32>
    %c0_50 = arith.constant 0 : index
    %c0_51 = arith.constant 0 : index
    %c0_52 = arith.constant 0 : index
    %146 = vector.load %arg9[%c0_50, %c0_51, %c0_52] : memref<1x32x64xbf16, #tpu.memory_space<vmem>>, vector<1x32x64xbf16>
    %147 = vector.shape_cast %146 : vector<1x32x64xbf16> to vector<32x64xbf16>
    %c0_53 = arith.constant 0 : index
    %c0_54 = arith.constant 0 : index
    %c0_55 = arith.constant 0 : index
    %148 = vector.load %arg10[%c0_53, %c0_54, %c0_55] : memref<1x1x64xf32, #tpu.memory_space<vmem>>, vector<1x1x64xf32>
    %149 = vector.shape_cast %148 : vector<1x1x64xf32> to vector<1x64xf32>
    %c0_56 = arith.constant 0 : index
    %c0_57 = arith.constant 0 : index
    %c0_58 = arith.constant 0 : index
    %150 = vector.load %arg11[%c0_56, %c0_57, %c0_58] : memref<1x64x32xbf16, #tpu.memory_space<vmem>>, vector<1x64x32xbf16>
    %151 = vector.shape_cast %150 : vector<1x64x32xbf16> to vector<64x32xbf16>
    %c0_59 = arith.constant 0 : index
    %c0_60 = arith.constant 0 : index
    %c0_61 = arith.constant 0 : index
    %152 = vector.load %arg12[%c0_59, %c0_60, %c0_61] : memref<1x1x32xf32, #tpu.memory_space<vmem>>, vector<1x1x32xf32>
    %153 = vector.shape_cast %152 : vector<1x1x32xf32> to vector<1x32xf32>
    %c0_62 = arith.constant 0 : index
    %c0_63 = arith.constant 0 : index
    %c0_64 = arith.constant 0 : index
    %154 = vector.load %arg13[%c0_62, %c0_63, %c0_64] : memref<1x1x32xf32, #tpu.memory_space<vmem>>, vector<1x1x32xf32>
    %155 = vector.shape_cast %154 : vector<1x1x32xf32> to vector<1x32xf32>
    %c0_65 = arith.constant 0 : index
    %c0_66 = arith.constant 0 : index
    %c0_67 = arith.constant 0 : index
    %156 = vector.load %arg14[%c0_65, %c0_66, %c0_67] : memref<1x1x32xf32, #tpu.memory_space<vmem>>, vector<1x1x32xf32>
    %157 = vector.shape_cast %156 : vector<1x1x32xf32> to vector<1x32xf32>
    %158 = arith.truncf %145 : vector<16x32xf32> to vector<16x32xbf16>
    %cst_68 = arith.constant dense<0.000000e+00> : vector<16x64xf32>
    %159 = tpu.matmul %158, %147, %cst_68 {dimension_numbers = #tpu.dot_dimension_numbers<[1], [0], [0], [1], [0, 0, 1, 1], [], []>} : vector<16x32xbf16>, vector<32x64xbf16>, vector<16x64xf32> -> vector<16x64xf32>
    %160 = vector.broadcast %149 : vector<1x64xf32> to vector<16x64xf32>
    %161 = arith.addf %159, %160 : vector<16x64xf32>
    %cst_69 = arith.constant 0.000000e+00 : f32
    %162 = vector.broadcast %cst_69 : f32 to vector<16x64xf32>
    %163 = arith.maximumf %161, %162 : vector<16x64xf32>
    %164 = arith.truncf %163 : vector<16x64xf32> to vector<16x64xbf16>
    %cst_70 = arith.constant dense<0.000000e+00> : vector<16x32xf32>
    %165 = tpu.matmul %164, %151, %cst_70 {dimension_numbers = #tpu.dot_dimension_numbers<[1], [0], [0], [1], [0, 0, 1, 1], [], []>} : vector<16x64xbf16>, vector<64x32xbf16>, vector<16x32xf32> -> vector<16x32xf32>
    %166 = vector.broadcast %153 : vector<1x32xf32> to vector<16x32xf32>
    %167 = arith.addf %165, %166 : vector<16x32xf32>
    %168 = arith.addf %145, %167 : vector<16x32xf32>
    %cst_71 = arith.constant dense<0.000000e+00> : vector<16xf32>
    %169 = vector.multi_reduction <add>, %168, %cst_71 [1] : vector<16x32xf32> to vector<16xf32>
    %170 = vector.shape_cast %169 : vector<16xf32> to vector<16x1xf32>
    %cst_72 = arith.constant 3.200000e+01 : f32
    %171 = vector.broadcast %cst_72 : f32 to vector<16x1xf32>
    %172 = arith.divf %170, %171 : vector<16x1xf32>
    %173 = vector.broadcast %172 : vector<16x1xf32> to vector<16x32xf32>
    %174 = arith.subf %168, %173 : vector<16x32xf32>
    %175 = arith.mulf %174, %174 : vector<16x32xf32>
    %cst_73 = arith.constant dense<0.000000e+00> : vector<16xf32>
    %176 = vector.multi_reduction <add>, %175, %cst_73 [1] : vector<16x32xf32> to vector<16xf32>
    %177 = vector.shape_cast %176 : vector<16xf32> to vector<16x1xf32>
    %cst_74 = arith.constant 3.200000e+01 : f32
    %178 = vector.broadcast %cst_74 : f32 to vector<16x1xf32>
    %179 = arith.divf %177, %178 : vector<16x1xf32>
    %cst_75 = arith.constant 9.99999974E-6 : f32
    %180 = vector.broadcast %cst_75 : f32 to vector<16x1xf32>
    %181 = arith.addf %179, %180 : vector<16x1xf32>
    %182 = math.rsqrt %181 : vector<16x1xf32>
    %183 = vector.broadcast %182 : vector<16x1xf32> to vector<16x32xf32>
    %184 = arith.mulf %174, %183 : vector<16x32xf32>
    %185 = vector.broadcast %155 : vector<1x32xf32> to vector<16x32xf32>
    %186 = arith.mulf %184, %185 : vector<16x32xf32>
    %187 = vector.broadcast %157 : vector<1x32xf32> to vector<16x32xf32>
    %188 = arith.addf %186, %187 : vector<16x32xf32>
    %c0_76 = arith.constant 0 : index
    %c0_77 = arith.constant 0 : index
    %189 = vector.load %arg18[%c0_76, %c0_77] : memref<16x32xf32, #tpu.memory_space<vmem>>, vector<16x32xf32>
    tpu.vector_store %arg18[%c0_76, %c0_77], %188 {strides = array<i32>} : memref<16x32xf32, #tpu.memory_space<vmem>>, vector<16x32xf32>,
    %c1_i32 = arith.constant 1 : i32
    %190 = arith.cmpi eq, %arg0, %c1_i32 : i32
    %191 = arith.extui %190 : i1 to i32
    %c0_i32_78 = arith.constant 0 : i32
    %192 = arith.cmpi ne, %191, %c0_i32_78 : i32
    scf.if %192 {
      %c0_79 = arith.constant 0 : index
      %c0_80 = arith.constant 0 : index
      %193 = vector.load %arg15[%c0_79, %c0_80] : memref<1x32xf32, #tpu.memory_space<vmem>>, vector<1x32xf32>
      %c0_81 = arith.constant 0 : index
      %c0_82 = arith.constant 0 : index
      %194 = vector.load %arg16[%c0_81, %c0_82] : memref<1x32xf32, #tpu.memory_space<vmem>>, vector<1x32xf32>
      %cst_83 = arith.constant dense<0.000000e+00> : vector<16xf32>
      %195 = vector.multi_reduction <add>, %188, %cst_83 [1] : vector<16x32xf32> to vector<16xf32>
      %196 = vector.shape_cast %195 : vector<16xf32> to vector<16x1xf32>
      %cst_84 = arith.constant 3.200000e+01 : f32
      %197 = vector.broadcast %cst_84 : f32 to vector<16x1xf32>
      %198 = arith.divf %196, %197 : vector<16x1xf32>
      %199 = vector.broadcast %198 : vector<16x1xf32> to vector<16x32xf32>
      %200 = arith.subf %188, %199 : vector<16x32xf32>
      %201 = arith.mulf %200, %200 : vector<16x32xf32>
      %cst_85 = arith.constant dense<0.000000e+00> : vector<16xf32>
      %202 = vector.multi_reduction <add>, %201, %cst_85 [1] : vector<16x32xf32> to vector<16xf32>
      %203 = vector.shape_cast %202 : vector<16xf32> to vector<16x1xf32>
      %cst_86 = arith.constant 3.200000e+01 : f32
      %204 = vector.broadcast %cst_86 : f32 to vector<16x1xf32>
      %205 = arith.divf %203, %204 : vector<16x1xf32>
      %cst_87 = arith.constant 9.99999974E-6 : f32
      %206 = vector.broadcast %cst_87 : f32 to vector<16x1xf32>
      %207 = arith.addf %205, %206 : vector<16x1xf32>
      %208 = math.rsqrt %207 : vector<16x1xf32>
      %209 = vector.broadcast %208 : vector<16x1xf32> to vector<16x32xf32>
      %210 = arith.mulf %200, %209 : vector<16x32xf32>
      %211 = vector.broadcast %193 : vector<1x32xf32> to vector<16x32xf32>
      %212 = arith.mulf %210, %211 : vector<16x32xf32>
      %213 = vector.broadcast %194 : vector<1x32xf32> to vector<16x32xf32>
      %214 = arith.addf %212, %213 : vector<16x32xf32>
      %215 = arith.truncf %214 : vector<16x32xf32> to vector<16x32xbf16>
      %c0_88 = arith.constant 0 : index
      %c0_89 = arith.constant 0 : index
      %216 = vector.load %arg17[%c0_88, %c0_89] : memref<16x32xbf16, #tpu.memory_space<vmem>>, vector<16x32xbf16>
      tpu.vector_store %arg17[%c0_88, %c0_89], %215 {strides = array<i32>} : memref<16x32xbf16, #tpu.memory_space<vmem>>, vector<16x32xbf16>,
    } else {
    }
    return
  }
  func.func @transform_0(%arg0: i32) -> (i32, i32) {
    %c0_i32 = arith.constant 0 : i32
    %c0_i32_0 = arith.constant 0 : i32
    %c0_i32_1 = arith.constant 0 : i32
    return %c0_i32, %c0_i32_0 : i32, i32
  }
  func.func @transform_1(%arg0: i32) -> (i32, i32, i32) {
    %c0_i32 = arith.constant 0 : i32
    %c0_i32_0 = arith.constant 0 : i32
    %c0_i32_1 = arith.constant 0 : i32
    %c0_i32_2 = arith.constant 0 : i32
    return %c0_i32, %c0_i32_0, %c0_i32_1 : i32, i32, i32
  }
  func.func @transform_2(%arg0: i32) -> (i32, i32, i32) {
    %c0_i32 = arith.constant 0 : i32
    %c0_i32_0 = arith.constant 0 : i32
    %c0_i32_1 = arith.constant 0 : i32
    return %arg0, %c0_i32, %c0_i32_0 : i32, i32, i32
  }
  func.func @transform_3(%arg0: i32) -> (i32, i32, i32) {
    %c0_i32 = arith.constant 0 : i32
    %c0_i32_0 = arith.constant 0 : i32
    %c0_i32_1 = arith.constant 0 : i32
    return %arg0, %c0_i32, %c0_i32_0 : i32, i32, i32
  }
  func.func @transform_4(%arg0: i32) -> (i32, i32, i32) {
    %c0_i32 = arith.constant 0 : i32
    %c0_i32_0 = arith.constant 0 : i32
    %c0_i32_1 = arith.constant 0 : i32
    return %arg0, %c0_i32, %c0_i32_0 : i32, i32, i32
  }
  func.func @transform_5(%arg0: i32) -> (i32, i32, i32) {
    %c0_i32 = arith.constant 0 : i32
    %c0_i32_0 = arith.constant 0 : i32
    %c0_i32_1 = arith.constant 0 : i32
    return %arg0, %c0_i32, %c0_i32_0 : i32, i32, i32
  }
  func.func @transform_6(%arg0: i32) -> (i32, i32, i32) {
    %c0_i32 = arith.constant 0 : i32
    %c0_i32_0 = arith.constant 0 : i32
    %c0_i32_1 = arith.constant 0 : i32
    return %arg0, %c0_i32, %c0_i32_0 : i32, i32, i32
  }
  func.func @transform_7(%arg0: i32) -> (i32, i32, i32) {
    %c0_i32 = arith.constant 0 : i32
    %c0_i32_0 = arith.constant 0 : i32
    %c0_i32_1 = arith.constant 0 : i32
    return %arg0, %c0_i32, %c0_i32_0 : i32, i32, i32
  }
  func.func @transform_8(%arg0: i32) -> (i32, i32, i32) {
    %c0_i32 = arith.constant 0 : i32
    %c0_i32_0 = arith.constant 0 : i32
    %c0_i32_1 = arith.constant 0 : i32
    return %arg0, %c0_i32, %c0_i32_0 : i32, i32, i32
  }
  func.func @transform_9(%arg0: i32) -> (i32, i32, i32) {
    %c0_i32 = arith.constant 0 : i32
    %c0_i32_0 = arith.constant 0 : i32
    %c0_i32_1 = arith.constant 0 : i32
    return %arg0, %c0_i32, %c0_i32_0 : i32, i32, i32
  }
  func.func @transform_10(%arg0: i32) -> (i32, i32, i32) {
    %c0_i32 = arith.constant 0 : i32
    %c0_i32_0 = arith.constant 0 : i32
    %c0_i32_1 = arith.constant 0 : i32
    return %arg0, %c0_i32, %c0_i32_0 : i32, i32, i32
  }
  func.func @transform_11(%arg0: i32) -> (i32, i32, i32) {
    %c0_i32 = arith.constant 0 : i32
    %c0_i32_0 = arith.constant 0 : i32
    %c0_i32_1 = arith.constant 0 : i32
    return %arg0, %c0_i32, %c0_i32_0 : i32, i32, i32
  }
  func.func @transform_12(%arg0: i32) -> (i32, i32, i32) {
    %c0_i32 = arith.constant 0 : i32
    %c0_i32_0 = arith.constant 0 : i32
    %c0_i32_1 = arith.constant 0 : i32
    return %arg0, %c0_i32, %c0_i32_0 : i32, i32, i32
  }
  func.func @transform_13(%arg0: i32) -> (i32, i32, i32) {
    %c0_i32 = arith.constant 0 : i32
    %c0_i32_0 = arith.constant 0 : i32
    %c0_i32_1 = arith.constant 0 : i32
    return %arg0, %c0_i32, %c0_i32_0 : i32, i32, i32
  }
  func.func @transform_14(%arg0: i32) -> (i32, i32) {
    %c0_i32 = arith.constant 0 : i32
    %c0_i32_0 = arith.constant 0 : i32
    %c0_i32_1 = arith.constant 0 : i32
    return %c0_i32, %c0_i32_0 : i32, i32
  }
  func.func @transform_15(%arg0: i32) -> (i32, i32) {
    %c0_i32 = arith.constant 0 : i32
    %c0_i32_0 = arith.constant 0 : i32
    %c0_i32_1 = arith.constant 0 : i32
    return %c0_i32, %c0_i32_0 : i32, i32
  }
  func.func @transform_16(%arg0: i32) -> (i32, i32) {
    %c0_i32 = arith.constant 0 : i32
    %c0_i32_0 = arith.constant 0 : i32
    %c0_i32_1 = arith.constant 0 : i32
    return %c0_i32, %c0_i32_0 : i32, i32
  }
}

module attributes {stable_mosaic.version = 11 : i64} {
  func.func @_decoder_kernel(%arg0: i32, %arg1: memref<16x32xbf16, #tpu.memory_space<vmem>>, %arg2: memref<16x32xbf16, #tpu.memory_space<vmem>>, %arg3: memref<8x8xf32, #tpu.memory_space<vmem>>, %arg4: memref<1x32x96xbf16, #tpu.memory_space<vmem>>, %arg5: memref<1x1x96xf32, #tpu.memory_space<vmem>>, %arg6: memref<1x32x32xbf16, #tpu.memory_space<vmem>>, %arg7: memref<1x1x32xf32, #tpu.memory_space<vmem>>, %arg8: memref<1x1x32xf32, #tpu.memory_space<vmem>>, %arg9: memref<1x1x32xf32, #tpu.memory_space<vmem>>, %arg10: memref<1x32x32xbf16, #tpu.memory_space<vmem>>, %arg11: memref<1x1x32xf32, #tpu.memory_space<vmem>>, %arg12: memref<1x32x64xbf16, #tpu.memory_space<vmem>>, %arg13: memref<1x1x64xf32, #tpu.memory_space<vmem>>, %arg14: memref<1x32x32xbf16, #tpu.memory_space<vmem>>, %arg15: memref<1x1x32xf32, #tpu.memory_space<vmem>>, %arg16: memref<1x1x32xf32, #tpu.memory_space<vmem>>, %arg17: memref<1x1x32xf32, #tpu.memory_space<vmem>>, %arg18: memref<1x32x64xbf16, #tpu.memory_space<vmem>>, %arg19: memref<1x1x64xf32, #tpu.memory_space<vmem>>, %arg20: memref<1x64x32xbf16, #tpu.memory_space<vmem>>, %arg21: memref<1x1x32xf32, #tpu.memory_space<vmem>>, %arg22: memref<1x1x32xf32, #tpu.memory_space<vmem>>, %arg23: memref<1x1x32xf32, #tpu.memory_space<vmem>>, %arg24: memref<1x32xf32, #tpu.memory_space<vmem>>, %arg25: memref<1x32xf32, #tpu.memory_space<vmem>>, %arg26: memref<16x32xbf16, #tpu.memory_space<vmem>>, %arg27: memref<16x32xf32, #tpu.memory_space<vmem>>) attributes {dimension_semantics = [#tpu.dimension_semantics<arbitrary>], iteration_bounds = array<i64: 2>, scalar_prefetch = 0 : i64, scratch_operands = 1 : i64, tpu.core_type = #tpu.core_type<tc>, window_params = [{pipeline_mode = #tpu.pipeline_mode<synchronous>, transform_indices = @transform_0, window_bounds = array<i64: 16, 32>}, {pipeline_mode = #tpu.pipeline_mode<synchronous>, transform_indices = @transform_1, window_bounds = array<i64: 16, 32>}, {pipeline_mode = #tpu.pipeline_mode<synchronous>, transform_indices = @transform_2, window_bounds = array<i64: 8, 8>}, {transform_indices = @transform_3, window_bounds = array<i64: 1, 32, 96>}, {transform_indices = @transform_4, window_bounds = array<i64: 1, 1, 96>}, {transform_indices = @transform_5, window_bounds = array<i64: 1, 32, 32>}, {transform_indices = @transform_6, window_bounds = array<i64: 1, 1, 32>}, {transform_indices = @transform_7, window_bounds = array<i64: 1, 1, 32>}, {transform_indices = @transform_8, window_bounds = array<i64: 1, 1, 32>}, {transform_indices = @transform_9, window_bounds = array<i64: 1, 32, 32>}, {transform_indices = @transform_10, window_bounds = array<i64: 1, 1, 32>}, {transform_indices = @transform_11, window_bounds = array<i64: 1, 32, 64>}, {transform_indices = @transform_12, window_bounds = array<i64: 1, 1, 64>}, {transform_indices = @transform_13, window_bounds = array<i64: 1, 32, 32>}, {transform_indices = @transform_14, window_bounds = array<i64: 1, 1, 32>}, {transform_indices = @transform_15, window_bounds = array<i64: 1, 1, 32>}, {transform_indices = @transform_16, window_bounds = array<i64: 1, 1, 32>}, {transform_indices = @transform_17, window_bounds = array<i64: 1, 32, 64>}, {transform_indices = @transform_18, window_bounds = array<i64: 1, 1, 64>}, {transform_indices = @transform_19, window_bounds = array<i64: 1, 64, 32>}, {transform_indices = @transform_20, window_bounds = array<i64: 1, 1, 32>}, {transform_indices = @transform_21, window_bounds = array<i64: 1, 1, 32>}, {transform_indices = @transform_22, window_bounds = array<i64: 1, 1, 32>}, {pipeline_mode = #tpu.pipeline_mode<synchronous>, transform_indices = @transform_23, window_bounds = array<i64: 1, 32>}, {pipeline_mode = #tpu.pipeline_mode<synchronous>, transform_indices = @transform_24, window_bounds = array<i64: 1, 32>}, {pipeline_mode = #tpu.pipeline_mode<synchronous>, transform_indices = @transform_25, window_bounds = array<i64: 16, 32>}]} {
    %c0_i32 = arith.constant 0 : i32
    %0 = arith.cmpi eq, %arg0, %c0_i32 : i32
    %1 = arith.extui %0 : i1 to i32
    %c0_i32_0 = arith.constant 0 : i32
    %2 = arith.cmpi ne, %1, %c0_i32_0 : i32
    scf.if %2 {
      %c0_131 = arith.constant 0 : index
      %c0_132 = arith.constant 0 : index
      %334 = vector.load %arg1[%c0_131, %c0_132] : memref<16x32xbf16, #tpu.memory_space<vmem>>, vector<16x32xbf16>
      %335 = arith.extf %334 : vector<16x32xbf16> to vector<16x32xf32>
      %c0_133 = arith.constant 0 : index
      %c0_134 = arith.constant 0 : index
      %336 = vector.load %arg27[%c0_133, %c0_134] : memref<16x32xf32, #tpu.memory_space<vmem>>, vector<16x32xf32>
      tpu.vector_store %arg27[%c0_133, %c0_134], %335 {strides = array<i32>} : memref<16x32xf32, #tpu.memory_space<vmem>>, vector<16x32xf32>,
    } else {
    }
    %c0 = arith.constant 0 : index
    %c0_1 = arith.constant 0 : index
    %3 = vector.load %arg27[%c0, %c0_1] : memref<16x32xf32, #tpu.memory_space<vmem>>, vector<16x32xf32>
    %c0_2 = arith.constant 0 : index
    %c0_3 = arith.constant 0 : index
    %4 = vector.load %arg2[%c0_2, %c0_3] : memref<16x32xbf16, #tpu.memory_space<vmem>>, vector<16x32xbf16>
    %c0_4 = arith.constant 0 : index
    %c0_5 = arith.constant 0 : index
    %5 = vector.load %arg3[%c0_4, %c0_5] : memref<8x8xf32, #tpu.memory_space<vmem>>, vector<8x8xf32>
    %c0_6 = arith.constant 0 : index
    %c0_7 = arith.constant 0 : index
    %c0_8 = arith.constant 0 : index
    %6 = vector.load %arg4[%c0_6, %c0_7, %c0_8] : memref<1x32x96xbf16, #tpu.memory_space<vmem>>, vector<1x32x96xbf16>
    %7 = vector.shape_cast %6 : vector<1x32x96xbf16> to vector<32x96xbf16>
    %c0_9 = arith.constant 0 : index
    %c0_10 = arith.constant 0 : index
    %c0_11 = arith.constant 0 : index
    %8 = vector.load %arg5[%c0_9, %c0_10, %c0_11] : memref<1x1x96xf32, #tpu.memory_space<vmem>>, vector<1x1x96xf32>
    %9 = vector.shape_cast %8 : vector<1x1x96xf32> to vector<1x96xf32>
    %c0_12 = arith.constant 0 : index
    %c0_13 = arith.constant 0 : index
    %c0_14 = arith.constant 0 : index
    %10 = vector.load %arg6[%c0_12, %c0_13, %c0_14] : memref<1x32x32xbf16, #tpu.memory_space<vmem>>, vector<1x32x32xbf16>
    %11 = vector.shape_cast %10 : vector<1x32x32xbf16> to vector<32x32xbf16>
    %c0_15 = arith.constant 0 : index
    %c0_16 = arith.constant 0 : index
    %c0_17 = arith.constant 0 : index
    %12 = vector.load %arg7[%c0_15, %c0_16, %c0_17] : memref<1x1x32xf32, #tpu.memory_space<vmem>>, vector<1x1x32xf32>
    %13 = vector.shape_cast %12 : vector<1x1x32xf32> to vector<1x32xf32>
    %c0_18 = arith.constant 0 : index
    %c0_19 = arith.constant 0 : index
    %c0_20 = arith.constant 0 : index
    %14 = vector.load %arg8[%c0_18, %c0_19, %c0_20] : memref<1x1x32xf32, #tpu.memory_space<vmem>>, vector<1x1x32xf32>
    %15 = vector.shape_cast %14 : vector<1x1x32xf32> to vector<1x32xf32>
    %c0_21 = arith.constant 0 : index
    %c0_22 = arith.constant 0 : index
    %c0_23 = arith.constant 0 : index
    %16 = vector.load %arg9[%c0_21, %c0_22, %c0_23] : memref<1x1x32xf32, #tpu.memory_space<vmem>>, vector<1x1x32xf32>
    %17 = vector.shape_cast %16 : vector<1x1x32xf32> to vector<1x32xf32>
    %18 = arith.truncf %3 : vector<16x32xf32> to vector<16x32xbf16>
    %cst = arith.constant dense<0.000000e+00> : vector<16x96xf32>
    %19 = tpu.matmul %18, %7, %cst {dimension_numbers = #tpu.dot_dimension_numbers<[1], [0], [0], [1], [0, 0, 1, 1], [], []>} : vector<16x32xbf16>, vector<32x96xbf16>, vector<16x96xf32> -> vector<16x96xf32>
    %20 = vector.broadcast %9 : vector<1x96xf32> to vector<16x96xf32>
    %21 = arith.addf %19, %20 : vector<16x96xf32>
    %22 = vector.shape_cast %21 : vector<16x96xf32> to vector<2x8x96xf32>
    %23 = vector.extract_strided_slice %22 {offsets = [0, 0, 0], sizes = [2, 8, 32], strides = [1, 1, 1]} : vector<2x8x96xf32> to vector<2x8x32xf32>
    %24 = vector.extract_strided_slice %22 {offsets = [0, 0, 32], sizes = [2, 8, 32], strides = [1, 1, 1]} : vector<2x8x96xf32> to vector<2x8x32xf32>
    %25 = vector.extract_strided_slice %22 {offsets = [0, 0, 64], sizes = [2, 8, 32], strides = [1, 1, 1]} : vector<2x8x96xf32> to vector<2x8x32xf32>
    %26 = vector.extract_strided_slice %23 {offsets = [0, 0, 0], sizes = [2, 8, 8], strides = [1, 1, 1]} : vector<2x8x32xf32> to vector<2x8x8xf32>
    %cst_24 = arith.constant 0.353553385 : f32
    %27 = vector.broadcast %cst_24 : f32 to vector<2x8x8xf32>
    %28 = arith.mulf %26, %27 : vector<2x8x8xf32>
    %29 = arith.truncf %28 : vector<2x8x8xf32> to vector<2x8x8xbf16>
    %30 = vector.extract_strided_slice %24 {offsets = [0, 0, 0], sizes = [2, 8, 8], strides = [1, 1, 1]} : vector<2x8x32xf32> to vector<2x8x8xf32>
    %31 = arith.truncf %30 : vector<2x8x8xf32> to vector<2x8x8xbf16>
    %32 = vector.extract_strided_slice %25 {offsets = [0, 0, 0], sizes = [2, 8, 8], strides = [1, 1, 1]} : vector<2x8x32xf32> to vector<2x8x8xf32>
    %33 = arith.truncf %32 : vector<2x8x8xf32> to vector<2x8x8xbf16>
    "tpu.trace_start"() <{level = 10 : i32, message = "bqd,bkd->bqk"}> : () -> ()
    %cst_25 = arith.constant dense<0.000000e+00> : vector<2x8x8xf32>
    %34 = tpu.matmul %29, %31, %cst_25 {dimension_numbers = #tpu.dot_dimension_numbers<[2], [2], [1], [1], [0, 0, 0, 1, 1, 1], [0], [0]>} : vector<2x8x8xbf16>, vector<2x8x8xbf16>, vector<2x8x8xf32> -> vector<2x8x8xf32>
    "tpu.trace_stop"() : () -> ()
    %35 = vector.shape_cast %5 : vector<8x8xf32> to vector<1x8x8xf32>
    %36 = vector.broadcast %35 : vector<1x8x8xf32> to vector<2x8x8xf32>
    %37 = arith.addf %34, %36 : vector<2x8x8xf32>
    %cst_26 = arith.constant dense<0xFF800000> : vector<2x8xf32>
    %38 = vector.multi_reduction <maximumf>, %37, %cst_26 [2] : vector<2x8x8xf32> to vector<2x8xf32>
    %39 = vector.shape_cast %38 : vector<2x8xf32> to vector<2x8x1xf32>
    %40 = vector.broadcast %39 : vector<2x8x1xf32> to vector<2x8x8xf32>
    %41 = arith.subf %37, %40 : vector<2x8x8xf32>
    %42 = math.exp %41 : vector<2x8x8xf32>
    %cst_27 = arith.constant dense<0.000000e+00> : vector<2x8xf32>
    %43 = vector.multi_reduction <add>, %42, %cst_27 [2] : vector<2x8x8xf32> to vector<2x8xf32>
    %44 = vector.shape_cast %43 : vector<2x8xf32> to vector<2x8x1xf32>
    %45 = tpu.reciprocal %44 {approx = true} : vector<2x8x1xf32> -> vector<2x8x1xf32>
    %46 = vector.broadcast %45 : vector<2x8x1xf32> to vector<2x8x8xf32>
    %47 = arith.mulf %42, %46 : vector<2x8x8xf32>
    %48 = arith.truncf %47 : vector<2x8x8xf32> to vector<2x8x8xbf16>
    "tpu.trace_start"() <{level = 10 : i32, message = "bqk,bkd->bqd"}> : () -> ()
    %cst_28 = arith.constant dense<0.000000e+00> : vector<2x8x8xf32>
    %49 = tpu.matmul %48, %33, %cst_28 {dimension_numbers = #tpu.dot_dimension_numbers<[2], [1], [1], [2], [0, 0, 0, 1, 1, 2], [0], [0]>} : vector<2x8x8xbf16>, vector<2x8x8xbf16>, vector<2x8x8xf32> -> vector<2x8x8xf32>
    "tpu.trace_stop"() : () -> ()
    %50 = vector.extract_strided_slice %23 {offsets = [0, 0, 8], sizes = [2, 8, 8], strides = [1, 1, 1]} : vector<2x8x32xf32> to vector<2x8x8xf32>
    %cst_29 = arith.constant 0.353553385 : f32
    %51 = vector.broadcast %cst_29 : f32 to vector<2x8x8xf32>
    %52 = arith.mulf %50, %51 : vector<2x8x8xf32>
    %53 = arith.truncf %52 : vector<2x8x8xf32> to vector<2x8x8xbf16>
    %54 = vector.extract_strided_slice %24 {offsets = [0, 0, 8], sizes = [2, 8, 8], strides = [1, 1, 1]} : vector<2x8x32xf32> to vector<2x8x8xf32>
    %55 = arith.truncf %54 : vector<2x8x8xf32> to vector<2x8x8xbf16>
    %56 = vector.extract_strided_slice %25 {offsets = [0, 0, 8], sizes = [2, 8, 8], strides = [1, 1, 1]} : vector<2x8x32xf32> to vector<2x8x8xf32>
    %57 = arith.truncf %56 : vector<2x8x8xf32> to vector<2x8x8xbf16>
    "tpu.trace_start"() <{level = 10 : i32, message = "bqd,bkd->bqk"}> : () -> ()
    %cst_30 = arith.constant dense<0.000000e+00> : vector<2x8x8xf32>
    %58 = tpu.matmul %53, %55, %cst_30 {dimension_numbers = #tpu.dot_dimension_numbers<[2], [2], [1], [1], [0, 0, 0, 1, 1, 1], [0], [0]>} : vector<2x8x8xbf16>, vector<2x8x8xbf16>, vector<2x8x8xf32> -> vector<2x8x8xf32>
    "tpu.trace_stop"() : () -> ()
    %59 = vector.shape_cast %5 : vector<8x8xf32> to vector<1x8x8xf32>
    %60 = vector.broadcast %59 : vector<1x8x8xf32> to vector<2x8x8xf32>
    %61 = arith.addf %58, %60 : vector<2x8x8xf32>
    %cst_31 = arith.constant dense<0xFF800000> : vector<2x8xf32>
    %62 = vector.multi_reduction <maximumf>, %61, %cst_31 [2] : vector<2x8x8xf32> to vector<2x8xf32>
    %63 = vector.shape_cast %62 : vector<2x8xf32> to vector<2x8x1xf32>
    %64 = vector.broadcast %63 : vector<2x8x1xf32> to vector<2x8x8xf32>
    %65 = arith.subf %61, %64 : vector<2x8x8xf32>
    %66 = math.exp %65 : vector<2x8x8xf32>
    %cst_32 = arith.constant dense<0.000000e+00> : vector<2x8xf32>
    %67 = vector.multi_reduction <add>, %66, %cst_32 [2] : vector<2x8x8xf32> to vector<2x8xf32>
    %68 = vector.shape_cast %67 : vector<2x8xf32> to vector<2x8x1xf32>
    %69 = tpu.reciprocal %68 {approx = true} : vector<2x8x1xf32> -> vector<2x8x1xf32>
    %70 = vector.broadcast %69 : vector<2x8x1xf32> to vector<2x8x8xf32>
    %71 = arith.mulf %66, %70 : vector<2x8x8xf32>
    %72 = arith.truncf %71 : vector<2x8x8xf32> to vector<2x8x8xbf16>
    "tpu.trace_start"() <{level = 10 : i32, message = "bqk,bkd->bqd"}> : () -> ()
    %cst_33 = arith.constant dense<0.000000e+00> : vector<2x8x8xf32>
    %73 = tpu.matmul %72, %57, %cst_33 {dimension_numbers = #tpu.dot_dimension_numbers<[2], [1], [1], [2], [0, 0, 0, 1, 1, 2], [0], [0]>} : vector<2x8x8xbf16>, vector<2x8x8xbf16>, vector<2x8x8xf32> -> vector<2x8x8xf32>
    "tpu.trace_stop"() : () -> ()
    %74 = vector.extract_strided_slice %23 {offsets = [0, 0, 16], sizes = [2, 8, 8], strides = [1, 1, 1]} : vector<2x8x32xf32> to vector<2x8x8xf32>
    %cst_34 = arith.constant 0.353553385 : f32
    %75 = vector.broadcast %cst_34 : f32 to vector<2x8x8xf32>
    %76 = arith.mulf %74, %75 : vector<2x8x8xf32>
    %77 = arith.truncf %76 : vector<2x8x8xf32> to vector<2x8x8xbf16>
    %78 = vector.extract_strided_slice %24 {offsets = [0, 0, 16], sizes = [2, 8, 8], strides = [1, 1, 1]} : vector<2x8x32xf32> to vector<2x8x8xf32>
    %79 = arith.truncf %78 : vector<2x8x8xf32> to vector<2x8x8xbf16>
    %80 = vector.extract_strided_slice %25 {offsets = [0, 0, 16], sizes = [2, 8, 8], strides = [1, 1, 1]} : vector<2x8x32xf32> to vector<2x8x8xf32>
    %81 = arith.truncf %80 : vector<2x8x8xf32> to vector<2x8x8xbf16>
    "tpu.trace_start"() <{level = 10 : i32, message = "bqd,bkd->bqk"}> : () -> ()
    %cst_35 = arith.constant dense<0.000000e+00> : vector<2x8x8xf32>
    %82 = tpu.matmul %77, %79, %cst_35 {dimension_numbers = #tpu.dot_dimension_numbers<[2], [2], [1], [1], [0, 0, 0, 1, 1, 1], [0], [0]>} : vector<2x8x8xbf16>, vector<2x8x8xbf16>, vector<2x8x8xf32> -> vector<2x8x8xf32>
    "tpu.trace_stop"() : () -> ()
    %83 = vector.shape_cast %5 : vector<8x8xf32> to vector<1x8x8xf32>
    %84 = vector.broadcast %83 : vector<1x8x8xf32> to vector<2x8x8xf32>
    %85 = arith.addf %82, %84 : vector<2x8x8xf32>
    %cst_36 = arith.constant dense<0xFF800000> : vector<2x8xf32>
    %86 = vector.multi_reduction <maximumf>, %85, %cst_36 [2] : vector<2x8x8xf32> to vector<2x8xf32>
    %87 = vector.shape_cast %86 : vector<2x8xf32> to vector<2x8x1xf32>
    %88 = vector.broadcast %87 : vector<2x8x1xf32> to vector<2x8x8xf32>
    %89 = arith.subf %85, %88 : vector<2x8x8xf32>
    %90 = math.exp %89 : vector<2x8x8xf32>
    %cst_37 = arith.constant dense<0.000000e+00> : vector<2x8xf32>
    %91 = vector.multi_reduction <add>, %90, %cst_37 [2] : vector<2x8x8xf32> to vector<2x8xf32>
    %92 = vector.shape_cast %91 : vector<2x8xf32> to vector<2x8x1xf32>
    %93 = tpu.reciprocal %92 {approx = true} : vector<2x8x1xf32> -> vector<2x8x1xf32>
    %94 = vector.broadcast %93 : vector<2x8x1xf32> to vector<2x8x8xf32>
    %95 = arith.mulf %90, %94 : vector<2x8x8xf32>
    %96 = arith.truncf %95 : vector<2x8x8xf32> to vector<2x8x8xbf16>
    "tpu.trace_start"() <{level = 10 : i32, message = "bqk,bkd->bqd"}> : () -> ()
    %cst_38 = arith.constant dense<0.000000e+00> : vector<2x8x8xf32>
    %97 = tpu.matmul %96, %81, %cst_38 {dimension_numbers = #tpu.dot_dimension_numbers<[2], [1], [1], [2], [0, 0, 0, 1, 1, 2], [0], [0]>} : vector<2x8x8xbf16>, vector<2x8x8xbf16>, vector<2x8x8xf32> -> vector<2x8x8xf32>
    "tpu.trace_stop"() : () -> ()
    %98 = vector.extract_strided_slice %23 {offsets = [0, 0, 24], sizes = [2, 8, 8], strides = [1, 1, 1]} : vector<2x8x32xf32> to vector<2x8x8xf32>
    %cst_39 = arith.constant 0.353553385 : f32
    %99 = vector.broadcast %cst_39 : f32 to vector<2x8x8xf32>
    %100 = arith.mulf %98, %99 : vector<2x8x8xf32>
    %101 = arith.truncf %100 : vector<2x8x8xf32> to vector<2x8x8xbf16>
    %102 = vector.extract_strided_slice %24 {offsets = [0, 0, 24], sizes = [2, 8, 8], strides = [1, 1, 1]} : vector<2x8x32xf32> to vector<2x8x8xf32>
    %103 = arith.truncf %102 : vector<2x8x8xf32> to vector<2x8x8xbf16>
    %104 = vector.extract_strided_slice %25 {offsets = [0, 0, 24], sizes = [2, 8, 8], strides = [1, 1, 1]} : vector<2x8x32xf32> to vector<2x8x8xf32>
    %105 = arith.truncf %104 : vector<2x8x8xf32> to vector<2x8x8xbf16>
    "tpu.trace_start"() <{level = 10 : i32, message = "bqd,bkd->bqk"}> : () -> ()
    %cst_40 = arith.constant dense<0.000000e+00> : vector<2x8x8xf32>
    %106 = tpu.matmul %101, %103, %cst_40 {dimension_numbers = #tpu.dot_dimension_numbers<[2], [2], [1], [1], [0, 0, 0, 1, 1, 1], [0], [0]>} : vector<2x8x8xbf16>, vector<2x8x8xbf16>, vector<2x8x8xf32> -> vector<2x8x8xf32>
    "tpu.trace_stop"() : () -> ()
    %107 = vector.shape_cast %5 : vector<8x8xf32> to vector<1x8x8xf32>
    %108 = vector.broadcast %107 : vector<1x8x8xf32> to vector<2x8x8xf32>
    %109 = arith.addf %106, %108 : vector<2x8x8xf32>
    %cst_41 = arith.constant dense<0xFF800000> : vector<2x8xf32>
    %110 = vector.multi_reduction <maximumf>, %109, %cst_41 [2] : vector<2x8x8xf32> to vector<2x8xf32>
    %111 = vector.shape_cast %110 : vector<2x8xf32> to vector<2x8x1xf32>
    %112 = vector.broadcast %111 : vector<2x8x1xf32> to vector<2x8x8xf32>
    %113 = arith.subf %109, %112 : vector<2x8x8xf32>
    %114 = math.exp %113 : vector<2x8x8xf32>
    %cst_42 = arith.constant dense<0.000000e+00> : vector<2x8xf32>
    %115 = vector.multi_reduction <add>, %114, %cst_42 [2] : vector<2x8x8xf32> to vector<2x8xf32>
    %116 = vector.shape_cast %115 : vector<2x8xf32> to vector<2x8x1xf32>
    %117 = tpu.reciprocal %116 {approx = true} : vector<2x8x1xf32> -> vector<2x8x1xf32>
    %118 = vector.broadcast %117 : vector<2x8x1xf32> to vector<2x8x8xf32>
    %119 = arith.mulf %114, %118 : vector<2x8x8xf32>
    %120 = arith.truncf %119 : vector<2x8x8xf32> to vector<2x8x8xbf16>
    "tpu.trace_start"() <{level = 10 : i32, message = "bqk,bkd->bqd"}> : () -> ()
    %cst_43 = arith.constant dense<0.000000e+00> : vector<2x8x8xf32>
    %121 = tpu.matmul %120, %105, %cst_43 {dimension_numbers = #tpu.dot_dimension_numbers<[2], [1], [1], [2], [0, 0, 0, 1, 1, 2], [0], [0]>} : vector<2x8x8xbf16>, vector<2x8x8xbf16>, vector<2x8x8xf32> -> vector<2x8x8xf32>
    "tpu.trace_stop"() : () -> ()
    %122 = tpu.concatenate %49, %73, %97, %121 in 2 : vector<2x8x8xf32>, vector<2x8x8xf32>, vector<2x8x8xf32>, vector<2x8x8xf32> -> vector<2x8x32xf32>
    %123 = vector.shape_cast %122 : vector<2x8x32xf32> to vector<16x32xf32>
    %124 = arith.truncf %123 : vector<16x32xf32> to vector<16x32xbf16>
    %cst_44 = arith.constant dense<0.000000e+00> : vector<16x32xf32>
    %125 = tpu.matmul %124, %11, %cst_44 {dimension_numbers = #tpu.dot_dimension_numbers<[1], [0], [0], [1], [0, 0, 1, 1], [], []>} : vector<16x32xbf16>, vector<32x32xbf16>, vector<16x32xf32> -> vector<16x32xf32>
    %126 = vector.broadcast %13 : vector<1x32xf32> to vector<16x32xf32>
    %127 = arith.addf %125, %126 : vector<16x32xf32>
    %128 = arith.addf %3, %127 : vector<16x32xf32>
    %cst_45 = arith.constant dense<0.000000e+00> : vector<16xf32>
    %129 = vector.multi_reduction <add>, %128, %cst_45 [1] : vector<16x32xf32> to vector<16xf32>
    %130 = vector.shape_cast %129 : vector<16xf32> to vector<16x1xf32>
    %cst_46 = arith.constant 3.200000e+01 : f32
    %131 = vector.broadcast %cst_46 : f32 to vector<16x1xf32>
    %132 = arith.divf %130, %131 : vector<16x1xf32>
    %133 = vector.broadcast %132 : vector<16x1xf32> to vector<16x32xf32>
    %134 = arith.subf %128, %133 : vector<16x32xf32>
    %135 = arith.mulf %134, %134 : vector<16x32xf32>
    %cst_47 = arith.constant dense<0.000000e+00> : vector<16xf32>
    %136 = vector.multi_reduction <add>, %135, %cst_47 [1] : vector<16x32xf32> to vector<16xf32>
    %137 = vector.shape_cast %136 : vector<16xf32> to vector<16x1xf32>
    %cst_48 = arith.constant 3.200000e+01 : f32
    %138 = vector.broadcast %cst_48 : f32 to vector<16x1xf32>
    %139 = arith.divf %137, %138 : vector<16x1xf32>
    %cst_49 = arith.constant 9.99999974E-6 : f32
    %140 = vector.broadcast %cst_49 : f32 to vector<16x1xf32>
    %141 = arith.addf %139, %140 : vector<16x1xf32>
    %142 = math.rsqrt %141 : vector<16x1xf32>
    %143 = vector.broadcast %142 : vector<16x1xf32> to vector<16x32xf32>
    %144 = arith.mulf %134, %143 : vector<16x32xf32>
    %145 = vector.broadcast %15 : vector<1x32xf32> to vector<16x32xf32>
    %146 = arith.mulf %144, %145 : vector<16x32xf32>
    %147 = vector.broadcast %17 : vector<1x32xf32> to vector<16x32xf32>
    %148 = arith.addf %146, %147 : vector<16x32xf32>
    %c0_50 = arith.constant 0 : index
    %c0_51 = arith.constant 0 : index
    %c0_52 = arith.constant 0 : index
    %149 = vector.load %arg10[%c0_50, %c0_51, %c0_52] : memref<1x32x32xbf16, #tpu.memory_space<vmem>>, vector<1x32x32xbf16>
    %150 = vector.shape_cast %149 : vector<1x32x32xbf16> to vector<32x32xbf16>
    %c0_53 = arith.constant 0 : index
    %c0_54 = arith.constant 0 : index
    %c0_55 = arith.constant 0 : index
    %151 = vector.load %arg11[%c0_53, %c0_54, %c0_55] : memref<1x1x32xf32, #tpu.memory_space<vmem>>, vector<1x1x32xf32>
    %152 = vector.shape_cast %151 : vector<1x1x32xf32> to vector<1x32xf32>
    %c0_56 = arith.constant 0 : index
    %c0_57 = arith.constant 0 : index
    %c0_58 = arith.constant 0 : index
    %153 = vector.load %arg12[%c0_56, %c0_57, %c0_58] : memref<1x32x64xbf16, #tpu.memory_space<vmem>>, vector<1x32x64xbf16>
    %154 = vector.shape_cast %153 : vector<1x32x64xbf16> to vector<32x64xbf16>
    %c0_59 = arith.constant 0 : index
    %c0_60 = arith.constant 0 : index
    %c0_61 = arith.constant 0 : index
    %155 = vector.load %arg13[%c0_59, %c0_60, %c0_61] : memref<1x1x64xf32, #tpu.memory_space<vmem>>, vector<1x1x64xf32>
    %156 = vector.shape_cast %155 : vector<1x1x64xf32> to vector<1x64xf32>
    %c0_62 = arith.constant 0 : index
    %c0_63 = arith.constant 0 : index
    %c0_64 = arith.constant 0 : index
    %157 = vector.load %arg14[%c0_62, %c0_63, %c0_64] : memref<1x32x32xbf16, #tpu.memory_space<vmem>>, vector<1x32x32xbf16>
    %158 = vector.shape_cast %157 : vector<1x32x32xbf16> to vector<32x32xbf16>
    %c0_65 = arith.constant 0 : index
    %c0_66 = arith.constant 0 : index
    %c0_67 = arith.constant 0 : index
    %159 = vector.load %arg15[%c0_65, %c0_66, %c0_67] : memref<1x1x32xf32, #tpu.memory_space<vmem>>, vector<1x1x32xf32>
    %160 = vector.shape_cast %159 : vector<1x1x32xf32> to vector<1x32xf32>
    %c0_68 = arith.constant 0 : index
    %c0_69 = arith.constant 0 : index
    %c0_70 = arith.constant 0 : index
    %161 = vector.load %arg16[%c0_68, %c0_69, %c0_70] : memref<1x1x32xf32, #tpu.memory_space<vmem>>, vector<1x1x32xf32>
    %162 = vector.shape_cast %161 : vector<1x1x32xf32> to vector<1x32xf32>
    %c0_71 = arith.constant 0 : index
    %c0_72 = arith.constant 0 : index
    %c0_73 = arith.constant 0 : index
    %163 = vector.load %arg17[%c0_71, %c0_72, %c0_73] : memref<1x1x32xf32, #tpu.memory_space<vmem>>, vector<1x1x32xf32>
    %164 = vector.shape_cast %163 : vector<1x1x32xf32> to vector<1x32xf32>
    %165 = arith.truncf %148 : vector<16x32xf32> to vector<16x32xbf16>
    %cst_74 = arith.constant dense<0.000000e+00> : vector<16x32xf32>
    %166 = tpu.matmul %165, %150, %cst_74 {dimension_numbers = #tpu.dot_dimension_numbers<[1], [0], [0], [1], [0, 0, 1, 1], [], []>} : vector<16x32xbf16>, vector<32x32xbf16>, vector<16x32xf32> -> vector<16x32xf32>
    %167 = vector.broadcast %152 : vector<1x32xf32> to vector<16x32xf32>
    %168 = arith.addf %166, %167 : vector<16x32xf32>
    %cst_75 = arith.constant dense<0.000000e+00> : vector<16x64xf32>
    %169 = tpu.matmul %4, %154, %cst_75 {dimension_numbers = #tpu.dot_dimension_numbers<[1], [0], [0], [1], [0, 0, 1, 1], [], []>} : vector<16x32xbf16>, vector<32x64xbf16>, vector<16x64xf32> -> vector<16x64xf32>
    %170 = vector.broadcast %156 : vector<1x64xf32> to vector<16x64xf32>
    %171 = arith.addf %169, %170 : vector<16x64xf32>
    %172 = vector.shape_cast %168 : vector<16x32xf32> to vector<2x8x32xf32>
    %173 = vector.shape_cast %171 : vector<16x64xf32> to vector<2x8x64xf32>
    %174 = vector.extract_strided_slice %173 {offsets = [0, 0, 0], sizes = [2, 8, 32], strides = [1, 1, 1]} : vector<2x8x64xf32> to vector<2x8x32xf32>
    %175 = vector.extract_strided_slice %173 {offsets = [0, 0, 32], sizes = [2, 8, 32], strides = [1, 1, 1]} : vector<2x8x64xf32> to vector<2x8x32xf32>
    %176 = vector.extract_strided_slice %172 {offsets = [0, 0, 0], sizes = [2, 8, 8], strides = [1, 1, 1]} : vector<2x8x32xf32> to vector<2x8x8xf32>
    %cst_76 = arith.constant 0.353553385 : f32
    %177 = vector.broadcast %cst_76 : f32 to vector<2x8x8xf32>
    %178 = arith.mulf %176, %177 : vector<2x8x8xf32>
    %179 = arith.truncf %178 : vector<2x8x8xf32> to vector<2x8x8xbf16>
    %180 = vector.extract_strided_slice %174 {offsets = [0, 0, 0], sizes = [2, 8, 8], strides = [1, 1, 1]} : vector<2x8x32xf32> to vector<2x8x8xf32>
    %181 = arith.truncf %180 : vector<2x8x8xf32> to vector<2x8x8xbf16>
    %182 = vector.extract_strided_slice %175 {offsets = [0, 0, 0], sizes = [2, 8, 8], strides = [1, 1, 1]} : vector<2x8x32xf32> to vector<2x8x8xf32>
    %183 = arith.truncf %182 : vector<2x8x8xf32> to vector<2x8x8xbf16>
    "tpu.trace_start"() <{level = 10 : i32, message = "bqd,bkd->bqk"}> : () -> ()
    %cst_77 = arith.constant dense<0.000000e+00> : vector<2x8x8xf32>
    %184 = tpu.matmul %179, %181, %cst_77 {dimension_numbers = #tpu.dot_dimension_numbers<[2], [2], [1], [1], [0, 0, 0, 1, 1, 1], [0], [0]>} : vector<2x8x8xbf16>, vector<2x8x8xbf16>, vector<2x8x8xf32> -> vector<2x8x8xf32>
    "tpu.trace_stop"() : () -> ()
    %cst_78 = arith.constant dense<0xFF800000> : vector<2x8xf32>
    %185 = vector.multi_reduction <maximumf>, %184, %cst_78 [2] : vector<2x8x8xf32> to vector<2x8xf32>
    %186 = vector.shape_cast %185 : vector<2x8xf32> to vector<2x8x1xf32>
    %187 = vector.broadcast %186 : vector<2x8x1xf32> to vector<2x8x8xf32>
    %188 = arith.subf %184, %187 : vector<2x8x8xf32>
    %189 = math.exp %188 : vector<2x8x8xf32>
    %cst_79 = arith.constant dense<0.000000e+00> : vector<2x8xf32>
    %190 = vector.multi_reduction <add>, %189, %cst_79 [2] : vector<2x8x8xf32> to vector<2x8xf32>
    %191 = vector.shape_cast %190 : vector<2x8xf32> to vector<2x8x1xf32>
    %192 = tpu.reciprocal %191 {approx = true} : vector<2x8x1xf32> -> vector<2x8x1xf32>
    %193 = vector.broadcast %192 : vector<2x8x1xf32> to vector<2x8x8xf32>
    %194 = arith.mulf %189, %193 : vector<2x8x8xf32>
    %195 = arith.truncf %194 : vector<2x8x8xf32> to vector<2x8x8xbf16>
    "tpu.trace_start"() <{level = 10 : i32, message = "bqk,bkd->bqd"}> : () -> ()
    %cst_80 = arith.constant dense<0.000000e+00> : vector<2x8x8xf32>
    %196 = tpu.matmul %195, %183, %cst_80 {dimension_numbers = #tpu.dot_dimension_numbers<[2], [1], [1], [2], [0, 0, 0, 1, 1, 2], [0], [0]>} : vector<2x8x8xbf16>, vector<2x8x8xbf16>, vector<2x8x8xf32> -> vector<2x8x8xf32>
    "tpu.trace_stop"() : () -> ()
    %197 = vector.extract_strided_slice %172 {offsets = [0, 0, 8], sizes = [2, 8, 8], strides = [1, 1, 1]} : vector<2x8x32xf32> to vector<2x8x8xf32>
    %cst_81 = arith.constant 0.353553385 : f32
    %198 = vector.broadcast %cst_81 : f32 to vector<2x8x8xf32>
    %199 = arith.mulf %197, %198 : vector<2x8x8xf32>
    %200 = arith.truncf %199 : vector<2x8x8xf32> to vector<2x8x8xbf16>
    %201 = vector.extract_strided_slice %174 {offsets = [0, 0, 8], sizes = [2, 8, 8], strides = [1, 1, 1]} : vector<2x8x32xf32> to vector<2x8x8xf32>
    %202 = arith.truncf %201 : vector<2x8x8xf32> to vector<2x8x8xbf16>
    %203 = vector.extract_strided_slice %175 {offsets = [0, 0, 8], sizes = [2, 8, 8], strides = [1, 1, 1]} : vector<2x8x32xf32> to vector<2x8x8xf32>
    %204 = arith.truncf %203 : vector<2x8x8xf32> to vector<2x8x8xbf16>
    "tpu.trace_start"() <{level = 10 : i32, message = "bqd,bkd->bqk"}> : () -> ()
    %cst_82 = arith.constant dense<0.000000e+00> : vector<2x8x8xf32>
    %205 = tpu.matmul %200, %202, %cst_82 {dimension_numbers = #tpu.dot_dimension_numbers<[2], [2], [1], [1], [0, 0, 0, 1, 1, 1], [0], [0]>} : vector<2x8x8xbf16>, vector<2x8x8xbf16>, vector<2x8x8xf32> -> vector<2x8x8xf32>
    "tpu.trace_stop"() : () -> ()
    %cst_83 = arith.constant dense<0xFF800000> : vector<2x8xf32>
    %206 = vector.multi_reduction <maximumf>, %205, %cst_83 [2] : vector<2x8x8xf32> to vector<2x8xf32>
    %207 = vector.shape_cast %206 : vector<2x8xf32> to vector<2x8x1xf32>
    %208 = vector.broadcast %207 : vector<2x8x1xf32> to vector<2x8x8xf32>
    %209 = arith.subf %205, %208 : vector<2x8x8xf32>
    %210 = math.exp %209 : vector<2x8x8xf32>
    %cst_84 = arith.constant dense<0.000000e+00> : vector<2x8xf32>
    %211 = vector.multi_reduction <add>, %210, %cst_84 [2] : vector<2x8x8xf32> to vector<2x8xf32>
    %212 = vector.shape_cast %211 : vector<2x8xf32> to vector<2x8x1xf32>
    %213 = tpu.reciprocal %212 {approx = true} : vector<2x8x1xf32> -> vector<2x8x1xf32>
    %214 = vector.broadcast %213 : vector<2x8x1xf32> to vector<2x8x8xf32>
    %215 = arith.mulf %210, %214 : vector<2x8x8xf32>
    %216 = arith.truncf %215 : vector<2x8x8xf32> to vector<2x8x8xbf16>
    "tpu.trace_start"() <{level = 10 : i32, message = "bqk,bkd->bqd"}> : () -> ()
    %cst_85 = arith.constant dense<0.000000e+00> : vector<2x8x8xf32>
    %217 = tpu.matmul %216, %204, %cst_85 {dimension_numbers = #tpu.dot_dimension_numbers<[2], [1], [1], [2], [0, 0, 0, 1, 1, 2], [0], [0]>} : vector<2x8x8xbf16>, vector<2x8x8xbf16>, vector<2x8x8xf32> -> vector<2x8x8xf32>
    "tpu.trace_stop"() : () -> ()
    %218 = vector.extract_strided_slice %172 {offsets = [0, 0, 16], sizes = [2, 8, 8], strides = [1, 1, 1]} : vector<2x8x32xf32> to vector<2x8x8xf32>
    %cst_86 = arith.constant 0.353553385 : f32
    %219 = vector.broadcast %cst_86 : f32 to vector<2x8x8xf32>
    %220 = arith.mulf %218, %219 : vector<2x8x8xf32>
    %221 = arith.truncf %220 : vector<2x8x8xf32> to vector<2x8x8xbf16>
    %222 = vector.extract_strided_slice %174 {offsets = [0, 0, 16], sizes = [2, 8, 8], strides = [1, 1, 1]} : vector<2x8x32xf32> to vector<2x8x8xf32>
    %223 = arith.truncf %222 : vector<2x8x8xf32> to vector<2x8x8xbf16>
    %224 = vector.extract_strided_slice %175 {offsets = [0, 0, 16], sizes = [2, 8, 8], strides = [1, 1, 1]} : vector<2x8x32xf32> to vector<2x8x8xf32>
    %225 = arith.truncf %224 : vector<2x8x8xf32> to vector<2x8x8xbf16>
    "tpu.trace_start"() <{level = 10 : i32, message = "bqd,bkd->bqk"}> : () -> ()
    %cst_87 = arith.constant dense<0.000000e+00> : vector<2x8x8xf32>
    %226 = tpu.matmul %221, %223, %cst_87 {dimension_numbers = #tpu.dot_dimension_numbers<[2], [2], [1], [1], [0, 0, 0, 1, 1, 1], [0], [0]>} : vector<2x8x8xbf16>, vector<2x8x8xbf16>, vector<2x8x8xf32> -> vector<2x8x8xf32>
    "tpu.trace_stop"() : () -> ()
    %cst_88 = arith.constant dense<0xFF800000> : vector<2x8xf32>
    %227 = vector.multi_reduction <maximumf>, %226, %cst_88 [2] : vector<2x8x8xf32> to vector<2x8xf32>
    %228 = vector.shape_cast %227 : vector<2x8xf32> to vector<2x8x1xf32>
    %229 = vector.broadcast %228 : vector<2x8x1xf32> to vector<2x8x8xf32>
    %230 = arith.subf %226, %229 : vector<2x8x8xf32>
    %231 = math.exp %230 : vector<2x8x8xf32>
    %cst_89 = arith.constant dense<0.000000e+00> : vector<2x8xf32>
    %232 = vector.multi_reduction <add>, %231, %cst_89 [2] : vector<2x8x8xf32> to vector<2x8xf32>
    %233 = vector.shape_cast %232 : vector<2x8xf32> to vector<2x8x1xf32>
    %234 = tpu.reciprocal %233 {approx = true} : vector<2x8x1xf32> -> vector<2x8x1xf32>
    %235 = vector.broadcast %234 : vector<2x8x1xf32> to vector<2x8x8xf32>
    %236 = arith.mulf %231, %235 : vector<2x8x8xf32>
    %237 = arith.truncf %236 : vector<2x8x8xf32> to vector<2x8x8xbf16>
    "tpu.trace_start"() <{level = 10 : i32, message = "bqk,bkd->bqd"}> : () -> ()
    %cst_90 = arith.constant dense<0.000000e+00> : vector<2x8x8xf32>
    %238 = tpu.matmul %237, %225, %cst_90 {dimension_numbers = #tpu.dot_dimension_numbers<[2], [1], [1], [2], [0, 0, 0, 1, 1, 2], [0], [0]>} : vector<2x8x8xbf16>, vector<2x8x8xbf16>, vector<2x8x8xf32> -> vector<2x8x8xf32>
    "tpu.trace_stop"() : () -> ()
    %239 = vector.extract_strided_slice %172 {offsets = [0, 0, 24], sizes = [2, 8, 8], strides = [1, 1, 1]} : vector<2x8x32xf32> to vector<2x8x8xf32>
    %cst_91 = arith.constant 0.353553385 : f32
    %240 = vector.broadcast %cst_91 : f32 to vector<2x8x8xf32>
    %241 = arith.mulf %239, %240 : vector<2x8x8xf32>
    %242 = arith.truncf %241 : vector<2x8x8xf32> to vector<2x8x8xbf16>
    %243 = vector.extract_strided_slice %174 {offsets = [0, 0, 24], sizes = [2, 8, 8], strides = [1, 1, 1]} : vector<2x8x32xf32> to vector<2x8x8xf32>
    %244 = arith.truncf %243 : vector<2x8x8xf32> to vector<2x8x8xbf16>
    %245 = vector.extract_strided_slice %175 {offsets = [0, 0, 24], sizes = [2, 8, 8], strides = [1, 1, 1]} : vector<2x8x32xf32> to vector<2x8x8xf32>
    %246 = arith.truncf %245 : vector<2x8x8xf32> to vector<2x8x8xbf16>
    "tpu.trace_start"() <{level = 10 : i32, message = "bqd,bkd->bqk"}> : () -> ()
    %cst_92 = arith.constant dense<0.000000e+00> : vector<2x8x8xf32>
    %247 = tpu.matmul %242, %244, %cst_92 {dimension_numbers = #tpu.dot_dimension_numbers<[2], [2], [1], [1], [0, 0, 0, 1, 1, 1], [0], [0]>} : vector<2x8x8xbf16>, vector<2x8x8xbf16>, vector<2x8x8xf32> -> vector<2x8x8xf32>
    "tpu.trace_stop"() : () -> ()
    %cst_93 = arith.constant dense<0xFF800000> : vector<2x8xf32>
    %248 = vector.multi_reduction <maximumf>, %247, %cst_93 [2] : vector<2x8x8xf32> to vector<2x8xf32>
    %249 = vector.shape_cast %248 : vector<2x8xf32> to vector<2x8x1xf32>
    %250 = vector.broadcast %249 : vector<2x8x1xf32> to vector<2x8x8xf32>
    %251 = arith.subf %247, %250 : vector<2x8x8xf32>
    %252 = math.exp %251 : vector<2x8x8xf32>
    %cst_94 = arith.constant dense<0.000000e+00> : vector<2x8xf32>
    %253 = vector.multi_reduction <add>, %252, %cst_94 [2] : vector<2x8x8xf32> to vector<2x8xf32>
    %254 = vector.shape_cast %253 : vector<2x8xf32> to vector<2x8x1xf32>
    %255 = tpu.reciprocal %254 {approx = true} : vector<2x8x1xf32> -> vector<2x8x1xf32>
    %256 = vector.broadcast %255 : vector<2x8x1xf32> to vector<2x8x8xf32>
    %257 = arith.mulf %252, %256 : vector<2x8x8xf32>
    %258 = arith.truncf %257 : vector<2x8x8xf32> to vector<2x8x8xbf16>
    "tpu.trace_start"() <{level = 10 : i32, message = "bqk,bkd->bqd"}> : () -> ()
    %cst_95 = arith.constant dense<0.000000e+00> : vector<2x8x8xf32>
    %259 = tpu.matmul %258, %246, %cst_95 {dimension_numbers = #tpu.dot_dimension_numbers<[2], [1], [1], [2], [0, 0, 0, 1, 1, 2], [0], [0]>} : vector<2x8x8xbf16>, vector<2x8x8xbf16>, vector<2x8x8xf32> -> vector<2x8x8xf32>
    "tpu.trace_stop"() : () -> ()
    %260 = tpu.concatenate %196, %217, %238, %259 in 2 : vector<2x8x8xf32>, vector<2x8x8xf32>, vector<2x8x8xf32>, vector<2x8x8xf32> -> vector<2x8x32xf32>
    %261 = vector.shape_cast %260 : vector<2x8x32xf32> to vector<16x32xf32>
    %262 = arith.truncf %261 : vector<16x32xf32> to vector<16x32xbf16>
    %cst_96 = arith.constant dense<0.000000e+00> : vector<16x32xf32>
    %263 = tpu.matmul %262, %158, %cst_96 {dimension_numbers = #tpu.dot_dimension_numbers<[1], [0], [0], [1], [0, 0, 1, 1], [], []>} : vector<16x32xbf16>, vector<32x32xbf16>, vector<16x32xf32> -> vector<16x32xf32>
    %264 = vector.broadcast %160 : vector<1x32xf32> to vector<16x32xf32>
    %265 = arith.addf %263, %264 : vector<16x32xf32>
    %266 = arith.addf %148, %265 : vector<16x32xf32>
    %cst_97 = arith.constant dense<0.000000e+00> : vector<16xf32>
    %267 = vector.multi_reduction <add>, %266, %cst_97 [1] : vector<16x32xf32> to vector<16xf32>
    %268 = vector.shape_cast %267 : vector<16xf32> to vector<16x1xf32>
    %cst_98 = arith.constant 3.200000e+01 : f32
    %269 = vector.broadcast %cst_98 : f32 to vector<16x1xf32>
    %270 = arith.divf %268, %269 : vector<16x1xf32>
    %271 = vector.broadcast %270 : vector<16x1xf32> to vector<16x32xf32>
    %272 = arith.subf %266, %271 : vector<16x32xf32>
    %273 = arith.mulf %272, %272 : vector<16x32xf32>
    %cst_99 = arith.constant dense<0.000000e+00> : vector<16xf32>
    %274 = vector.multi_reduction <add>, %273, %cst_99 [1] : vector<16x32xf32> to vector<16xf32>
    %275 = vector.shape_cast %274 : vector<16xf32> to vector<16x1xf32>
    %cst_100 = arith.constant 3.200000e+01 : f32
    %276 = vector.broadcast %cst_100 : f32 to vector<16x1xf32>
    %277 = arith.divf %275, %276 : vector<16x1xf32>
    %cst_101 = arith.constant 9.99999974E-6 : f32
    %278 = vector.broadcast %cst_101 : f32 to vector<16x1xf32>
    %279 = arith.addf %277, %278 : vector<16x1xf32>
    %280 = math.rsqrt %279 : vector<16x1xf32>
    %281 = vector.broadcast %280 : vector<16x1xf32> to vector<16x32xf32>
    %282 = arith.mulf %272, %281 : vector<16x32xf32>
    %283 = vector.broadcast %162 : vector<1x32xf32> to vector<16x32xf32>
    %284 = arith.mulf %282, %283 : vector<16x32xf32>
    %285 = vector.broadcast %164 : vector<1x32xf32> to vector<16x32xf32>
    %286 = arith.addf %284, %285 : vector<16x32xf32>
    %c0_102 = arith.constant 0 : index
    %c0_103 = arith.constant 0 : index
    %c0_104 = arith.constant 0 : index
    %287 = vector.load %arg18[%c0_102, %c0_103, %c0_104] : memref<1x32x64xbf16, #tpu.memory_space<vmem>>, vector<1x32x64xbf16>
    %288 = vector.shape_cast %287 : vector<1x32x64xbf16> to vector<32x64xbf16>
    %c0_105 = arith.constant 0 : index
    %c0_106 = arith.constant 0 : index
    %c0_107 = arith.constant 0 : index
    %289 = vector.load %arg19[%c0_105, %c0_106, %c0_107] : memref<1x1x64xf32, #tpu.memory_space<vmem>>, vector<1x1x64xf32>
    %290 = vector.shape_cast %289 : vector<1x1x64xf32> to vector<1x64xf32>
    %c0_108 = arith.constant 0 : index
    %c0_109 = arith.constant 0 : index
    %c0_110 = arith.constant 0 : index
    %291 = vector.load %arg20[%c0_108, %c0_109, %c0_110] : memref<1x64x32xbf16, #tpu.memory_space<vmem>>, vector<1x64x32xbf16>
    %292 = vector.shape_cast %291 : vector<1x64x32xbf16> to vector<64x32xbf16>
    %c0_111 = arith.constant 0 : index
    %c0_112 = arith.constant 0 : index
    %c0_113 = arith.constant 0 : index
    %293 = vector.load %arg21[%c0_111, %c0_112, %c0_113] : memref<1x1x32xf32, #tpu.memory_space<vmem>>, vector<1x1x32xf32>
    %294 = vector.shape_cast %293 : vector<1x1x32xf32> to vector<1x32xf32>
    %c0_114 = arith.constant 0 : index
    %c0_115 = arith.constant 0 : index
    %c0_116 = arith.constant 0 : index
    %295 = vector.load %arg22[%c0_114, %c0_115, %c0_116] : memref<1x1x32xf32, #tpu.memory_space<vmem>>, vector<1x1x32xf32>
    %296 = vector.shape_cast %295 : vector<1x1x32xf32> to vector<1x32xf32>
    %c0_117 = arith.constant 0 : index
    %c0_118 = arith.constant 0 : index
    %c0_119 = arith.constant 0 : index
    %297 = vector.load %arg23[%c0_117, %c0_118, %c0_119] : memref<1x1x32xf32, #tpu.memory_space<vmem>>, vector<1x1x32xf32>
    %298 = vector.shape_cast %297 : vector<1x1x32xf32> to vector<1x32xf32>
    %299 = arith.truncf %286 : vector<16x32xf32> to vector<16x32xbf16>
    %cst_120 = arith.constant dense<0.000000e+00> : vector<16x64xf32>
    %300 = tpu.matmul %299, %288, %cst_120 {dimension_numbers = #tpu.dot_dimension_numbers<[1], [0], [0], [1], [0, 0, 1, 1], [], []>} : vector<16x32xbf16>, vector<32x64xbf16>, vector<16x64xf32> -> vector<16x64xf32>
    %301 = vector.broadcast %290 : vector<1x64xf32> to vector<16x64xf32>
    %302 = arith.addf %300, %301 : vector<16x64xf32>
    %cst_121 = arith.constant 0.000000e+00 : f32
    %303 = vector.broadcast %cst_121 : f32 to vector<16x64xf32>
    %304 = arith.maximumf %302, %303 : vector<16x64xf32>
    %305 = arith.truncf %304 : vector<16x64xf32> to vector<16x64xbf16>
    %cst_122 = arith.constant dense<0.000000e+00> : vector<16x32xf32>
    %306 = tpu.matmul %305, %292, %cst_122 {dimension_numbers = #tpu.dot_dimension_numbers<[1], [0], [0], [1], [0, 0, 1, 1], [], []>} : vector<16x64xbf16>, vector<64x32xbf16>, vector<16x32xf32> -> vector<16x32xf32>
    %307 = vector.broadcast %294 : vector<1x32xf32> to vector<16x32xf32>
    %308 = arith.addf %306, %307 : vector<16x32xf32>
    %309 = arith.addf %286, %308 : vector<16x32xf32>
    %cst_123 = arith.constant dense<0.000000e+00> : vector<16xf32>
    %310 = vector.multi_reduction <add>, %309, %cst_123 [1] : vector<16x32xf32> to vector<16xf32>
    %311 = vector.shape_cast %310 : vector<16xf32> to vector<16x1xf32>
    %cst_124 = arith.constant 3.200000e+01 : f32
    %312 = vector.broadcast %cst_124 : f32 to vector<16x1xf32>
    %313 = arith.divf %311, %312 : vector<16x1xf32>
    %314 = vector.broadcast %313 : vector<16x1xf32> to vector<16x32xf32>
    %315 = arith.subf %309, %314 : vector<16x32xf32>
    %316 = arith.mulf %315, %315 : vector<16x32xf32>
    %cst_125 = arith.constant dense<0.000000e+00> : vector<16xf32>
    %317 = vector.multi_reduction <add>, %316, %cst_125 [1] : vector<16x32xf32> to vector<16xf32>
    %318 = vector.shape_cast %317 : vector<16xf32> to vector<16x1xf32>
    %cst_126 = arith.constant 3.200000e+01 : f32
    %319 = vector.broadcast %cst_126 : f32 to vector<16x1xf32>
    %320 = arith.divf %318, %319 : vector<16x1xf32>
    %cst_127 = arith.constant 9.99999974E-6 : f32
    %321 = vector.broadcast %cst_127 : f32 to vector<16x1xf32>
    %322 = arith.addf %320, %321 : vector<16x1xf32>
    %323 = math.rsqrt %322 : vector<16x1xf32>
    %324 = vector.broadcast %323 : vector<16x1xf32> to vector<16x32xf32>
    %325 = arith.mulf %315, %324 : vector<16x32xf32>
    %326 = vector.broadcast %296 : vector<1x32xf32> to vector<16x32xf32>
    %327 = arith.mulf %325, %326 : vector<16x32xf32>
    %328 = vector.broadcast %298 : vector<1x32xf32> to vector<16x32xf32>
    %329 = arith.addf %327, %328 : vector<16x32xf32>
    %c0_128 = arith.constant 0 : index
    %c0_129 = arith.constant 0 : index
    %330 = vector.load %arg27[%c0_128, %c0_129] : memref<16x32xf32, #tpu.memory_space<vmem>>, vector<16x32xf32>
    tpu.vector_store %arg27[%c0_128, %c0_129], %329 {strides = array<i32>} : memref<16x32xf32, #tpu.memory_space<vmem>>, vector<16x32xf32>,
    %c1_i32 = arith.constant 1 : i32
    %331 = arith.cmpi eq, %arg0, %c1_i32 : i32
    %332 = arith.extui %331 : i1 to i32
    %c0_i32_130 = arith.constant 0 : i32
    %333 = arith.cmpi ne, %332, %c0_i32_130 : i32
    scf.if %333 {
      %c0_131 = arith.constant 0 : index
      %c0_132 = arith.constant 0 : index
      %334 = vector.load %arg24[%c0_131, %c0_132] : memref<1x32xf32, #tpu.memory_space<vmem>>, vector<1x32xf32>
      %c0_133 = arith.constant 0 : index
      %c0_134 = arith.constant 0 : index
      %335 = vector.load %arg25[%c0_133, %c0_134] : memref<1x32xf32, #tpu.memory_space<vmem>>, vector<1x32xf32>
      %cst_135 = arith.constant dense<0.000000e+00> : vector<16xf32>
      %336 = vector.multi_reduction <add>, %329, %cst_135 [1] : vector<16x32xf32> to vector<16xf32>
      %337 = vector.shape_cast %336 : vector<16xf32> to vector<16x1xf32>
      %cst_136 = arith.constant 3.200000e+01 : f32
      %338 = vector.broadcast %cst_136 : f32 to vector<16x1xf32>
      %339 = arith.divf %337, %338 : vector<16x1xf32>
      %340 = vector.broadcast %339 : vector<16x1xf32> to vector<16x32xf32>
      %341 = arith.subf %329, %340 : vector<16x32xf32>
      %342 = arith.mulf %341, %341 : vector<16x32xf32>
      %cst_137 = arith.constant dense<0.000000e+00> : vector<16xf32>
      %343 = vector.multi_reduction <add>, %342, %cst_137 [1] : vector<16x32xf32> to vector<16xf32>
      %344 = vector.shape_cast %343 : vector<16xf32> to vector<16x1xf32>
      %cst_138 = arith.constant 3.200000e+01 : f32
      %345 = vector.broadcast %cst_138 : f32 to vector<16x1xf32>
      %346 = arith.divf %344, %345 : vector<16x1xf32>
      %cst_139 = arith.constant 9.99999974E-6 : f32
      %347 = vector.broadcast %cst_139 : f32 to vector<16x1xf32>
      %348 = arith.addf %346, %347 : vector<16x1xf32>
      %349 = math.rsqrt %348 : vector<16x1xf32>
      %350 = vector.broadcast %349 : vector<16x1xf32> to vector<16x32xf32>
      %351 = arith.mulf %341, %350 : vector<16x32xf32>
      %352 = vector.broadcast %334 : vector<1x32xf32> to vector<16x32xf32>
      %353 = arith.mulf %351, %352 : vector<16x32xf32>
      %354 = vector.broadcast %335 : vector<1x32xf32> to vector<16x32xf32>
      %355 = arith.addf %353, %354 : vector<16x32xf32>
      %356 = arith.truncf %355 : vector<16x32xf32> to vector<16x32xbf16>
      %c0_140 = arith.constant 0 : index
      %c0_141 = arith.constant 0 : index
      %357 = vector.load %arg26[%c0_140, %c0_141] : memref<16x32xbf16, #tpu.memory_space<vmem>>, vector<16x32xbf16>
      tpu.vector_store %arg26[%c0_140, %c0_141], %356 {strides = array<i32>} : memref<16x32xbf16, #tpu.memory_space<vmem>>, vector<16x32xbf16>,
    } else {
    }
    return
  }
  func.func @transform_0(%arg0: i32) -> (i32, i32) {
    %c0_i32 = arith.constant 0 : i32
    %c0_i32_0 = arith.constant 0 : i32
    %c0_i32_1 = arith.constant 0 : i32
    return %c0_i32, %c0_i32_0 : i32, i32
  }
  func.func @transform_1(%arg0: i32) -> (i32, i32) {
    %c0_i32 = arith.constant 0 : i32
    %c0_i32_0 = arith.constant 0 : i32
    %c0_i32_1 = arith.constant 0 : i32
    return %c0_i32, %c0_i32_0 : i32, i32
  }
  func.func @transform_2(%arg0: i32) -> (i32, i32) {
    %c0_i32 = arith.constant 0 : i32
    %c0_i32_0 = arith.constant 0 : i32
    %c0_i32_1 = arith.constant 0 : i32
    return %c0_i32, %c0_i32_0 : i32, i32
  }
  func.func @transform_3(%arg0: i32) -> (i32, i32, i32) {
    %c0_i32 = arith.constant 0 : i32
    %c0_i32_0 = arith.constant 0 : i32
    %c0_i32_1 = arith.constant 0 : i32
    return %arg0, %c0_i32, %c0_i32_0 : i32, i32, i32
  }
  func.func @transform_4(%arg0: i32) -> (i32, i32, i32) {
    %c0_i32 = arith.constant 0 : i32
    %c0_i32_0 = arith.constant 0 : i32
    %c0_i32_1 = arith.constant 0 : i32
    return %arg0, %c0_i32, %c0_i32_0 : i32, i32, i32
  }
  func.func @transform_5(%arg0: i32) -> (i32, i32, i32) {
    %c0_i32 = arith.constant 0 : i32
    %c0_i32_0 = arith.constant 0 : i32
    %c0_i32_1 = arith.constant 0 : i32
    return %arg0, %c0_i32, %c0_i32_0 : i32, i32, i32
  }
  func.func @transform_6(%arg0: i32) -> (i32, i32, i32) {
    %c0_i32 = arith.constant 0 : i32
    %c0_i32_0 = arith.constant 0 : i32
    %c0_i32_1 = arith.constant 0 : i32
    return %arg0, %c0_i32, %c0_i32_0 : i32, i32, i32
  }
  func.func @transform_7(%arg0: i32) -> (i32, i32, i32) {
    %c0_i32 = arith.constant 0 : i32
    %c0_i32_0 = arith.constant 0 : i32
    %c0_i32_1 = arith.constant 0 : i32
    return %arg0, %c0_i32, %c0_i32_0 : i32, i32, i32
  }
  func.func @transform_8(%arg0: i32) -> (i32, i32, i32) {
    %c0_i32 = arith.constant 0 : i32
    %c0_i32_0 = arith.constant 0 : i32
    %c0_i32_1 = arith.constant 0 : i32
    return %arg0, %c0_i32, %c0_i32_0 : i32, i32, i32
  }
  func.func @transform_9(%arg0: i32) -> (i32, i32, i32) {
    %c0_i32 = arith.constant 0 : i32
    %c0_i32_0 = arith.constant 0 : i32
    %c0_i32_1 = arith.constant 0 : i32
    return %arg0, %c0_i32, %c0_i32_0 : i32, i32, i32
  }
  func.func @transform_10(%arg0: i32) -> (i32, i32, i32) {
    %c0_i32 = arith.constant 0 : i32
    %c0_i32_0 = arith.constant 0 : i32
    %c0_i32_1 = arith.constant 0 : i32
    return %arg0, %c0_i32, %c0_i32_0 : i32, i32, i32
  }
  func.func @transform_11(%arg0: i32) -> (i32, i32, i32) {
    %c0_i32 = arith.constant 0 : i32
    %c0_i32_0 = arith.constant 0 : i32
    %c0_i32_1 = arith.constant 0 : i32
    return %arg0, %c0_i32, %c0_i32_0 : i32, i32, i32
  }
  func.func @transform_12(%arg0: i32) -> (i32, i32, i32) {
    %c0_i32 = arith.constant 0 : i32
    %c0_i32_0 = arith.constant 0 : i32
    %c0_i32_1 = arith.constant 0 : i32
    return %arg0, %c0_i32, %c0_i32_0 : i32, i32, i32
  }
  func.func @transform_13(%arg0: i32) -> (i32, i32, i32) {
    %c0_i32 = arith.constant 0 : i32
    %c0_i32_0 = arith.constant 0 : i32
    %c0_i32_1 = arith.constant 0 : i32
    return %arg0, %c0_i32, %c0_i32_0 : i32, i32, i32
  }
  func.func @transform_14(%arg0: i32) -> (i32, i32, i32) {
    %c0_i32 = arith.constant 0 : i32
    %c0_i32_0 = arith.constant 0 : i32
    %c0_i32_1 = arith.constant 0 : i32
    return %arg0, %c0_i32, %c0_i32_0 : i32, i32, i32
  }
  func.func @transform_15(%arg0: i32) -> (i32, i32, i32) {
    %c0_i32 = arith.constant 0 : i32
    %c0_i32_0 = arith.constant 0 : i32
    %c0_i32_1 = arith.constant 0 : i32
    return %arg0, %c0_i32, %c0_i32_0 : i32, i32, i32
  }
  func.func @transform_16(%arg0: i32) -> (i32, i32, i32) {
    %c0_i32 = arith.constant 0 : i32
    %c0_i32_0 = arith.constant 0 : i32
    %c0_i32_1 = arith.constant 0 : i32
    return %arg0, %c0_i32, %c0_i32_0 : i32, i32, i32
  }
  func.func @transform_17(%arg0: i32) -> (i32, i32, i32) {
    %c0_i32 = arith.constant 0 : i32
    %c0_i32_0 = arith.constant 0 : i32
    %c0_i32_1 = arith.constant 0 : i32
    return %arg0, %c0_i32, %c0_i32_0 : i32, i32, i32
  }
  func.func @transform_18(%arg0: i32) -> (i32, i32, i32) {
    %c0_i32 = arith.constant 0 : i32
    %c0_i32_0 = arith.constant 0 : i32
    %c0_i32_1 = arith.constant 0 : i32
    return %arg0, %c0_i32, %c0_i32_0 : i32, i32, i32
  }
  func.func @transform_19(%arg0: i32) -> (i32, i32, i32) {
    %c0_i32 = arith.constant 0 : i32
    %c0_i32_0 = arith.constant 0 : i32
    %c0_i32_1 = arith.constant 0 : i32
    return %arg0, %c0_i32, %c0_i32_0 : i32, i32, i32
  }
  func.func @transform_20(%arg0: i32) -> (i32, i32, i32) {
    %c0_i32 = arith.constant 0 : i32
    %c0_i32_0 = arith.constant 0 : i32
    %c0_i32_1 = arith.constant 0 : i32
    return %arg0, %c0_i32, %c0_i32_0 : i32, i32, i32
  }
  func.func @transform_21(%arg0: i32) -> (i32, i32, i32) {
    %c0_i32 = arith.constant 0 : i32
    %c0_i32_0 = arith.constant 0 : i32
    %c0_i32_1 = arith.constant 0 : i32
    return %arg0, %c0_i32, %c0_i32_0 : i32, i32, i32
  }
  func.func @transform_22(%arg0: i32) -> (i32, i32, i32) {
    %c0_i32 = arith.constant 0 : i32
    %c0_i32_0 = arith.constant 0 : i32
    %c0_i32_1 = arith.constant 0 : i32
    return %arg0, %c0_i32, %c0_i32_0 : i32, i32, i32
  }
  func.func @transform_23(%arg0: i32) -> (i32, i32) {
    %c0_i32 = arith.constant 0 : i32
    %c0_i32_0 = arith.constant 0 : i32
    %c0_i32_1 = arith.constant 0 : i32
    return %c0_i32, %c0_i32_0 : i32, i32
  }
  func.func @transform_24(%arg0: i32) -> (i32, i32) {
    %c0_i32 = arith.constant 0 : i32
    %c0_i32_0 = arith.constant 0 : i32
    %c0_i32_1 = arith.constant 0 : i32
    return %c0_i32, %c0_i32_0 : i32, i32
  }
  func.func @transform_25(%arg0: i32) -> (i32, i32) {
    %c0_i32 = arith.constant 0 : i32
    %c0_i32_0 = arith.constant 0 : i32
    %c0_i32_1 = arith.constant 0 : i32
    return %c0_i32, %c0_i32_0 : i32, i32
  }
}

</mosaic_0001>

<llo_original>
// kernel: summarizer_transformer_forward.5
$region0: #{summarizer_transformer_forward.5}
  #allocation0 [shape = 'u32[]', space=smem, size = 0x4, offset = 0x4, fixed_abs, tag = 'smem constant byte address 0x4 - core index']
  #allocation1 [shape = 'u32[144,128]{1,0:T(1,128)}', space=vmem, size = 0x12000, scoped, tag = 'internal scratch']
  %s0 = inlined_call_operand.vmem [shape: bf16[16,32], index: 0, kind: input, shape index: {}]
  %s1 = inlined_call_operand.vmem [shape: bf16[32,128], index: 1, kind: input, shape index: {}]
  %s2 = inlined_call_operand.vmem [shape: f32[1,128], index: 2, kind: input, shape index: {}]
  %s3 = inlined_call_operand.hbm [shape: f32[16,128], index: 3, kind: output, shape index: {}]
  %s4 = sld [smem:[#allocation0]]
  $region22: #{summarizer_transformer_forward.5} parent=0
    _
  %s6 = ssub.s32 1, %s4
  %s7 = scalar_select 0, %s6, %s4
  $region1: #{summarizer_transformer_forward.5} parent=0
    #allocation2 [shape = 'u8[8192]{0}', space=vmem, size = 0x2000, scoped, tag = 'output window, operand 0, single buffered']
    #allocation3 [shape = 's32[1]{0}', space=sflag, size = 0x4, scoped, tag = 'scoped memory for summarizer_transformer_forward.5']
    %8 = vsyncpa [#allocation3], 0
    // Predicated region
    $region2: #{summarizer_transformer_forward.5} parent=1 // pred_check
      _
    $region3: #{summarizer_transformer_forward.5} parent=1 // pred_check_branch
      %10 = sbr.rel (0) target = $region5
    $region4: #{summarizer_transformer_forward.5} parent=1 // pred_region
      _
    $region5: #{summarizer_transformer_forward.5} parent=1 // pred_fallthru
      _
    // Predicated region
    $region6: #{summarizer_transformer_forward.5} parent=1 // pred_check
      _
    $region7: #{summarizer_transformer_forward.5} parent=1 // pred_check_branch
      %12 = sbr.rel (0) target = $region9
    $region8: #{summarizer_transformer_forward.5} parent=1 // pred_region
      _
    $region9: #{summarizer_transformer_forward.5} parent=1 // pred_fallthru
      _
    // Predicated region
    $region10: #{summarizer_transformer_forward.5} parent=1 // pred_check
      _
    $region11: #{summarizer_transformer_forward.5} parent=1 // pred_check_branch
      %14 = sbr.rel (0) target = $region13
    $region12: #{summarizer_transformer_forward.5} parent=1 // pred_region
      _
    $region13: #{summarizer_transformer_forward.5} parent=1 // pred_fallthru
      _
    %v16 = vld [vmem:[%s0] sm:$0xf]
    %v17 = vld [vmem:[%s0 + $0x4] sm:$0xf]
    %v18 = vld [vmem:[%s1] sm:$0xf]
    %v19 = vld [vmem:[%s1 + $0x4] sm:$0xf]
    %v20 = vld [vmem:[%s1 + $0x8] sm:$0xf]
    %v21 = vld [vmem:[%s1 + $0xc] sm:$0xf]
    %v22 = vld [vmem:[%s2] sm:$0x1]
    %v24 = vlaneseq
    %v25 = vshrl.u32 %v24, 7
    %v26 = vsub.s32 0, %v25
    %v27 = vrot.slane %v22, %v26
    %v31 = vunpack.c.l.b16 %v16
    %v32 = vunpack.c.l.b16 %v17
    %v33 = vpack.c.b16 %v32, %v31
    %v38 = vunpack.c.l.b16 %v18
    %v39 = vunpack.c.l.b16 %v19
    %v40 = vunpack.c.l.b16 %v20
    %v41 = vunpack.c.l.b16 %v21
    %v42 = vpack.c.b16 %v39, %v38
    %v43 = vpack.c.b16 %v41, %v40
    %vm46 = vcmask 261120
    %v48 = vsel %vm46, %v33, 0
    %50 = vmatprep.subr.bf16.mxu0 0
    %51 = vmatpush1.bf16.msra.mxu0 %v42
    %52 = vmatprep.subr.bf16.mxu0 0
    %53 = vmatpush1.bf16.msra.mxu0 %v43
    %54 = vmatprep.subr.bf16.mxu0 0
    %55 = vmatpush1.bf16.msra.mxu0 0
    %56 = vmatprep.subr.bf16.mxu0 0
    %57 = vmatpush1.bf16.msra.mxu0 0
    %58 = vmatprep.subr.bf16.mxu0 0
    %59 = vmatpush1.bf16.msra.mxu0 0
    %60 = vmatprep.subr.bf16.mxu0 0
    %61 = vmatpush1.bf16.msra.mxu0 0
    %62 = vmatprep.subr.bf16.mxu0 0
    %63 = vmatpush1.bf16.msra.mxu0 0
    %64 = vmatprep.subr.bf16.mxu0 0
    %65 = vmatpush1.bf16.msra.mxu0 0
    %66 = vmatprep.subr.bf16.mxu0 0
    %67 = vmatpush1.bf16.msra.mxu0 0
    %68 = vmatprep.subr.bf16.mxu0 0
    %69 = vmatpush1.bf16.msra.mxu0 0
    %70 = vmatprep.subr.bf16.mxu0 0
    %71 = vmatpush1.bf16.msra.mxu0 0
    %72 = vmatprep.subr.bf16.mxu0 0
    %73 = vmatpush1.bf16.msra.mxu0 0
    %74 = vmatprep.subr.bf16.mxu0 0
    %75 = vmatpush1.bf16.msra.mxu0 0
    %76 = vmatprep.subr.bf16.mxu0 0
    %77 = vmatpush1.bf16.msra.mxu0 0
    %78 = vmatprep.subr.bf16.mxu0 0
    %79 = vmatpush1.bf16.msra.mxu0 0
    %80 = vmatprep.subr.bf16.mxu0 0
    %81 = vmatpush1.bf16.msra.mxu0 0
    %82 = vmatprep.mubr.bf16.mxu0 0
    %83 = vmatmul.mubr.bf16.gmra.mrb[0].mxu0 %v48
    %v84 = vpop.f32.mrb[0].mxu0
    %v85 = vadd.f32 %v27, %v84
    %v86 = vpop.f32.mrb[0].mxu0
    %v87 = vpop.f32.mrb[0].mxu0
    %v88 = vadd.f32 %v27, %v87
    %v89 = vpop.f32.mrb[0].mxu0
    %90 = vdwg.mxu0
    %91 = vst [vmem:[#allocation2] sm:$0xff] %v85
    %92 = vst [vmem:[#allocation2 + $0x8] sm:$0xff] %v88
    // Predicated region
    $region14: #{summarizer_transformer_forward.5} parent=1 // pred_check
      _
    $region15: #{summarizer_transformer_forward.5} parent=1 // pred_check_branch
      %94 = sbr.rel (0) target = $region17
    $region16: #{summarizer_transformer_forward.5} parent=1 // pred_region
      %s96 = ssub.s32 256, 256
      %97 = vsyncadd [#allocation3], %s96
      %s98 = sshll.u32 [#allocation2], 4
      %s99 = int_to_ptr.vmem [resolvable:$true] %s98
      %104 = dma.vmem_to_hbm [thread:$0]  %s99, 256, %s3, [#allocation3], 128, 128, 8
    $region17: #{summarizer_transformer_forward.5} parent=1 // pred_fallthru
      _
    // Predicated region
    $region18: #{summarizer_transformer_forward.5} parent=1 // pred_check
      _
    $region19: #{summarizer_transformer_forward.5} parent=1 // pred_check_branch
      %106 = sbr.rel (0) target = $region21
    $region20: #{summarizer_transformer_forward.5} parent=1 // pred_region
      %107 = dma.done [#allocation3], 256
    $region21: #{summarizer_transformer_forward.5} parent=1 // pred_fallthru
      _
    %108 = vsyncpa [#allocation3], 1

// kernel: summarizer_transformer_forward.3
$region0: #{summarizer_transformer_forward.3}
  #allocation0 [shape = 'u32[]', space=smem, size = 0x4, offset = 0x4, fixed_abs, tag = 'smem constant byte address 0x4 - core index']
  #allocation1 [shape = 'u32[144,128]{1,0:T(1,128)}', space=vmem, size = 0x12000, scoped, tag = 'internal scratch']
  #allocation2 [shape = 'f32[16,32]{1,0:T(8,128)}', space=vmem, size = 0x2000, scoped, tag = 'scratch operand']
  %s0 = inlined_call_operand.vmem [shape: bf16[16,32], index: 0, kind: input, shape index: {}]
  %s1 = inlined_call_operand.vmem [shape: f32[2,1,8], index: 1, kind: input, shape index: {}]
  %s2 = inlined_call_operand.vmem [shape: bf16[2,32,96], index: 2, kind: input, shape index: {}]
  %s3 = inlined_call_operand.vmem [shape: f32[2,1,96], index: 3, kind: input, shape index: {}]
  %s4 = inlined_call_operand.vmem [shape: bf16[2,32,32], index: 4, kind: input, shape index: {}]
  %s5 = inlined_call_operand.vmem [shape: f32[2,1,32], index: 5, kind: input, shape index: {}]
  %s6 = inlined_call_operand.vmem [shape: f32[2,1,32], index: 6, kind: input, shape index: {}]
  %s7 = inlined_call_operand.vmem [shape: f32[2,1,32], index: 7, kind: input, shape index: {}]
  %s8 = inlined_call_operand.vmem [shape: bf16[2,32,64], index: 8, kind: input, shape index: {}]
  %s9 = inlined_call_operand.vmem [shape: f32[2,1,64], index: 9, kind: input, shape index: {}]
  %s10 = inlined_call_operand.vmem [shape: bf16[2,64,32], index: 10, kind: input, shape index: {}]
  %s11 = inlined_call_operand.vmem [shape: f32[2,1,32], index: 11, kind: input, shape index: {}]
  %s12 = inlined_call_operand.vmem [shape: f32[2,1,32], index: 12, kind: input, shape index: {}]
  %s13 = inlined_call_operand.vmem [shape: f32[2,1,32], index: 13, kind: input, shape index: {}]
  %s14 = inlined_call_operand.vmem [shape: f32[1,32], index: 14, kind: input, shape index: {}]
  %s15 = inlined_call_operand.vmem [shape: f32[1,32], index: 15, kind: input, shape index: {}]
  %s16 = inlined_call_operand.vmem [shape: bf16[16,32], index: 16, kind: output, shape index: {}]
  %s17 = sld [smem:[#allocation0]]
  $region105: #{summarizer_transformer_forward.3} parent=0
    _
  %s19 = ssub.s32 1, %s17
  %s20 = scalar_select 0, %s19, %s17
  loop: start=0, step=1, limit=4
  $region2: #{summarizer_transformer_forward.3} parent=0 // loop_pre_header
    _
  $region3: #{summarizer_transformer_forward.3} parent=0 // loop_header
    %s22 = sphi 0, %s26
    %p23 = scmp.ge.s32.totalorder %s22, 4
    %s30 = sphi 0, %s30
    %s32 = sphi 0, %s30
    %s33 = sphi 0, %s32
    %s47 = sphi 0, %s33
    %s51 = sphi 0, %s51
    %s53 = sphi 0, %s51
    %s54 = sphi 0, %s53
    %s68 = sphi 0, %s54
    %s74 = sphi 0, %s76
    %s77 = sphi 0, %s74
    %s78 = sphi 0, %s77
    %s94 = sphi 0, %s78
    %s100 = sphi 0, %s102
    %s103 = sphi 0, %s100
    %s104 = sphi 0, %s103
    %s120 = sphi 0, %s104
    %s126 = sphi 0, %s128
    %s129 = sphi 0, %s126
    %s130 = sphi 0, %s129
    %s146 = sphi 0, %s130
    %s152 = sphi 0, %s154
    %s155 = sphi 0, %s152
    %s156 = sphi 0, %s155
    %s172 = sphi 0, %s156
    %s178 = sphi 0, %s180
    %s181 = sphi 0, %s178
    %s182 = sphi 0, %s181
    %s198 = sphi 0, %s182
    %s204 = sphi 0, %s206
    %s207 = sphi 0, %s204
    %s208 = sphi 0, %s207
    %s224 = sphi 0, %s208
    %s230 = sphi 0, %s232
    %s233 = sphi 0, %s230
    %s234 = sphi 0, %s233
    %s250 = sphi 0, %s234
    %s256 = sphi 0, %s258
    %s259 = sphi 0, %s256
    %s260 = sphi 0, %s259
    %s276 = sphi 0, %s260
    %s282 = sphi 0, %s284
    %s285 = sphi 0, %s282
    %s286 = sphi 0, %s285
    %s302 = sphi 0, %s286
    %s308 = sphi 0, %s310
    %s311 = sphi 0, %s308
    %s312 = sphi 0, %s311
    %s328 = sphi 0, %s312
    %s334 = sphi 0, %s336
    %s337 = sphi 0, %s334
    %s338 = sphi 0, %s337
    %s354 = sphi 0, %s338
    %s360 = sphi 0, %s362
    %s363 = sphi 0, %s360
    %s364 = sphi 0, %s363
    %s380 = sphi 0, %s364
    %s384 = sphi 0, %s384
    %s386 = sphi 0, %s384
    %s387 = sphi 0, %s386
    %s401 = sphi 0, %s387
    %s405 = sphi 0, %s405
    %s407 = sphi 0, %s405
    %s408 = sphi 0, %s407
    %s422 = sphi 0, %s408
    %s426 = sphi 0, %s426
    %s428 = sphi 0, %s426
    %s429 = sphi 0, %s428
    %s443 = sphi 0, %s429
  $region4: #{summarizer_transformer_forward.3} parent=0 // loop_header_branch
    %25 = sbr.rel (%p23) target = $region8
  $region5: #{summarizer_transformer_forward.3} parent=0 // loop_body
    %s27 = ssub.s32 %s22, 1
    %s28 = ssub.s32 %s22, 2
    %s29 = sadd.s32 %s22, 1
    %s31 = sadd.s32 %s30, 1
    %p34 = scmp.eq.s32.totalorder %s22, 1
    %p35 = scmp.ne.s32.totalorder %s30, %s32
    %p36 = scmp.eq.s32.totalorder %s22, 0
    %p37 = por %p35, %p36
    %p38 = scmp.ne.s32.totalorder %s30, %s32
    %p39 = scmp.eq.s32.totalorder %s27, 1
    %p40 = por %p38, %p39
    %p41 = scmp.ne.s32.totalorder %s32, %s33
    %p42 = scmp.eq.s32.totalorder %s27, 0
    %p43 = por %p41, %p42
    %p44 = scmp.ne.s32.totalorder %s32, %s33
    %p45 = scmp.eq.s32.totalorder %s28, 1
    %p46 = por %p44, %p45
    %p48 = scmp.ne.s32.totalorder %s33, %s47
    %p49 = scmp.eq.s32.totalorder %s28, 0
    %p50 = por %p48, %p49
    %s52 = sadd.s32 %s51, 1
    %p55 = scmp.eq.s32.totalorder %s22, 1
    %p56 = scmp.ne.s32.totalorder %s51, %s53
    %p57 = scmp.eq.s32.totalorder %s22, 0
    %p58 = por %p56, %p57
    %p59 = scmp.ne.s32.totalorder %s51, %s53
    %p60 = scmp.eq.s32.totalorder %s27, 1
    %p61 = por %p59, %p60
    %p62 = scmp.ne.s32.totalorder %s53, %s54
    %p63 = scmp.eq.s32.totalorder %s27, 0
    %p64 = por %p62, %p63
    %p65 = scmp.ne.s32.totalorder %s53, %s54
    %p66 = scmp.eq.s32.totalorder %s28, 1
    %p67 = por %p65, %p66
    %p69 = scmp.ne.s32.totalorder %s54, %s68
    %p70 = scmp.eq.s32.totalorder %s28, 0
    %p71 = por %p69, %p70
    %s72 = ssub.s32 %s22, %s29
    %p73 = scmp.eq.s32.totalorder %s72, 0
    %s75 = sadd.s32 %s74, 1
    %s76 = scalar_select %p73, %s74, %s75
    %p79 = pneg %p73
    %p80 = scmp.eq.s32.totalorder %s22, 1
    %p81 = por %p79, %p80
    %p82 = scmp.ne.s32.totalorder %s74, %s77
    %p83 = scmp.eq.s32.totalorder %s22, 0
    %p84 = por %p82, %p83
    %p85 = scmp.ne.s32.totalorder %s74, %s77
    %p86 = scmp.eq.s32.totalorder %s27, 1
    %p87 = por %p85, %p86
    %p88 = scmp.ne.s32.totalorder %s77, %s78
    %p89 = scmp.eq.s32.totalorder %s27, 0
    %p90 = por %p88, %p89
    %p91 = scmp.ne.s32.totalorder %s77, %s78
    %p92 = scmp.eq.s32.totalorder %s28, 1
    %p93 = por %p91, %p92
    %p95 = scmp.ne.s32.totalorder %s78, %s94
    %p96 = scmp.eq.s32.totalorder %s28, 0
    %p97 = por %p95, %p96
    %s98 = ssub.s32 %s22, %s29
    %p99 = scmp.eq.s32.totalorder %s98, 0
    %s101 = sadd.s32 %s100, 1
    %s102 = scalar_select %p99, %s100, %s101
    %p105 = pneg %p99
    %p106 = scmp.eq.s32.totalorder %s22, 1
    %p107 = por %p105, %p106
    %p108 = scmp.ne.s32.totalorder %s100, %s103
    %p109 = scmp.eq.s32.totalorder %s22, 0
    %p110 = por %p108, %p109
    %p111 = scmp.ne.s32.totalorder %s100, %s103
    %p112 = scmp.eq.s32.totalorder %s27, 1
    %p113 = por %p111, %p112
    %p114 = scmp.ne.s32.totalorder %s103, %s104
    %p115 = scmp.eq.s32.totalorder %s27, 0
    %p116 = por %p114, %p115
    %p117 = scmp.ne.s32.totalorder %s103, %s104
    %p118 = scmp.eq.s32.totalorder %s28, 1
    %p119 = por %p117, %p118
    %p121 = scmp.ne.s32.totalorder %s104, %s120
    %p122 = scmp.eq.s32.totalorder %s28, 0
    %p123 = por %p121, %p122
    %s124 = ssub.s32 %s22, %s29
    %p125 = scmp.eq.s32.totalorder %s124, 0
    %s127 = sadd.s32 %s126, 1
    %s128 = scalar_select %p125, %s126, %s127
    %p131 = pneg %p125
    %p132 = scmp.eq.s32.totalorder %s22, 1
    %p133 = por %p131, %p132
    %p134 = scmp.ne.s32.totalorder %s126, %s129
    %p135 = scmp.eq.s32.totalorder %s22, 0
    %p136 = por %p134, %p135
    %p137 = scmp.ne.s32.totalorder %s126, %s129
    %p138 = scmp.eq.s32.totalorder %s27, 1
    %p139 = por %p137, %p138
    %p140 = scmp.ne.s32.totalorder %s129, %s130
    %p141 = scmp.eq.s32.totalorder %s27, 0
    %p142 = por %p140, %p141
    %p143 = scmp.ne.s32.totalorder %s129, %s130
    %p144 = scmp.eq.s32.totalorder %s28, 1
    %p145 = por %p143, %p144
    %p147 = scmp.ne.s32.totalorder %s130, %s146
    %p148 = scmp.eq.s32.totalorder %s28, 0
    %p149 = por %p147, %p148
    %s150 = ssub.s32 %s22, %s29
    %p151 = scmp.eq.s32.totalorder %s150, 0
    %s153 = sadd.s32 %s152, 1
    %s154 = scalar_select %p151, %s152, %s153
    %p157 = pneg %p151
    %p158 = scmp.eq.s32.totalorder %s22, 1
    %p159 = por %p157, %p158
    %p160 = scmp.ne.s32.totalorder %s152, %s155
    %p161 = scmp.eq.s32.totalorder %s22, 0
    %p162 = por %p160, %p161
    %p163 = scmp.ne.s32.totalorder %s152, %s155
    %p164 = scmp.eq.s32.totalorder %s27, 1
    %p165 = por %p163, %p164
    %p166 = scmp.ne.s32.totalorder %s155, %s156
    %p167 = scmp.eq.s32.totalorder %s27, 0
    %p168 = por %p166, %p167
    %p169 = scmp.ne.s32.totalorder %s155, %s156
    %p170 = scmp.eq.s32.totalorder %s28, 1
    %p171 = por %p169, %p170
    %p173 = scmp.ne.s32.totalorder %s156, %s172
    %p174 = scmp.eq.s32.totalorder %s28, 0
    %p175 = por %p173, %p174
    %s176 = ssub.s32 %s22, %s29
    %p177 = scmp.eq.s32.totalorder %s176, 0
    %s179 = sadd.s32 %s178, 1
    %s180 = scalar_select %p177, %s178, %s179
    %p183 = pneg %p177
    %p184 = scmp.eq.s32.totalorder %s22, 1
    %p185 = por %p183, %p184
    %p186 = scmp.ne.s32.totalorder %s178, %s181
    %p187 = scmp.eq.s32.totalorder %s22, 0
    %p188 = por %p186, %p187
    %p189 = scmp.ne.s32.totalorder %s178, %s181
    %p190 = scmp.eq.s32.totalorder %s27, 1
    %p191 = por %p189, %p190
    %p192 = scmp.ne.s32.totalorder %s181, %s182
    %p193 = scmp.eq.s32.totalorder %s27, 0
    %p194 = por %p192, %p193
    %p195 = scmp.ne.s32.totalorder %s181, %s182
    %p196 = scmp.eq.s32.totalorder %s28, 1
    %p197 = por %p195, %p196
    %p199 = scmp.ne.s32.totalorder %s182, %s198
    %p200 = scmp.eq.s32.totalorder %s28, 0
    %p201 = por %p199, %p200
    %s202 = ssub.s32 %s22, %s29
    %p203 = scmp.eq.s32.totalorder %s202, 0
    %s205 = sadd.s32 %s204, 1
    %s206 = scalar_select %p203, %s204, %s205
    %p209 = pneg %p203
    %p210 = scmp.eq.s32.totalorder %s22, 1
    %p211 = por %p209, %p210
    %p212 = scmp.ne.s32.totalorder %s204, %s207
    %p213 = scmp.eq.s32.totalorder %s22, 0
    %p214 = por %p212, %p213
    %p215 = scmp.ne.s32.totalorder %s204, %s207
    %p216 = scmp.eq.s32.totalorder %s27, 1
    %p217 = por %p215, %p216
    %p218 = scmp.ne.s32.totalorder %s207, %s208
    %p219 = scmp.eq.s32.totalorder %s27, 0
    %p220 = por %p218, %p219
    %p221 = scmp.ne.s32.totalorder %s207, %s208
    %p222 = scmp.eq.s32.totalorder %s28, 1
    %p223 = por %p221, %p222
    %p225 = scmp.ne.s32.totalorder %s208, %s224
    %p226 = scmp.eq.s32.totalorder %s28, 0
    %p227 = por %p225, %p226
    %s228 = ssub.s32 %s22, %s29
    %p229 = scmp.eq.s32.totalorder %s228, 0
    %s231 = sadd.s32 %s230, 1
    %s232 = scalar_select %p229, %s230, %s231
    %p235 = pneg %p229
    %p236 = scmp.eq.s32.totalorder %s22, 1
    %p237 = por %p235, %p236
    %p238 = scmp.ne.s32.totalorder %s230, %s233
    %p239 = scmp.eq.s32.totalorder %s22, 0
    %p240 = por %p238, %p239
    %p241 = scmp.ne.s32.totalorder %s230, %s233
    %p242 = scmp.eq.s32.totalorder %s27, 1
    %p243 = por %p241, %p242
    %p244 = scmp.ne.s32.totalorder %s233, %s234
    %p245 = scmp.eq.s32.totalorder %s27, 0
    %p246 = por %p244, %p245
    %p247 = scmp.ne.s32.totalorder %s233, %s234
    %p248 = scmp.eq.s32.totalorder %s28, 1
    %p249 = por %p247, %p248
    %p251 = scmp.ne.s32.totalorder %s234, %s250
    %p252 = scmp.eq.s32.totalorder %s28, 0
    %p253 = por %p251, %p252
    %s254 = ssub.s32 %s22, %s29
    %p255 = scmp.eq.s32.totalorder %s254, 0
    %s257 = sadd.s32 %s256, 1
    %s258 = scalar_select %p255, %s256, %s257
    %p261 = pneg %p255
    %p262 = scmp.eq.s32.totalorder %s22, 1
    %p263 = por %p261, %p262
    %p264 = scmp.ne.s32.totalorder %s256, %s259
    %p265 = scmp.eq.s32.totalorder %s22, 0
    %p266 = por %p264, %p265
    %p267 = scmp.ne.s32.totalorder %s256, %s259
    %p268 = scmp.eq.s32.totalorder %s27, 1
    %p269 = por %p267, %p268
    %p270 = scmp.ne.s32.totalorder %s259, %s260
    %p271 = scmp.eq.s32.totalorder %s27, 0
    %p272 = por %p270, %p271
    %p273 = scmp.ne.s32.totalorder %s259, %s260
    %p274 = scmp.eq.s32.totalorder %s28, 1
    %p275 = por %p273, %p274
    %p277 = scmp.ne.s32.totalorder %s260, %s276
    %p278 = scmp.eq.s32.totalorder %s28, 0
    %p279 = por %p277, %p278
    %s280 = ssub.s32 %s22, %s29
    %p281 = scmp.eq.s32.totalorder %s280, 0
    %s283 = sadd.s32 %s282, 1
    %s284 = scalar_select %p281, %s282, %s283
    %p287 = pneg %p281
    %p288 = scmp.eq.s32.totalorder %s22, 1
    %p289 = por %p287, %p288
    %p290 = scmp.ne.s32.totalorder %s282, %s285
    %p291 = scmp.eq.s32.totalorder %s22, 0
    %p292 = por %p290, %p291
    %p293 = scmp.ne.s32.totalorder %s282, %s285
    %p294 = scmp.eq.s32.totalorder %s27, 1
    %p295 = por %p293, %p294
    %p296 = scmp.ne.s32.totalorder %s285, %s286
    %p297 = scmp.eq.s32.totalorder %s27, 0
    %p298 = por %p296, %p297
    %p299 = scmp.ne.s32.totalorder %s285, %s286
    %p300 = scmp.eq.s32.totalorder %s28, 1
    %p301 = por %p299, %p300
    %p303 = scmp.ne.s32.totalorder %s286, %s302
    %p304 = scmp.eq.s32.totalorder %s28, 0
    %p305 = por %p303, %p304
    %s306 = ssub.s32 %s22, %s29
    %p307 = scmp.eq.s32.totalorder %s306, 0
    %s309 = sadd.s32 %s308, 1
    %s310 = scalar_select %p307, %s308, %s309
    %p313 = pneg %p307
    %p314 = scmp.eq.s32.totalorder %s22, 1
    %p315 = por %p313, %p314
    %p316 = scmp.ne.s32.totalorder %s308, %s311
    %p317 = scmp.eq.s32.totalorder %s22, 0
    %p318 = por %p316, %p317
    %p319 = scmp.ne.s32.totalorder %s308, %s311
    %p320 = scmp.eq.s32.totalorder %s27, 1
    %p321 = por %p319, %p320
    %p322 = scmp.ne.s32.totalorder %s311, %s312
    %p323 = scmp.eq.s32.totalorder %s27, 0
    %p324 = por %p322, %p323
    %p325 = scmp.ne.s32.totalorder %s311, %s312
    %p326 = scmp.eq.s32.totalorder %s28, 1
    %p327 = por %p325, %p326
    %p329 = scmp.ne.s32.totalorder %s312, %s328
    %p330 = scmp.eq.s32.totalorder %s28, 0
    %p331 = por %p329, %p330
    %s332 = ssub.s32 %s22, %s29
    %p333 = scmp.eq.s32.totalorder %s332, 0
    %s335 = sadd.s32 %s334, 1
    %s336 = scalar_select %p333, %s334, %s335
    %p339 = pneg %p333
    %p340 = scmp.eq.s32.totalorder %s22, 1
    %p341 = por %p339, %p340
    %p342 = scmp.ne.s32.totalorder %s334, %s337
    %p343 = scmp.eq.s32.totalorder %s22, 0
    %p344 = por %p342, %p343
    %p345 = scmp.ne.s32.totalorder %s334, %s337
    %p346 = scmp.eq.s32.totalorder %s27, 1
    %p347 = por %p345, %p346
    %p348 = scmp.ne.s32.totalorder %s337, %s338
    %p349 = scmp.eq.s32.totalorder %s27, 0
    %p350 = por %p348, %p349
    %p351 = scmp.ne.s32.totalorder %s337, %s338
    %p352 = scmp.eq.s32.totalorder %s28, 1
    %p353 = por %p351, %p352
    %p355 = scmp.ne.s32.totalorder %s338, %s354
    %p356 = scmp.eq.s32.totalorder %s28, 0
    %p357 = por %p355, %p356
    %s358 = ssub.s32 %s22, %s29
    %p359 = scmp.eq.s32.totalorder %s358, 0
    %s361 = sadd.s32 %s360, 1
    %s362 = scalar_select %p359, %s360, %s361
    %p365 = pneg %p359
    %p366 = scmp.eq.s32.totalorder %s22, 1
    %p367 = por %p365, %p366
    %p368 = scmp.ne.s32.totalorder %s360, %s363
    %p369 = scmp.eq.s32.totalorder %s22, 0
    %p370 = por %p368, %p369
    %p371 = scmp.ne.s32.totalorder %s360, %s363
    %p372 = scmp.eq.s32.totalorder %s27, 1
    %p373 = por %p371, %p372
    %p374 = scmp.ne.s32.totalorder %s363, %s364
    %p375 = scmp.eq.s32.totalorder %s27, 0
    %p376 = por %p374, %p375
    %p377 = scmp.ne.s32.totalorder %s363, %s364
    %p378 = scmp.eq.s32.totalorder %s28, 1
    %p379 = por %p377, %p378
    %p381 = scmp.ne.s32.totalorder %s364, %s380
    %p382 = scmp.eq.s32.totalorder %s28, 0
    %p383 = por %p381, %p382
    %s385 = sadd.s32 %s384, 1
    %p388 = scmp.eq.s32.totalorder %s22, 1
    %p389 = scmp.ne.s32.totalorder %s384, %s386
    %p390 = scmp.eq.s32.totalorder %s22, 0
    %p391 = por %p389, %p390
    %p392 = scmp.ne.s32.totalorder %s384, %s386
    %p393 = scmp.eq.s32.totalorder %s27, 1
    %p394 = por %p392, %p393
    %p395 = scmp.ne.s32.totalorder %s386, %s387
    %p396 = scmp.eq.s32.totalorder %s27, 0
    %p397 = por %p395, %p396
    %p398 = scmp.ne.s32.totalorder %s386, %s387
    %p399 = scmp.eq.s32.totalorder %s28, 1
    %p400 = por %p398, %p399
    %p402 = scmp.ne.s32.totalorder %s387, %s401
    %p403 = scmp.eq.s32.totalorder %s28, 0
    %p404 = por %p402, %p403
    %s406 = sadd.s32 %s405, 1
    %p409 = scmp.eq.s32.totalorder %s22, 1
    %p410 = scmp.ne.s32.totalorder %s405, %s407
    %p411 = scmp.eq.s32.totalorder %s22, 0
    %p412 = por %p410, %p411
    %p413 = scmp.ne.s32.totalorder %s405, %s407
    %p414 = scmp.eq.s32.totalorder %s27, 1
    %p415 = por %p413, %p414
    %p416 = scmp.ne.s32.totalorder %s407, %s408
    %p417 = scmp.eq.s32.totalorder %s27, 0
    %p418 = por %p416, %p417
    %p419 = scmp.ne.s32.totalorder %s407, %s408
    %p420 = scmp.eq.s32.totalorder %s28, 1
    %p421 = por %p419, %p420
    %p423 = scmp.ne.s32.totalorder %s408, %s422
    %p424 = scmp.eq.s32.totalorder %s28, 0
    %p425 = por %p423, %p424
    %s427 = sadd.s32 %s426, 1
    %p430 = scmp.eq.s32.totalorder %s22, 1
    %p431 = scmp.ne.s32.totalorder %s426, %s428
    %p432 = scmp.eq.s32.totalorder %s22, 0
    %p433 = por %p431, %p432
    %p434 = scmp.ne.s32.totalorder %s426, %s428
    %p435 = scmp.eq.s32.totalorder %s27, 1
    %p436 = por %p434, %p435
    %p437 = scmp.ne.s32.totalorder %s428, %s429
    %p438 = scmp.eq.s32.totalorder %s27, 0
    %p439 = por %p437, %p438
    %p440 = scmp.ne.s32.totalorder %s428, %s429
    %p441 = scmp.eq.s32.totalorder %s28, 1
    %p442 = por %p440, %p441
    %p444 = scmp.ne.s32.totalorder %s429, %s443
    %p445 = scmp.eq.s32.totalorder %s28, 0
    %p446 = por %p444, %p445
    %p447 = scmp.le.s32.totalorder 1, %s22
    %p448 = scmp.lt.s32.totalorder %s22, 3
    %p449 = pnand %p447, %p448
    %p450 = pneg %p449
    // Predicated region
    $region9: #{summarizer_transformer_forward.3} parent=5 // pred_check
      _
    $region10: #{summarizer_transformer_forward.3} parent=5 // pred_check_branch
      %452 = sbr.rel (%p449) target = $region12
    $region11: #{summarizer_transformer_forward.3} parent=5 // pred_region
      %s453 = ssub.s32 %s22, 1
      // Predicated region
      $region13: #{summarizer_transformer_forward.3} parent=11 // pred_check
        %p454 = pneg %p43
      $region14: #{summarizer_transformer_forward.3} parent=11 // pred_check_branch
        %456 = sbr.rel (%p454) target = $region16
      $region15: #{summarizer_transformer_forward.3} parent=11 // pred_region
        _
      $region16: #{summarizer_transformer_forward.3} parent=11 // pred_fallthru
        _
      // Predicated region
      $region17: #{summarizer_transformer_forward.3} parent=11 // pred_check
        %p457 = pneg %p64
      $region18: #{summarizer_transformer_forward.3} parent=11 // pred_check_branch
        %459 = sbr.rel (%p457) target = $region20
      $region19: #{summarizer_transformer_forward.3} parent=11 // pred_region
        _
      $region20: #{summarizer_transformer_forward.3} parent=11 // pred_fallthru
        _
      // Predicated region
      $region21: #{summarizer_transformer_forward.3} parent=11 // pred_check
        %p460 = pneg %p397
      $region22: #{summarizer_transformer_forward.3} parent=11 // pred_check_branch
        %462 = sbr.rel (%p460) target = $region24
      $region23: #{summarizer_transformer_forward.3} parent=11 // pred_region
        _
      $region24: #{summarizer_transformer_forward.3} parent=11 // pred_fallthru
        _
      // Predicated region
      $region25: #{summarizer_transformer_forward.3} parent=11 // pred_check
        %p463 = pneg %p418
      $region26: #{summarizer_transformer_forward.3} parent=11 // pred_check_branch
        %465 = sbr.rel (%p463) target = $region28
      $region27: #{summarizer_transformer_forward.3} parent=11 // pred_region
        _
      $region28: #{summarizer_transformer_forward.3} parent=11 // pred_fallthru
        _
    $region12: #{summarizer_transformer_forward.3} parent=5 // pred_fallthru
      _
    %p466 = scmp.lt.s32.totalorder %s22, 2
    // Predicated region
    $region29: #{summarizer_transformer_forward.3} parent=5 // pred_check
      %p467 = pneg %p466
    $region30: #{summarizer_transformer_forward.3} parent=5 // pred_check_branch
      %469 = sbr.rel (%p467) target = $region32
    $region31: #{summarizer_transformer_forward.3} parent=5 // pred_region
      // Predicated region
      $region33: #{summarizer_transformer_forward.3} parent=31 // pred_check
        %p470 = pneg %p84
      $region34: #{summarizer_transformer_forward.3} parent=31 // pred_check_branch
        %472 = sbr.rel (%p470) target = $region36
      $region35: #{summarizer_transformer_forward.3} parent=31 // pred_region
        %p473 = scmp.lt.s32.totalorder %s22, 1
        %s474 = scalar_select %p473, %s22, 1
        %s475 = smul.addr %s474, 4
        %s476 = smul.addr %s475, 4
        %s477 = scalar_lea.vmem %s2, %s476
      $region36: #{summarizer_transformer_forward.3} parent=31 // pred_fallthru
        _
      // Predicated region
      $region37: #{summarizer_transformer_forward.3} parent=31 // pred_check
        %p478 = pneg %p110
      $region38: #{summarizer_transformer_forward.3} parent=31 // pred_check_branch
        %480 = sbr.rel (%p478) target = $region40
      $region39: #{summarizer_transformer_forward.3} parent=31 // pred_region
        %p481 = scmp.lt.s32.totalorder %s22, 1
        %s482 = scalar_select %p481, %s22, 1
        %s483 = scalar_lea.vmem %s3, %s482
      $region40: #{summarizer_transformer_forward.3} parent=31 // pred_fallthru
        _
      // Predicated region
      $region41: #{summarizer_transformer_forward.3} parent=31 // pred_check
        %p484 = pneg %p136
      $region42: #{summarizer_transformer_forward.3} parent=31 // pred_check_branch
        %486 = sbr.rel (%p484) target = $region44
      $region43: #{summarizer_transformer_forward.3} parent=31 // pred_region
        %p487 = scmp.lt.s32.totalorder %s22, 1
        %s488 = scalar_select %p487, %s22, 1
        %s489 = smul.addr %s488, 4
        %s490 = smul.addr %s489, 4
        %s491 = scalar_lea.vmem %s4, %s490
      $region44: #{summarizer_transformer_forward.3} parent=31 // pred_fallthru
        _
      // Predicated region
      $region45: #{summarizer_transformer_forward.3} parent=31 // pred_check
        %p492 = pneg %p162
      $region46: #{summarizer_transformer_forward.3} parent=31 // pred_check_branch
        %494 = sbr.rel (%p492) target = $region48
      $region47: #{summarizer_transformer_forward.3} parent=31 // pred_region
        %p495 = scmp.lt.s32.totalorder %s22, 1
        %s496 = scalar_select %p495, %s22, 1
        %s497 = scalar_lea.vmem %s5, %s496
      $region48: #{summarizer_transformer_forward.3} parent=31 // pred_fallthru
        _
      // Predicated region
      $region49: #{summarizer_transformer_forward.3} parent=31 // pred_check
        %p498 = pneg %p188
      $region50: #{summarizer_transformer_forward.3} parent=31 // pred_check_branch
        %500 = sbr.rel (%p498) target = $region52
      $region51: #{summarizer_transformer_forward.3} parent=31 // pred_region
        %p501 = scmp.lt.s32.totalorder %s22, 1
        %s502 = scalar_select %p501, %s22, 1
        %s503 = scalar_lea.vmem %s6, %s502
      $region52: #{summarizer_transformer_forward.3} parent=31 // pred_fallthru
        _
      // Predicated region
      $region53: #{summarizer_transformer_forward.3} parent=31 // pred_check
        %p504 = pneg %p214
      $region54: #{summarizer_transformer_forward.3} parent=31 // pred_check_branch
        %506 = sbr.rel (%p504) target = $region56
      $region55: #{summarizer_transformer_forward.3} parent=31 // pred_region
        %p507 = scmp.lt.s32.totalorder %s22, 1
        %s508 = scalar_select %p507, %s22, 1
        %s509 = scalar_lea.vmem %s7, %s508
      $region56: #{summarizer_transformer_forward.3} parent=31 // pred_fallthru
        _
      // Predicated region
      $region57: #{summarizer_transformer_forward.3} parent=31 // pred_check
        %p510 = pneg %p240
      $region58: #{summarizer_transformer_forward.3} parent=31 // pred_check_branch
        %512 = sbr.rel (%p510) target = $region60
      $region59: #{summarizer_transformer_forward.3} parent=31 // pred_region
        %p513 = scmp.lt.s32.totalorder %s22, 1
        %s514 = scalar_select %p513, %s22, 1
        %s515 = smul.addr %s514, 4
        %s516 = smul.addr %s515, 4
        %s517 = scalar_lea.vmem %s8, %s516
      $region60: #{summarizer_transformer_forward.3} parent=31 // pred_fallthru
        _
      // Predicated region
      $region61: #{summarizer_transformer_forward.3} parent=31 // pred_check
        %p518 = pneg %p266
      $region62: #{summarizer_transformer_forward.3} parent=31 // pred_check_branch
        %520 = sbr.rel (%p518) target = $region64
      $region63: #{summarizer_transformer_forward.3} parent=31 // pred_region
        %p521 = scmp.lt.s32.totalorder %s22, 1
        %s522 = scalar_select %p521, %s22, 1
        %s523 = scalar_lea.vmem %s9, %s522
      $region64: #{summarizer_transformer_forward.3} parent=31 // pred_fallthru
        _
      // Predicated region
      $region65: #{summarizer_transformer_forward.3} parent=31 // pred_check
        %p524 = pneg %p292
      $region66: #{summarizer_transformer_forward.3} parent=31 // pred_check_branch
        %526 = sbr.rel (%p524) target = $region68
      $region67: #{summarizer_transformer_forward.3} parent=31 // pred_region
        %p527 = scmp.lt.s32.totalorder %s22, 1
        %s528 = scalar_select %p527, %s22, 1
        %s529 = smul.addr %s528, 8
        %s530 = smul.addr %s529, 4
        %s531 = scalar_lea.vmem %s10, %s530
      $region68: #{summarizer_transformer_forward.3} parent=31 // pred_fallthru
        _
      // Predicated region
      $region69: #{summarizer_transformer_forward.3} parent=31 // pred_check
        %p532 = pneg %p318
      $region70: #{summarizer_transformer_forward.3} parent=31 // pred_check_branch
        %534 = sbr.rel (%p532) target = $region72
      $region71: #{summarizer_transformer_forward.3} parent=31 // pred_region
        %p535 = scmp.lt.s32.totalorder %s22, 1
        %s536 = scalar_select %p535, %s22, 1
        %s537 = scalar_lea.vmem %s11, %s536
      $region72: #{summarizer_transformer_forward.3} parent=31 // pred_fallthru
        _
      // Predicated region
      $region73: #{summarizer_transformer_forward.3} parent=31 // pred_check
        %p538 = pneg %p344
      $region74: #{summarizer_transformer_forward.3} parent=31 // pred_check_branch
        %540 = sbr.rel (%p538) target = $region76
      $region75: #{summarizer_transformer_forward.3} parent=31 // pred_region
        %p541 = scmp.lt.s32.totalorder %s22, 1
        %s542 = scalar_select %p541, %s22, 1
        %s543 = scalar_lea.vmem %s12, %s542
      $region76: #{summarizer_transformer_forward.3} parent=31 // pred_fallthru
        _
      // Predicated region
      $region77: #{summarizer_transformer_forward.3} parent=31 // pred_check
        %p544 = pneg %p370
      $region78: #{summarizer_transformer_forward.3} parent=31 // pred_check_branch
        %546 = sbr.rel (%p544) target = $region80
      $region79: #{summarizer_transformer_forward.3} parent=31 // pred_region
        %p547 = scmp.lt.s32.totalorder %s22, 1
        %s548 = scalar_select %p547, %s22, 1
        %s549 = scalar_lea.vmem %s13, %s548
      $region80: #{summarizer_transformer_forward.3} parent=31 // pred_fallthru
        _
    $region32: #{summarizer_transformer_forward.3} parent=5 // pred_fallthru
      _
    %p550 = scmp.le.s32.totalorder 1, %s22
    %p551 = scmp.lt.s32.totalorder %s22, 3
    %p552 = pnand %p550, %p551
    %p553 = pneg %p552
    // Predicated region
    $region81: #{summarizer_transformer_forward.3} parent=5 // pred_check
      _
    $region82: #{summarizer_transformer_forward.3} parent=5 // pred_check_branch
      %555 = sbr.rel (%p552) target = $region84
    $region83: #{summarizer_transformer_forward.3} parent=5 // pred_region
      %s556 = ssub.s32 %s22, 1
      %p557 = pneg %p43
      %p558 = pneg %p40
      %p559 = pneg %p64
      %p560 = pneg %p61
      %p561 = scmp.lt.s32.totalorder %s27, 1
      %s562 = scalar_select %p561, %s27, 1
      %s563 = smul.addr %s562, 4
      %s564 = smul.addr %s563, 4
      %s565 = scalar_lea.vmem %s2, %s564
      %p566 = pneg %p90
      %p567 = pneg %p87
      %p568 = scmp.lt.s32.totalorder %s27, 1
      %s569 = scalar_select %p568, %s27, 1
      %s570 = scalar_lea.vmem %s3, %s569
      %p571 = pneg %p116
      %p572 = pneg %p113
      %p573 = scmp.lt.s32.totalorder %s27, 1
      %s574 = scalar_select %p573, %s27, 1
      %s575 = smul.addr %s574, 4
      %s576 = smul.addr %s575, 4
      %s577 = scalar_lea.vmem %s4, %s576
      %p578 = pneg %p142
      %p579 = pneg %p139
      %p580 = scmp.lt.s32.totalorder %s27, 1
      %s581 = scalar_select %p580, %s27, 1
      %s582 = scalar_lea.vmem %s5, %s581
      %p583 = pneg %p168
      %p584 = pneg %p165
      %p585 = scmp.lt.s32.totalorder %s27, 1
      %s586 = scalar_select %p585, %s27, 1
      %s587 = scalar_lea.vmem %s6, %s586
      %p588 = pneg %p194
      %p589 = pneg %p191
      %p590 = scmp.lt.s32.totalorder %s27, 1
      %s591 = scalar_select %p590, %s27, 1
      %s592 = scalar_lea.vmem %s7, %s591
      %p593 = pneg %p220
      %p594 = pneg %p217
      %p595 = scmp.lt.s32.totalorder %s27, 1
      %s596 = scalar_select %p595, %s27, 1
      %s597 = smul.addr %s596, 4
      %s598 = smul.addr %s597, 4
      %s599 = scalar_lea.vmem %s8, %s598
      %p600 = pneg %p246
      %p601 = pneg %p243
      %p602 = scmp.lt.s32.totalorder %s27, 1
      %s603 = scalar_select %p602, %s27, 1
      %s604 = scalar_lea.vmem %s9, %s603
      %p605 = pneg %p272
      %p606 = pneg %p269
      %p607 = scmp.lt.s32.totalorder %s27, 1
      %s608 = scalar_select %p607, %s27, 1
      %s609 = smul.addr %s608, 8
      %s610 = smul.addr %s609, 4
      %s611 = scalar_lea.vmem %s10, %s610
      %p612 = pneg %p298
      %p613 = pneg %p295
      %p614 = scmp.lt.s32.totalorder %s27, 1
      %s615 = scalar_select %p614, %s27, 1
      %s616 = scalar_lea.vmem %s11, %s615
      %p617 = pneg %p324
      %p618 = pneg %p321
      %p619 = scmp.lt.s32.totalorder %s27, 1
      %s620 = scalar_select %p619, %s27, 1
      %s621 = scalar_lea.vmem %s12, %s620
      %p622 = pneg %p350
      %p623 = pneg %p347
      %p624 = scmp.lt.s32.totalorder %s27, 1
      %s625 = scalar_select %p624, %s27, 1
      %s626 = scalar_lea.vmem %s13, %s625
      %p627 = pneg %p376
      %p628 = pneg %p373
      %p629 = pneg %p397
      %p630 = pneg %p394
      %p631 = pneg %p418
      %p632 = pneg %p415
      %p633 = pneg %p439
      %p634 = pneg %p436
      %p635 = scmp.lt.s32.totalorder %s27, 1
      %s636 = scalar_select %p635, %s27, 1
      %s637 = smul.addr %s636, 4
      %s638 = smul.addr %s637, 4
      %s639 = scalar_lea.vmem %s2, %s638
      %p640 = scmp.lt.s32.totalorder %s27, 1
      %s641 = scalar_select %p640, %s27, 1
      %s642 = scalar_lea.vmem %s3, %s641
      %p643 = scmp.lt.s32.totalorder %s27, 1
      %s644 = scalar_select %p643, %s27, 1
      %s645 = smul.addr %s644, 4
      %s646 = smul.addr %s645, 4
      %s647 = scalar_lea.vmem %s4, %s646
      %p648 = scmp.lt.s32.totalorder %s27, 1
      %s649 = scalar_select %p648, %s27, 1
      %s650 = scalar_lea.vmem %s5, %s649
      %p651 = scmp.lt.s32.totalorder %s27, 1
      %s652 = scalar_select %p651, %s27, 1
      %s653 = scalar_lea.vmem %s6, %s652
      %p654 = scmp.lt.s32.totalorder %s27, 1
      %s655 = scalar_select %p654, %s27, 1
      %s656 = scalar_lea.vmem %s7, %s655
      %p657 = scmp.lt.s32.totalorder %s27, 1
      %s658 = scalar_select %p657, %s27, 1
      %s659 = smul.addr %s658, 4
      %s660 = smul.addr %s659, 4
      %s661 = scalar_lea.vmem %s8, %s660
      %p662 = scmp.lt.s32.totalorder %s27, 1
      %s663 = scalar_select %p662, %s27, 1
      %s664 = scalar_lea.vmem %s9, %s663
      %p665 = scmp.lt.s32.totalorder %s27, 1
      %s666 = scalar_select %p665, %s27, 1
      %s667 = smul.addr %s666, 8
      %s668 = smul.addr %s667, 4
      %s669 = scalar_lea.vmem %s10, %s668
      %p670 = scmp.lt.s32.totalorder %s27, 1
      %s671 = scalar_select %p670, %s27, 1
      %s672 = scalar_lea.vmem %s11, %s671
      %p673 = scmp.lt.s32.totalorder %s27, 1
      %s674 = scalar_select %p673, %s27, 1
      %s675 = scalar_lea.vmem %s12, %s674
      %p676 = scmp.lt.s32.totalorder %s27, 1
      %s677 = scalar_select %p676, %s27, 1
      %s678 = scalar_lea.vmem %s13, %s677
      %p680 = scmp.eq.s32.totalorder %s27, 0
      // Predicated region
      $region85: #{summarizer_transformer_forward.3} parent=83 // pred_check
        %p681 = pneg %p680
      $region86: #{summarizer_transformer_forward.3} parent=83 // pred_check_branch
        %683 = sbr.rel (%p681) target = $region88
      $region87: #{summarizer_transformer_forward.3} parent=83 // pred_region
        %v684 = vld [vmem:[%s0] sm:$0xf]
        %v685 = vld [vmem:[%s0 + $0x4] sm:$0xf]
        %v686 = vunpack.c.l.bf16 %v684
        %v687 = vunpack.c.l.bf16 %v685
        %vm688 = vcmask 261120
        %689 = vst.msk [vmem:[#allocation2] sm:$0xff] %vm688, %v686
        %690 = vst.msk [vmem:[#allocation2 + $0x8] sm:$0xff] %vm688, %v687
      $region88: #{summarizer_transformer_forward.3} parent=83 // pred_fallthru
        _
      %v691 = vld [vmem:[#allocation2] sm:$0xff]
      %v692 = vld [vmem:[#allocation2 + $0x8] sm:$0xff]
      %v693 = vld [vmem:[%s1] sm:$0x1]
      %v694 = vld [vmem:[%s1 + $0x1] sm:$0x1]
      %v695 = vmul.f32 %v693, -1e+09
      %v696 = vmul.f32 %v694, -1e+09
      %v697 = vld [vmem:[%s639] sm:$0xf]
      %v698 = vld [vmem:[%s639 + $0x4] sm:$0xf]
      %v699 = vld [vmem:[%s639 + $0x8] sm:$0xf]
      %v700 = vld [vmem:[%s639 + $0xc] sm:$0xf]
      %v701 = vld [vmem:[%s642] sm:$0x1]
      %v702 = vld [vmem:[%s647] sm:$0xf]
      %v703 = vld [vmem:[%s647 + $0x4] sm:$0xf]
      %v704 = vld [vmem:[%s647 + $0x8] sm:$0xf]
      %v705 = vld [vmem:[%s647 + $0xc] sm:$0xf]
      %v706 = vld [vmem:[%s650] sm:$0x1]
      %v707 = vld [vmem:[%s653] sm:$0x1]
      %v708 = vld [vmem:[%s656] sm:$0x1]
      %v709 = vpack.c.bf16 %v692, %v691
      %v711 = vlaneseq
      %v712 = vshrl.u32 %v711, 7
      %v713 = vsub.s32 0, %v712
      %v714 = vrot.slane %v701, %v713
      %v720 = vunpack.c.l.b16 %v697
      %v721 = vunpack.c.l.b16 %v698
      %v722 = vunpack.c.l.b16 %v699
      %v723 = vunpack.c.l.b16 %v700
      %v724 = vpack.c.b16 %v721, %v720
      %v725 = vpack.c.b16 %v723, %v722
      %vm728 = vcmask 261120
      %v730 = vsel %vm728, %v709, 0
      %732 = vmatprep.subr.bf16.mxu0 0
      %733 = vmatpush1.bf16.msra.mxu0 %v724
      %734 = vmatprep.subr.bf16.mxu0 0
      %735 = vmatpush1.bf16.msra.mxu0 %v725
      %736 = vmatprep.subr.bf16.mxu0 0
      %737 = vmatpush1.bf16.msra.mxu0 0
      %738 = vmatprep.subr.bf16.mxu0 0
      %739 = vmatpush1.bf16.msra.mxu0 0
      %740 = vmatprep.subr.bf16.mxu0 0
      %741 = vmatpush1.bf16.msra.mxu0 0
      %742 = vmatprep.subr.bf16.mxu0 0
      %743 = vmatpush1.bf16.msra.mxu0 0
      %744 = vmatprep.subr.bf16.mxu0 0
      %745 = vmatpush1.bf16.msra.mxu0 0
      %746 = vmatprep.subr.bf16.mxu0 0
      %747 = vmatpush1.bf16.msra.mxu0 0
      %748 = vmatprep.subr.bf16.mxu0 0
      %749 = vmatpush1.bf16.msra.mxu0 0
      %750 = vmatprep.subr.bf16.mxu0 0
      %751 = vmatpush1.bf16.msra.mxu0 0
      %752 = vmatprep.subr.bf16.mxu0 0
      %753 = vmatpush1.bf16.msra.mxu0 0
      %754 = vmatprep.subr.bf16.mxu0 0
      %755 = vmatpush1.bf16.msra.mxu0 0
      %756 = vmatprep.subr.bf16.mxu0 0
      %757 = vmatpush1.bf16.msra.mxu0 0
      %758 = vmatprep.subr.bf16.mxu0 0
      %759 = vmatpush1.bf16.msra.mxu0 0
      %760 = vmatprep.subr.bf16.mxu0 0
      %761 = vmatpush1.bf16.msra.mxu0 0
      %762 = vmatprep.subr.bf16.mxu0 0
      %763 = vmatpush1.bf16.msra.mxu0 0
      %764 = vmatprep.mubr.bf16.mxu0 0
      %765 = vmatmul.mubr.bf16.gmra.mrb[0].mxu0 %v730
      %v766 = vpop.f32.mrb[0].mxu0
      %v767 = vadd.f32 %v714, %v766
      %v768 = vpop.f32.mrb[0].mxu0
      %v769 = vpop.f32.mrb[0].mxu0
      %v770 = vadd.f32 %v714, %v769
      %v771 = vpop.f32.mrb[0].mxu0
      %772 = vdwg.mxu0
      %v773 = vmul.f32 %v767, 0.35355338
      %v774 = vmul.f32 %v770, 0.35355338
      %v775 = vpack.c.bf16 %v773, %v773
      %v776 = vpack.c.bf16 %v774, %v774
      %v777 = vpack.c.bf16 %v767, %v767
      %v778 = vpack.c.bf16 %v770, %v770
      %v781 = vlaneseq
      %v782 = vshrl.u32 %v781, 7
      %v783 = vsub.s32 0, %v782
      %v784 = vrot.slane %v695, %v783
      %v785 = vlaneseq
      %v786 = vshrl.u32 %v785, 7
      %v787 = vsub.s32 0, %v786
      %v788 = vrot.slane %v696, %v787
      %792 = vrot.lane.b32.xlu0 %v777, 96
      %v793 = vpop.permute.xlu0 %792
      %vm794 = vcmask 64512
      %v796 = vsel %vm794, %v775, 0
      %v799 = vsel %vm794, %v793, 0
      %801 = vmatprep.subr.bf16.mxu0 0
      %802 = vmatpush1.bf16.xpose.msra.mxu0 %v799
      %803 = vmatprep.subr.bf16.mxu0 0
      %804 = vmatpush1.bf16.xpose.msra.mxu0 0
      %805 = vmatprep.subr.bf16.mxu0 0
      %806 = vmatpush1.bf16.xpose.msra.mxu0 0
      %807 = vmatprep.subr.bf16.mxu0 0
      %808 = vmatpush1.bf16.xpose.msra.mxu0 0
      %809 = vmatprep.subr.bf16.mxu0 0
      %810 = vmatpush1.bf16.xpose.msra.mxu0 0
      %811 = vmatprep.subr.bf16.mxu0 0
      %812 = vmatpush1.bf16.xpose.msra.mxu0 0
      %813 = vmatprep.subr.bf16.mxu0 0
      %814 = vmatpush1.bf16.xpose.msra.mxu0 0
      %815 = vmatprep.subr.bf16.mxu0 0
      %816 = vmatpush1.bf16.xpose.msra.mxu0 0
      %817 = vmatprep.subr.bf16.mxu0 0
      %818 = vmatpush1.bf16.xpose.msra.mxu0 0
      %819 = vmatprep.subr.bf16.mxu0 0
      %820 = vmatpush1.bf16.xpose.msra.mxu0 0
      %821 = vmatprep.subr.bf16.mxu0 0
      %822 = vmatpush1.bf16.xpose.msra.mxu0 0
      %823 = vmatprep.subr.bf16.mxu0 0
      %824 = vmatpush1.bf16.xpose.msra.mxu0 0
      %825 = vmatprep.subr.bf16.mxu0 0
      %826 = vmatpush1.bf16.xpose.msra.mxu0 0
      %827 = vmatprep.subr.bf16.mxu0 0
      %828 = vmatpush1.bf16.xpose.msra.mxu0 0
      %829 = vmatprep.subr.bf16.mxu0 0
      %830 = vmatpush1.bf16.xpose.msra.mxu0 0
      %831 = vmatprep.subr.bf16.mxu0 0
      %832 = vmatpush1.bf16.xpose.msra.mxu0 0
      %833 = vmatprep.mubr.bf16.mxu0 0
      %834 = vmatmul.mubr.bf16.gmra.mrb[0].mxu0 %v796
      %v835 = vpop.f32.mrb[0].mxu0
      %v836 = vadd.f32 %v784, %v835
      %v837 = vpop.f32.mrb[0].mxu0
      %v838 = vpop.f32.mrb[0].mxu0
      %v839 = vpop.f32.mrb[0].mxu0
      %840 = vdwg.mxu0
      %842 = vrot.lane.b32.xlu0 %v778, 96
      %v843 = vpop.permute.xlu0 %842
      %v845 = vsel %vm794, %v776, 0
      %v848 = vsel %vm794, %v843, 0
      %850 = vmatprep.subr.bf16.mxu0 0
      %851 = vmatpush1.bf16.xpose.msra.mxu0 %v848
      %852 = vmatprep.subr.bf16.mxu0 0
      %853 = vmatpush1.bf16.xpose.msra.mxu0 0
      %854 = vmatprep.subr.bf16.mxu0 0
      %855 = vmatpush1.bf16.xpose.msra.mxu0 0
      %856 = vmatprep.subr.bf16.mxu0 0
      %857 = vmatpush1.bf16.xpose.msra.mxu0 0
      %858 = vmatprep.subr.bf16.mxu0 0
      %859 = vmatpush1.bf16.xpose.msra.mxu0 0
      %860 = vmatprep.subr.bf16.mxu0 0
      %861 = vmatpush1.bf16.xpose.msra.mxu0 0
      %862 = vmatprep.subr.bf16.mxu0 0
      %863 = vmatpush1.bf16.xpose.msra.mxu0 0
      %864 = vmatprep.subr.bf16.mxu0 0
      %865 = vmatpush1.bf16.xpose.msra.mxu0 0
      %866 = vmatprep.subr.bf16.mxu0 0
      %867 = vmatpush1.bf16.xpose.msra.mxu0 0
      %868 = vmatprep.subr.bf16.mxu0 0
      %869 = vmatpush1.bf16.xpose.msra.mxu0 0
      %870 = vmatprep.subr.bf16.mxu0 0
      %871 = vmatpush1.bf16.xpose.msra.mxu0 0
      %872 = vmatprep.subr.bf16.mxu0 0
      %873 = vmatpush1.bf16.xpose.msra.mxu0 0
      %874 = vmatprep.subr.bf16.mxu0 0
      %875 = vmatpush1.bf16.xpose.msra.mxu0 0
      %876 = vmatprep.subr.bf16.mxu0 0
      %877 = vmatpush1.bf16.xpose.msra.mxu0 0
      %878 = vmatprep.subr.bf16.mxu0 0
      %879 = vmatpush1.bf16.xpose.msra.mxu0 0
      %880 = vmatprep.subr.bf16.mxu0 0
      %881 = vmatpush1.bf16.xpose.msra.mxu0 0
      %882 = vmatprep.mubr.bf16.mxu0 0
      %883 = vmatmul.mubr.bf16.gmra.mrb[0].mxu0 %v845
      %v884 = vpop.f32.mrb[0].mxu0
      %v885 = vadd.f32 %v788, %v884
      %v886 = vpop.f32.mrb[0].mxu0
      %v887 = vpop.f32.mrb[0].mxu0
      %v888 = vpop.f32.mrb[0].mxu0
      %889 = vdwg.mxu0
      %v890 = vsel %vm794, %v836, -inf
      %891 = vmax.xlane.f32.xlu0 %v890
      %v892 = vpop.xlane.xlu0 %891
      %v893 = vsel %vm794, %v885, -inf
      %894 = vmax.xlane.f32.xlu0 %v893
      %v895 = vpop.xlane.xlu0 %894
      %v896 = vsub.f32 %v836, %v892
      %v897 = vsub.f32 %v885, %v895
      %v898 = vmul.f32 %v896, 1.442695
      %v899 = vpow.pop %v898
      %v900 = vmul.f32 %v897, 1.442695
      %v901 = vpow.pop %v900
      %v902 = vsel %vm794, %v899, 0.0
      %903 = vadd.xlane.f32.xlu0 %v902
      %v904 = vpop.xlane.xlu0 %903
      %v905 = vsel %vm794, %v901, 0.0
      %906 = vadd.xlane.f32.xlu0 %v905
      %v907 = vpop.xlane.xlu0 %906
      %v908 = vrcp.pop %v904
      %v909 = vrcp.pop %v907
      %v910 = vmul.f32 %v899, %v908
      %v911 = vmul.f32 %v901, %v909
      %v912 = vpack.c.bf16 %v910, %v910
      %v913 = vpack.c.bf16 %v911, %v911
      %914 = vrot.lane.b32.xlu0 %v777, 64
      %v915 = vpop.permute.xlu0 %914
      %v917 = vsel %vm794, %v912, 0
      %vm919 = vcmask 1043456
      %v921 = vsel %vm919, %v915, 0
      %923 = vmatprep.subr.bf16.mxu0 0
      %924 = vmatpush1.bf16.msra.mxu0 %v921
      %925 = vmatprep.subr.bf16.mxu0 0
      %926 = vmatpush1.bf16.msra.mxu0 0
      %927 = vmatprep.subr.bf16.mxu0 0
      %928 = vmatpush1.bf16.msra.mxu0 0
      %929 = vmatprep.subr.bf16.mxu0 0
      %930 = vmatpush1.bf16.msra.mxu0 0
      %931 = vmatprep.subr.bf16.mxu0 0
      %932 = vmatpush1.bf16.msra.mxu0 0
      %933 = vmatprep.subr.bf16.mxu0 0
      %934 = vmatpush1.bf16.msra.mxu0 0
      %935 = vmatprep.subr.bf16.mxu0 0
      %936 = vmatpush1.bf16.msra.mxu0 0
      %937 = vmatprep.subr.bf16.mxu0 0
      %938 = vmatpush1.bf16.msra.mxu0 0
      %939 = vmatprep.subr.bf16.mxu0 0
      %940 = vmatpush1.bf16.msra.mxu0 0
      %941 = vmatprep.subr.bf16.mxu0 0
      %942 = vmatpush1.bf16.msra.mxu0 0
      %943 = vmatprep.subr.bf16.mxu0 0
      %944 = vmatpush1.bf16.msra.mxu0 0
      %945 = vmatprep.subr.bf16.mxu0 0
      %946 = vmatpush1.bf16.msra.mxu0 0
      %947 = vmatprep.subr.bf16.mxu0 0
      %948 = vmatpush1.bf16.msra.mxu0 0
      %949 = vmatprep.subr.bf16.mxu0 0
      %950 = vmatpush1.bf16.msra.mxu0 0
      %951 = vmatprep.subr.bf16.mxu0 0
      %952 = vmatpush1.bf16.msra.mxu0 0
      %953 = vmatprep.subr.bf16.mxu0 0
      %954 = vmatpush1.bf16.msra.mxu0 0
      %955 = vmatprep.mubr.bf16.mxu0 0
      %956 = vmatmul.mubr.bf16.gmra.mrb[0].mxu0 %v917
      %v957 = vpop.f32.mrb[0].mxu0
      %v958 = vadd.f32 0.0, %v957
      %v959 = vpop.f32.mrb[0].mxu0
      %v960 = vpop.f32.mrb[0].mxu0
      %v961 = vpop.f32.mrb[0].mxu0
      %962 = vdwg.mxu0
      %963 = vrot.lane.b32.xlu0 %v778, 64
      %v964 = vpop.permute.xlu0 %963
      %v966 = vsel %vm794, %v913, 0
      %v969 = vsel %vm919, %v964, 0
      %971 = vmatprep.subr.bf16.mxu0 0
      %972 = vmatpush1.bf16.msra.mxu0 %v969
      %973 = vmatprep.subr.bf16.mxu0 0
      %974 = vmatpush1.bf16.msra.mxu0 0
      %975 = vmatprep.subr.bf16.mxu0 0
      %976 = vmatpush1.bf16.msra.mxu0 0
      %977 = vmatprep.subr.bf16.mxu0 0
      %978 = vmatpush1.bf16.msra.mxu0 0
      %979 = vmatprep.subr.bf16.mxu0 0
      %980 = vmatpush1.bf16.msra.mxu0 0
      %981 = vmatprep.subr.bf16.mxu0 0
      %982 = vmatpush1.bf16.msra.mxu0 0
      %983 = vmatprep.subr.bf16.mxu0 0
      %984 = vmatpush1.bf16.msra.mxu0 0
      %985 = vmatprep.subr.bf16.mxu0 0
      %986 = vmatpush1.bf16.msra.mxu0 0
      %987 = vmatprep.subr.bf16.mxu0 0
      %988 = vmatpush1.bf16.msra.mxu0 0
      %989 = vmatprep.subr.bf16.mxu0 0
      %990 = vmatpush1.bf16.msra.mxu0 0
      %991 = vmatprep.subr.bf16.mxu0 0
      %992 = vmatpush1.bf16.msra.mxu0 0
      %993 = vmatprep.subr.bf16.mxu0 0
      %994 = vmatpush1.bf16.msra.mxu0 0
      %995 = vmatprep.subr.bf16.mxu0 0
      %996 = vmatpush1.bf16.msra.mxu0 0
      %997 = vmatprep.subr.bf16.mxu0 0
      %998 = vmatpush1.bf16.msra.mxu0 0
      %999 = vmatprep.subr.bf16.mxu0 0
      %1000 = vmatpush1.bf16.msra.mxu0 0
      %1001 = vmatprep.subr.bf16.mxu0 0
      %1002 = vmatpush1.bf16.msra.mxu0 0
      %1003 = vmatprep.mubr.bf16.mxu0 0
      %1004 = vmatmul.mubr.bf16.gmra.mrb[0].mxu0 %v966
      %v1005 = vpop.f32.mrb[0].mxu0
      %v1006 = vadd.f32 0.0, %v1005
      %v1007 = vpop.f32.mrb[0].mxu0
      %v1008 = vpop.f32.mrb[0].mxu0
      %v1009 = vpop.f32.mrb[0].mxu0
      %1010 = vdwg.mxu0
      %1012 = vrot.lane.b32.xlu0 %v775, 120
      %v1013 = vpop.permute.xlu0 %1012
      %1014 = vrot.lane.b32.xlu0 %v777, 88
      %v1015 = vpop.permute.xlu0 %1014
      %v1017 = vsel %vm794, %v1013, 0
      %v1020 = vsel %vm794, %v1015, 0
      %1022 = vmatprep.subr.bf16.mxu0 0
      %1023 = vmatpush1.bf16.xpose.msra.mxu0 %v1020
      %1024 = vmatprep.subr.bf16.mxu0 0
      %1025 = vmatpush1.bf16.xpose.msra.mxu0 0
      %1026 = vmatprep.subr.bf16.mxu0 0
      %1027 = vmatpush1.bf16.xpose.msra.mxu0 0
      %1028 = vmatprep.subr.bf16.mxu0 0
      %1029 = vmatpush1.bf16.xpose.msra.mxu0 0
      %1030 = vmatprep.subr.bf16.mxu0 0
      %1031 = vmatpush1.bf16.xpose.msra.mxu0 0
      %1032 = vmatprep.subr.bf16.mxu0 0
      %1033 = vmatpush1.bf16.xpose.msra.mxu0 0
      %1034 = vmatprep.subr.bf16.mxu0 0
      %1035 = vmatpush1.bf16.xpose.msra.mxu0 0
      %1036 = vmatprep.subr.bf16.mxu0 0
      %1037 = vmatpush1.bf16.xpose.msra.mxu0 0
      %1038 = vmatprep.subr.bf16.mxu0 0
      %1039 = vmatpush1.bf16.xpose.msra.mxu0 0
      %1040 = vmatprep.subr.bf16.mxu0 0
      %1041 = vmatpush1.bf16.xpose.msra.mxu0 0
      %1042 = vmatprep.subr.bf16.mxu0 0
      %1043 = vmatpush1.bf16.xpose.msra.mxu0 0
      %1044 = vmatprep.subr.bf16.mxu0 0
      %1045 = vmatpush1.bf16.xpose.msra.mxu0 0
      %1046 = vmatprep.subr.bf16.mxu0 0
      %1047 = vmatpush1.bf16.xpose.msra.mxu0 0
      %1048 = vmatprep.subr.bf16.mxu0 0
      %1049 = vmatpush1.bf16.xpose.msra.mxu0 0
      %1050 = vmatprep.subr.bf16.mxu0 0
      %1051 = vmatpush1.bf16.xpose.msra.mxu0 0
      %1052 = vmatprep.subr.bf16.mxu0 0
      %1053 = vmatpush1.bf16.xpose.msra.mxu0 0
      %1054 = vmatprep.mubr.bf16.mxu0 0
      %1055 = vmatmul.mubr.bf16.gmra.mrb[0].mxu0 %v1017
      %v1056 = vpop.f32.mrb[0].mxu0
      %v1057 = vadd.f32 %v784, %v1056
      %v1058 = vpop.f32.mrb[0].mxu0
      %v1059 = vpop.f32.mrb[0].mxu0
      %v1060 = vpop.f32.mrb[0].mxu0
      %1061 = vdwg.mxu0
      %1063 = vrot.lane.b32.xlu0 %v776, 120
      %v1064 = vpop.permute.xlu0 %1063
      %1065 = vrot.lane.b32.xlu0 %v778, 88
      %v1066 = vpop.permute.xlu0 %1065
      %v1068 = vsel %vm794, %v1064, 0
      %v1071 = vsel %vm794, %v1066, 0
      %1073 = vmatprep.subr.bf16.mxu0 0
      %1074 = vmatpush1.bf16.xpose.msra.mxu0 %v1071
      %1075 = vmatprep.subr.bf16.mxu0 0
      %1076 = vmatpush1.bf16.xpose.msra.mxu0 0
      %1077 = vmatprep.subr.bf16.mxu0 0
      %1078 = vmatpush1.bf16.xpose.msra.mxu0 0
      %1079 = vmatprep.subr.bf16.mxu0 0
      %1080 = vmatpush1.bf16.xpose.msra.mxu0 0
      %1081 = vmatprep.subr.bf16.mxu0 0
      %1082 = vmatpush1.bf16.xpose.msra.mxu0 0
      %1083 = vmatprep.subr.bf16.mxu0 0
      %1084 = vmatpush1.bf16.xpose.msra.mxu0 0
      %1085 = vmatprep.subr.bf16.mxu0 0
      %1086 = vmatpush1.bf16.xpose.msra.mxu0 0
      %1087 = vmatprep.subr.bf16.mxu0 0
      %1088 = vmatpush1.bf16.xpose.msra.mxu0 0
      %1089 = vmatprep.subr.bf16.mxu0 0
      %1090 = vmatpush1.bf16.xpose.msra.mxu0 0
      %1091 = vmatprep.subr.bf16.mxu0 0
      %1092 = vmatpush1.bf16.xpose.msra.mxu0 0
      %1093 = vmatprep.subr.bf16.mxu0 0
      %1094 = vmatpush1.bf16.xpose.msra.mxu0 0
      %1095 = vmatprep.subr.bf16.mxu0 0
      %1096 = vmatpush1.bf16.xpose.msra.mxu0 0
      %1097 = vmatprep.subr.bf16.mxu0 0
      %1098 = vmatpush1.bf16.xpose.msra.mxu0 0
      %1099 = vmatprep.subr.bf16.mxu0 0
      %1100 = vmatpush1.bf16.xpose.msra.mxu0 0
      %1101 = vmatprep.subr.bf16.mxu0 0
      %1102 = vmatpush1.bf16.xpose.msra.mxu0 0
      %1103 = vmatprep.subr.bf16.mxu0 0
      %1104 = vmatpush1.bf16.xpose.msra.mxu0 0
      %1105 = vmatprep.mubr.bf16.mxu0 0
      %1106 = vmatmul.mubr.bf16.gmra.mrb[0].mxu0 %v1068
      %v1107 = vpop.f32.mrb[0].mxu0
      %v1108 = vadd.f32 %v788, %v1107
      %v1109 = vpop.f32.mrb[0].mxu0
      %v1110 = vpop.f32.mrb[0].mxu0
      %v1111 = vpop.f32.mrb[0].mxu0
      %1112 = vdwg.mxu0
      %v1113 = vsel %vm794, %v1057, -inf
      %1114 = vmax.xlane.f32.xlu0 %v1113
      %v1115 = vpop.xlane.xlu0 %1114
      %v1116 = vsel %vm794, %v1108, -inf
      %1117 = vmax.xlane.f32.xlu0 %v1116
      %v1118 = vpop.xlane.xlu0 %1117
      %v1119 = vsub.f32 %v1057, %v1115
      %v1120 = vsub.f32 %v1108, %v1118
      %v1121 = vmul.f32 %v1119, 1.442695
      %v1122 = vpow.pop %v1121
      %v1123 = vmul.f32 %v1120, 1.442695
      %v1124 = vpow.pop %v1123
      %v1125 = vsel %vm794, %v1122, 0.0
      %1126 = vadd.xlane.f32.xlu0 %v1125
      %v1127 = vpop.xlane.xlu0 %1126
      %v1128 = vsel %vm794, %v1124, 0.0
      %1129 = vadd.xlane.f32.xlu0 %v1128
      %v1130 = vpop.xlane.xlu0 %1129
      %v1131 = vrcp.pop %v1127
      %v1132 = vrcp.pop %v1130
      %v1133 = vmul.f32 %v1122, %v1131
      %v1134 = vmul.f32 %v1124, %v1132
      %v1135 = vpack.c.bf16 %v1133, %v1133
      %v1136 = vpack.c.bf16 %v1134, %v1134
      %1137 = vrot.lane.b32.xlu0 %v777, 56
      %v1138 = vpop.permute.xlu0 %1137
      %v1140 = vsel %vm794, %v1135, 0
      %v1143 = vsel %vm919, %v1138, 0
      %1145 = vmatprep.subr.bf16.mxu0 0
      %1146 = vmatpush1.bf16.msra.mxu0 %v1143
      %1147 = vmatprep.subr.bf16.mxu0 0
      %1148 = vmatpush1.bf16.msra.mxu0 0
      %1149 = vmatprep.subr.bf16.mxu0 0
      %1150 = vmatpush1.bf16.msra.mxu0 0
      %1151 = vmatprep.subr.bf16.mxu0 0
      %1152 = vmatpush1.bf16.msra.mxu0 0
      %1153 = vmatprep.subr.bf16.mxu0 0
      %1154 = vmatpush1.bf16.msra.mxu0 0
      %1155 = vmatprep.subr.bf16.mxu0 0
      %1156 = vmatpush1.bf16.msra.mxu0 0
      %1157 = vmatprep.subr.bf16.mxu0 0
      %1158 = vmatpush1.bf16.msra.mxu0 0
      %1159 = vmatprep.subr.bf16.mxu0 0
      %1160 = vmatpush1.bf16.msra.mxu0 0
      %1161 = vmatprep.subr.bf16.mxu0 0
      %1162 = vmatpush1.bf16.msra.mxu0 0
      %1163 = vmatprep.subr.bf16.mxu0 0
      %1164 = vmatpush1.bf16.msra.mxu0 0
      %1165 = vmatprep.subr.bf16.mxu0 0
      %1166 = vmatpush1.bf16.msra.mxu0 0
      %1167 = vmatprep.subr.bf16.mxu0 0
      %1168 = vmatpush1.bf16.msra.mxu0 0
      %1169 = vmatprep.subr.bf16.mxu0 0
      %1170 = vmatpush1.bf16.msra.mxu0 0
      %1171 = vmatprep.subr.bf16.mxu0 0
      %1172 = vmatpush1.bf16.msra.mxu0 0
      %1173 = vmatprep.subr.bf16.mxu0 0
      %1174 = vmatpush1.bf16.msra.mxu0 0
      %1175 = vmatprep.subr.bf16.mxu0 0
      %1176 = vmatpush1.bf16.msra.mxu0 0
      %1177 = vmatprep.mubr.bf16.mxu0 0
      %1178 = vmatmul.mubr.bf16.gmra.mrb[0].mxu0 %v1140
      %v1179 = vpop.f32.mrb[0].mxu0
      %v1180 = vadd.f32 0.0, %v1179
      %v1181 = vpop.f32.mrb[0].mxu0
      %v1182 = vpop.f32.mrb[0].mxu0
      %v1183 = vpop.f32.mrb[0].mxu0
      %1184 = vdwg.mxu0
      %1185 = vrot.lane.b32.xlu0 %v778, 56
      %v1186 = vpop.permute.xlu0 %1185
      %v1188 = vsel %vm794, %v1136, 0
      %v1191 = vsel %vm919, %v1186, 0
      %1193 = vmatprep.subr.bf16.mxu0 0
      %1194 = vmatpush1.bf16.msra.mxu0 %v1191
      %1195 = vmatprep.subr.bf16.mxu0 0
      %1196 = vmatpush1.bf16.msra.mxu0 0
      %1197 = vmatprep.subr.bf16.mxu0 0
      %1198 = vmatpush1.bf16.msra.mxu0 0
      %1199 = vmatprep.subr.bf16.mxu0 0
      %1200 = vmatpush1.bf16.msra.mxu0 0
      %1201 = vmatprep.subr.bf16.mxu0 0
      %1202 = vmatpush1.bf16.msra.mxu0 0
      %1203 = vmatprep.subr.bf16.mxu0 0
      %1204 = vmatpush1.bf16.msra.mxu0 0
      %1205 = vmatprep.subr.bf16.mxu0 0
      %1206 = vmatpush1.bf16.msra.mxu0 0
      %1207 = vmatprep.subr.bf16.mxu0 0
      %1208 = vmatpush1.bf16.msra.mxu0 0
      %1209 = vmatprep.subr.bf16.mxu0 0
      %1210 = vmatpush1.bf16.msra.mxu0 0
      %1211 = vmatprep.subr.bf16.mxu0 0
      %1212 = vmatpush1.bf16.msra.mxu0 0
      %1213 = vmatprep.subr.bf16.mxu0 0
      %1214 = vmatpush1.bf16.msra.mxu0 0
      %1215 = vmatprep.subr.bf16.mxu0 0
      %1216 = vmatpush1.bf16.msra.mxu0 0
      %1217 = vmatprep.subr.bf16.mxu0 0
      %1218 = vmatpush1.bf16.msra.mxu0 0
      %1219 = vmatprep.subr.bf16.mxu0 0
      %1220 = vmatpush1.bf16.msra.mxu0 0
      %1221 = vmatprep.subr.bf16.mxu0 0
      %1222 = vmatpush1.bf16.msra.mxu0 0
      %1223 = vmatprep.subr.bf16.mxu0 0
      %1224 = vmatpush1.bf16.msra.mxu0 0
      %1225 = vmatprep.mubr.bf16.mxu0 0
      %1226 = vmatmul.mubr.bf16.gmra.mrb[0].mxu0 %v1188
      %v1227 = vpop.f32.mrb[0].mxu0
      %v1228 = vadd.f32 0.0, %v1227
      %v1229 = vpop.f32.mrb[0].mxu0
      %v1230 = vpop.f32.mrb[0].mxu0
      %v1231 = vpop.f32.mrb[0].mxu0
      %1232 = vdwg.mxu0
      %1233 = vrot.lane.b32.xlu0 %v775, 112
      %v1234 = vpop.permute.xlu0 %1233
      %1235 = vrot.lane.b32.xlu0 %v777, 80
      %v1236 = vpop.permute.xlu0 %1235
      %v1238 = vsel %vm794, %v1234, 0
      %v1241 = vsel %vm794, %v1236, 0
      %1243 = vmatprep.subr.bf16.mxu0 0
      %1244 = vmatpush1.bf16.xpose.msra.mxu0 %v1241
      %1245 = vmatprep.subr.bf16.mxu0 0
      %1246 = vmatpush1.bf16.xpose.msra.mxu0 0
      %1247 = vmatprep.subr.bf16.mxu0 0
      %1248 = vmatpush1.bf16.xpose.msra.mxu0 0
      %1249 = vmatprep.subr.bf16.mxu0 0
      %1250 = vmatpush1.bf16.xpose.msra.mxu0 0
      %1251 = vmatprep.subr.bf16.mxu0 0
      %1252 = vmatpush1.bf16.xpose.msra.mxu0 0
      %1253 = vmatprep.subr.bf16.mxu0 0
      %1254 = vmatpush1.bf16.xpose.msra.mxu0 0
      %1255 = vmatprep.subr.bf16.mxu0 0
      %1256 = vmatpush1.bf16.xpose.msra.mxu0 0
      %1257 = vmatprep.subr.bf16.mxu0 0
      %1258 = vmatpush1.bf16.xpose.msra.mxu0 0
      %1259 = vmatprep.subr.bf16.mxu0 0
      %1260 = vmatpush1.bf16.xpose.msra.mxu0 0
      %1261 = vmatprep.subr.bf16.mxu0 0
      %1262 = vmatpush1.bf16.xpose.msra.mxu0 0
      %1263 = vmatprep.subr.bf16.mxu0 0
      %1264 = vmatpush1.bf16.xpose.msra.mxu0 0
      %1265 = vmatprep.subr.bf16.mxu0 0
      %1266 = vmatpush1.bf16.xpose.msra.mxu0 0
      %1267 = vmatprep.subr.bf16.mxu0 0
      %1268 = vmatpush1.bf16.xpose.msra.mxu0 0
      %1269 = vmatprep.subr.bf16.mxu0 0
      %1270 = vmatpush1.bf16.xpose.msra.mxu0 0
      %1271 = vmatprep.subr.bf16.mxu0 0
      %1272 = vmatpush1.bf16.xpose.msra.mxu0 0
      %1273 = vmatprep.subr.bf16.mxu0 0
      %1274 = vmatpush1.bf16.xpose.msra.mxu0 0
      %1275 = vmatprep.mubr.bf16.mxu0 0
      %1276 = vmatmul.mubr.bf16.gmra.mrb[0].mxu0 %v1238
      %v1277 = vpop.f32.mrb[0].mxu0
      %v1278 = vadd.f32 %v784, %v1277
      %v1279 = vpop.f32.mrb[0].mxu0
      %v1280 = vpop.f32.mrb[0].mxu0
      %v1281 = vpop.f32.mrb[0].mxu0
      %1282 = vdwg.mxu0
      %1283 = vrot.lane.b32.xlu0 %v776, 112
      %v1284 = vpop.permute.xlu0 %1283
      %1285 = vrot.lane.b32.xlu0 %v778, 80
      %v1286 = vpop.permute.xlu0 %1285
      %v1288 = vsel %vm794, %v1284, 0
      %v1291 = vsel %vm794, %v1286, 0
      %1293 = vmatprep.subr.bf16.mxu0 0
      %1294 = vmatpush1.bf16.xpose.msra.mxu0 %v1291
      %1295 = vmatprep.subr.bf16.mxu0 0
      %1296 = vmatpush1.bf16.xpose.msra.mxu0 0
      %1297 = vmatprep.subr.bf16.mxu0 0
      %1298 = vmatpush1.bf16.xpose.msra.mxu0 0
      %1299 = vmatprep.subr.bf16.mxu0 0
      %1300 = vmatpush1.bf16.xpose.msra.mxu0 0
      %1301 = vmatprep.subr.bf16.mxu0 0
      %1302 = vmatpush1.bf16.xpose.msra.mxu0 0
      %1303 = vmatprep.subr.bf16.mxu0 0
      %1304 = vmatpush1.bf16.xpose.msra.mxu0 0
      %1305 = vmatprep.subr.bf16.mxu0 0
      %1306 = vmatpush1.bf16.xpose.msra.mxu0 0
      %1307 = vmatprep.subr.bf16.mxu0 0
      %1308 = vmatpush1.bf16.xpose.msra.mxu0 0
      %1309 = vmatprep.subr.bf16.mxu0 0
      %1310 = vmatpush1.bf16.xpose.msra.mxu0 0
      %1311 = vmatprep.subr.bf16.mxu0 0
      %1312 = vmatpush1.bf16.xpose.msra.mxu0 0
      %1313 = vmatprep.subr.bf16.mxu0 0
      %1314 = vmatpush1.bf16.xpose.msra.mxu0 0
      %1315 = vmatprep.subr.bf16.mxu0 0
      %1316 = vmatpush1.bf16.xpose.msra.mxu0 0
      %1317 = vmatprep.subr.bf16.mxu0 0
      %1318 = vmatpush1.bf16.xpose.msra.mxu0 0
      %1319 = vmatprep.subr.bf16.mxu0 0
      %1320 = vmatpush1.bf16.xpose.msra.mxu0 0
      %1321 = vmatprep.subr.bf16.mxu0 0
      %1322 = vmatpush1.bf16.xpose.msra.mxu0 0
      %1323 = vmatprep.subr.bf16.mxu0 0
      %1324 = vmatpush1.bf16.xpose.msra.mxu0 0
      %1325 = vmatprep.mubr.bf16.mxu0 0
      %1326 = vmatmul.mubr.bf16.gmra.mrb[0].mxu0 %v1288
      %v1327 = vpop.f32.mrb[0].mxu0
      %v1328 = vadd.f32 %v788, %v1327
      %v1329 = vpop.f32.mrb[0].mxu0
      %v1330 = vpop.f32.mrb[0].mxu0
      %v1331 = vpop.f32.mrb[0].mxu0
      %1332 = vdwg.mxu0
      %v1333 = vsel %vm794, %v1278, -inf
      %1334 = vmax.xlane.f32.xlu0 %v1333
      %v1335 = vpop.xlane.xlu0 %1334
      %v1336 = vsel %vm794, %v1328, -inf
      %1337 = vmax.xlane.f32.xlu0 %v1336
      %v1338 = vpop.xlane.xlu0 %1337
      %v1339 = vsub.f32 %v1278, %v1335
      %v1340 = vsub.f32 %v1328, %v1338
      %v1341 = vmul.f32 %v1339, 1.442695
      %v1342 = vpow.pop %v1341
      %v1343 = vmul.f32 %v1340, 1.442695
      %v1344 = vpow.pop %v1343
      %v1345 = vsel %vm794, %v1342, 0.0
      %1346 = vadd.xlane.f32.xlu0 %v1345
      %v1347 = vpop.xlane.xlu0 %1346
      %v1348 = vsel %vm794, %v1344, 0.0
      %1349 = vadd.xlane.f32.xlu0 %v1348
      %v1350 = vpop.xlane.xlu0 %1349
      %v1351 = vrcp.pop %v1347
      %v1352 = vrcp.pop %v1350
      %v1353 = vmul.f32 %v1342, %v1351
      %v1354 = vmul.f32 %v1344, %v1352
      %v1355 = vpack.c.bf16 %v1353, %v1353
      %v1356 = vpack.c.bf16 %v1354, %v1354
      %1357 = vrot.lane.b32.xlu0 %v777, 48
      %v1358 = vpop.permute.xlu0 %1357
      %v1360 = vsel %vm794, %v1355, 0
      %v1363 = vsel %vm919, %v1358, 0
      %1365 = vmatprep.subr.bf16.mxu0 0
      %1366 = vmatpush1.bf16.msra.mxu0 %v1363
      %1367 = vmatprep.subr.bf16.mxu0 0
      %1368 = vmatpush1.bf16.msra.mxu0 0
      %1369 = vmatprep.subr.bf16.mxu0 0
      %1370 = vmatpush1.bf16.msra.mxu0 0
      %1371 = vmatprep.subr.bf16.mxu0 0
      %1372 = vmatpush1.bf16.msra.mxu0 0
      %1373 = vmatprep.subr.bf16.mxu0 0
      %1374 = vmatpush1.bf16.msra.mxu0 0
      %1375 = vmatprep.subr.bf16.mxu0 0
      %1376 = vmatpush1.bf16.msra.mxu0 0
      %1377 = vmatprep.subr.bf16.mxu0 0
      %1378 = vmatpush1.bf16.msra.mxu0 0
      %1379 = vmatprep.subr.bf16.mxu0 0
      %1380 = vmatpush1.bf16.msra.mxu0 0
      %1381 = vmatprep.subr.bf16.mxu0 0
      %1382 = vmatpush1.bf16.msra.mxu0 0
      %1383 = vmatprep.subr.bf16.mxu0 0
      %1384 = vmatpush1.bf16.msra.mxu0 0
      %1385 = vmatprep.subr.bf16.mxu0 0
      %1386 = vmatpush1.bf16.msra.mxu0 0
      %1387 = vmatprep.subr.bf16.mxu0 0
      %1388 = vmatpush1.bf16.msra.mxu0 0
      %1389 = vmatprep.subr.bf16.mxu0 0
      %1390 = vmatpush1.bf16.msra.mxu0 0
      %1391 = vmatprep.subr.bf16.mxu0 0
      %1392 = vmatpush1.bf16.msra.mxu0 0
      %1393 = vmatprep.subr.bf16.mxu0 0
      %1394 = vmatpush1.bf16.msra.mxu0 0
      %1395 = vmatprep.subr.bf16.mxu0 0
      %1396 = vmatpush1.bf16.msra.mxu0 0
      %1397 = vmatprep.mubr.bf16.mxu0 0
      %1398 = vmatmul.mubr.bf16.gmra.mrb[0].mxu0 %v1360
      %v1399 = vpop.f32.mrb[0].mxu0
      %v1400 = vadd.f32 0.0, %v1399
      %v1401 = vpop.f32.mrb[0].mxu0
      %v1402 = vpop.f32.mrb[0].mxu0
      %v1403 = vpop.f32.mrb[0].mxu0
      %1404 = vdwg.mxu0
      %1405 = vrot.lane.b32.xlu0 %v778, 48
      %v1406 = vpop.permute.xlu0 %1405
      %v1408 = vsel %vm794, %v1356, 0
      %v1411 = vsel %vm919, %v1406, 0
      %1413 = vmatprep.subr.bf16.mxu0 0
      %1414 = vmatpush1.bf16.msra.mxu0 %v1411
      %1415 = vmatprep.subr.bf16.mxu0 0
      %1416 = vmatpush1.bf16.msra.mxu0 0
      %1417 = vmatprep.subr.bf16.mxu0 0
      %1418 = vmatpush1.bf16.msra.mxu0 0
      %1419 = vmatprep.subr.bf16.mxu0 0
      %1420 = vmatpush1.bf16.msra.mxu0 0
      %1421 = vmatprep.subr.bf16.mxu0 0
      %1422 = vmatpush1.bf16.msra.mxu0 0
      %1423 = vmatprep.subr.bf16.mxu0 0
      %1424 = vmatpush1.bf16.msra.mxu0 0
      %1425 = vmatprep.subr.bf16.mxu0 0
      %1426 = vmatpush1.bf16.msra.mxu0 0
      %1427 = vmatprep.subr.bf16.mxu0 0
      %1428 = vmatpush1.bf16.msra.mxu0 0
      %1429 = vmatprep.subr.bf16.mxu0 0
      %1430 = vmatpush1.bf16.msra.mxu0 0
      %1431 = vmatprep.subr.bf16.mxu0 0
      %1432 = vmatpush1.bf16.msra.mxu0 0
      %1433 = vmatprep.subr.bf16.mxu0 0
      %1434 = vmatpush1.bf16.msra.mxu0 0
      %1435 = vmatprep.subr.bf16.mxu0 0
      %1436 = vmatpush1.bf16.msra.mxu0 0
      %1437 = vmatprep.subr.bf16.mxu0 0
      %1438 = vmatpush1.bf16.msra.mxu0 0
      %1439 = vmatprep.subr.bf16.mxu0 0
      %1440 = vmatpush1.bf16.msra.mxu0 0
      %1441 = vmatprep.subr.bf16.mxu0 0
      %1442 = vmatpush1.bf16.msra.mxu0 0
      %1443 = vmatprep.subr.bf16.mxu0 0
      %1444 = vmatpush1.bf16.msra.mxu0 0
      %1445 = vmatprep.mubr.bf16.mxu0 0
      %1446 = vmatmul.mubr.bf16.gmra.mrb[0].mxu0 %v1408
      %v1447 = vpop.f32.mrb[0].mxu0
      %v1448 = vadd.f32 0.0, %v1447
      %v1449 = vpop.f32.mrb[0].mxu0
      %v1450 = vpop.f32.mrb[0].mxu0
      %v1451 = vpop.f32.mrb[0].mxu0
      %1452 = vdwg.mxu0
      %1453 = vrot.lane.b32.xlu0 %v775, 104
      %v1454 = vpop.permute.xlu0 %1453
      %1455 = vrot.lane.b32.xlu0 %v777, 72
      %v1456 = vpop.permute.xlu0 %1455
      %v1458 = vsel %vm794, %v1454, 0
      %v1461 = vsel %vm794, %v1456, 0
      %1463 = vmatprep.subr.bf16.mxu0 0
      %1464 = vmatpush1.bf16.xpose.msra.mxu0 %v1461
      %1465 = vmatprep.subr.bf16.mxu0 0
      %1466 = vmatpush1.bf16.xpose.msra.mxu0 0
      %1467 = vmatprep.subr.bf16.mxu0 0
      %1468 = vmatpush1.bf16.xpose.msra.mxu0 0
      %1469 = vmatprep.subr.bf16.mxu0 0
      %1470 = vmatpush1.bf16.xpose.msra.mxu0 0
      %1471 = vmatprep.subr.bf16.mxu0 0
      %1472 = vmatpush1.bf16.xpose.msra.mxu0 0
      %1473 = vmatprep.subr.bf16.mxu0 0
      %1474 = vmatpush1.bf16.xpose.msra.mxu0 0
      %1475 = vmatprep.subr.bf16.mxu0 0
      %1476 = vmatpush1.bf16.xpose.msra.mxu0 0
      %1477 = vmatprep.subr.bf16.mxu0 0
      %1478 = vmatpush1.bf16.xpose.msra.mxu0 0
      %1479 = vmatprep.subr.bf16.mxu0 0
      %1480 = vmatpush1.bf16.xpose.msra.mxu0 0
      %1481 = vmatprep.subr.bf16.mxu0 0
      %1482 = vmatpush1.bf16.xpose.msra.mxu0 0
      %1483 = vmatprep.subr.bf16.mxu0 0
      %1484 = vmatpush1.bf16.xpose.msra.mxu0 0
      %1485 = vmatprep.subr.bf16.mxu0 0
      %1486 = vmatpush1.bf16.xpose.msra.mxu0 0
      %1487 = vmatprep.subr.bf16.mxu0 0
      %1488 = vmatpush1.bf16.xpose.msra.mxu0 0
      %1489 = vmatprep.subr.bf16.mxu0 0
      %1490 = vmatpush1.bf16.xpose.msra.mxu0 0
      %1491 = vmatprep.subr.bf16.mxu0 0
      %1492 = vmatpush1.bf16.xpose.msra.mxu0 0
      %1493 = vmatprep.subr.bf16.mxu0 0
      %1494 = vmatpush1.bf16.xpose.msra.mxu0 0
      %1495 = vmatprep.mubr.bf16.mxu0 0
      %1496 = vmatmul.mubr.bf16.gmra.mrb[0].mxu0 %v1458
      %v1497 = vpop.f32.mrb[0].mxu0
      %v1498 = vadd.f32 %v784, %v1497
      %v1499 = vpop.f32.mrb[0].mxu0
      %v1500 = vpop.f32.mrb[0].mxu0
      %v1501 = vpop.f32.mrb[0].mxu0
      %1502 = vdwg.mxu0
      %1503 = vrot.lane.b32.xlu0 %v776, 104
      %v1504 = vpop.permute.xlu0 %1503
      %1505 = vrot.lane.b32.xlu0 %v778, 72
      %v1506 = vpop.permute.xlu0 %1505
      %v1508 = vsel %vm794, %v1504, 0
      %v1511 = vsel %vm794, %v1506, 0
      %1513 = vmatprep.subr.bf16.mxu0 0
      %1514 = vmatpush1.bf16.xpose.msra.mxu0 %v1511
      %1515 = vmatprep.subr.bf16.mxu0 0
      %1516 = vmatpush1.bf16.xpose.msra.mxu0 0
      %1517 = vmatprep.subr.bf16.mxu0 0
      %1518 = vmatpush1.bf16.xpose.msra.mxu0 0
      %1519 = vmatprep.subr.bf16.mxu0 0
      %1520 = vmatpush1.bf16.xpose.msra.mxu0 0
      %1521 = vmatprep.subr.bf16.mxu0 0
      %1522 = vmatpush1.bf16.xpose.msra.mxu0 0
      %1523 = vmatprep.subr.bf16.mxu0 0
      %1524 = vmatpush1.bf16.xpose.msra.mxu0 0
      %1525 = vmatprep.subr.bf16.mxu0 0
      %1526 = vmatpush1.bf16.xpose.msra.mxu0 0
      %1527 = vmatprep.subr.bf16.mxu0 0
      %1528 = vmatpush1.bf16.xpose.msra.mxu0 0
      %1529 = vmatprep.subr.bf16.mxu0 0
      %1530 = vmatpush1.bf16.xpose.msra.mxu0 0
      %1531 = vmatprep.subr.bf16.mxu0 0
      %1532 = vmatpush1.bf16.xpose.msra.mxu0 0
      %1533 = vmatprep.subr.bf16.mxu0 0
      %1534 = vmatpush1.bf16.xpose.msra.mxu0 0
      %1535 = vmatprep.subr.bf16.mxu0 0
      %1536 = vmatpush1.bf16.xpose.msra.mxu0 0
      %1537 = vmatprep.subr.bf16.mxu0 0
      %1538 = vmatpush1.bf16.xpose.msra.mxu0 0
      %1539 = vmatprep.subr.bf16.mxu0 0
      %1540 = vmatpush1.bf16.xpose.msra.mxu0 0
      %1541 = vmatprep.subr.bf16.mxu0 0
      %1542 = vmatpush1.bf16.xpose.msra.mxu0 0
      %1543 = vmatprep.subr.bf16.mxu0 0
      %1544 = vmatpush1.bf16.xpose.msra.mxu0 0
      %1545 = vmatprep.mubr.bf16.mxu0 0
      %1546 = vmatmul.mubr.bf16.gmra.mrb[0].mxu0 %v1508
      %v1547 = vpop.f32.mrb[0].mxu0
      %v1548 = vadd.f32 %v788, %v1547
      %v1549 = vpop.f32.mrb[0].mxu0
      %v1550 = vpop.f32.mrb[0].mxu0
      %v1551 = vpop.f32.mrb[0].mxu0
      %1552 = vdwg.mxu0
      %v1553 = vsel %vm794, %v1498, -inf
      %1554 = vmax.xlane.f32.xlu0 %v1553
      %v1555 = vpop.xlane.xlu0 %1554
      %v1556 = vsel %vm794, %v1548, -inf
      %1557 = vmax.xlane.f32.xlu0 %v1556
      %v1558 = vpop.xlane.xlu0 %1557
      %v1559 = vsub.f32 %v1498, %v1555
      %v1560 = vsub.f32 %v1548, %v1558
      %v1561 = vmul.f32 %v1559, 1.442695
      %v1562 = vpow.pop %v1561
      %v1563 = vmul.f32 %v1560, 1.442695
      %v1564 = vpow.pop %v1563
      %v1565 = vsel %vm794, %v1562, 0.0
      %1566 = vadd.xlane.f32.xlu0 %v1565
      %v1567 = vpop.xlane.xlu0 %1566
      %v1568 = vsel %vm794, %v1564, 0.0
      %1569 = vadd.xlane.f32.xlu0 %v1568
      %v1570 = vpop.xlane.xlu0 %1569
      %v1571 = vrcp.pop %v1567
      %v1572 = vrcp.pop %v1570
      %v1573 = vmul.f32 %v1562, %v1571
      %v1574 = vmul.f32 %v1564, %v1572
      %v1575 = vpack.c.bf16 %v1573, %v1573
      %v1576 = vpack.c.bf16 %v1574, %v1574
      %1577 = vrot.lane.b32.xlu0 %v777, 40
      %v1578 = vpop.permute.xlu0 %1577
      %v1580 = vsel %vm794, %v1575, 0
      %v1583 = vsel %vm919, %v1578, 0
      %1585 = vmatprep.subr.bf16.mxu0 0
      %1586 = vmatpush1.bf16.msra.mxu0 %v1583
      %1587 = vmatprep.subr.bf16.mxu0 0
      %1588 = vmatpush1.bf16.msra.mxu0 0
      %1589 = vmatprep.subr.bf16.mxu0 0
      %1590 = vmatpush1.bf16.msra.mxu0 0
      %1591 = vmatprep.subr.bf16.mxu0 0
      %1592 = vmatpush1.bf16.msra.mxu0 0
      %1593 = vmatprep.subr.bf16.mxu0 0
      %1594 = vmatpush1.bf16.msra.mxu0 0
      %1595 = vmatprep.subr.bf16.mxu0 0
      %1596 = vmatpush1.bf16.msra.mxu0 0
      %1597 = vmatprep.subr.bf16.mxu0 0
      %1598 = vmatpush1.bf16.msra.mxu0 0
      %1599 = vmatprep.subr.bf16.mxu0 0
      %1600 = vmatpush1.bf16.msra.mxu0 0
      %1601 = vmatprep.subr.bf16.mxu0 0
      %1602 = vmatpush1.bf16.msra.mxu0 0
      %1603 = vmatprep.subr.bf16.mxu0 0
      %1604 = vmatpush1.bf16.msra.mxu0 0
      %1605 = vmatprep.subr.bf16.mxu0 0
      %1606 = vmatpush1.bf16.msra.mxu0 0
      %1607 = vmatprep.subr.bf16.mxu0 0
      %1608 = vmatpush1.bf16.msra.mxu0 0
      %1609 = vmatprep.subr.bf16.mxu0 0
      %1610 = vmatpush1.bf16.msra.mxu0 0
      %1611 = vmatprep.subr.bf16.mxu0 0
      %1612 = vmatpush1.bf16.msra.mxu0 0
      %1613 = vmatprep.subr.bf16.mxu0 0
      %1614 = vmatpush1.bf16.msra.mxu0 0
      %1615 = vmatprep.subr.bf16.mxu0 0
      %1616 = vmatpush1.bf16.msra.mxu0 0
      %1617 = vmatprep.mubr.bf16.mxu0 0
      %1618 = vmatmul.mubr.bf16.gmra.mrb[0].mxu0 %v1580
      %v1619 = vpop.f32.mrb[0].mxu0
      %v1620 = vadd.f32 0.0, %v1619
      %v1621 = vpop.f32.mrb[0].mxu0
      %v1622 = vpop.f32.mrb[0].mxu0
      %v1623 = vpop.f32.mrb[0].mxu0
      %1624 = vdwg.mxu0
      %1625 = vrot.lane.b32.xlu0 %v778, 40
      %v1626 = vpop.permute.xlu0 %1625
      %v1628 = vsel %vm794, %v1576, 0
      %v1631 = vsel %vm919, %v1626, 0
      %1633 = vmatprep.subr.bf16.mxu0 0
      %1634 = vmatpush1.bf16.msra.mxu0 %v1631
      %1635 = vmatprep.subr.bf16.mxu0 0
      %1636 = vmatpush1.bf16.msra.mxu0 0
      %1637 = vmatprep.subr.bf16.mxu0 0
      %1638 = vmatpush1.bf16.msra.mxu0 0
      %1639 = vmatprep.subr.bf16.mxu0 0
      %1640 = vmatpush1.bf16.msra.mxu0 0
      %1641 = vmatprep.subr.bf16.mxu0 0
      %1642 = vmatpush1.bf16.msra.mxu0 0
      %1643 = vmatprep.subr.bf16.mxu0 0
      %1644 = vmatpush1.bf16.msra.mxu0 0
      %1645 = vmatprep.subr.bf16.mxu0 0
      %1646 = vmatpush1.bf16.msra.mxu0 0
      %1647 = vmatprep.subr.bf16.mxu0 0
      %1648 = vmatpush1.bf16.msra.mxu0 0
      %1649 = vmatprep.subr.bf16.mxu0 0
      %1650 = vmatpush1.bf16.msra.mxu0 0
      %1651 = vmatprep.subr.bf16.mxu0 0
      %1652 = vmatpush1.bf16.msra.mxu0 0
      %1653 = vmatprep.subr.bf16.mxu0 0
      %1654 = vmatpush1.bf16.msra.mxu0 0
      %1655 = vmatprep.subr.bf16.mxu0 0
      %1656 = vmatpush1.bf16.msra.mxu0 0
      %1657 = vmatprep.subr.bf16.mxu0 0
      %1658 = vmatpush1.bf16.msra.mxu0 0
      %1659 = vmatprep.subr.bf16.mxu0 0
      %1660 = vmatpush1.bf16.msra.mxu0 0
      %1661 = vmatprep.subr.bf16.mxu0 0
      %1662 = vmatpush1.bf16.msra.mxu0 0
      %1663 = vmatprep.subr.bf16.mxu0 0
      %1664 = vmatpush1.bf16.msra.mxu0 0
      %1665 = vmatprep.mubr.bf16.mxu0 0
      %1666 = vmatmul.mubr.bf16.gmra.mrb[0].mxu0 %v1628
      %v1667 = vpop.f32.mrb[0].mxu0
      %v1668 = vadd.f32 0.0, %v1667
      %v1669 = vpop.f32.mrb[0].mxu0
      %v1670 = vpop.f32.mrb[0].mxu0
      %v1671 = vpop.f32.mrb[0].mxu0
      %1672 = vdwg.mxu0
      %1675 = vrot.lane.b32.xlu0 %v1180, 8
      %v1676 = vpop.permute.xlu0 %1675
      %1677 = vrot.lane.b32.xlu0 %v1228, 8
      %v1678 = vpop.permute.xlu0 %1677
      %1683 = vrot.lane.b32.xlu0 %v1400, 16
      %v1684 = vpop.permute.xlu0 %1683
      %1685 = vrot.lane.b32.xlu0 %v1448, 16
      %v1686 = vpop.permute.xlu0 %1685
      %1691 = vrot.lane.b32.xlu0 %v1620, 24
      %v1692 = vpop.permute.xlu0 %1691
      %1693 = vrot.lane.b32.xlu0 %v1668, 24
      %v1694 = vpop.permute.xlu0 %1693
      %v1697 = vsel %vm794, %v958, %v1676
      %v1698 = vsel %vm794, %v1006, %v1678
      %vm1699 = vcmask 130048
      %v1700 = vsel %vm1699, %v1697, %v1684
      %v1701 = vsel %vm1699, %v1698, %v1686
      %vm1702 = vcmask 195584
      %v1703 = vsel %vm1702, %v1700, %v1692
      %v1704 = vsel %vm1702, %v1701, %v1694
      %v1705 = vpack.c.bf16 %v1704, %v1703
      %v1707 = vlaneseq
      %v1708 = vshrl.u32 %v1707, 7
      %v1709 = vsub.s32 0, %v1708
      %v1710 = vrot.slane %v706, %v1709
      %v1716 = vunpack.c.l.b16 %v702
      %v1717 = vunpack.c.l.b16 %v703
      %v1718 = vunpack.c.l.b16 %v704
      %v1719 = vunpack.c.l.b16 %v705
      %v1720 = vpack.c.b16 %v1717, %v1716
      %v1721 = vpack.c.b16 %v1719, %v1718
      %v1725 = vsel %vm728, %v1705, 0
      %1727 = vmatprep.subr.bf16.mxu0 0
      %1728 = vmatpush1.bf16.msra.mxu0 %v1720
      %1729 = vmatprep.subr.bf16.mxu0 0
      %1730 = vmatpush1.bf16.msra.mxu0 %v1721
      %1731 = vmatprep.subr.bf16.mxu0 0
      %1732 = vmatpush1.bf16.msra.mxu0 0
      %1733 = vmatprep.subr.bf16.mxu0 0
      %1734 = vmatpush1.bf16.msra.mxu0 0
      %1735 = vmatprep.subr.bf16.mxu0 0
      %1736 = vmatpush1.bf16.msra.mxu0 0
      %1737 = vmatprep.subr.bf16.mxu0 0
      %1738 = vmatpush1.bf16.msra.mxu0 0
      %1739 = vmatprep.subr.bf16.mxu0 0
      %1740 = vmatpush1.bf16.msra.mxu0 0
      %1741 = vmatprep.subr.bf16.mxu0 0
      %1742 = vmatpush1.bf16.msra.mxu0 0
      %1743 = vmatprep.subr.bf16.mxu0 0
      %1744 = vmatpush1.bf16.msra.mxu0 0
      %1745 = vmatprep.subr.bf16.mxu0 0
      %1746 = vmatpush1.bf16.msra.mxu0 0
      %1747 = vmatprep.subr.bf16.mxu0 0
      %1748 = vmatpush1.bf16.msra.mxu0 0
      %1749 = vmatprep.subr.bf16.mxu0 0
      %1750 = vmatpush1.bf16.msra.mxu0 0
      %1751 = vmatprep.subr.bf16.mxu0 0
      %1752 = vmatpush1.bf16.msra.mxu0 0
      %1753 = vmatprep.subr.bf16.mxu0 0
      %1754 = vmatpush1.bf16.msra.mxu0 0
      %1755 = vmatprep.subr.bf16.mxu0 0
      %1756 = vmatpush1.bf16.msra.mxu0 0
      %1757 = vmatprep.subr.bf16.mxu0 0
      %1758 = vmatpush1.bf16.msra.mxu0 0
      %1759 = vmatprep.mubr.bf16.mxu0 0
      %1760 = vmatmul.mubr.bf16.gmra.mrb[0].mxu0 %v1725
      %v1761 = vpop.f32.mrb[0].mxu0
      %v1762 = vadd.f32 %v1710, %v1761
      %v1763 = vpop.f32.mrb[0].mxu0
      %v1764 = vpop.f32.mrb[0].mxu0
      %v1765 = vadd.f32 %v1710, %v1764
      %v1766 = vpop.f32.mrb[0].mxu0
      %1767 = vdwg.mxu0
      %v1768 = vadd.f32 %v691, %v1762
      %v1769 = vadd.f32 %v692, %v1765
      %v1770 = vsel %vm728, %v1768, 0.0
      %1771 = vadd.xlane.f32.xlu0 %v1770
      %v1772 = vpop.xlane.xlu0 %1771
      %v1773 = vsel %vm728, %v1769, 0.0
      %1774 = vadd.xlane.f32.xlu0 %v1773
      %v1775 = vpop.xlane.xlu0 %1774
      %v1776 = vrcp.pop 32.0
      %v1777 = vmul.f32 %v1772, %v1776
      %v1778 = vmul.f32 %v1775, %v1776
      %v1779 = vsub.f32 %v1768, %v1777
      %v1780 = vsub.f32 %v1769, %v1778
      %v1781 = vmul.f32 %v1779, %v1779
      %v1782 = vmul.f32 %v1780, %v1780
      %v1783 = vsel %vm728, %v1781, 0.0
      %1784 = vadd.xlane.f32.xlu0 %v1783
      %v1785 = vpop.xlane.xlu0 %1784
      %v1786 = vsel %vm728, %v1782, 0.0
      %1787 = vadd.xlane.f32.xlu0 %v1786
      %v1788 = vpop.xlane.xlu0 %1787
      %v1789 = vmul.f32 %v1785, %v1776
      %v1790 = vmul.f32 %v1788, %v1776
      %v1791 = vadd.f32 %v1789, 1e-05
      %v1792 = vadd.f32 %v1790, 1e-05
      %v1793 = vrsqrt.pop %v1791
      %v1794 = vrsqrt.pop %v1792
      %v1795 = vmul.f32 %v1779, %v1793
      %v1796 = vmul.f32 %v1780, %v1794
      %v1798 = vlaneseq
      %v1799 = vshrl.u32 %v1798, 7
      %v1800 = vsub.s32 0, %v1799
      %v1801 = vrot.slane %v707, %v1800
      %v1803 = vmul.f32 %v1795, %v1801
      %v1804 = vmul.f32 %v1796, %v1801
      %v1806 = vlaneseq
      %v1807 = vshrl.u32 %v1806, 7
      %v1808 = vsub.s32 0, %v1807
      %v1809 = vrot.slane %v708, %v1808
      %v1811 = vadd.f32 %v1803, %v1809
      %v1812 = vadd.f32 %v1804, %v1809
      %v1813 = vld [vmem:[%s661] sm:$0xf]
      %v1814 = vld [vmem:[%s661 + $0x4] sm:$0xf]
      %v1815 = vld [vmem:[%s661 + $0x8] sm:$0xf]
      %v1816 = vld [vmem:[%s661 + $0xc] sm:$0xf]
      %v1817 = vld [vmem:[%s664] sm:$0x1]
      %v1818 = vld [vmem:[%s669] sm:$0xf]
      %v1819 = vld [vmem:[%s669 + $0x4] sm:$0xf]
      %v1820 = vld [vmem:[%s669 + $0x8] sm:$0xf]
      %v1821 = vld [vmem:[%s669 + $0xc] sm:$0xf]
      %v1822 = vld [vmem:[%s669 + $0x10] sm:$0xf]
      %v1823 = vld [vmem:[%s669 + $0x14] sm:$0xf]
      %v1824 = vld [vmem:[%s669 + $0x18] sm:$0xf]
      %v1825 = vld [vmem:[%s669 + $0x1c] sm:$0xf]
      %v1826 = vld [vmem:[%s672] sm:$0x1]
      %v1827 = vld [vmem:[%s675] sm:$0x1]
      %v1828 = vld [vmem:[%s678] sm:$0x1]
      %v1829 = vpack.c.bf16 %v1812, %v1811
      %v1831 = vlaneseq
      %v1832 = vshrl.u32 %v1831, 7
      %v1833 = vsub.s32 0, %v1832
      %v1834 = vrot.slane %v1817, %v1833
      %v1840 = vunpack.c.l.b16 %v1813
      %v1841 = vunpack.c.l.b16 %v1814
      %v1842 = vunpack.c.l.b16 %v1815
      %v1843 = vunpack.c.l.b16 %v1816
      %v1844 = vpack.c.b16 %v1841, %v1840
      %v1845 = vpack.c.b16 %v1843, %v1842
      %v1849 = vsel %vm728, %v1829, 0
      %1851 = vmatprep.subr.bf16.mxu0 0
      %1852 = vmatpush1.bf16.msra.mxu0 %v1844
      %1853 = vmatprep.subr.bf16.mxu0 0
      %1854 = vmatpush1.bf16.msra.mxu0 %v1845
      %1855 = vmatprep.subr.bf16.mxu0 0
      %1856 = vmatpush1.bf16.msra.mxu0 0
      %1857 = vmatprep.subr.bf16.mxu0 0
      %1858 = vmatpush1.bf16.msra.mxu0 0
      %1859 = vmatprep.subr.bf16.mxu0 0
      %1860 = vmatpush1.bf16.msra.mxu0 0
      %1861 = vmatprep.subr.bf16.mxu0 0
      %1862 = vmatpush1.bf16.msra.mxu0 0
      %1863 = vmatprep.subr.bf16.mxu0 0
      %1864 = vmatpush1.bf16.msra.mxu0 0
      %1865 = vmatprep.subr.bf16.mxu0 0
      %1866 = vmatpush1.bf16.msra.mxu0 0
      %1867 = vmatprep.subr.bf16.mxu0 0
      %1868 = vmatpush1.bf16.msra.mxu0 0
      %1869 = vmatprep.subr.bf16.mxu0 0
      %1870 = vmatpush1.bf16.msra.mxu0 0
      %1871 = vmatprep.subr.bf16.mxu0 0
      %1872 = vmatpush1.bf16.msra.mxu0 0
      %1873 = vmatprep.subr.bf16.mxu0 0
      %1874 = vmatpush1.bf16.msra.mxu0 0
      %1875 = vmatprep.subr.bf16.mxu0 0
      %1876 = vmatpush1.bf16.msra.mxu0 0
      %1877 = vmatprep.subr.bf16.mxu0 0
      %1878 = vmatpush1.bf16.msra.mxu0 0
      %1879 = vmatprep.subr.bf16.mxu0 0
      %1880 = vmatpush1.bf16.msra.mxu0 0
      %1881 = vmatprep.subr.bf16.mxu0 0
      %1882 = vmatpush1.bf16.msra.mxu0 0
      %1883 = vmatprep.mubr.bf16.mxu0 0
      %1884 = vmatmul.mubr.bf16.gmra.mrb[0].mxu0 %v1849
      %v1885 = vpop.f32.mrb[0].mxu0
      %v1886 = vadd.f32 %v1834, %v1885
      %v1887 = vpop.f32.mrb[0].mxu0
      %v1888 = vpop.f32.mrb[0].mxu0
      %v1889 = vadd.f32 %v1834, %v1888
      %v1890 = vpop.f32.mrb[0].mxu0
      %1891 = vdwg.mxu0
      %v1892 = vmax.f32 %v1886, 0.0
      %v1893 = vmax.f32 %v1889, 0.0
      %v1894 = vpack.c.bf16 %v1893, %v1892
      %v1896 = vlaneseq
      %v1897 = vshrl.u32 %v1896, 7
      %v1898 = vsub.s32 0, %v1897
      %v1899 = vrot.slane %v1826, %v1898
      %v1909 = vunpack.c.l.b16 %v1818
      %v1910 = vunpack.c.l.b16 %v1819
      %v1911 = vunpack.c.l.b16 %v1820
      %v1912 = vunpack.c.l.b16 %v1821
      %v1913 = vunpack.c.l.b16 %v1822
      %v1914 = vunpack.c.l.b16 %v1823
      %v1915 = vunpack.c.l.b16 %v1824
      %v1916 = vunpack.c.l.b16 %v1825
      %v1917 = vpack.c.b16 %v1910, %v1909
      %v1918 = vpack.c.b16 %v1912, %v1911
      %v1919 = vpack.c.b16 %v1914, %v1913
      %v1920 = vpack.c.b16 %v1916, %v1915
      %vm1925 = vcmask 523264
      %v1927 = vsel %vm1925, %v1894, 0
      %1929 = vmatprep.subr.bf16.mxu0 0
      %1930 = vmatpush1.bf16.msra.mxu0 %v1917
      %1931 = vmatprep.subr.bf16.mxu0 0
      %1932 = vmatpush1.bf16.msra.mxu0 %v1918
      %1933 = vmatprep.subr.bf16.mxu0 0
      %1934 = vmatpush1.bf16.msra.mxu0 %v1919
      %1935 = vmatprep.subr.bf16.mxu0 0
      %1936 = vmatpush1.bf16.msra.mxu0 %v1920
      %1937 = vmatprep.subr.bf16.mxu0 0
      %1938 = vmatpush1.bf16.msra.mxu0 0
      %1939 = vmatprep.subr.bf16.mxu0 0
      %1940 = vmatpush1.bf16.msra.mxu0 0
      %1941 = vmatprep.subr.bf16.mxu0 0
      %1942 = vmatpush1.bf16.msra.mxu0 0
      %1943 = vmatprep.subr.bf16.mxu0 0
      %1944 = vmatpush1.bf16.msra.mxu0 0
      %1945 = vmatprep.subr.bf16.mxu0 0
      %1946 = vmatpush1.bf16.msra.mxu0 0
      %1947 = vmatprep.subr.bf16.mxu0 0
      %1948 = vmatpush1.bf16.msra.mxu0 0
      %1949 = vmatprep.subr.bf16.mxu0 0
      %1950 = vmatpush1.bf16.msra.mxu0 0
      %1951 = vmatprep.subr.bf16.mxu0 0
      %1952 = vmatpush1.bf16.msra.mxu0 0
      %1953 = vmatprep.subr.bf16.mxu0 0
      %1954 = vmatpush1.bf16.msra.mxu0 0
      %1955 = vmatprep.subr.bf16.mxu0 0
      %1956 = vmatpush1.bf16.msra.mxu0 0
      %1957 = vmatprep.subr.bf16.mxu0 0
      %1958 = vmatpush1.bf16.msra.mxu0 0
      %1959 = vmatprep.subr.bf16.mxu0 0
      %1960 = vmatpush1.bf16.msra.mxu0 0
      %1961 = vmatprep.mubr.bf16.mxu0 0
      %1962 = vmatmul.mubr.bf16.gmra.mrb[0].mxu0 %v1927
      %v1963 = vpop.f32.mrb[0].mxu0
      %v1964 = vadd.f32 %v1899, %v1963
      %v1965 = vpop.f32.mrb[0].mxu0
      %v1966 = vpop.f32.mrb[0].mxu0
      %v1967 = vadd.f32 %v1899, %v1966
      %v1968 = vpop.f32.mrb[0].mxu0
      %1969 = vdwg.mxu0
      %v1970 = vadd.f32 %v1811, %v1964
      %v1971 = vadd.f32 %v1812, %v1967
      %v1972 = vsel %vm728, %v1970, 0.0
      %1973 = vadd.xlane.f32.xlu0 %v1972
      %v1974 = vpop.xlane.xlu0 %1973
      %v1975 = vsel %vm728, %v1971, 0.0
      %1976 = vadd.xlane.f32.xlu0 %v1975
      %v1977 = vpop.xlane.xlu0 %1976
      %v1978 = vmul.f32 %v1974, %v1776
      %v1979 = vmul.f32 %v1977, %v1776
      %v1980 = vsub.f32 %v1970, %v1978
      %v1981 = vsub.f32 %v1971, %v1979
      %v1982 = vmul.f32 %v1980, %v1980
      %v1983 = vmul.f32 %v1981, %v1981
      %v1984 = vsel %vm728, %v1982, 0.0
      %1985 = vadd.xlane.f32.xlu0 %v1984
      %v1986 = vpop.xlane.xlu0 %1985
      %v1987 = vsel %vm728, %v1983, 0.0
      %1988 = vadd.xlane.f32.xlu0 %v1987
      %v1989 = vpop.xlane.xlu0 %1988
      %v1990 = vmul.f32 %v1986, %v1776
      %v1991 = vmul.f32 %v1989, %v1776
      %v1992 = vadd.f32 %v1990, 1e-05
      %v1993 = vadd.f32 %v1991, 1e-05
      %v1994 = vrsqrt.pop %v1992
      %v1995 = vrsqrt.pop %v1993
      %v1996 = vmul.f32 %v1980, %v1994
      %v1997 = vmul.f32 %v1981, %v1995
      %v1999 = vlaneseq
      %v2000 = vshrl.u32 %v1999, 7
      %v2001 = vsub.s32 0, %v2000
      %v2002 = vrot.slane %v1827, %v2001
      %v2004 = vmul.f32 %v1996, %v2002
      %v2005 = vmul.f32 %v1997, %v2002
      %v2007 = vlaneseq
      %v2008 = vshrl.u32 %v2007, 7
      %v2009 = vsub.s32 0, %v2008
      %v2010 = vrot.slane %v1828, %v2009
      %v2012 = vadd.f32 %v2004, %v2010
      %v2013 = vadd.f32 %v2005, %v2010
      %2014 = vst.msk [vmem:[#allocation2] sm:$0xff] %vm728, %v2012
      %2015 = vst.msk [vmem:[#allocation2 + $0x8] sm:$0xff] %vm728, %v2013
      %p2016 = scmp.eq.s32.totalorder %s27, 1
      // Predicated region
      $region89: #{summarizer_transformer_forward.3} parent=83 // pred_check
        %p2017 = pneg %p2016
      $region90: #{summarizer_transformer_forward.3} parent=83 // pred_check_branch
        %2019 = sbr.rel (%p2017) target = $region92
      $region91: #{summarizer_transformer_forward.3} parent=83 // pred_region
        %v2020 = vld [vmem:[%s14] sm:$0x1]
        %v2021 = vld [vmem:[%s15] sm:$0x1]
        %v2022 = vsel %vm728, %v2012, 0.0
        %2023 = vadd.xlane.f32.xlu0 %v2022
        %v2024 = vpop.xlane.xlu0 %2023
        %v2025 = vsel %vm728, %v2013, 0.0
        %2026 = vadd.xlane.f32.xlu0 %v2025
        %v2027 = vpop.xlane.xlu0 %2026
        %v2028 = vmul.f32 %v2024, %v1776
        %v2029 = vmul.f32 %v2027, %v1776
        %v2030 = vsub.f32 %v2012, %v2028
        %v2031 = vsub.f32 %v2013, %v2029
        %v2032 = vmul.f32 %v2030, %v2030
        %v2033 = vmul.f32 %v2031, %v2031
        %v2034 = vsel %vm728, %v2032, 0.0
        %2035 = vadd.xlane.f32.xlu0 %v2034
        %v2036 = vpop.xlane.xlu0 %2035
        %v2037 = vsel %vm728, %v2033, 0.0
        %2038 = vadd.xlane.f32.xlu0 %v2037
        %v2039 = vpop.xlane.xlu0 %2038
        %v2040 = vmul.f32 %v2036, %v1776
        %v2041 = vmul.f32 %v2039, %v1776
        %v2042 = vadd.f32 %v2040, 1e-05
        %v2043 = vadd.f32 %v2041, 1e-05
        %v2044 = vrsqrt.pop %v2042
        %v2045 = vrsqrt.pop %v2043
        %v2046 = vmul.f32 %v2030, %v2044
        %v2047 = vmul.f32 %v2031, %v2045
        %v2049 = vlaneseq
        %v2050 = vshrl.u32 %v2049, 7
        %v2051 = vsub.s32 0, %v2050
        %v2052 = vrot.slane %v2020, %v2051
        %v2054 = vmul.f32 %v2046, %v2052
        %v2055 = vmul.f32 %v2047, %v2052
        %v2057 = vlaneseq
        %v2058 = vshrl.u32 %v2057, 7
        %v2059 = vsub.s32 0, %v2058
        %v2060 = vrot.slane %v2021, %v2059
        %v2062 = vadd.f32 %v2054, %v2060
        %v2063 = vadd.f32 %v2055, %v2060
        %v2064 = vpack.c.bf16 %v2063, %v2062
        %v2066 = vunpack.c.l.b16 %v2064
        %v2067 = vunpack.c.h.b16 %v2064
        %v2068 = vpack.c.b16 %v2066, %v2066
        %v2069 = vpack.c.b16 %v2067, %v2067
        %vm2072 = vcmask 257024
        %2073 = vst.msk [vmem:[%s16] sm:$0xf] %vm2072, %v2068
        %2074 = vst.msk [vmem:[%s16 + $0x4] sm:$0xf] %vm2072, %v2069
      $region92: #{summarizer_transformer_forward.3} parent=83 // pred_fallthru
        _
      // Predicated region
      $region93: #{summarizer_transformer_forward.3} parent=83 // pred_check
        %p2075 = pneg %p436
      $region94: #{summarizer_transformer_forward.3} parent=83 // pred_check_branch
        %2077 = sbr.rel (%p2075) target = $region96
      $region95: #{summarizer_transformer_forward.3} parent=83 // pred_region
        _
      $region96: #{summarizer_transformer_forward.3} parent=83 // pred_fallthru
        _
      // Predicated region
      $region97: #{summarizer_transformer_forward.3} parent=83 // pred_check
        %p2078 = pneg %p436
      $region98: #{summarizer_transformer_forward.3} parent=83 // pred_check_branch
        %2080 = sbr.rel (%p2078) target = $region100
      $region99: #{summarizer_transformer_forward.3} parent=83 // pred_region
        _
      $region100: #{summarizer_transformer_forward.3} parent=83 // pred_fallthru
        _
    $region84: #{summarizer_transformer_forward.3} parent=5 // pred_fallthru
      _
    %p2081 = scmp.le.s32.totalorder 2, %s22
    // Predicated region
    $region101: #{summarizer_transformer_forward.3} parent=5 // pred_check
      %p2082 = pneg %p2081
    $region102: #{summarizer_transformer_forward.3} parent=5 // pred_check_branch
      %2084 = sbr.rel (%p2082) target = $region104
    $region103: #{summarizer_transformer_forward.3} parent=5 // pred_region
      %s2085 = ssub.s32 %s22, 2
    $region104: #{summarizer_transformer_forward.3} parent=5 // pred_fallthru
      _
  $region6: #{summarizer_transformer_forward.3} parent=0 // loop_footer
    %s26 = sadd.s32 1, %s22
  $region7: #{summarizer_transformer_forward.3} parent=0 // loop_footer_branch
    %21 = sbr.rel target = $region3
  $region8: #{summarizer_transformer_forward.3} parent=0 // loop_exit
    _

// kernel: summarizer_transformer_forward.4
$region0: #{summarizer_transformer_forward.4}
  #allocation0 [shape = 'u32[]', space=smem, size = 0x4, offset = 0x4, fixed_abs, tag = 'smem constant byte address 0x4 - core index']
  #allocation1 [shape = 'u32[144,128]{1,0:T(1,128)}', space=vmem, size = 0x12000, scoped, tag = 'internal scratch']
  #allocation2 [shape = 'f32[16,32]{1,0:T(8,128)}', space=vmem, size = 0x2000, scoped, tag = 'scratch operand']
  %s0 = inlined_call_operand.vmem [shape: bf16[16,32], index: 0, kind: input, shape index: {}]
  %s1 = inlined_call_operand.vmem [shape: bf16[16,32], index: 1, kind: input, shape index: {}]
  %s2 = inlined_call_operand.vmem [shape: f32[8,8], index: 2, kind: input, shape index: {}]
  %s3 = inlined_call_operand.vmem [shape: bf16[2,32,96], index: 3, kind: input, shape index: {}]
  %s4 = inlined_call_operand.vmem [shape: f32[2,1,96], index: 4, kind: input, shape index: {}]
  %s5 = inlined_call_operand.vmem [shape: bf16[2,32,32], index: 5, kind: input, shape index: {}]
  %s6 = inlined_call_operand.vmem [shape: f32[2,1,32], index: 6, kind: input, shape index: {}]
  %s7 = inlined_call_operand.vmem [shape: f32[2,1,32], index: 7, kind: input, shape index: {}]
  %s8 = inlined_call_operand.vmem [shape: f32[2,1,32], index: 8, kind: input, shape index: {}]
  %s9 = inlined_call_operand.vmem [shape: bf16[2,32,32], index: 9, kind: input, shape index: {}]
  %s10 = inlined_call_operand.vmem [shape: f32[2,1,32], index: 10, kind: input, shape index: {}]
  %s11 = inlined_call_operand.vmem [shape: bf16[2,32,64], index: 11, kind: input, shape index: {}]
  %s12 = inlined_call_operand.vmem [shape: f32[2,1,64], index: 12, kind: input, shape index: {}]
  %s13 = inlined_call_operand.vmem [shape: bf16[2,32,32], index: 13, kind: input, shape index: {}]
  %s14 = inlined_call_operand.vmem [shape: f32[2,1,32], index: 14, kind: input, shape index: {}]
  %s15 = inlined_call_operand.vmem [shape: f32[2,1,32], index: 15, kind: input, shape index: {}]
  %s16 = inlined_call_operand.vmem [shape: f32[2,1,32], index: 16, kind: input, shape index: {}]
  %s17 = inlined_call_operand.vmem [shape: bf16[2,32,64], index: 17, kind: input, shape index: {}]
  %s18 = inlined_call_operand.vmem [shape: f32[2,1,64], index: 18, kind: input, shape index: {}]
  %s19 = inlined_call_operand.vmem [shape: bf16[2,64,32], index: 19, kind: input, shape index: {}]
  %s20 = inlined_call_operand.vmem [shape: f32[2,1,32], index: 20, kind: input, shape index: {}]
  %s21 = inlined_call_operand.vmem [shape: f32[2,1,32], index: 21, kind: input, shape index: {}]
  %s22 = inlined_call_operand.vmem [shape: f32[2,1,32], index: 22, kind: input, shape index: {}]
  %s23 = inlined_call_operand.vmem [shape: f32[1,32], index: 23, kind: input, shape index: {}]
  %s24 = inlined_call_operand.vmem [shape: f32[1,32], index: 24, kind: input, shape index: {}]
  %s25 = inlined_call_operand.vmem [shape: bf16[16,32], index: 25, kind: output, shape index: {}]
  %s26 = sld [smem:[#allocation0]]
  $region141: #{summarizer_transformer_forward.4} parent=0
    _
  %s28 = ssub.s32 1, %s26
  %s29 = scalar_select 0, %s28, %s26
  loop: start=0, step=1, limit=4
  $region2: #{summarizer_transformer_forward.4} parent=0 // loop_pre_header
    _
  $region3: #{summarizer_transformer_forward.4} parent=0 // loop_header
    %s31 = sphi 0, %s35
    %p32 = scmp.ge.s32.totalorder %s31, 4
    %s39 = sphi 0, %s39
    %s41 = sphi 0, %s39
    %s42 = sphi 0, %s41
    %s56 = sphi 0, %s42
    %s60 = sphi 0, %s60
    %s62 = sphi 0, %s60
    %s63 = sphi 0, %s62
    %s77 = sphi 0, %s63
    %s81 = sphi 0, %s81
    %s83 = sphi 0, %s81
    %s84 = sphi 0, %s83
    %s98 = sphi 0, %s84
    %s104 = sphi 0, %s106
    %s107 = sphi 0, %s104
    %s108 = sphi 0, %s107
    %s124 = sphi 0, %s108
    %s130 = sphi 0, %s132
    %s133 = sphi 0, %s130
    %s134 = sphi 0, %s133
    %s150 = sphi 0, %s134
    %s156 = sphi 0, %s158
    %s159 = sphi 0, %s156
    %s160 = sphi 0, %s159
    %s176 = sphi 0, %s160
    %s182 = sphi 0, %s184
    %s185 = sphi 0, %s182
    %s186 = sphi 0, %s185
    %s202 = sphi 0, %s186
    %s208 = sphi 0, %s210
    %s211 = sphi 0, %s208
    %s212 = sphi 0, %s211
    %s228 = sphi 0, %s212
    %s234 = sphi 0, %s236
    %s237 = sphi 0, %s234
    %s238 = sphi 0, %s237
    %s254 = sphi 0, %s238
    %s260 = sphi 0, %s262
    %s263 = sphi 0, %s260
    %s264 = sphi 0, %s263
    %s280 = sphi 0, %s264
    %s286 = sphi 0, %s288
    %s289 = sphi 0, %s286
    %s290 = sphi 0, %s289
    %s306 = sphi 0, %s290
    %s312 = sphi 0, %s314
    %s315 = sphi 0, %s312
    %s316 = sphi 0, %s315
    %s332 = sphi 0, %s316
    %s338 = sphi 0, %s340
    %s341 = sphi 0, %s338
    %s342 = sphi 0, %s341
    %s358 = sphi 0, %s342
    %s364 = sphi 0, %s366
    %s367 = sphi 0, %s364
    %s368 = sphi 0, %s367
    %s384 = sphi 0, %s368
    %s390 = sphi 0, %s392
    %s393 = sphi 0, %s390
    %s394 = sphi 0, %s393
    %s410 = sphi 0, %s394
    %s416 = sphi 0, %s418
    %s419 = sphi 0, %s416
    %s420 = sphi 0, %s419
    %s436 = sphi 0, %s420
    %s442 = sphi 0, %s444
    %s445 = sphi 0, %s442
    %s446 = sphi 0, %s445
    %s462 = sphi 0, %s446
    %s468 = sphi 0, %s470
    %s471 = sphi 0, %s468
    %s472 = sphi 0, %s471
    %s488 = sphi 0, %s472
    %s494 = sphi 0, %s496
    %s497 = sphi 0, %s494
    %s498 = sphi 0, %s497
    %s514 = sphi 0, %s498
    %s520 = sphi 0, %s522
    %s523 = sphi 0, %s520
    %s524 = sphi 0, %s523
    %s540 = sphi 0, %s524
    %s546 = sphi 0, %s548
    %s549 = sphi 0, %s546
    %s550 = sphi 0, %s549
    %s566 = sphi 0, %s550
    %s572 = sphi 0, %s574
    %s575 = sphi 0, %s572
    %s576 = sphi 0, %s575
    %s592 = sphi 0, %s576
    %s598 = sphi 0, %s600
    %s601 = sphi 0, %s598
    %s602 = sphi 0, %s601
    %s618 = sphi 0, %s602
    %s622 = sphi 0, %s622
    %s624 = sphi 0, %s622
    %s625 = sphi 0, %s624
    %s639 = sphi 0, %s625
    %s643 = sphi 0, %s643
    %s645 = sphi 0, %s643
    %s646 = sphi 0, %s645
    %s660 = sphi 0, %s646
    %s664 = sphi 0, %s664
    %s666 = sphi 0, %s664
    %s667 = sphi 0, %s666
    %s681 = sphi 0, %s667
  $region4: #{summarizer_transformer_forward.4} parent=0 // loop_header_branch
    %34 = sbr.rel (%p32) target = $region8
  $region5: #{summarizer_transformer_forward.4} parent=0 // loop_body
    %s36 = ssub.s32 %s31, 1
    %s37 = ssub.s32 %s31, 2
    %s38 = sadd.s32 %s31, 1
    %s40 = sadd.s32 %s39, 1
    %p43 = scmp.eq.s32.totalorder %s31, 1
    %p44 = scmp.ne.s32.totalorder %s39, %s41
    %p45 = scmp.eq.s32.totalorder %s31, 0
    %p46 = por %p44, %p45
    %p47 = scmp.ne.s32.totalorder %s39, %s41
    %p48 = scmp.eq.s32.totalorder %s36, 1
    %p49 = por %p47, %p48
    %p50 = scmp.ne.s32.totalorder %s41, %s42
    %p51 = scmp.eq.s32.totalorder %s36, 0
    %p52 = por %p50, %p51
    %p53 = scmp.ne.s32.totalorder %s41, %s42
    %p54 = scmp.eq.s32.totalorder %s37, 1
    %p55 = por %p53, %p54
    %p57 = scmp.ne.s32.totalorder %s42, %s56
    %p58 = scmp.eq.s32.totalorder %s37, 0
    %p59 = por %p57, %p58
    %s61 = sadd.s32 %s60, 1
    %p64 = scmp.eq.s32.totalorder %s31, 1
    %p65 = scmp.ne.s32.totalorder %s60, %s62
    %p66 = scmp.eq.s32.totalorder %s31, 0
    %p67 = por %p65, %p66
    %p68 = scmp.ne.s32.totalorder %s60, %s62
    %p69 = scmp.eq.s32.totalorder %s36, 1
    %p70 = por %p68, %p69
    %p71 = scmp.ne.s32.totalorder %s62, %s63
    %p72 = scmp.eq.s32.totalorder %s36, 0
    %p73 = por %p71, %p72
    %p74 = scmp.ne.s32.totalorder %s62, %s63
    %p75 = scmp.eq.s32.totalorder %s37, 1
    %p76 = por %p74, %p75
    %p78 = scmp.ne.s32.totalorder %s63, %s77
    %p79 = scmp.eq.s32.totalorder %s37, 0
    %p80 = por %p78, %p79
    %s82 = sadd.s32 %s81, 1
    %p85 = scmp.eq.s32.totalorder %s31, 1
    %p86 = scmp.ne.s32.totalorder %s81, %s83
    %p87 = scmp.eq.s32.totalorder %s31, 0
    %p88 = por %p86, %p87
    %p89 = scmp.ne.s32.totalorder %s81, %s83
    %p90 = scmp.eq.s32.totalorder %s36, 1
    %p91 = por %p89, %p90
    %p92 = scmp.ne.s32.totalorder %s83, %s84
    %p93 = scmp.eq.s32.totalorder %s36, 0
    %p94 = por %p92, %p93
    %p95 = scmp.ne.s32.totalorder %s83, %s84
    %p96 = scmp.eq.s32.totalorder %s37, 1
    %p97 = por %p95, %p96
    %p99 = scmp.ne.s32.totalorder %s84, %s98
    %p100 = scmp.eq.s32.totalorder %s37, 0
    %p101 = por %p99, %p100
    %s102 = ssub.s32 %s31, %s38
    %p103 = scmp.eq.s32.totalorder %s102, 0
    %s105 = sadd.s32 %s104, 1
    %s106 = scalar_select %p103, %s104, %s105
    %p109 = pneg %p103
    %p110 = scmp.eq.s32.totalorder %s31, 1
    %p111 = por %p109, %p110
    %p112 = scmp.ne.s32.totalorder %s104, %s107
    %p113 = scmp.eq.s32.totalorder %s31, 0
    %p114 = por %p112, %p113
    %p115 = scmp.ne.s32.totalorder %s104, %s107
    %p116 = scmp.eq.s32.totalorder %s36, 1
    %p117 = por %p115, %p116
    %p118 = scmp.ne.s32.totalorder %s107, %s108
    %p119 = scmp.eq.s32.totalorder %s36, 0
    %p120 = por %p118, %p119
    %p121 = scmp.ne.s32.totalorder %s107, %s108
    %p122 = scmp.eq.s32.totalorder %s37, 1
    %p123 = por %p121, %p122
    %p125 = scmp.ne.s32.totalorder %s108, %s124
    %p126 = scmp.eq.s32.totalorder %s37, 0
    %p127 = por %p125, %p126
    %s128 = ssub.s32 %s31, %s38
    %p129 = scmp.eq.s32.totalorder %s128, 0
    %s131 = sadd.s32 %s130, 1
    %s132 = scalar_select %p129, %s130, %s131
    %p135 = pneg %p129
    %p136 = scmp.eq.s32.totalorder %s31, 1
    %p137 = por %p135, %p136
    %p138 = scmp.ne.s32.totalorder %s130, %s133
    %p139 = scmp.eq.s32.totalorder %s31, 0
    %p140 = por %p138, %p139
    %p141 = scmp.ne.s32.totalorder %s130, %s133
    %p142 = scmp.eq.s32.totalorder %s36, 1
    %p143 = por %p141, %p142
    %p144 = scmp.ne.s32.totalorder %s133, %s134
    %p145 = scmp.eq.s32.totalorder %s36, 0
    %p146 = por %p144, %p145
    %p147 = scmp.ne.s32.totalorder %s133, %s134
    %p148 = scmp.eq.s32.totalorder %s37, 1
    %p149 = por %p147, %p148
    %p151 = scmp.ne.s32.totalorder %s134, %s150
    %p152 = scmp.eq.s32.totalorder %s37, 0
    %p153 = por %p151, %p152
    %s154 = ssub.s32 %s31, %s38
    %p155 = scmp.eq.s32.totalorder %s154, 0
    %s157 = sadd.s32 %s156, 1
    %s158 = scalar_select %p155, %s156, %s157
    %p161 = pneg %p155
    %p162 = scmp.eq.s32.totalorder %s31, 1
    %p163 = por %p161, %p162
    %p164 = scmp.ne.s32.totalorder %s156, %s159
    %p165 = scmp.eq.s32.totalorder %s31, 0
    %p166 = por %p164, %p165
    %p167 = scmp.ne.s32.totalorder %s156, %s159
    %p168 = scmp.eq.s32.totalorder %s36, 1
    %p169 = por %p167, %p168
    %p170 = scmp.ne.s32.totalorder %s159, %s160
    %p171 = scmp.eq.s32.totalorder %s36, 0
    %p172 = por %p170, %p171
    %p173 = scmp.ne.s32.totalorder %s159, %s160
    %p174 = scmp.eq.s32.totalorder %s37, 1
    %p175 = por %p173, %p174
    %p177 = scmp.ne.s32.totalorder %s160, %s176
    %p178 = scmp.eq.s32.totalorder %s37, 0
    %p179 = por %p177, %p178
    %s180 = ssub.s32 %s31, %s38
    %p181 = scmp.eq.s32.totalorder %s180, 0
    %s183 = sadd.s32 %s182, 1
    %s184 = scalar_select %p181, %s182, %s183
    %p187 = pneg %p181
    %p188 = scmp.eq.s32.totalorder %s31, 1
    %p189 = por %p187, %p188
    %p190 = scmp.ne.s32.totalorder %s182, %s185
    %p191 = scmp.eq.s32.totalorder %s31, 0
    %p192 = por %p190, %p191
    %p193 = scmp.ne.s32.totalorder %s182, %s185
    %p194 = scmp.eq.s32.totalorder %s36, 1
    %p195 = por %p193, %p194
    %p196 = scmp.ne.s32.totalorder %s185, %s186
    %p197 = scmp.eq.s32.totalorder %s36, 0
    %p198 = por %p196, %p197
    %p199 = scmp.ne.s32.totalorder %s185, %s186
    %p200 = scmp.eq.s32.totalorder %s37, 1
    %p201 = por %p199, %p200
    %p203 = scmp.ne.s32.totalorder %s186, %s202
    %p204 = scmp.eq.s32.totalorder %s37, 0
    %p205 = por %p203, %p204
    %s206 = ssub.s32 %s31, %s38
    %p207 = scmp.eq.s32.totalorder %s206, 0
    %s209 = sadd.s32 %s208, 1
    %s210 = scalar_select %p207, %s208, %s209
    %p213 = pneg %p207
    %p214 = scmp.eq.s32.totalorder %s31, 1
    %p215 = por %p213, %p214
    %p216 = scmp.ne.s32.totalorder %s208, %s211
    %p217 = scmp.eq.s32.totalorder %s31, 0
    %p218 = por %p216, %p217
    %p219 = scmp.ne.s32.totalorder %s208, %s211
    %p220 = scmp.eq.s32.totalorder %s36, 1
    %p221 = por %p219, %p220
    %p222 = scmp.ne.s32.totalorder %s211, %s212
    %p223 = scmp.eq.s32.totalorder %s36, 0
    %p224 = por %p222, %p223
    %p225 = scmp.ne.s32.totalorder %s211, %s212
    %p226 = scmp.eq.s32.totalorder %s37, 1
    %p227 = por %p225, %p226
    %p229 = scmp.ne.s32.totalorder %s212, %s228
    %p230 = scmp.eq.s32.totalorder %s37, 0
    %p231 = por %p229, %p230
    %s232 = ssub.s32 %s31, %s38
    %p233 = scmp.eq.s32.totalorder %s232, 0
    %s235 = sadd.s32 %s234, 1
    %s236 = scalar_select %p233, %s234, %s235
    %p239 = pneg %p233
    %p240 = scmp.eq.s32.totalorder %s31, 1
    %p241 = por %p239, %p240
    %p242 = scmp.ne.s32.totalorder %s234, %s237
    %p243 = scmp.eq.s32.totalorder %s31, 0
    %p244 = por %p242, %p243
    %p245 = scmp.ne.s32.totalorder %s234, %s237
    %p246 = scmp.eq.s32.totalorder %s36, 1
    %p247 = por %p245, %p246
    %p248 = scmp.ne.s32.totalorder %s237, %s238
    %p249 = scmp.eq.s32.totalorder %s36, 0
    %p250 = por %p248, %p249
    %p251 = scmp.ne.s32.totalorder %s237, %s238
    %p252 = scmp.eq.s32.totalorder %s37, 1
    %p253 = por %p251, %p252
    %p255 = scmp.ne.s32.totalorder %s238, %s254
    %p256 = scmp.eq.s32.totalorder %s37, 0
    %p257 = por %p255, %p256
    %s258 = ssub.s32 %s31, %s38
    %p259 = scmp.eq.s32.totalorder %s258, 0
    %s261 = sadd.s32 %s260, 1
    %s262 = scalar_select %p259, %s260, %s261
    %p265 = pneg %p259
    %p266 = scmp.eq.s32.totalorder %s31, 1
    %p267 = por %p265, %p266
    %p268 = scmp.ne.s32.totalorder %s260, %s263
    %p269 = scmp.eq.s32.totalorder %s31, 0
    %p270 = por %p268, %p269
    %p271 = scmp.ne.s32.totalorder %s260, %s263
    %p272 = scmp.eq.s32.totalorder %s36, 1
    %p273 = por %p271, %p272
    %p274 = scmp.ne.s32.totalorder %s263, %s264
    %p275 = scmp.eq.s32.totalorder %s36, 0
    %p276 = por %p274, %p275
    %p277 = scmp.ne.s32.totalorder %s263, %s264
    %p278 = scmp.eq.s32.totalorder %s37, 1
    %p279 = por %p277, %p278
    %p281 = scmp.ne.s32.totalorder %s264, %s280
    %p282 = scmp.eq.s32.totalorder %s37, 0
    %p283 = por %p281, %p282
    %s284 = ssub.s32 %s31, %s38
    %p285 = scmp.eq.s32.totalorder %s284, 0
    %s287 = sadd.s32 %s286, 1
    %s288 = scalar_select %p285, %s286, %s287
    %p291 = pneg %p285
    %p292 = scmp.eq.s32.totalorder %s31, 1
    %p293 = por %p291, %p292
    %p294 = scmp.ne.s32.totalorder %s286, %s289
    %p295 = scmp.eq.s32.totalorder %s31, 0
    %p296 = por %p294, %p295
    %p297 = scmp.ne.s32.totalorder %s286, %s289
    %p298 = scmp.eq.s32.totalorder %s36, 1
    %p299 = por %p297, %p298
    %p300 = scmp.ne.s32.totalorder %s289, %s290
    %p301 = scmp.eq.s32.totalorder %s36, 0
    %p302 = por %p300, %p301
    %p303 = scmp.ne.s32.totalorder %s289, %s290
    %p304 = scmp.eq.s32.totalorder %s37, 1
    %p305 = por %p303, %p304
    %p307 = scmp.ne.s32.totalorder %s290, %s306
    %p308 = scmp.eq.s32.totalorder %s37, 0
    %p309 = por %p307, %p308
    %s310 = ssub.s32 %s31, %s38
    %p311 = scmp.eq.s32.totalorder %s310, 0
    %s313 = sadd.s32 %s312, 1
    %s314 = scalar_select %p311, %s312, %s313
    %p317 = pneg %p311
    %p318 = scmp.eq.s32.totalorder %s31, 1
    %p319 = por %p317, %p318
    %p320 = scmp.ne.s32.totalorder %s312, %s315
    %p321 = scmp.eq.s32.totalorder %s31, 0
    %p322 = por %p320, %p321
    %p323 = scmp.ne.s32.totalorder %s312, %s315
    %p324 = scmp.eq.s32.totalorder %s36, 1
    %p325 = por %p323, %p324
    %p326 = scmp.ne.s32.totalorder %s315, %s316
    %p327 = scmp.eq.s32.totalorder %s36, 0
    %p328 = por %p326, %p327
    %p329 = scmp.ne.s32.totalorder %s315, %s316
    %p330 = scmp.eq.s32.totalorder %s37, 1
    %p331 = por %p329, %p330
    %p333 = scmp.ne.s32.totalorder %s316, %s332
    %p334 = scmp.eq.s32.totalorder %s37, 0
    %p335 = por %p333, %p334
    %s336 = ssub.s32 %s31, %s38
    %p337 = scmp.eq.s32.totalorder %s336, 0
    %s339 = sadd.s32 %s338, 1
    %s340 = scalar_select %p337, %s338, %s339
    %p343 = pneg %p337
    %p344 = scmp.eq.s32.totalorder %s31, 1
    %p345 = por %p343, %p344
    %p346 = scmp.ne.s32.totalorder %s338, %s341
    %p347 = scmp.eq.s32.totalorder %s31, 0
    %p348 = por %p346, %p347
    %p349 = scmp.ne.s32.totalorder %s338, %s341
    %p350 = scmp.eq.s32.totalorder %s36, 1
    %p351 = por %p349, %p350
    %p352 = scmp.ne.s32.totalorder %s341, %s342
    %p353 = scmp.eq.s32.totalorder %s36, 0
    %p354 = por %p352, %p353
    %p355 = scmp.ne.s32.totalorder %s341, %s342
    %p356 = scmp.eq.s32.totalorder %s37, 1
    %p357 = por %p355, %p356
    %p359 = scmp.ne.s32.totalorder %s342, %s358
    %p360 = scmp.eq.s32.totalorder %s37, 0
    %p361 = por %p359, %p360
    %s362 = ssub.s32 %s31, %s38
    %p363 = scmp.eq.s32.totalorder %s362, 0
    %s365 = sadd.s32 %s364, 1
    %s366 = scalar_select %p363, %s364, %s365
    %p369 = pneg %p363
    %p370 = scmp.eq.s32.totalorder %s31, 1
    %p371 = por %p369, %p370
    %p372 = scmp.ne.s32.totalorder %s364, %s367
    %p373 = scmp.eq.s32.totalorder %s31, 0
    %p374 = por %p372, %p373
    %p375 = scmp.ne.s32.totalorder %s364, %s367
    %p376 = scmp.eq.s32.totalorder %s36, 1
    %p377 = por %p375, %p376
    %p378 = scmp.ne.s32.totalorder %s367, %s368
    %p379 = scmp.eq.s32.totalorder %s36, 0
    %p380 = por %p378, %p379
    %p381 = scmp.ne.s32.totalorder %s367, %s368
    %p382 = scmp.eq.s32.totalorder %s37, 1
    %p383 = por %p381, %p382
    %p385 = scmp.ne.s32.totalorder %s368, %s384
    %p386 = scmp.eq.s32.totalorder %s37, 0
    %p387 = por %p385, %p386
    %s388 = ssub.s32 %s31, %s38
    %p389 = scmp.eq.s32.totalorder %s388, 0
    %s391 = sadd.s32 %s390, 1
    %s392 = scalar_select %p389, %s390, %s391
    %p395 = pneg %p389
    %p396 = scmp.eq.s32.totalorder %s31, 1
    %p397 = por %p395, %p396
    %p398 = scmp.ne.s32.totalorder %s390, %s393
    %p399 = scmp.eq.s32.totalorder %s31, 0
    %p400 = por %p398, %p399
    %p401 = scmp.ne.s32.totalorder %s390, %s393
    %p402 = scmp.eq.s32.totalorder %s36, 1
    %p403 = por %p401, %p402
    %p404 = scmp.ne.s32.totalorder %s393, %s394
    %p405 = scmp.eq.s32.totalorder %s36, 0
    %p406 = por %p404, %p405
    %p407 = scmp.ne.s32.totalorder %s393, %s394
    %p408 = scmp.eq.s32.totalorder %s37, 1
    %p409 = por %p407, %p408
    %p411 = scmp.ne.s32.totalorder %s394, %s410
    %p412 = scmp.eq.s32.totalorder %s37, 0
    %p413 = por %p411, %p412
    %s414 = ssub.s32 %s31, %s38
    %p415 = scmp.eq.s32.totalorder %s414, 0
    %s417 = sadd.s32 %s416, 1
    %s418 = scalar_select %p415, %s416, %s417
    %p421 = pneg %p415
    %p422 = scmp.eq.s32.totalorder %s31, 1
    %p423 = por %p421, %p422
    %p424 = scmp.ne.s32.totalorder %s416, %s419
    %p425 = scmp.eq.s32.totalorder %s31, 0
    %p426 = por %p424, %p425
    %p427 = scmp.ne.s32.totalorder %s416, %s419
    %p428 = scmp.eq.s32.totalorder %s36, 1
    %p429 = por %p427, %p428
    %p430 = scmp.ne.s32.totalorder %s419, %s420
    %p431 = scmp.eq.s32.totalorder %s36, 0
    %p432 = por %p430, %p431
    %p433 = scmp.ne.s32.totalorder %s419, %s420
    %p434 = scmp.eq.s32.totalorder %s37, 1
    %p435 = por %p433, %p434
    %p437 = scmp.ne.s32.totalorder %s420, %s436
    %p438 = scmp.eq.s32.totalorder %s37, 0
    %p439 = por %p437, %p438
    %s440 = ssub.s32 %s31, %s38
    %p441 = scmp.eq.s32.totalorder %s440, 0
    %s443 = sadd.s32 %s442, 1
    %s444 = scalar_select %p441, %s442, %s443
    %p447 = pneg %p441
    %p448 = scmp.eq.s32.totalorder %s31, 1
    %p449 = por %p447, %p448
    %p450 = scmp.ne.s32.totalorder %s442, %s445
    %p451 = scmp.eq.s32.totalorder %s31, 0
    %p452 = por %p450, %p451
    %p453 = scmp.ne.s32.totalorder %s442, %s445
    %p454 = scmp.eq.s32.totalorder %s36, 1
    %p455 = por %p453, %p454
    %p456 = scmp.ne.s32.totalorder %s445, %s446
    %p457 = scmp.eq.s32.totalorder %s36, 0
    %p458 = por %p456, %p457
    %p459 = scmp.ne.s32.totalorder %s445, %s446
    %p460 = scmp.eq.s32.totalorder %s37, 1
    %p461 = por %p459, %p460
    %p463 = scmp.ne.s32.totalorder %s446, %s462
    %p464 = scmp.eq.s32.totalorder %s37, 0
    %p465 = por %p463, %p464
    %s466 = ssub.s32 %s31, %s38
    %p467 = scmp.eq.s32.totalorder %s466, 0
    %s469 = sadd.s32 %s468, 1
    %s470 = scalar_select %p467, %s468, %s469
    %p473 = pneg %p467
    %p474 = scmp.eq.s32.totalorder %s31, 1
    %p475 = por %p473, %p474
    %p476 = scmp.ne.s32.totalorder %s468, %s471
    %p477 = scmp.eq.s32.totalorder %s31, 0
    %p478 = por %p476, %p477
    %p479 = scmp.ne.s32.totalorder %s468, %s471
    %p480 = scmp.eq.s32.totalorder %s36, 1
    %p481 = por %p479, %p480
    %p482 = scmp.ne.s32.totalorder %s471, %s472
    %p483 = scmp.eq.s32.totalorder %s36, 0
    %p484 = por %p482, %p483
    %p485 = scmp.ne.s32.totalorder %s471, %s472
    %p486 = scmp.eq.s32.totalorder %s37, 1
    %p487 = por %p485, %p486
    %p489 = scmp.ne.s32.totalorder %s472, %s488
    %p490 = scmp.eq.s32.totalorder %s37, 0
    %p491 = por %p489, %p490
    %s492 = ssub.s32 %s31, %s38
    %p493 = scmp.eq.s32.totalorder %s492, 0
    %s495 = sadd.s32 %s494, 1
    %s496 = scalar_select %p493, %s494, %s495
    %p499 = pneg %p493
    %p500 = scmp.eq.s32.totalorder %s31, 1
    %p501 = por %p499, %p500
    %p502 = scmp.ne.s32.totalorder %s494, %s497
    %p503 = scmp.eq.s32.totalorder %s31, 0
    %p504 = por %p502, %p503
    %p505 = scmp.ne.s32.totalorder %s494, %s497
    %p506 = scmp.eq.s32.totalorder %s36, 1
    %p507 = por %p505, %p506
    %p508 = scmp.ne.s32.totalorder %s497, %s498
    %p509 = scmp.eq.s32.totalorder %s36, 0
    %p510 = por %p508, %p509
    %p511 = scmp.ne.s32.totalorder %s497, %s498
    %p512 = scmp.eq.s32.totalorder %s37, 1
    %p513 = por %p511, %p512
    %p515 = scmp.ne.s32.totalorder %s498, %s514
    %p516 = scmp.eq.s32.totalorder %s37, 0
    %p517 = por %p515, %p516
    %s518 = ssub.s32 %s31, %s38
    %p519 = scmp.eq.s32.totalorder %s518, 0
    %s521 = sadd.s32 %s520, 1
    %s522 = scalar_select %p519, %s520, %s521
    %p525 = pneg %p519
    %p526 = scmp.eq.s32.totalorder %s31, 1
    %p527 = por %p525, %p526
    %p528 = scmp.ne.s32.totalorder %s520, %s523
    %p529 = scmp.eq.s32.totalorder %s31, 0
    %p530 = por %p528, %p529
    %p531 = scmp.ne.s32.totalorder %s520, %s523
    %p532 = scmp.eq.s32.totalorder %s36, 1
    %p533 = por %p531, %p532
    %p534 = scmp.ne.s32.totalorder %s523, %s524
    %p535 = scmp.eq.s32.totalorder %s36, 0
    %p536 = por %p534, %p535
    %p537 = scmp.ne.s32.totalorder %s523, %s524
    %p538 = scmp.eq.s32.totalorder %s37, 1
    %p539 = por %p537, %p538
    %p541 = scmp.ne.s32.totalorder %s524, %s540
    %p542 = scmp.eq.s32.totalorder %s37, 0
    %p543 = por %p541, %p542
    %s544 = ssub.s32 %s31, %s38
    %p545 = scmp.eq.s32.totalorder %s544, 0
    %s547 = sadd.s32 %s546, 1
    %s548 = scalar_select %p545, %s546, %s547
    %p551 = pneg %p545
    %p552 = scmp.eq.s32.totalorder %s31, 1
    %p553 = por %p551, %p552
    %p554 = scmp.ne.s32.totalorder %s546, %s549
    %p555 = scmp.eq.s32.totalorder %s31, 0
    %p556 = por %p554, %p555
    %p557 = scmp.ne.s32.totalorder %s546, %s549
    %p558 = scmp.eq.s32.totalorder %s36, 1
    %p559 = por %p557, %p558
    %p560 = scmp.ne.s32.totalorder %s549, %s550
    %p561 = scmp.eq.s32.totalorder %s36, 0
    %p562 = por %p560, %p561
    %p563 = scmp.ne.s32.totalorder %s549, %s550
    %p564 = scmp.eq.s32.totalorder %s37, 1
    %p565 = por %p563, %p564
    %p567 = scmp.ne.s32.totalorder %s550, %s566
    %p568 = scmp.eq.s32.totalorder %s37, 0
    %p569 = por %p567, %p568
    %s570 = ssub.s32 %s31, %s38
    %p571 = scmp.eq.s32.totalorder %s570, 0
    %s573 = sadd.s32 %s572, 1
    %s574 = scalar_select %p571, %s572, %s573
    %p577 = pneg %p571
    %p578 = scmp.eq.s32.totalorder %s31, 1
    %p579 = por %p577, %p578
    %p580 = scmp.ne.s32.totalorder %s572, %s575
    %p581 = scmp.eq.s32.totalorder %s31, 0
    %p582 = por %p580, %p581
    %p583 = scmp.ne.s32.totalorder %s572, %s575
    %p584 = scmp.eq.s32.totalorder %s36, 1
    %p585 = por %p583, %p584
    %p586 = scmp.ne.s32.totalorder %s575, %s576
    %p587 = scmp.eq.s32.totalorder %s36, 0
    %p588 = por %p586, %p587
    %p589 = scmp.ne.s32.totalorder %s575, %s576
    %p590 = scmp.eq.s32.totalorder %s37, 1
    %p591 = por %p589, %p590
    %p593 = scmp.ne.s32.totalorder %s576, %s592
    %p594 = scmp.eq.s32.totalorder %s37, 0
    %p595 = por %p593, %p594
    %s596 = ssub.s32 %s31, %s38
    %p597 = scmp.eq.s32.totalorder %s596, 0
    %s599 = sadd.s32 %s598, 1
    %s600 = scalar_select %p597, %s598, %s599
    %p603 = pneg %p597
    %p604 = scmp.eq.s32.totalorder %s31, 1
    %p605 = por %p603, %p604
    %p606 = scmp.ne.s32.totalorder %s598, %s601
    %p607 = scmp.eq.s32.totalorder %s31, 0
    %p608 = por %p606, %p607
    %p609 = scmp.ne.s32.totalorder %s598, %s601
    %p610 = scmp.eq.s32.totalorder %s36, 1
    %p611 = por %p609, %p610
    %p612 = scmp.ne.s32.totalorder %s601, %s602
    %p613 = scmp.eq.s32.totalorder %s36, 0
    %p614 = por %p612, %p613
    %p615 = scmp.ne.s32.totalorder %s601, %s602
    %p616 = scmp.eq.s32.totalorder %s37, 1
    %p617 = por %p615, %p616
    %p619 = scmp.ne.s32.totalorder %s602, %s618
    %p620 = scmp.eq.s32.totalorder %s37, 0
    %p621 = por %p619, %p620
    %s623 = sadd.s32 %s622, 1
    %p626 = scmp.eq.s32.totalorder %s31, 1
    %p627 = scmp.ne.s32.totalorder %s622, %s624
    %p628 = scmp.eq.s32.totalorder %s31, 0
    %p629 = por %p627, %p628
    %p630 = scmp.ne.s32.totalorder %s622, %s624
    %p631 = scmp.eq.s32.totalorder %s36, 1
    %p632 = por %p630, %p631
    %p633 = scmp.ne.s32.totalorder %s624, %s625
    %p634 = scmp.eq.s32.totalorder %s36, 0
    %p635 = por %p633, %p634
    %p636 = scmp.ne.s32.totalorder %s624, %s625
    %p637 = scmp.eq.s32.totalorder %s37, 1
    %p638 = por %p636, %p637
    %p640 = scmp.ne.s32.totalorder %s625, %s639
    %p641 = scmp.eq.s32.totalorder %s37, 0
    %p642 = por %p640, %p641
    %s644 = sadd.s32 %s643, 1
    %p647 = scmp.eq.s32.totalorder %s31, 1
    %p648 = scmp.ne.s32.totalorder %s643, %s645
    %p649 = scmp.eq.s32.totalorder %s31, 0
    %p650 = por %p648, %p649
    %p651 = scmp.ne.s32.totalorder %s643, %s645
    %p652 = scmp.eq.s32.totalorder %s36, 1
    %p653 = por %p651, %p652
    %p654 = scmp.ne.s32.totalorder %s645, %s646
    %p655 = scmp.eq.s32.totalorder %s36, 0
    %p656 = por %p654, %p655
    %p657 = scmp.ne.s32.totalorder %s645, %s646
    %p658 = scmp.eq.s32.totalorder %s37, 1
    %p659 = por %p657, %p658
    %p661 = scmp.ne.s32.totalorder %s646, %s660
    %p662 = scmp.eq.s32.totalorder %s37, 0
    %p663 = por %p661, %p662
    %s665 = sadd.s32 %s664, 1
    %p668 = scmp.eq.s32.totalorder %s31, 1
    %p669 = scmp.ne.s32.totalorder %s664, %s666
    %p670 = scmp.eq.s32.totalorder %s31, 0
    %p671 = por %p669, %p670
    %p672 = scmp.ne.s32.totalorder %s664, %s666
    %p673 = scmp.eq.s32.totalorder %s36, 1
    %p674 = por %p672, %p673
    %p675 = scmp.ne.s32.totalorder %s666, %s667
    %p676 = scmp.eq.s32.totalorder %s36, 0
    %p677 = por %p675, %p676
    %p678 = scmp.ne.s32.totalorder %s666, %s667
    %p679 = scmp.eq.s32.totalorder %s37, 1
    %p680 = por %p678, %p679
    %p682 = scmp.ne.s32.totalorder %s667, %s681
    %p683 = scmp.eq.s32.totalorder %s37, 0
    %p684 = por %p682, %p683
    %p685 = scmp.le.s32.totalorder 1, %s31
    %p686 = scmp.lt.s32.totalorder %s31, 3
    %p687 = pnand %p685, %p686
    %p688 = pneg %p687
    // Predicated region
    $region9: #{summarizer_transformer_forward.4} parent=5 // pred_check
      _
    $region10: #{summarizer_transformer_forward.4} parent=5 // pred_check_branch
      %690 = sbr.rel (%p687) target = $region12
    $region11: #{summarizer_transformer_forward.4} parent=5 // pred_region
      %s691 = ssub.s32 %s31, 1
      // Predicated region
      $region13: #{summarizer_transformer_forward.4} parent=11 // pred_check
        %p692 = pneg %p52
      $region14: #{summarizer_transformer_forward.4} parent=11 // pred_check_branch
        %694 = sbr.rel (%p692) target = $region16
      $region15: #{summarizer_transformer_forward.4} parent=11 // pred_region
        _
      $region16: #{summarizer_transformer_forward.4} parent=11 // pred_fallthru
        _
      // Predicated region
      $region17: #{summarizer_transformer_forward.4} parent=11 // pred_check
        %p695 = pneg %p73
      $region18: #{summarizer_transformer_forward.4} parent=11 // pred_check_branch
        %697 = sbr.rel (%p695) target = $region20
      $region19: #{summarizer_transformer_forward.4} parent=11 // pred_region
        _
      $region20: #{summarizer_transformer_forward.4} parent=11 // pred_fallthru
        _
      // Predicated region
      $region21: #{summarizer_transformer_forward.4} parent=11 // pred_check
        %p698 = pneg %p94
      $region22: #{summarizer_transformer_forward.4} parent=11 // pred_check_branch
        %700 = sbr.rel (%p698) target = $region24
      $region23: #{summarizer_transformer_forward.4} parent=11 // pred_region
        _
      $region24: #{summarizer_transformer_forward.4} parent=11 // pred_fallthru
        _
      // Predicated region
      $region25: #{summarizer_transformer_forward.4} parent=11 // pred_check
        %p701 = pneg %p635
      $region26: #{summarizer_transformer_forward.4} parent=11 // pred_check_branch
        %703 = sbr.rel (%p701) target = $region28
      $region27: #{summarizer_transformer_forward.4} parent=11 // pred_region
        _
      $region28: #{summarizer_transformer_forward.4} parent=11 // pred_fallthru
        _
      // Predicated region
      $region29: #{summarizer_transformer_forward.4} parent=11 // pred_check
        %p704 = pneg %p656
      $region30: #{summarizer_transformer_forward.4} parent=11 // pred_check_branch
        %706 = sbr.rel (%p704) target = $region32
      $region31: #{summarizer_transformer_forward.4} parent=11 // pred_region
        _
      $region32: #{summarizer_transformer_forward.4} parent=11 // pred_fallthru
        _
    $region12: #{summarizer_transformer_forward.4} parent=5 // pred_fallthru
      _
    %p707 = scmp.lt.s32.totalorder %s31, 2
    // Predicated region
    $region33: #{summarizer_transformer_forward.4} parent=5 // pred_check
      %p708 = pneg %p707
    $region34: #{summarizer_transformer_forward.4} parent=5 // pred_check_branch
      %710 = sbr.rel (%p708) target = $region36
    $region35: #{summarizer_transformer_forward.4} parent=5 // pred_region
      // Predicated region
      $region37: #{summarizer_transformer_forward.4} parent=35 // pred_check
        %p711 = pneg %p114
      $region38: #{summarizer_transformer_forward.4} parent=35 // pred_check_branch
        %713 = sbr.rel (%p711) target = $region40
      $region39: #{summarizer_transformer_forward.4} parent=35 // pred_region
        %p714 = scmp.lt.s32.totalorder %s31, 1
        %s715 = scalar_select %p714, %s31, 1
        %s716 = smul.addr %s715, 4
        %s717 = smul.addr %s716, 4
        %s718 = scalar_lea.vmem %s3, %s717
      $region40: #{summarizer_transformer_forward.4} parent=35 // pred_fallthru
        _
      // Predicated region
      $region41: #{summarizer_transformer_forward.4} parent=35 // pred_check
        %p719 = pneg %p140
      $region42: #{summarizer_transformer_forward.4} parent=35 // pred_check_branch
        %721 = sbr.rel (%p719) target = $region44
      $region43: #{summarizer_transformer_forward.4} parent=35 // pred_region
        %p722 = scmp.lt.s32.totalorder %s31, 1
        %s723 = scalar_select %p722, %s31, 1
        %s724 = scalar_lea.vmem %s4, %s723
      $region44: #{summarizer_transformer_forward.4} parent=35 // pred_fallthru
        _
      // Predicated region
      $region45: #{summarizer_transformer_forward.4} parent=35 // pred_check
        %p725 = pneg %p166
      $region46: #{summarizer_transformer_forward.4} parent=35 // pred_check_branch
        %727 = sbr.rel (%p725) target = $region48
      $region47: #{summarizer_transformer_forward.4} parent=35 // pred_region
        %p728 = scmp.lt.s32.totalorder %s31, 1
        %s729 = scalar_select %p728, %s31, 1
        %s730 = smul.addr %s729, 4
        %s731 = smul.addr %s730, 4
        %s732 = scalar_lea.vmem %s5, %s731
      $region48: #{summarizer_transformer_forward.4} parent=35 // pred_fallthru
        _
      // Predicated region
      $region49: #{summarizer_transformer_forward.4} parent=35 // pred_check
        %p733 = pneg %p192
      $region50: #{summarizer_transformer_forward.4} parent=35 // pred_check_branch
        %735 = sbr.rel (%p733) target = $region52
      $region51: #{summarizer_transformer_forward.4} parent=35 // pred_region
        %p736 = scmp.lt.s32.totalorder %s31, 1
        %s737 = scalar_select %p736, %s31, 1
        %s738 = scalar_lea.vmem %s6, %s737
      $region52: #{summarizer_transformer_forward.4} parent=35 // pred_fallthru
        _
      // Predicated region
      $region53: #{summarizer_transformer_forward.4} parent=35 // pred_check
        %p739 = pneg %p218
      $region54: #{summarizer_transformer_forward.4} parent=35 // pred_check_branch
        %741 = sbr.rel (%p739) target = $region56
      $region55: #{summarizer_transformer_forward.4} parent=35 // pred_region
        %p742 = scmp.lt.s32.totalorder %s31, 1
        %s743 = scalar_select %p742, %s31, 1
        %s744 = scalar_lea.vmem %s7, %s743
      $region56: #{summarizer_transformer_forward.4} parent=35 // pred_fallthru
        _
      // Predicated region
      $region57: #{summarizer_transformer_forward.4} parent=35 // pred_check
        %p745 = pneg %p244
      $region58: #{summarizer_transformer_forward.4} parent=35 // pred_check_branch
        %747 = sbr.rel (%p745) target = $region60
      $region59: #{summarizer_transformer_forward.4} parent=35 // pred_region
        %p748 = scmp.lt.s32.totalorder %s31, 1
        %s749 = scalar_select %p748, %s31, 1
        %s750 = scalar_lea.vmem %s8, %s749
      $region60: #{summarizer_transformer_forward.4} parent=35 // pred_fallthru
        _
      // Predicated region
      $region61: #{summarizer_transformer_forward.4} parent=35 // pred_check
        %p751 = pneg %p270
      $region62: #{summarizer_transformer_forward.4} parent=35 // pred_check_branch
        %753 = sbr.rel (%p751) target = $region64
      $region63: #{summarizer_transformer_forward.4} parent=35 // pred_region
        %p754 = scmp.lt.s32.totalorder %s31, 1
        %s755 = scalar_select %p754, %s31, 1
        %s756 = smul.addr %s755, 4
        %s757 = smul.addr %s756, 4
        %s758 = scalar_lea.vmem %s9, %s757
      $region64: #{summarizer_transformer_forward.4} parent=35 // pred_fallthru
        _
      // Predicated region
      $region65: #{summarizer_transformer_forward.4} parent=35 // pred_check
        %p759 = pneg %p296
      $region66: #{summarizer_transformer_forward.4} parent=35 // pred_check_branch
        %761 = sbr.rel (%p759) target = $region68
      $region67: #{summarizer_transformer_forward.4} parent=35 // pred_region
        %p762 = scmp.lt.s32.totalorder %s31, 1
        %s763 = scalar_select %p762, %s31, 1
        %s764 = scalar_lea.vmem %s10, %s763
      $region68: #{summarizer_transformer_forward.4} parent=35 // pred_fallthru
        _
      // Predicated region
      $region69: #{summarizer_transformer_forward.4} parent=35 // pred_check
        %p765 = pneg %p322
      $region70: #{summarizer_transformer_forward.4} parent=35 // pred_check_branch
        %767 = sbr.rel (%p765) target = $region72
      $region71: #{summarizer_transformer_forward.4} parent=35 // pred_region
        %p768 = scmp.lt.s32.totalorder %s31, 1
        %s769 = scalar_select %p768, %s31, 1
        %s770 = smul.addr %s769, 4
        %s771 = smul.addr %s770, 4
        %s772 = scalar_lea.vmem %s11, %s771
      $region72: #{summarizer_transformer_forward.4} parent=35 // pred_fallthru
        _
      // Predicated region
      $region73: #{summarizer_transformer_forward.4} parent=35 // pred_check
        %p773 = pneg %p348
      $region74: #{summarizer_transformer_forward.4} parent=35 // pred_check_branch
        %775 = sbr.rel (%p773) target = $region76
      $region75: #{summarizer_transformer_forward.4} parent=35 // pred_region
        %p776 = scmp.lt.s32.totalorder %s31, 1
        %s777 = scalar_select %p776, %s31, 1
        %s778 = scalar_lea.vmem %s12, %s777
      $region76: #{summarizer_transformer_forward.4} parent=35 // pred_fallthru
        _
      // Predicated region
      $region77: #{summarizer_transformer_forward.4} parent=35 // pred_check
        %p779 = pneg %p374
      $region78: #{summarizer_transformer_forward.4} parent=35 // pred_check_branch
        %781 = sbr.rel (%p779) target = $region80
      $region79: #{summarizer_transformer_forward.4} parent=35 // pred_region
        %p782 = scmp.lt.s32.totalorder %s31, 1
        %s783 = scalar_select %p782, %s31, 1
        %s784 = smul.addr %s783, 4
        %s785 = smul.addr %s784, 4
        %s786 = scalar_lea.vmem %s13, %s785
      $region80: #{summarizer_transformer_forward.4} parent=35 // pred_fallthru
        _
      // Predicated region
      $region81: #{summarizer_transformer_forward.4} parent=35 // pred_check
        %p787 = pneg %p400
      $region82: #{summarizer_transformer_forward.4} parent=35 // pred_check_branch
        %789 = sbr.rel (%p787) target = $region84
      $region83: #{summarizer_transformer_forward.4} parent=35 // pred_region
        %p790 = scmp.lt.s32.totalorder %s31, 1
        %s791 = scalar_select %p790, %s31, 1
        %s792 = scalar_lea.vmem %s14, %s791
      $region84: #{summarizer_transformer_forward.4} parent=35 // pred_fallthru
        _
      // Predicated region
      $region85: #{summarizer_transformer_forward.4} parent=35 // pred_check
        %p793 = pneg %p426
      $region86: #{summarizer_transformer_forward.4} parent=35 // pred_check_branch
        %795 = sbr.rel (%p793) target = $region88
      $region87: #{summarizer_transformer_forward.4} parent=35 // pred_region
        %p796 = scmp.lt.s32.totalorder %s31, 1
        %s797 = scalar_select %p796, %s31, 1
        %s798 = scalar_lea.vmem %s15, %s797
      $region88: #{summarizer_transformer_forward.4} parent=35 // pred_fallthru
        _
      // Predicated region
      $region89: #{summarizer_transformer_forward.4} parent=35 // pred_check
        %p799 = pneg %p452
      $region90: #{summarizer_transformer_forward.4} parent=35 // pred_check_branch
        %801 = sbr.rel (%p799) target = $region92
      $region91: #{summarizer_transformer_forward.4} parent=35 // pred_region
        %p802 = scmp.lt.s32.totalorder %s31, 1
        %s803 = scalar_select %p802, %s31, 1
        %s804 = scalar_lea.vmem %s16, %s803
      $region92: #{summarizer_transformer_forward.4} parent=35 // pred_fallthru
        _
      // Predicated region
      $region93: #{summarizer_transformer_forward.4} parent=35 // pred_check
        %p805 = pneg %p478
      $region94: #{summarizer_transformer_forward.4} parent=35 // pred_check_branch
        %807 = sbr.rel (%p805) target = $region96
      $region95: #{summarizer_transformer_forward.4} parent=35 // pred_region
        %p808 = scmp.lt.s32.totalorder %s31, 1
        %s809 = scalar_select %p808, %s31, 1
        %s810 = smul.addr %s809, 4
        %s811 = smul.addr %s810, 4
        %s812 = scalar_lea.vmem %s17, %s811
      $region96: #{summarizer_transformer_forward.4} parent=35 // pred_fallthru
        _
      // Predicated region
      $region97: #{summarizer_transformer_forward.4} parent=35 // pred_check
        %p813 = pneg %p504
      $region98: #{summarizer_transformer_forward.4} parent=35 // pred_check_branch
        %815 = sbr.rel (%p813) target = $region100
      $region99: #{summarizer_transformer_forward.4} parent=35 // pred_region
        %p816 = scmp.lt.s32.totalorder %s31, 1
        %s817 = scalar_select %p816, %s31, 1
        %s818 = scalar_lea.vmem %s18, %s817
      $region100: #{summarizer_transformer_forward.4} parent=35 // pred_fallthru
        _
      // Predicated region
      $region101: #{summarizer_transformer_forward.4} parent=35 // pred_check
        %p819 = pneg %p530
      $region102: #{summarizer_transformer_forward.4} parent=35 // pred_check_branch
        %821 = sbr.rel (%p819) target = $region104
      $region103: #{summarizer_transformer_forward.4} parent=35 // pred_region
        %p822 = scmp.lt.s32.totalorder %s31, 1
        %s823 = scalar_select %p822, %s31, 1
        %s824 = smul.addr %s823, 8
        %s825 = smul.addr %s824, 4
        %s826 = scalar_lea.vmem %s19, %s825
      $region104: #{summarizer_transformer_forward.4} parent=35 // pred_fallthru
        _
      // Predicated region
      $region105: #{summarizer_transformer_forward.4} parent=35 // pred_check
        %p827 = pneg %p556
      $region106: #{summarizer_transformer_forward.4} parent=35 // pred_check_branch
        %829 = sbr.rel (%p827) target = $region108
      $region107: #{summarizer_transformer_forward.4} parent=35 // pred_region
        %p830 = scmp.lt.s32.totalorder %s31, 1
        %s831 = scalar_select %p830, %s31, 1
        %s832 = scalar_lea.vmem %s20, %s831
      $region108: #{summarizer_transformer_forward.4} parent=35 // pred_fallthru
        _
      // Predicated region
      $region109: #{summarizer_transformer_forward.4} parent=35 // pred_check
        %p833 = pneg %p582
      $region110: #{summarizer_transformer_forward.4} parent=35 // pred_check_branch
        %835 = sbr.rel (%p833) target = $region112
      $region111: #{summarizer_transformer_forward.4} parent=35 // pred_region
        %p836 = scmp.lt.s32.totalorder %s31, 1
        %s837 = scalar_select %p836, %s31, 1
        %s838 = scalar_lea.vmem %s21, %s837
      $region112: #{summarizer_transformer_forward.4} parent=35 // pred_fallthru
        _
      // Predicated region
      $region113: #{summarizer_transformer_forward.4} parent=35 // pred_check
        %p839 = pneg %p608
      $region114: #{summarizer_transformer_forward.4} parent=35 // pred_check_branch
        %841 = sbr.rel (%p839) target = $region116
      $region115: #{summarizer_transformer_forward.4} parent=35 // pred_region
        %p842 = scmp.lt.s32.totalorder %s31, 1
        %s843 = scalar_select %p842, %s31, 1
        %s844 = scalar_lea.vmem %s22, %s843
      $region116: #{summarizer_transformer_forward.4} parent=35 // pred_fallthru
        _
    $region36: #{summarizer_transformer_forward.4} parent=5 // pred_fallthru
      _
    %p845 = scmp.le.s32.totalorder 1, %s31
    %p846 = scmp.lt.s32.totalorder %s31, 3
    %p847 = pnand %p845, %p846
    %p848 = pneg %p847
    // Predicated region
    $region117: #{summarizer_transformer_forward.4} parent=5 // pred_check
      _
    $region118: #{summarizer_transformer_forward.4} parent=5 // pred_check_branch
      %850 = sbr.rel (%p847) target = $region120
    $region119: #{summarizer_transformer_forward.4} parent=5 // pred_region
      %s851 = ssub.s32 %s31, 1
      %p852 = pneg %p52
      %p853 = pneg %p49
      %p854 = pneg %p73
      %p855 = pneg %p70
      %p856 = pneg %p94
      %p857 = pneg %p91
      %p858 = scmp.lt.s32.totalorder %s36, 1
      %s859 = scalar_select %p858, %s36, 1
      %s860 = smul.addr %s859, 4
      %s861 = smul.addr %s860, 4
      %s862 = scalar_lea.vmem %s3, %s861
      %p863 = pneg %p120
      %p864 = pneg %p117
      %p865 = scmp.lt.s32.totalorder %s36, 1
      %s866 = scalar_select %p865, %s36, 1
      %s867 = scalar_lea.vmem %s4, %s866
      %p868 = pneg %p146
      %p869 = pneg %p143
      %p870 = scmp.lt.s32.totalorder %s36, 1
      %s871 = scalar_select %p870, %s36, 1
      %s872 = smul.addr %s871, 4
      %s873 = smul.addr %s872, 4
      %s874 = scalar_lea.vmem %s5, %s873
      %p875 = pneg %p172
      %p876 = pneg %p169
      %p877 = scmp.lt.s32.totalorder %s36, 1
      %s878 = scalar_select %p877, %s36, 1
      %s879 = scalar_lea.vmem %s6, %s878
      %p880 = pneg %p198
      %p881 = pneg %p195
      %p882 = scmp.lt.s32.totalorder %s36, 1
      %s883 = scalar_select %p882, %s36, 1
      %s884 = scalar_lea.vmem %s7, %s883
      %p885 = pneg %p224
      %p886 = pneg %p221
      %p887 = scmp.lt.s32.totalorder %s36, 1
      %s888 = scalar_select %p887, %s36, 1
      %s889 = scalar_lea.vmem %s8, %s888
      %p890 = pneg %p250
      %p891 = pneg %p247
      %p892 = scmp.lt.s32.totalorder %s36, 1
      %s893 = scalar_select %p892, %s36, 1
      %s894 = smul.addr %s893, 4
      %s895 = smul.addr %s894, 4
      %s896 = scalar_lea.vmem %s9, %s895
      %p897 = pneg %p276
      %p898 = pneg %p273
      %p899 = scmp.lt.s32.totalorder %s36, 1
      %s900 = scalar_select %p899, %s36, 1
      %s901 = scalar_lea.vmem %s10, %s900
      %p902 = pneg %p302
      %p903 = pneg %p299
      %p904 = scmp.lt.s32.totalorder %s36, 1
      %s905 = scalar_select %p904, %s36, 1
      %s906 = smul.addr %s905, 4
      %s907 = smul.addr %s906, 4
      %s908 = scalar_lea.vmem %s11, %s907
      %p909 = pneg %p328
      %p910 = pneg %p325
      %p911 = scmp.lt.s32.totalorder %s36, 1
      %s912 = scalar_select %p911, %s36, 1
      %s913 = scalar_lea.vmem %s12, %s912
      %p914 = pneg %p354
      %p915 = pneg %p351
      %p916 = scmp.lt.s32.totalorder %s36, 1
      %s917 = scalar_select %p916, %s36, 1
      %s918 = smul.addr %s917, 4
      %s919 = smul.addr %s918, 4
      %s920 = scalar_lea.vmem %s13, %s919
      %p921 = pneg %p380
      %p922 = pneg %p377
      %p923 = scmp.lt.s32.totalorder %s36, 1
      %s924 = scalar_select %p923, %s36, 1
      %s925 = scalar_lea.vmem %s14, %s924
      %p926 = pneg %p406
      %p927 = pneg %p403
      %p928 = scmp.lt.s32.totalorder %s36, 1
      %s929 = scalar_select %p928, %s36, 1
      %s930 = scalar_lea.vmem %s15, %s929
      %p931 = pneg %p432
      %p932 = pneg %p429
      %p933 = scmp.lt.s32.totalorder %s36, 1
      %s934 = scalar_select %p933, %s36, 1
      %s935 = scalar_lea.vmem %s16, %s934
      %p936 = pneg %p458
      %p937 = pneg %p455
      %p938 = scmp.lt.s32.totalorder %s36, 1
      %s939 = scalar_select %p938, %s36, 1
      %s940 = smul.addr %s939, 4
      %s941 = smul.addr %s940, 4
      %s942 = scalar_lea.vmem %s17, %s941
      %p943 = pneg %p484
      %p944 = pneg %p481
      %p945 = scmp.lt.s32.totalorder %s36, 1
      %s946 = scalar_select %p945, %s36, 1
      %s947 = scalar_lea.vmem %s18, %s946
      %p948 = pneg %p510
      %p949 = pneg %p507
      %p950 = scmp.lt.s32.totalorder %s36, 1
      %s951 = scalar_select %p950, %s36, 1
      %s952 = smul.addr %s951, 8
      %s953 = smul.addr %s952, 4
      %s954 = scalar_lea.vmem %s19, %s953
      %p955 = pneg %p536
      %p956 = pneg %p533
      %p957 = scmp.lt.s32.totalorder %s36, 1
      %s958 = scalar_select %p957, %s36, 1
      %s959 = scalar_lea.vmem %s20, %s958
      %p960 = pneg %p562
      %p961 = pneg %p559
      %p962 = scmp.lt.s32.totalorder %s36, 1
      %s963 = scalar_select %p962, %s36, 1
      %s964 = scalar_lea.vmem %s21, %s963
      %p965 = pneg %p588
      %p966 = pneg %p585
      %p967 = scmp.lt.s32.totalorder %s36, 1
      %s968 = scalar_select %p967, %s36, 1
      %s969 = scalar_lea.vmem %s22, %s968
      %p970 = pneg %p614
      %p971 = pneg %p611
      %p972 = pneg %p635
      %p973 = pneg %p632
      %p974 = pneg %p656
      %p975 = pneg %p653
      %p976 = pneg %p677
      %p977 = pneg %p674
      %p978 = scmp.lt.s32.totalorder %s36, 1
      %s979 = scalar_select %p978, %s36, 1
      %s980 = smul.addr %s979, 4
      %s981 = smul.addr %s980, 4
      %s982 = scalar_lea.vmem %s3, %s981
      %p983 = scmp.lt.s32.totalorder %s36, 1
      %s984 = scalar_select %p983, %s36, 1
      %s985 = scalar_lea.vmem %s4, %s984
      %p986 = scmp.lt.s32.totalorder %s36, 1
      %s987 = scalar_select %p986, %s36, 1
      %s988 = smul.addr %s987, 4
      %s989 = smul.addr %s988, 4
      %s990 = scalar_lea.vmem %s5, %s989
      %p991 = scmp.lt.s32.totalorder %s36, 1
      %s992 = scalar_select %p991, %s36, 1
      %s993 = scalar_lea.vmem %s6, %s992
      %p994 = scmp.lt.s32.totalorder %s36, 1
      %s995 = scalar_select %p994, %s36, 1
      %s996 = scalar_lea.vmem %s7, %s995
      %p997 = scmp.lt.s32.totalorder %s36, 1
      %s998 = scalar_select %p997, %s36, 1
      %s999 = scalar_lea.vmem %s8, %s998
      %p1000 = scmp.lt.s32.totalorder %s36, 1
      %s1001 = scalar_select %p1000, %s36, 1
      %s1002 = smul.addr %s1001, 4
      %s1003 = smul.addr %s1002, 4
      %s1004 = scalar_lea.vmem %s9, %s1003
      %p1005 = scmp.lt.s32.totalorder %s36, 1
      %s1006 = scalar_select %p1005, %s36, 1
      %s1007 = scalar_lea.vmem %s10, %s1006
      %p1008 = scmp.lt.s32.totalorder %s36, 1
      %s1009 = scalar_select %p1008, %s36, 1
      %s1010 = smul.addr %s1009, 4
      %s1011 = smul.addr %s1010, 4
      %s1012 = scalar_lea.vmem %s11, %s1011
      %p1013 = scmp.lt.s32.totalorder %s36, 1
      %s1014 = scalar_select %p1013, %s36, 1
      %s1015 = scalar_lea.vmem %s12, %s1014
      %p1016 = scmp.lt.s32.totalorder %s36, 1
      %s1017 = scalar_select %p1016, %s36, 1
      %s1018 = smul.addr %s1017, 4
      %s1019 = smul.addr %s1018, 4
      %s1020 = scalar_lea.vmem %s13, %s1019
      %p1021 = scmp.lt.s32.totalorder %s36, 1
      %s1022 = scalar_select %p1021, %s36, 1
      %s1023 = scalar_lea.vmem %s14, %s1022
      %p1024 = scmp.lt.s32.totalorder %s36, 1
      %s1025 = scalar_select %p1024, %s36, 1
      %s1026 = scalar_lea.vmem %s15, %s1025
      %p1027 = scmp.lt.s32.totalorder %s36, 1
      %s1028 = scalar_select %p1027, %s36, 1
      %s1029 = scalar_lea.vmem %s16, %s1028
      %p1030 = scmp.lt.s32.totalorder %s36, 1
      %s1031 = scalar_select %p1030, %s36, 1
      %s1032 = smul.addr %s1031, 4
      %s1033 = smul.addr %s1032, 4
      %s1034 = scalar_lea.vmem %s17, %s1033
      %p1035 = scmp.lt.s32.totalorder %s36, 1
      %s1036 = scalar_select %p1035, %s36, 1
      %s1037 = scalar_lea.vmem %s18, %s1036
      %p1038 = scmp.lt.s32.totalorder %s36, 1
      %s1039 = scalar_select %p1038, %s36, 1
      %s1040 = smul.addr %s1039, 8
      %s1041 = smul.addr %s1040, 4
      %s1042 = scalar_lea.vmem %s19, %s1041
      %p1043 = scmp.lt.s32.totalorder %s36, 1
      %s1044 = scalar_select %p1043, %s36, 1
      %s1045 = scalar_lea.vmem %s20, %s1044
      %p1046 = scmp.lt.s32.totalorder %s36, 1
      %s1047 = scalar_select %p1046, %s36, 1
      %s1048 = scalar_lea.vmem %s21, %s1047
      %p1049 = scmp.lt.s32.totalorder %s36, 1
      %s1050 = scalar_select %p1049, %s36, 1
      %s1051 = scalar_lea.vmem %s22, %s1050
      %p1053 = scmp.eq.s32.totalorder %s36, 0
      // Predicated region
      $region121: #{summarizer_transformer_forward.4} parent=119 // pred_check
        %p1054 = pneg %p1053
      $region122: #{summarizer_transformer_forward.4} parent=119 // pred_check_branch
        %1056 = sbr.rel (%p1054) target = $region124
      $region123: #{summarizer_transformer_forward.4} parent=119 // pred_region
        %v1057 = vld [vmem:[%s0] sm:$0xf]
        %v1058 = vld [vmem:[%s0 + $0x4] sm:$0xf]
        %v1059 = vunpack.c.l.bf16 %v1057
        %v1060 = vunpack.c.l.bf16 %v1058
        %vm1061 = vcmask 261120
        %1062 = vst.msk [vmem:[#allocation2] sm:$0xff] %vm1061, %v1059
        %1063 = vst.msk [vmem:[#allocation2 + $0x8] sm:$0xff] %vm1061, %v1060
      $region124: #{summarizer_transformer_forward.4} parent=119 // pred_fallthru
        _
      %v1064 = vld [vmem:[#allocation2] sm:$0xff]
      %v1065 = vld [vmem:[#allocation2 + $0x8] sm:$0xff]
      %v1066 = vld [vmem:[%s1] sm:$0xf]
      %v1067 = vld [vmem:[%s1 + $0x4] sm:$0xf]
      %v1068 = vld [vmem:[%s2] sm:$0xff]
      %v1069 = vld [vmem:[%s982] sm:$0xf]
      %v1070 = vld [vmem:[%s982 + $0x4] sm:$0xf]
      %v1071 = vld [vmem:[%s982 + $0x8] sm:$0xf]
      %v1072 = vld [vmem:[%s982 + $0xc] sm:$0xf]
      %v1073 = vld [vmem:[%s985] sm:$0x1]
      %v1074 = vld [vmem:[%s990] sm:$0xf]
      %v1075 = vld [vmem:[%s990 + $0x4] sm:$0xf]
      %v1076 = vld [vmem:[%s990 + $0x8] sm:$0xf]
      %v1077 = vld [vmem:[%s990 + $0xc] sm:$0xf]
      %v1078 = vld [vmem:[%s993] sm:$0x1]
      %v1079 = vld [vmem:[%s996] sm:$0x1]
      %v1080 = vld [vmem:[%s999] sm:$0x1]
      %v1081 = vpack.c.bf16 %v1065, %v1064
      %v1083 = vlaneseq
      %v1084 = vshrl.u32 %v1083, 7
      %v1085 = vsub.s32 0, %v1084
      %v1086 = vrot.slane %v1073, %v1085
      %v1092 = vunpack.c.l.b16 %v1069
      %v1093 = vunpack.c.l.b16 %v1070
      %v1094 = vunpack.c.l.b16 %v1071
      %v1095 = vunpack.c.l.b16 %v1072
      %v1096 = vpack.c.b16 %v1093, %v1092
      %v1097 = vpack.c.b16 %v1095, %v1094
      %vm1100 = vcmask 261120
      %v1102 = vsel %vm1100, %v1081, 0
      %1104 = vmatprep.subr.bf16.mxu0 0
      %1105 = vmatpush1.bf16.msra.mxu0 %v1096
      %1106 = vmatprep.subr.bf16.mxu0 0
      %1107 = vmatpush1.bf16.msra.mxu0 %v1097
      %1108 = vmatprep.subr.bf16.mxu0 0
      %1109 = vmatpush1.bf16.msra.mxu0 0
      %1110 = vmatprep.subr.bf16.mxu0 0
      %1111 = vmatpush1.bf16.msra.mxu0 0
      %1112 = vmatprep.subr.bf16.mxu0 0
      %1113 = vmatpush1.bf16.msra.mxu0 0
      %1114 = vmatprep.subr.bf16.mxu0 0
      %1115 = vmatpush1.bf16.msra.mxu0 0
      %1116 = vmatprep.subr.bf16.mxu0 0
      %1117 = vmatpush1.bf16.msra.mxu0 0
      %1118 = vmatprep.subr.bf16.mxu0 0
      %1119 = vmatpush1.bf16.msra.mxu0 0
      %1120 = vmatprep.subr.bf16.mxu0 0
      %1121 = vmatpush1.bf16.msra.mxu0 0
      %1122 = vmatprep.subr.bf16.mxu0 0
      %1123 = vmatpush1.bf16.msra.mxu0 0
      %1124 = vmatprep.subr.bf16.mxu0 0
      %1125 = vmatpush1.bf16.msra.mxu0 0
      %1126 = vmatprep.subr.bf16.mxu0 0
      %1127 = vmatpush1.bf16.msra.mxu0 0
      %1128 = vmatprep.subr.bf16.mxu0 0
      %1129 = vmatpush1.bf16.msra.mxu0 0
      %1130 = vmatprep.subr.bf16.mxu0 0
      %1131 = vmatpush1.bf16.msra.mxu0 0
      %1132 = vmatprep.subr.bf16.mxu0 0
      %1133 = vmatpush1.bf16.msra.mxu0 0
      %1134 = vmatprep.subr.bf16.mxu0 0
      %1135 = vmatpush1.bf16.msra.mxu0 0
      %1136 = vmatprep.mubr.bf16.mxu0 0
      %1137 = vmatmul.mubr.bf16.gmra.mrb[0].mxu0 %v1102
      %v1138 = vpop.f32.mrb[0].mxu0
      %v1139 = vadd.f32 %v1086, %v1138
      %v1140 = vpop.f32.mrb[0].mxu0
      %v1141 = vpop.f32.mrb[0].mxu0
      %v1142 = vadd.f32 %v1086, %v1141
      %v1143 = vpop.f32.mrb[0].mxu0
      %1144 = vdwg.mxu0
      %v1145 = vmul.f32 %v1139, 0.35355338
      %v1146 = vmul.f32 %v1142, 0.35355338
      %v1147 = vpack.c.bf16 %v1145, %v1145
      %v1148 = vpack.c.bf16 %v1146, %v1146
      %v1149 = vpack.c.bf16 %v1139, %v1139
      %v1150 = vpack.c.bf16 %v1142, %v1142
      %1152 = vrot.lane.b32.xlu0 %v1149, 96
      %v1153 = vpop.permute.xlu0 %1152
      %vm1154 = vcmask 64512
      %v1156 = vsel %vm1154, %v1147, 0
      %v1159 = vsel %vm1154, %v1153, 0
      %1161 = vmatprep.subr.bf16.mxu0 0
      %1162 = vmatpush1.bf16.xpose.msra.mxu0 %v1159
      %1163 = vmatprep.subr.bf16.mxu0 0
      %1164 = vmatpush1.bf16.xpose.msra.mxu0 0
      %1165 = vmatprep.subr.bf16.mxu0 0
      %1166 = vmatpush1.bf16.xpose.msra.mxu0 0
      %1167 = vmatprep.subr.bf16.mxu0 0
      %1168 = vmatpush1.bf16.xpose.msra.mxu0 0
      %1169 = vmatprep.subr.bf16.mxu0 0
      %1170 = vmatpush1.bf16.xpose.msra.mxu0 0
      %1171 = vmatprep.subr.bf16.mxu0 0
      %1172 = vmatpush1.bf16.xpose.msra.mxu0 0
      %1173 = vmatprep.subr.bf16.mxu0 0
      %1174 = vmatpush1.bf16.xpose.msra.mxu0 0
      %1175 = vmatprep.subr.bf16.mxu0 0
      %1176 = vmatpush1.bf16.xpose.msra.mxu0 0
      %1177 = vmatprep.subr.bf16.mxu0 0
      %1178 = vmatpush1.bf16.xpose.msra.mxu0 0
      %1179 = vmatprep.subr.bf16.mxu0 0
      %1180 = vmatpush1.bf16.xpose.msra.mxu0 0
      %1181 = vmatprep.subr.bf16.mxu0 0
      %1182 = vmatpush1.bf16.xpose.msra.mxu0 0
      %1183 = vmatprep.subr.bf16.mxu0 0
      %1184 = vmatpush1.bf16.xpose.msra.mxu0 0
      %1185 = vmatprep.subr.bf16.mxu0 0
      %1186 = vmatpush1.bf16.xpose.msra.mxu0 0
      %1187 = vmatprep.subr.bf16.mxu0 0
      %1188 = vmatpush1.bf16.xpose.msra.mxu0 0
      %1189 = vmatprep.subr.bf16.mxu0 0
      %1190 = vmatpush1.bf16.xpose.msra.mxu0 0
      %1191 = vmatprep.subr.bf16.mxu0 0
      %1192 = vmatpush1.bf16.xpose.msra.mxu0 0
      %1193 = vmatprep.mubr.bf16.mxu0 0
      %1194 = vmatmul.mubr.bf16.gmra.mrb[0].mxu0 %v1156
      %v1195 = vpop.f32.mrb[0].mxu0
      %v1196 = vadd.f32 %v1068, %v1195
      %v1197 = vpop.f32.mrb[0].mxu0
      %v1198 = vpop.f32.mrb[0].mxu0
      %v1199 = vpop.f32.mrb[0].mxu0
      %1200 = vdwg.mxu0
      %1202 = vrot.lane.b32.xlu0 %v1150, 96
      %v1203 = vpop.permute.xlu0 %1202
      %v1205 = vsel %vm1154, %v1148, 0
      %v1208 = vsel %vm1154, %v1203, 0
      %1210 = vmatprep.subr.bf16.mxu0 0
      %1211 = vmatpush1.bf16.xpose.msra.mxu0 %v1208
      %1212 = vmatprep.subr.bf16.mxu0 0
      %1213 = vmatpush1.bf16.xpose.msra.mxu0 0
      %1214 = vmatprep.subr.bf16.mxu0 0
      %1215 = vmatpush1.bf16.xpose.msra.mxu0 0
      %1216 = vmatprep.subr.bf16.mxu0 0
      %1217 = vmatpush1.bf16.xpose.msra.mxu0 0
      %1218 = vmatprep.subr.bf16.mxu0 0
      %1219 = vmatpush1.bf16.xpose.msra.mxu0 0
      %1220 = vmatprep.subr.bf16.mxu0 0
      %1221 = vmatpush1.bf16.xpose.msra.mxu0 0
      %1222 = vmatprep.subr.bf16.mxu0 0
      %1223 = vmatpush1.bf16.xpose.msra.mxu0 0
      %1224 = vmatprep.subr.bf16.mxu0 0
      %1225 = vmatpush1.bf16.xpose.msra.mxu0 0
      %1226 = vmatprep.subr.bf16.mxu0 0
      %1227 = vmatpush1.bf16.xpose.msra.mxu0 0
      %1228 = vmatprep.subr.bf16.mxu0 0
      %1229 = vmatpush1.bf16.xpose.msra.mxu0 0
      %1230 = vmatprep.subr.bf16.mxu0 0
      %1231 = vmatpush1.bf16.xpose.msra.mxu0 0
      %1232 = vmatprep.subr.bf16.mxu0 0
      %1233 = vmatpush1.bf16.xpose.msra.mxu0 0
      %1234 = vmatprep.subr.bf16.mxu0 0
      %1235 = vmatpush1.bf16.xpose.msra.mxu0 0
      %1236 = vmatprep.subr.bf16.mxu0 0
      %1237 = vmatpush1.bf16.xpose.msra.mxu0 0
      %1238 = vmatprep.subr.bf16.mxu0 0
      %1239 = vmatpush1.bf16.xpose.msra.mxu0 0
      %1240 = vmatprep.subr.bf16.mxu0 0
      %1241 = vmatpush1.bf16.xpose.msra.mxu0 0
      %1242 = vmatprep.mubr.bf16.mxu0 0
      %1243 = vmatmul.mubr.bf16.gmra.mrb[0].mxu0 %v1205
      %v1244 = vpop.f32.mrb[0].mxu0
      %v1245 = vadd.f32 %v1068, %v1244
      %v1246 = vpop.f32.mrb[0].mxu0
      %v1247 = vpop.f32.mrb[0].mxu0
      %v1248 = vpop.f32.mrb[0].mxu0
      %1249 = vdwg.mxu0
      %v1250 = vsel %vm1154, %v1196, -inf
      %1251 = vmax.xlane.f32.xlu0 %v1250
      %v1252 = vpop.xlane.xlu0 %1251
      %v1253 = vsel %vm1154, %v1245, -inf
      %1254 = vmax.xlane.f32.xlu0 %v1253
      %v1255 = vpop.xlane.xlu0 %1254
      %v1256 = vsub.f32 %v1196, %v1252
      %v1257 = vsub.f32 %v1245, %v1255
      %v1258 = vmul.f32 %v1256, 1.442695
      %v1259 = vpow.pop %v1258
      %v1260 = vmul.f32 %v1257, 1.442695
      %v1261 = vpow.pop %v1260
      %v1262 = vsel %vm1154, %v1259, 0.0
      %1263 = vadd.xlane.f32.xlu0 %v1262
      %v1264 = vpop.xlane.xlu0 %1263
      %v1265 = vsel %vm1154, %v1261, 0.0
      %1266 = vadd.xlane.f32.xlu0 %v1265
      %v1267 = vpop.xlane.xlu0 %1266
      %v1268 = vrcp.pop %v1264
      %v1269 = vrcp.pop %v1267
      %v1270 = vmul.f32 %v1259, %v1268
      %v1271 = vmul.f32 %v1261, %v1269
      %v1272 = vpack.c.bf16 %v1270, %v1270
      %v1273 = vpack.c.bf16 %v1271, %v1271
      %1274 = vrot.lane.b32.xlu0 %v1149, 64
      %v1275 = vpop.permute.xlu0 %1274
      %v1277 = vsel %vm1154, %v1272, 0
      %vm1279 = vcmask 1043456
      %v1281 = vsel %vm1279, %v1275, 0
      %1283 = vmatprep.subr.bf16.mxu0 0
      %1284 = vmatpush1.bf16.msra.mxu0 %v1281
      %1285 = vmatprep.subr.bf16.mxu0 0
      %1286 = vmatpush1.bf16.msra.mxu0 0
      %1287 = vmatprep.subr.bf16.mxu0 0
      %1288 = vmatpush1.bf16.msra.mxu0 0
      %1289 = vmatprep.subr.bf16.mxu0 0
      %1290 = vmatpush1.bf16.msra.mxu0 0
      %1291 = vmatprep.subr.bf16.mxu0 0
      %1292 = vmatpush1.bf16.msra.mxu0 0
      %1293 = vmatprep.subr.bf16.mxu0 0
      %1294 = vmatpush1.bf16.msra.mxu0 0
      %1295 = vmatprep.subr.bf16.mxu0 0
      %1296 = vmatpush1.bf16.msra.mxu0 0
      %1297 = vmatprep.subr.bf16.mxu0 0
      %1298 = vmatpush1.bf16.msra.mxu0 0
      %1299 = vmatprep.subr.bf16.mxu0 0
      %1300 = vmatpush1.bf16.msra.mxu0 0
      %1301 = vmatprep.subr.bf16.mxu0 0
      %1302 = vmatpush1.bf16.msra.mxu0 0
      %1303 = vmatprep.subr.bf16.mxu0 0
      %1304 = vmatpush1.bf16.msra.mxu0 0
      %1305 = vmatprep.subr.bf16.mxu0 0
      %1306 = vmatpush1.bf16.msra.mxu0 0
      %1307 = vmatprep.subr.bf16.mxu0 0
      %1308 = vmatpush1.bf16.msra.mxu0 0
      %1309 = vmatprep.subr.bf16.mxu0 0
      %1310 = vmatpush1.bf16.msra.mxu0 0
      %1311 = vmatprep.subr.bf16.mxu0 0
      %1312 = vmatpush1.bf16.msra.mxu0 0
      %1313 = vmatprep.subr.bf16.mxu0 0
      %1314 = vmatpush1.bf16.msra.mxu0 0
      %1315 = vmatprep.mubr.bf16.mxu0 0
      %1316 = vmatmul.mubr.bf16.gmra.mrb[0].mxu0 %v1277
      %v1317 = vpop.f32.mrb[0].mxu0
      %v1318 = vadd.f32 0.0, %v1317
      %v1319 = vpop.f32.mrb[0].mxu0
      %v1320 = vpop.f32.mrb[0].mxu0
      %v1321 = vpop.f32.mrb[0].mxu0
      %1322 = vdwg.mxu0
      %1323 = vrot.lane.b32.xlu0 %v1150, 64
      %v1324 = vpop.permute.xlu0 %1323
      %v1326 = vsel %vm1154, %v1273, 0
      %v1329 = vsel %vm1279, %v1324, 0
      %1331 = vmatprep.subr.bf16.mxu0 0
      %1332 = vmatpush1.bf16.msra.mxu0 %v1329
      %1333 = vmatprep.subr.bf16.mxu0 0
      %1334 = vmatpush1.bf16.msra.mxu0 0
      %1335 = vmatprep.subr.bf16.mxu0 0
      %1336 = vmatpush1.bf16.msra.mxu0 0
      %1337 = vmatprep.subr.bf16.mxu0 0
      %1338 = vmatpush1.bf16.msra.mxu0 0
      %1339 = vmatprep.subr.bf16.mxu0 0
      %1340 = vmatpush1.bf16.msra.mxu0 0
      %1341 = vmatprep.subr.bf16.mxu0 0
      %1342 = vmatpush1.bf16.msra.mxu0 0
      %1343 = vmatprep.subr.bf16.mxu0 0
      %1344 = vmatpush1.bf16.msra.mxu0 0
      %1345 = vmatprep.subr.bf16.mxu0 0
      %1346 = vmatpush1.bf16.msra.mxu0 0
      %1347 = vmatprep.subr.bf16.mxu0 0
      %1348 = vmatpush1.bf16.msra.mxu0 0
      %1349 = vmatprep.subr.bf16.mxu0 0
      %1350 = vmatpush1.bf16.msra.mxu0 0
      %1351 = vmatprep.subr.bf16.mxu0 0
      %1352 = vmatpush1.bf16.msra.mxu0 0
      %1353 = vmatprep.subr.bf16.mxu0 0
      %1354 = vmatpush1.bf16.msra.mxu0 0
      %1355 = vmatprep.subr.bf16.mxu0 0
      %1356 = vmatpush1.bf16.msra.mxu0 0
      %1357 = vmatprep.subr.bf16.mxu0 0
      %1358 = vmatpush1.bf16.msra.mxu0 0
      %1359 = vmatprep.subr.bf16.mxu0 0
      %1360 = vmatpush1.bf16.msra.mxu0 0
      %1361 = vmatprep.subr.bf16.mxu0 0
      %1362 = vmatpush1.bf16.msra.mxu0 0
      %1363 = vmatprep.mubr.bf16.mxu0 0
      %1364 = vmatmul.mubr.bf16.gmra.mrb[0].mxu0 %v1326
      %v1365 = vpop.f32.mrb[0].mxu0
      %v1366 = vadd.f32 0.0, %v1365
      %v1367 = vpop.f32.mrb[0].mxu0
      %v1368 = vpop.f32.mrb[0].mxu0
      %v1369 = vpop.f32.mrb[0].mxu0
      %1370 = vdwg.mxu0
      %1372 = vrot.lane.b32.xlu0 %v1147, 120
      %v1373 = vpop.permute.xlu0 %1372
      %1374 = vrot.lane.b32.xlu0 %v1149, 88
      %v1375 = vpop.permute.xlu0 %1374
      %v1377 = vsel %vm1154, %v1373, 0
      %v1380 = vsel %vm1154, %v1375, 0
      %1382 = vmatprep.subr.bf16.mxu0 0
      %1383 = vmatpush1.bf16.xpose.msra.mxu0 %v1380
      %1384 = vmatprep.subr.bf16.mxu0 0
      %1385 = vmatpush1.bf16.xpose.msra.mxu0 0
      %1386 = vmatprep.subr.bf16.mxu0 0
      %1387 = vmatpush1.bf16.xpose.msra.mxu0 0
      %1388 = vmatprep.subr.bf16.mxu0 0
      %1389 = vmatpush1.bf16.xpose.msra.mxu0 0
      %1390 = vmatprep.subr.bf16.mxu0 0
      %1391 = vmatpush1.bf16.xpose.msra.mxu0 0
      %1392 = vmatprep.subr.bf16.mxu0 0
      %1393 = vmatpush1.bf16.xpose.msra.mxu0 0
      %1394 = vmatprep.subr.bf16.mxu0 0
      %1395 = vmatpush1.bf16.xpose.msra.mxu0 0
      %1396 = vmatprep.subr.bf16.mxu0 0
      %1397 = vmatpush1.bf16.xpose.msra.mxu0 0
      %1398 = vmatprep.subr.bf16.mxu0 0
      %1399 = vmatpush1.bf16.xpose.msra.mxu0 0
      %1400 = vmatprep.subr.bf16.mxu0 0
      %1401 = vmatpush1.bf16.xpose.msra.mxu0 0
      %1402 = vmatprep.subr.bf16.mxu0 0
      %1403 = vmatpush1.bf16.xpose.msra.mxu0 0
      %1404 = vmatprep.subr.bf16.mxu0 0
      %1405 = vmatpush1.bf16.xpose.msra.mxu0 0
      %1406 = vmatprep.subr.bf16.mxu0 0
      %1407 = vmatpush1.bf16.xpose.msra.mxu0 0
      %1408 = vmatprep.subr.bf16.mxu0 0
      %1409 = vmatpush1.bf16.xpose.msra.mxu0 0
      %1410 = vmatprep.subr.bf16.mxu0 0
      %1411 = vmatpush1.bf16.xpose.msra.mxu0 0
      %1412 = vmatprep.subr.bf16.mxu0 0
      %1413 = vmatpush1.bf16.xpose.msra.mxu0 0
      %1414 = vmatprep.mubr.bf16.mxu0 0
      %1415 = vmatmul.mubr.bf16.gmra.mrb[0].mxu0 %v1377
      %v1416 = vpop.f32.mrb[0].mxu0
      %v1417 = vadd.f32 %v1068, %v1416
      %v1418 = vpop.f32.mrb[0].mxu0
      %v1419 = vpop.f32.mrb[0].mxu0
      %v1420 = vpop.f32.mrb[0].mxu0
      %1421 = vdwg.mxu0
      %1423 = vrot.lane.b32.xlu0 %v1148, 120
      %v1424 = vpop.permute.xlu0 %1423
      %1425 = vrot.lane.b32.xlu0 %v1150, 88
      %v1426 = vpop.permute.xlu0 %1425
      %v1428 = vsel %vm1154, %v1424, 0
      %v1431 = vsel %vm1154, %v1426, 0
      %1433 = vmatprep.subr.bf16.mxu0 0
      %1434 = vmatpush1.bf16.xpose.msra.mxu0 %v1431
      %1435 = vmatprep.subr.bf16.mxu0 0
      %1436 = vmatpush1.bf16.xpose.msra.mxu0 0
      %1437 = vmatprep.subr.bf16.mxu0 0
      %1438 = vmatpush1.bf16.xpose.msra.mxu0 0
      %1439 = vmatprep.subr.bf16.mxu0 0
      %1440 = vmatpush1.bf16.xpose.msra.mxu0 0
      %1441 = vmatprep.subr.bf16.mxu0 0
      %1442 = vmatpush1.bf16.xpose.msra.mxu0 0
      %1443 = vmatprep.subr.bf16.mxu0 0
      %1444 = vmatpush1.bf16.xpose.msra.mxu0 0
      %1445 = vmatprep.subr.bf16.mxu0 0
      %1446 = vmatpush1.bf16.xpose.msra.mxu0 0
      %1447 = vmatprep.subr.bf16.mxu0 0
      %1448 = vmatpush1.bf16.xpose.msra.mxu0 0
      %1449 = vmatprep.subr.bf16.mxu0 0
      %1450 = vmatpush1.bf16.xpose.msra.mxu0 0
      %1451 = vmatprep.subr.bf16.mxu0 0
      %1452 = vmatpush1.bf16.xpose.msra.mxu0 0
      %1453 = vmatprep.subr.bf16.mxu0 0
      %1454 = vmatpush1.bf16.xpose.msra.mxu0 0
      %1455 = vmatprep.subr.bf16.mxu0 0
      %1456 = vmatpush1.bf16.xpose.msra.mxu0 0
      %1457 = vmatprep.subr.bf16.mxu0 0
      %1458 = vmatpush1.bf16.xpose.msra.mxu0 0
      %1459 = vmatprep.subr.bf16.mxu0 0
      %1460 = vmatpush1.bf16.xpose.msra.mxu0 0
      %1461 = vmatprep.subr.bf16.mxu0 0
      %1462 = vmatpush1.bf16.xpose.msra.mxu0 0
      %1463 = vmatprep.subr.bf16.mxu0 0
      %1464 = vmatpush1.bf16.xpose.msra.mxu0 0
      %1465 = vmatprep.mubr.bf16.mxu0 0
      %1466 = vmatmul.mubr.bf16.gmra.mrb[0].mxu0 %v1428
      %v1467 = vpop.f32.mrb[0].mxu0
      %v1468 = vadd.f32 %v1068, %v1467
      %v1469 = vpop.f32.mrb[0].mxu0
      %v1470 = vpop.f32.mrb[0].mxu0
      %v1471 = vpop.f32.mrb[0].mxu0
      %1472 = vdwg.mxu0
      %v1473 = vsel %vm1154, %v1417, -inf
      %1474 = vmax.xlane.f32.xlu0 %v1473
      %v1475 = vpop.xlane.xlu0 %1474
      %v1476 = vsel %vm1154, %v1468, -inf
      %1477 = vmax.xlane.f32.xlu0 %v1476
      %v1478 = vpop.xlane.xlu0 %1477
      %v1479 = vsub.f32 %v1417, %v1475
      %v1480 = vsub.f32 %v1468, %v1478
      %v1481 = vmul.f32 %v1479, 1.442695
      %v1482 = vpow.pop %v1481
      %v1483 = vmul.f32 %v1480, 1.442695
      %v1484 = vpow.pop %v1483
      %v1485 = vsel %vm1154, %v1482, 0.0
      %1486 = vadd.xlane.f32.xlu0 %v1485
      %v1487 = vpop.xlane.xlu0 %1486
      %v1488 = vsel %vm1154, %v1484, 0.0
      %1489 = vadd.xlane.f32.xlu0 %v1488
      %v1490 = vpop.xlane.xlu0 %1489
      %v1491 = vrcp.pop %v1487
      %v1492 = vrcp.pop %v1490
      %v1493 = vmul.f32 %v1482, %v1491
      %v1494 = vmul.f32 %v1484, %v1492
      %v1495 = vpack.c.bf16 %v1493, %v1493
      %v1496 = vpack.c.bf16 %v1494, %v1494
      %1497 = vrot.lane.b32.xlu0 %v1149, 56
      %v1498 = vpop.permute.xlu0 %1497
      %v1500 = vsel %vm1154, %v1495, 0
      %v1503 = vsel %vm1279, %v1498, 0
      %1505 = vmatprep.subr.bf16.mxu0 0
      %1506 = vmatpush1.bf16.msra.mxu0 %v1503
      %1507 = vmatprep.subr.bf16.mxu0 0
      %1508 = vmatpush1.bf16.msra.mxu0 0
      %1509 = vmatprep.subr.bf16.mxu0 0
      %1510 = vmatpush1.bf16.msra.mxu0 0
      %1511 = vmatprep.subr.bf16.mxu0 0
      %1512 = vmatpush1.bf16.msra.mxu0 0
      %1513 = vmatprep.subr.bf16.mxu0 0
      %1514 = vmatpush1.bf16.msra.mxu0 0
      %1515 = vmatprep.subr.bf16.mxu0 0
      %1516 = vmatpush1.bf16.msra.mxu0 0
      %1517 = vmatprep.subr.bf16.mxu0 0
      %1518 = vmatpush1.bf16.msra.mxu0 0
      %1519 = vmatprep.subr.bf16.mxu0 0
      %1520 = vmatpush1.bf16.msra.mxu0 0
      %1521 = vmatprep.subr.bf16.mxu0 0
      %1522 = vmatpush1.bf16.msra.mxu0 0
      %1523 = vmatprep.subr.bf16.mxu0 0
      %1524 = vmatpush1.bf16.msra.mxu0 0
      %1525 = vmatprep.subr.bf16.mxu0 0
      %1526 = vmatpush1.bf16.msra.mxu0 0
      %1527 = vmatprep.subr.bf16.mxu0 0
      %1528 = vmatpush1.bf16.msra.mxu0 0
      %1529 = vmatprep.subr.bf16.mxu0 0
      %1530 = vmatpush1.bf16.msra.mxu0 0
      %1531 = vmatprep.subr.bf16.mxu0 0
      %1532 = vmatpush1.bf16.msra.mxu0 0
      %1533 = vmatprep.subr.bf16.mxu0 0
      %1534 = vmatpush1.bf16.msra.mxu0 0
      %1535 = vmatprep.subr.bf16.mxu0 0
      %1536 = vmatpush1.bf16.msra.mxu0 0
      %1537 = vmatprep.mubr.bf16.mxu0 0
      %1538 = vmatmul.mubr.bf16.gmra.mrb[0].mxu0 %v1500
      %v1539 = vpop.f32.mrb[0].mxu0
      %v1540 = vadd.f32 0.0, %v1539
      %v1541 = vpop.f32.mrb[0].mxu0
      %v1542 = vpop.f32.mrb[0].mxu0
      %v1543 = vpop.f32.mrb[0].mxu0
      %1544 = vdwg.mxu0
      %1545 = vrot.lane.b32.xlu0 %v1150, 56
      %v1546 = vpop.permute.xlu0 %1545
      %v1548 = vsel %vm1154, %v1496, 0
      %v1551 = vsel %vm1279, %v1546, 0
      %1553 = vmatprep.subr.bf16.mxu0 0
      %1554 = vmatpush1.bf16.msra.mxu0 %v1551
      %1555 = vmatprep.subr.bf16.mxu0 0
      %1556 = vmatpush1.bf16.msra.mxu0 0
      %1557 = vmatprep.subr.bf16.mxu0 0
      %1558 = vmatpush1.bf16.msra.mxu0 0
      %1559 = vmatprep.subr.bf16.mxu0 0
      %1560 = vmatpush1.bf16.msra.mxu0 0
      %1561 = vmatprep.subr.bf16.mxu0 0
      %1562 = vmatpush1.bf16.msra.mxu0 0
      %1563 = vmatprep.subr.bf16.mxu0 0
      %1564 = vmatpush1.bf16.msra.mxu0 0
      %1565 = vmatprep.subr.bf16.mxu0 0
      %1566 = vmatpush1.bf16.msra.mxu0 0
      %1567 = vmatprep.subr.bf16.mxu0 0
      %1568 = vmatpush1.bf16.msra.mxu0 0
      %1569 = vmatprep.subr.bf16.mxu0 0
      %1570 = vmatpush1.bf16.msra.mxu0 0
      %1571 = vmatprep.subr.bf16.mxu0 0
      %1572 = vmatpush1.bf16.msra.mxu0 0
      %1573 = vmatprep.subr.bf16.mxu0 0
      %1574 = vmatpush1.bf16.msra.mxu0 0
      %1575 = vmatprep.subr.bf16.mxu0 0
      %1576 = vmatpush1.bf16.msra.mxu0 0
      %1577 = vmatprep.subr.bf16.mxu0 0
      %1578 = vmatpush1.bf16.msra.mxu0 0
      %1579 = vmatprep.subr.bf16.mxu0 0
      %1580 = vmatpush1.bf16.msra.mxu0 0
      %1581 = vmatprep.subr.bf16.mxu0 0
      %1582 = vmatpush1.bf16.msra.mxu0 0
      %1583 = vmatprep.subr.bf16.mxu0 0
      %1584 = vmatpush1.bf16.msra.mxu0 0
      %1585 = vmatprep.mubr.bf16.mxu0 0
      %1586 = vmatmul.mubr.bf16.gmra.mrb[0].mxu0 %v1548
      %v1587 = vpop.f32.mrb[0].mxu0
      %v1588 = vadd.f32 0.0, %v1587
      %v1589 = vpop.f32.mrb[0].mxu0
      %v1590 = vpop.f32.mrb[0].mxu0
      %v1591 = vpop.f32.mrb[0].mxu0
      %1592 = vdwg.mxu0
      %1593 = vrot.lane.b32.xlu0 %v1147, 112
      %v1594 = vpop.permute.xlu0 %1593
      %1595 = vrot.lane.b32.xlu0 %v1149, 80
      %v1596 = vpop.permute.xlu0 %1595
      %v1598 = vsel %vm1154, %v1594, 0
      %v1601 = vsel %vm1154, %v1596, 0
      %1603 = vmatprep.subr.bf16.mxu0 0
      %1604 = vmatpush1.bf16.xpose.msra.mxu0 %v1601
      %1605 = vmatprep.subr.bf16.mxu0 0
      %1606 = vmatpush1.bf16.xpose.msra.mxu0 0
      %1607 = vmatprep.subr.bf16.mxu0 0
      %1608 = vmatpush1.bf16.xpose.msra.mxu0 0
      %1609 = vmatprep.subr.bf16.mxu0 0
      %1610 = vmatpush1.bf16.xpose.msra.mxu0 0
      %1611 = vmatprep.subr.bf16.mxu0 0
      %1612 = vmatpush1.bf16.xpose.msra.mxu0 0
      %1613 = vmatprep.subr.bf16.mxu0 0
      %1614 = vmatpush1.bf16.xpose.msra.mxu0 0
      %1615 = vmatprep.subr.bf16.mxu0 0
      %1616 = vmatpush1.bf16.xpose.msra.mxu0 0
      %1617 = vmatprep.subr.bf16.mxu0 0
      %1618 = vmatpush1.bf16.xpose.msra.mxu0 0
      %1619 = vmatprep.subr.bf16.mxu0 0
      %1620 = vmatpush1.bf16.xpose.msra.mxu0 0
      %1621 = vmatprep.subr.bf16.mxu0 0
      %1622 = vmatpush1.bf16.xpose.msra.mxu0 0
      %1623 = vmatprep.subr.bf16.mxu0 0
      %1624 = vmatpush1.bf16.xpose.msra.mxu0 0
      %1625 = vmatprep.subr.bf16.mxu0 0
      %1626 = vmatpush1.bf16.xpose.msra.mxu0 0
      %1627 = vmatprep.subr.bf16.mxu0 0
      %1628 = vmatpush1.bf16.xpose.msra.mxu0 0
      %1629 = vmatprep.subr.bf16.mxu0 0
      %1630 = vmatpush1.bf16.xpose.msra.mxu0 0
      %1631 = vmatprep.subr.bf16.mxu0 0
      %1632 = vmatpush1.bf16.xpose.msra.mxu0 0
      %1633 = vmatprep.subr.bf16.mxu0 0
      %1634 = vmatpush1.bf16.xpose.msra.mxu0 0
      %1635 = vmatprep.mubr.bf16.mxu0 0
      %1636 = vmatmul.mubr.bf16.gmra.mrb[0].mxu0 %v1598
      %v1637 = vpop.f32.mrb[0].mxu0
      %v1638 = vadd.f32 %v1068, %v1637
      %v1639 = vpop.f32.mrb[0].mxu0
      %v1640 = vpop.f32.mrb[0].mxu0
      %v1641 = vpop.f32.mrb[0].mxu0
      %1642 = vdwg.mxu0
      %1643 = vrot.lane.b32.xlu0 %v1148, 112
      %v1644 = vpop.permute.xlu0 %1643
      %1645 = vrot.lane.b32.xlu0 %v1150, 80
      %v1646 = vpop.permute.xlu0 %1645
      %v1648 = vsel %vm1154, %v1644, 0
      %v1651 = vsel %vm1154, %v1646, 0
      %1653 = vmatprep.subr.bf16.mxu0 0
      %1654 = vmatpush1.bf16.xpose.msra.mxu0 %v1651
      %1655 = vmatprep.subr.bf16.mxu0 0
      %1656 = vmatpush1.bf16.xpose.msra.mxu0 0
      %1657 = vmatprep.subr.bf16.mxu0 0
      %1658 = vmatpush1.bf16.xpose.msra.mxu0 0
      %1659 = vmatprep.subr.bf16.mxu0 0
      %1660 = vmatpush1.bf16.xpose.msra.mxu0 0
      %1661 = vmatprep.subr.bf16.mxu0 0
      %1662 = vmatpush1.bf16.xpose.msra.mxu0 0
      %1663 = vmatprep.subr.bf16.mxu0 0
      %1664 = vmatpush1.bf16.xpose.msra.mxu0 0
      %1665 = vmatprep.subr.bf16.mxu0 0
      %1666 = vmatpush1.bf16.xpose.msra.mxu0 0
      %1667 = vmatprep.subr.bf16.mxu0 0
      %1668 = vmatpush1.bf16.xpose.msra.mxu0 0
      %1669 = vmatprep.subr.bf16.mxu0 0
      %1670 = vmatpush1.bf16.xpose.msra.mxu0 0
      %1671 = vmatprep.subr.bf16.mxu0 0
      %1672 = vmatpush1.bf16.xpose.msra.mxu0 0
      %1673 = vmatprep.subr.bf16.mxu0 0
      %1674 = vmatpush1.bf16.xpose.msra.mxu0 0
      %1675 = vmatprep.subr.bf16.mxu0 0
      %1676 = vmatpush1.bf16.xpose.msra.mxu0 0
      %1677 = vmatprep.subr.bf16.mxu0 0
      %1678 = vmatpush1.bf16.xpose.msra.mxu0 0
      %1679 = vmatprep.subr.bf16.mxu0 0
      %1680 = vmatpush1.bf16.xpose.msra.mxu0 0
      %1681 = vmatprep.subr.bf16.mxu0 0
      %1682 = vmatpush1.bf16.xpose.msra.mxu0 0
      %1683 = vmatprep.subr.bf16.mxu0 0
      %1684 = vmatpush1.bf16.xpose.msra.mxu0 0
      %1685 = vmatprep.mubr.bf16.mxu0 0
      %1686 = vmatmul.mubr.bf16.gmra.mrb[0].mxu0 %v1648
      %v1687 = vpop.f32.mrb[0].mxu0
      %v1688 = vadd.f32 %v1068, %v1687
      %v1689 = vpop.f32.mrb[0].mxu0
      %v1690 = vpop.f32.mrb[0].mxu0
      %v1691 = vpop.f32.mrb[0].mxu0
      %1692 = vdwg.mxu0
      %v1693 = vsel %vm1154, %v1638, -inf
      %1694 = vmax.xlane.f32.xlu0 %v1693
      %v1695 = vpop.xlane.xlu0 %1694
      %v1696 = vsel %vm1154, %v1688, -inf
      %1697 = vmax.xlane.f32.xlu0 %v1696
      %v1698 = vpop.xlane.xlu0 %1697
      %v1699 = vsub.f32 %v1638, %v1695
      %v1700 = vsub.f32 %v1688, %v1698
      %v1701 = vmul.f32 %v1699, 1.442695
      %v1702 = vpow.pop %v1701
      %v1703 = vmul.f32 %v1700, 1.442695
      %v1704 = vpow.pop %v1703
      %v1705 = vsel %vm1154, %v1702, 0.0
      %1706 = vadd.xlane.f32.xlu0 %v1705
      %v1707 = vpop.xlane.xlu0 %1706
      %v1708 = vsel %vm1154, %v1704, 0.0
      %1709 = vadd.xlane.f32.xlu0 %v1708
      %v1710 = vpop.xlane.xlu0 %1709
      %v1711 = vrcp.pop %v1707
      %v1712 = vrcp.pop %v1710
      %v1713 = vmul.f32 %v1702, %v1711
      %v1714 = vmul.f32 %v1704, %v1712
      %v1715 = vpack.c.bf16 %v1713, %v1713
      %v1716 = vpack.c.bf16 %v1714, %v1714
      %1717 = vrot.lane.b32.xlu0 %v1149, 48
      %v1718 = vpop.permute.xlu0 %1717
      %v1720 = vsel %vm1154, %v1715, 0
      %v1723 = vsel %vm1279, %v1718, 0
      %1725 = vmatprep.subr.bf16.mxu0 0
      %1726 = vmatpush1.bf16.msra.mxu0 %v1723
      %1727 = vmatprep.subr.bf16.mxu0 0
      %1728 = vmatpush1.bf16.msra.mxu0 0
      %1729 = vmatprep.subr.bf16.mxu0 0
      %1730 = vmatpush1.bf16.msra.mxu0 0
      %1731 = vmatprep.subr.bf16.mxu0 0
      %1732 = vmatpush1.bf16.msra.mxu0 0
      %1733 = vmatprep.subr.bf16.mxu0 0
      %1734 = vmatpush1.bf16.msra.mxu0 0
      %1735 = vmatprep.subr.bf16.mxu0 0
      %1736 = vmatpush1.bf16.msra.mxu0 0
      %1737 = vmatprep.subr.bf16.mxu0 0
      %1738 = vmatpush1.bf16.msra.mxu0 0
      %1739 = vmatprep.subr.bf16.mxu0 0
      %1740 = vmatpush1.bf16.msra.mxu0 0
      %1741 = vmatprep.subr.bf16.mxu0 0
      %1742 = vmatpush1.bf16.msra.mxu0 0
      %1743 = vmatprep.subr.bf16.mxu0 0
      %1744 = vmatpush1.bf16.msra.mxu0 0
      %1745 = vmatprep.subr.bf16.mxu0 0
      %1746 = vmatpush1.bf16.msra.mxu0 0
      %1747 = vmatprep.subr.bf16.mxu0 0
      %1748 = vmatpush1.bf16.msra.mxu0 0
      %1749 = vmatprep.subr.bf16.mxu0 0
      %1750 = vmatpush1.bf16.msra.mxu0 0
      %1751 = vmatprep.subr.bf16.mxu0 0
      %1752 = vmatpush1.bf16.msra.mxu0 0
      %1753 = vmatprep.subr.bf16.mxu0 0
      %1754 = vmatpush1.bf16.msra.mxu0 0
      %1755 = vmatprep.subr.bf16.mxu0 0
      %1756 = vmatpush1.bf16.msra.mxu0 0
      %1757 = vmatprep.mubr.bf16.mxu0 0
      %1758 = vmatmul.mubr.bf16.gmra.mrb[0].mxu0 %v1720
      %v1759 = vpop.f32.mrb[0].mxu0
      %v1760 = vadd.f32 0.0, %v1759
      %v1761 = vpop.f32.mrb[0].mxu0
      %v1762 = vpop.f32.mrb[0].mxu0
      %v1763 = vpop.f32.mrb[0].mxu0
      %1764 = vdwg.mxu0
      %1765 = vrot.lane.b32.xlu0 %v1150, 48
      %v1766 = vpop.permute.xlu0 %1765
      %v1768 = vsel %vm1154, %v1716, 0
      %v1771 = vsel %vm1279, %v1766, 0
      %1773 = vmatprep.subr.bf16.mxu0 0
      %1774 = vmatpush1.bf16.msra.mxu0 %v1771
      %1775 = vmatprep.subr.bf16.mxu0 0
      %1776 = vmatpush1.bf16.msra.mxu0 0
      %1777 = vmatprep.subr.bf16.mxu0 0
      %1778 = vmatpush1.bf16.msra.mxu0 0
      %1779 = vmatprep.subr.bf16.mxu0 0
      %1780 = vmatpush1.bf16.msra.mxu0 0
      %1781 = vmatprep.subr.bf16.mxu0 0
      %1782 = vmatpush1.bf16.msra.mxu0 0
      %1783 = vmatprep.subr.bf16.mxu0 0
      %1784 = vmatpush1.bf16.msra.mxu0 0
      %1785 = vmatprep.subr.bf16.mxu0 0
      %1786 = vmatpush1.bf16.msra.mxu0 0
      %1787 = vmatprep.subr.bf16.mxu0 0
      %1788 = vmatpush1.bf16.msra.mxu0 0
      %1789 = vmatprep.subr.bf16.mxu0 0
      %1790 = vmatpush1.bf16.msra.mxu0 0
      %1791 = vmatprep.subr.bf16.mxu0 0
      %1792 = vmatpush1.bf16.msra.mxu0 0
      %1793 = vmatprep.subr.bf16.mxu0 0
      %1794 = vmatpush1.bf16.msra.mxu0 0
      %1795 = vmatprep.subr.bf16.mxu0 0
      %1796 = vmatpush1.bf16.msra.mxu0 0
      %1797 = vmatprep.subr.bf16.mxu0 0
      %1798 = vmatpush1.bf16.msra.mxu0 0
      %1799 = vmatprep.subr.bf16.mxu0 0
      %1800 = vmatpush1.bf16.msra.mxu0 0
      %1801 = vmatprep.subr.bf16.mxu0 0
      %1802 = vmatpush1.bf16.msra.mxu0 0
      %1803 = vmatprep.subr.bf16.mxu0 0
      %1804 = vmatpush1.bf16.msra.mxu0 0
      %1805 = vmatprep.mubr.bf16.mxu0 0
      %1806 = vmatmul.mubr.bf16.gmra.mrb[0].mxu0 %v1768
      %v1807 = vpop.f32.mrb[0].mxu0
      %v1808 = vadd.f32 0.0, %v1807
      %v1809 = vpop.f32.mrb[0].mxu0
      %v1810 = vpop.f32.mrb[0].mxu0
      %v1811 = vpop.f32.mrb[0].mxu0
      %1812 = vdwg.mxu0
      %1813 = vrot.lane.b32.xlu0 %v1147, 104
      %v1814 = vpop.permute.xlu0 %1813
      %1815 = vrot.lane.b32.xlu0 %v1149, 72
      %v1816 = vpop.permute.xlu0 %1815
      %v1818 = vsel %vm1154, %v1814, 0
      %v1821 = vsel %vm1154, %v1816, 0
      %1823 = vmatprep.subr.bf16.mxu0 0
      %1824 = vmatpush1.bf16.xpose.msra.mxu0 %v1821
      %1825 = vmatprep.subr.bf16.mxu0 0
      %1826 = vmatpush1.bf16.xpose.msra.mxu0 0
      %1827 = vmatprep.subr.bf16.mxu0 0
      %1828 = vmatpush1.bf16.xpose.msra.mxu0 0
      %1829 = vmatprep.subr.bf16.mxu0 0
      %1830 = vmatpush1.bf16.xpose.msra.mxu0 0
      %1831 = vmatprep.subr.bf16.mxu0 0
      %1832 = vmatpush1.bf16.xpose.msra.mxu0 0
      %1833 = vmatprep.subr.bf16.mxu0 0
      %1834 = vmatpush1.bf16.xpose.msra.mxu0 0
      %1835 = vmatprep.subr.bf16.mxu0 0
      %1836 = vmatpush1.bf16.xpose.msra.mxu0 0
      %1837 = vmatprep.subr.bf16.mxu0 0
      %1838 = vmatpush1.bf16.xpose.msra.mxu0 0
      %1839 = vmatprep.subr.bf16.mxu0 0
      %1840 = vmatpush1.bf16.xpose.msra.mxu0 0
      %1841 = vmatprep.subr.bf16.mxu0 0
      %1842 = vmatpush1.bf16.xpose.msra.mxu0 0
      %1843 = vmatprep.subr.bf16.mxu0 0
      %1844 = vmatpush1.bf16.xpose.msra.mxu0 0
      %1845 = vmatprep.subr.bf16.mxu0 0
      %1846 = vmatpush1.bf16.xpose.msra.mxu0 0
      %1847 = vmatprep.subr.bf16.mxu0 0
      %1848 = vmatpush1.bf16.xpose.msra.mxu0 0
      %1849 = vmatprep.subr.bf16.mxu0 0
      %1850 = vmatpush1.bf16.xpose.msra.mxu0 0
      %1851 = vmatprep.subr.bf16.mxu0 0
      %1852 = vmatpush1.bf16.xpose.msra.mxu0 0
      %1853 = vmatprep.subr.bf16.mxu0 0
      %1854 = vmatpush1.bf16.xpose.msra.mxu0 0
      %1855 = vmatprep.mubr.bf16.mxu0 0
      %1856 = vmatmul.mubr.bf16.gmra.mrb[0].mxu0 %v1818
      %v1857 = vpop.f32.mrb[0].mxu0
      %v1858 = vadd.f32 %v1068, %v1857
      %v1859 = vpop.f32.mrb[0].mxu0
      %v1860 = vpop.f32.mrb[0].mxu0
      %v1861 = vpop.f32.mrb[0].mxu0
      %1862 = vdwg.mxu0
      %1863 = vrot.lane.b32.xlu0 %v1148, 104
      %v1864 = vpop.permute.xlu0 %1863
      %1865 = vrot.lane.b32.xlu0 %v1150, 72
      %v1866 = vpop.permute.xlu0 %1865
      %v1868 = vsel %vm1154, %v1864, 0
      %v1871 = vsel %vm1154, %v1866, 0
      %1873 = vmatprep.subr.bf16.mxu0 0
      %1874 = vmatpush1.bf16.xpose.msra.mxu0 %v1871
      %1875 = vmatprep.subr.bf16.mxu0 0
      %1876 = vmatpush1.bf16.xpose.msra.mxu0 0
      %1877 = vmatprep.subr.bf16.mxu0 0
      %1878 = vmatpush1.bf16.xpose.msra.mxu0 0
      %1879 = vmatprep.subr.bf16.mxu0 0
      %1880 = vmatpush1.bf16.xpose.msra.mxu0 0
      %1881 = vmatprep.subr.bf16.mxu0 0
      %1882 = vmatpush1.bf16.xpose.msra.mxu0 0
      %1883 = vmatprep.subr.bf16.mxu0 0
      %1884 = vmatpush1.bf16.xpose.msra.mxu0 0
      %1885 = vmatprep.subr.bf16.mxu0 0
      %1886 = vmatpush1.bf16.xpose.msra.mxu0 0
      %1887 = vmatprep.subr.bf16.mxu0 0
      %1888 = vmatpush1.bf16.xpose.msra.mxu0 0
      %1889 = vmatprep.subr.bf16.mxu0 0
      %1890 = vmatpush1.bf16.xpose.msra.mxu0 0
      %1891 = vmatprep.subr.bf16.mxu0 0
      %1892 = vmatpush1.bf16.xpose.msra.mxu0 0
      %1893 = vmatprep.subr.bf16.mxu0 0
      %1894 = vmatpush1.bf16.xpose.msra.mxu0 0
      %1895 = vmatprep.subr.bf16.mxu0 0
      %1896 = vmatpush1.bf16.xpose.msra.mxu0 0
      %1897 = vmatprep.subr.bf16.mxu0 0
      %1898 = vmatpush1.bf16.xpose.msra.mxu0 0
      %1899 = vmatprep.subr.bf16.mxu0 0
      %1900 = vmatpush1.bf16.xpose.msra.mxu0 0
      %1901 = vmatprep.subr.bf16.mxu0 0
      %1902 = vmatpush1.bf16.xpose.msra.mxu0 0
      %1903 = vmatprep.subr.bf16.mxu0 0
      %1904 = vmatpush1.bf16.xpose.msra.mxu0 0
      %1905 = vmatprep.mubr.bf16.mxu0 0
      %1906 = vmatmul.mubr.bf16.gmra.mrb[0].mxu0 %v1868
      %v1907 = vpop.f32.mrb[0].mxu0
      %v1908 = vadd.f32 %v1068, %v1907
      %v1909 = vpop.f32.mrb[0].mxu0
      %v1910 = vpop.f32.mrb[0].mxu0
      %v1911 = vpop.f32.mrb[0].mxu0
      %1912 = vdwg.mxu0
      %v1913 = vsel %vm1154, %v1858, -inf
      %1914 = vmax.xlane.f32.xlu0 %v1913
      %v1915 = vpop.xlane.xlu0 %1914
      %v1916 = vsel %vm1154, %v1908, -inf
      %1917 = vmax.xlane.f32.xlu0 %v1916
      %v1918 = vpop.xlane.xlu0 %1917
      %v1919 = vsub.f32 %v1858, %v1915
      %v1920 = vsub.f32 %v1908, %v1918
      %v1921 = vmul.f32 %v1919, 1.442695
      %v1922 = vpow.pop %v1921
      %v1923 = vmul.f32 %v1920, 1.442695
      %v1924 = vpow.pop %v1923
      %v1925 = vsel %vm1154, %v1922, 0.0
      %1926 = vadd.xlane.f32.xlu0 %v1925
      %v1927 = vpop.xlane.xlu0 %1926
      %v1928 = vsel %vm1154, %v1924, 0.0
      %1929 = vadd.xlane.f32.xlu0 %v1928
      %v1930 = vpop.xlane.xlu0 %1929
      %v1931 = vrcp.pop %v1927
      %v1932 = vrcp.pop %v1930
      %v1933 = vmul.f32 %v1922, %v1931
      %v1934 = vmul.f32 %v1924, %v1932
      %v1935 = vpack.c.bf16 %v1933, %v1933
      %v1936 = vpack.c.bf16 %v1934, %v1934
      %1937 = vrot.lane.b32.xlu0 %v1149, 40
      %v1938 = vpop.permute.xlu0 %1937
      %v1940 = vsel %vm1154, %v1935, 0
      %v1943 = vsel %vm1279, %v1938, 0
      %1945 = vmatprep.subr.bf16.mxu0 0
      %1946 = vmatpush1.bf16.msra.mxu0 %v1943
      %1947 = vmatprep.subr.bf16.mxu0 0
      %1948 = vmatpush1.bf16.msra.mxu0 0
      %1949 = vmatprep.subr.bf16.mxu0 0
      %1950 = vmatpush1.bf16.msra.mxu0 0
      %1951 = vmatprep.subr.bf16.mxu0 0
      %1952 = vmatpush1.bf16.msra.mxu0 0
      %1953 = vmatprep.subr.bf16.mxu0 0
      %1954 = vmatpush1.bf16.msra.mxu0 0
      %1955 = vmatprep.subr.bf16.mxu0 0
      %1956 = vmatpush1.bf16.msra.mxu0 0
      %1957 = vmatprep.subr.bf16.mxu0 0
      %1958 = vmatpush1.bf16.msra.mxu0 0
      %1959 = vmatprep.subr.bf16.mxu0 0
      %1960 = vmatpush1.bf16.msra.mxu0 0
      %1961 = vmatprep.subr.bf16.mxu0 0
      %1962 = vmatpush1.bf16.msra.mxu0 0
      %1963 = vmatprep.subr.bf16.mxu0 0
      %1964 = vmatpush1.bf16.msra.mxu0 0
      %1965 = vmatprep.subr.bf16.mxu0 0
      %1966 = vmatpush1.bf16.msra.mxu0 0
      %1967 = vmatprep.subr.bf16.mxu0 0
      %1968 = vmatpush1.bf16.msra.mxu0 0
      %1969 = vmatprep.subr.bf16.mxu0 0
      %1970 = vmatpush1.bf16.msra.mxu0 0
      %1971 = vmatprep.subr.bf16.mxu0 0
      %1972 = vmatpush1.bf16.msra.mxu0 0
      %1973 = vmatprep.subr.bf16.mxu0 0
      %1974 = vmatpush1.bf16.msra.mxu0 0
      %1975 = vmatprep.subr.bf16.mxu0 0
      %1976 = vmatpush1.bf16.msra.mxu0 0
      %1977 = vmatprep.mubr.bf16.mxu0 0
      %1978 = vmatmul.mubr.bf16.gmra.mrb[0].mxu0 %v1940
      %v1979 = vpop.f32.mrb[0].mxu0
      %v1980 = vadd.f32 0.0, %v1979
      %v1981 = vpop.f32.mrb[0].mxu0
      %v1982 = vpop.f32.mrb[0].mxu0
      %v1983 = vpop.f32.mrb[0].mxu0
      %1984 = vdwg.mxu0
      %1985 = vrot.lane.b32.xlu0 %v1150, 40
      %v1986 = vpop.permute.xlu0 %1985
      %v1988 = vsel %vm1154, %v1936, 0
      %v1991 = vsel %vm1279, %v1986, 0
      %1993 = vmatprep.subr.bf16.mxu0 0
      %1994 = vmatpush1.bf16.msra.mxu0 %v1991
      %1995 = vmatprep.subr.bf16.mxu0 0
      %1996 = vmatpush1.bf16.msra.mxu0 0
      %1997 = vmatprep.subr.bf16.mxu0 0
      %1998 = vmatpush1.bf16.msra.mxu0 0
      %1999 = vmatprep.subr.bf16.mxu0 0
      %2000 = vmatpush1.bf16.msra.mxu0 0
      %2001 = vmatprep.subr.bf16.mxu0 0
      %2002 = vmatpush1.bf16.msra.mxu0 0
      %2003 = vmatprep.subr.bf16.mxu0 0
      %2004 = vmatpush1.bf16.msra.mxu0 0
      %2005 = vmatprep.subr.bf16.mxu0 0
      %2006 = vmatpush1.bf16.msra.mxu0 0
      %2007 = vmatprep.subr.bf16.mxu0 0
      %2008 = vmatpush1.bf16.msra.mxu0 0
      %2009 = vmatprep.subr.bf16.mxu0 0
      %2010 = vmatpush1.bf16.msra.mxu0 0
      %2011 = vmatprep.subr.bf16.mxu0 0
      %2012 = vmatpush1.bf16.msra.mxu0 0
      %2013 = vmatprep.subr.bf16.mxu0 0
      %2014 = vmatpush1.bf16.msra.mxu0 0
      %2015 = vmatprep.subr.bf16.mxu0 0
      %2016 = vmatpush1.bf16.msra.mxu0 0
      %2017 = vmatprep.subr.bf16.mxu0 0
      %2018 = vmatpush1.bf16.msra.mxu0 0
      %2019 = vmatprep.subr.bf16.mxu0 0
      %2020 = vmatpush1.bf16.msra.mxu0 0
      %2021 = vmatprep.subr.bf16.mxu0 0
      %2022 = vmatpush1.bf16.msra.mxu0 0
      %2023 = vmatprep.subr.bf16.mxu0 0
      %2024 = vmatpush1.bf16.msra.mxu0 0
      %2025 = vmatprep.mubr.bf16.mxu0 0
      %2026 = vmatmul.mubr.bf16.gmra.mrb[0].mxu0 %v1988
      %v2027 = vpop.f32.mrb[0].mxu0
      %v2028 = vadd.f32 0.0, %v2027
      %v2029 = vpop.f32.mrb[0].mxu0
      %v2030 = vpop.f32.mrb[0].mxu0
      %v2031 = vpop.f32.mrb[0].mxu0
      %2032 = vdwg.mxu0
      %2035 = vrot.lane.b32.xlu0 %v1540, 8
      %v2036 = vpop.permute.xlu0 %2035
      %2037 = vrot.lane.b32.xlu0 %v1588, 8
      %v2038 = vpop.permute.xlu0 %2037
      %2043 = vrot.lane.b32.xlu0 %v1760, 16
      %v2044 = vpop.permute.xlu0 %2043
      %2045 = vrot.lane.b32.xlu0 %v1808, 16
      %v2046 = vpop.permute.xlu0 %2045
      %2051 = vrot.lane.b32.xlu0 %v1980, 24
      %v2052 = vpop.permute.xlu0 %2051
      %2053 = vrot.lane.b32.xlu0 %v2028, 24
      %v2054 = vpop.permute.xlu0 %2053
      %v2057 = vsel %vm1154, %v1318, %v2036
      %v2058 = vsel %vm1154, %v1366, %v2038
      %vm2059 = vcmask 130048
      %v2060 = vsel %vm2059, %v2057, %v2044
      %v2061 = vsel %vm2059, %v2058, %v2046
      %vm2062 = vcmask 195584
      %v2063 = vsel %vm2062, %v2060, %v2052
      %v2064 = vsel %vm2062, %v2061, %v2054
      %v2065 = vpack.c.bf16 %v2064, %v2063
      %v2067 = vlaneseq
      %v2068 = vshrl.u32 %v2067, 7
      %v2069 = vsub.s32 0, %v2068
      %v2070 = vrot.slane %v1078, %v2069
      %v2076 = vunpack.c.l.b16 %v1074
      %v2077 = vunpack.c.l.b16 %v1075
      %v2078 = vunpack.c.l.b16 %v1076
      %v2079 = vunpack.c.l.b16 %v1077
      %v2080 = vpack.c.b16 %v2077, %v2076
      %v2081 = vpack.c.b16 %v2079, %v2078
      %v2085 = vsel %vm1100, %v2065, 0
      %2087 = vmatprep.subr.bf16.mxu0 0
      %2088 = vmatpush1.bf16.msra.mxu0 %v2080
      %2089 = vmatprep.subr.bf16.mxu0 0
      %2090 = vmatpush1.bf16.msra.mxu0 %v2081
      %2091 = vmatprep.subr.bf16.mxu0 0
      %2092 = vmatpush1.bf16.msra.mxu0 0
      %2093 = vmatprep.subr.bf16.mxu0 0
      %2094 = vmatpush1.bf16.msra.mxu0 0
      %2095 = vmatprep.subr.bf16.mxu0 0
      %2096 = vmatpush1.bf16.msra.mxu0 0
      %2097 = vmatprep.subr.bf16.mxu0 0
      %2098 = vmatpush1.bf16.msra.mxu0 0
      %2099 = vmatprep.subr.bf16.mxu0 0
      %2100 = vmatpush1.bf16.msra.mxu0 0
      %2101 = vmatprep.subr.bf16.mxu0 0
      %2102 = vmatpush1.bf16.msra.mxu0 0
      %2103 = vmatprep.subr.bf16.mxu0 0
      %2104 = vmatpush1.bf16.msra.mxu0 0
      %2105 = vmatprep.subr.bf16.mxu0 0
      %2106 = vmatpush1.bf16.msra.mxu0 0
      %2107 = vmatprep.subr.bf16.mxu0 0
      %2108 = vmatpush1.bf16.msra.mxu0 0
      %2109 = vmatprep.subr.bf16.mxu0 0
      %2110 = vmatpush1.bf16.msra.mxu0 0
      %2111 = vmatprep.subr.bf16.mxu0 0
      %2112 = vmatpush1.bf16.msra.mxu0 0
      %2113 = vmatprep.subr.bf16.mxu0 0
      %2114 = vmatpush1.bf16.msra.mxu0 0
      %2115 = vmatprep.subr.bf16.mxu0 0
      %2116 = vmatpush1.bf16.msra.mxu0 0
      %2117 = vmatprep.subr.bf16.mxu0 0
      %2118 = vmatpush1.bf16.msra.mxu0 0
      %2119 = vmatprep.mubr.bf16.mxu0 0
      %2120 = vmatmul.mubr.bf16.gmra.mrb[0].mxu0 %v2085
      %v2121 = vpop.f32.mrb[0].mxu0
      %v2122 = vadd.f32 %v2070, %v2121
      %v2123 = vpop.f32.mrb[0].mxu0
      %v2124 = vpop.f32.mrb[0].mxu0
      %v2125 = vadd.f32 %v2070, %v2124
      %v2126 = vpop.f32.mrb[0].mxu0
      %2127 = vdwg.mxu0
      %v2128 = vadd.f32 %v1064, %v2122
      %v2129 = vadd.f32 %v1065, %v2125
      %v2130 = vsel %vm1100, %v2128, 0.0
      %2131 = vadd.xlane.f32.xlu0 %v2130
      %v2132 = vpop.xlane.xlu0 %2131
      %v2133 = vsel %vm1100, %v2129, 0.0
      %2134 = vadd.xlane.f32.xlu0 %v2133
      %v2135 = vpop.xlane.xlu0 %2134
      %v2136 = vrcp.pop 32.0
      %v2137 = vmul.f32 %v2132, %v2136
      %v2138 = vmul.f32 %v2135, %v2136
      %v2139 = vsub.f32 %v2128, %v2137
      %v2140 = vsub.f32 %v2129, %v2138
      %v2141 = vmul.f32 %v2139, %v2139
      %v2142 = vmul.f32 %v2140, %v2140
      %v2143 = vsel %vm1100, %v2141, 0.0
      %2144 = vadd.xlane.f32.xlu0 %v2143
      %v2145 = vpop.xlane.xlu0 %2144
      %v2146 = vsel %vm1100, %v2142, 0.0
      %2147 = vadd.xlane.f32.xlu0 %v2146
      %v2148 = vpop.xlane.xlu0 %2147
      %v2149 = vmul.f32 %v2145, %v2136
      %v2150 = vmul.f32 %v2148, %v2136
      %v2151 = vadd.f32 %v2149, 1e-05
      %v2152 = vadd.f32 %v2150, 1e-05
      %v2153 = vrsqrt.pop %v2151
      %v2154 = vrsqrt.pop %v2152
      %v2155 = vmul.f32 %v2139, %v2153
      %v2156 = vmul.f32 %v2140, %v2154
      %v2158 = vlaneseq
      %v2159 = vshrl.u32 %v2158, 7
      %v2160 = vsub.s32 0, %v2159
      %v2161 = vrot.slane %v1079, %v2160
      %v2163 = vmul.f32 %v2155, %v2161
      %v2164 = vmul.f32 %v2156, %v2161
      %v2166 = vlaneseq
      %v2167 = vshrl.u32 %v2166, 7
      %v2168 = vsub.s32 0, %v2167
      %v2169 = vrot.slane %v1080, %v2168
      %v2171 = vadd.f32 %v2163, %v2169
      %v2172 = vadd.f32 %v2164, %v2169
      %v2173 = vld [vmem:[%s1004] sm:$0xf]
      %v2174 = vld [vmem:[%s1004 + $0x4] sm:$0xf]
      %v2175 = vld [vmem:[%s1004 + $0x8] sm:$0xf]
      %v2176 = vld [vmem:[%s1004 + $0xc] sm:$0xf]
      %v2177 = vld [vmem:[%s1007] sm:$0x1]
      %v2178 = vld [vmem:[%s1012] sm:$0xf]
      %v2179 = vld [vmem:[%s1012 + $0x4] sm:$0xf]
      %v2180 = vld [vmem:[%s1012 + $0x8] sm:$0xf]
      %v2181 = vld [vmem:[%s1012 + $0xc] sm:$0xf]
      %v2182 = vld [vmem:[%s1015] sm:$0x1]
      %v2183 = vld [vmem:[%s1020] sm:$0xf]
      %v2184 = vld [vmem:[%s1020 + $0x4] sm:$0xf]
      %v2185 = vld [vmem:[%s1020 + $0x8] sm:$0xf]
      %v2186 = vld [vmem:[%s1020 + $0xc] sm:$0xf]
      %v2187 = vld [vmem:[%s1023] sm:$0x1]
      %v2188 = vld [vmem:[%s1026] sm:$0x1]
      %v2189 = vld [vmem:[%s1029] sm:$0x1]
      %v2190 = vpack.c.bf16 %v2172, %v2171
      %v2192 = vlaneseq
      %v2193 = vshrl.u32 %v2192, 7
      %v2194 = vsub.s32 0, %v2193
      %v2195 = vrot.slane %v2177, %v2194
      %v2201 = vunpack.c.l.b16 %v2173
      %v2202 = vunpack.c.l.b16 %v2174
      %v2203 = vunpack.c.l.b16 %v2175
      %v2204 = vunpack.c.l.b16 %v2176
      %v2205 = vpack.c.b16 %v2202, %v2201
      %v2206 = vpack.c.b16 %v2204, %v2203
      %v2210 = vsel %vm1100, %v2190, 0
      %2212 = vmatprep.subr.bf16.mxu0 0
      %2213 = vmatpush1.bf16.msra.mxu0 %v2205
      %2214 = vmatprep.subr.bf16.mxu0 0
      %2215 = vmatpush1.bf16.msra.mxu0 %v2206
      %2216 = vmatprep.subr.bf16.mxu0 0
      %2217 = vmatpush1.bf16.msra.mxu0 0
      %2218 = vmatprep.subr.bf16.mxu0 0
      %2219 = vmatpush1.bf16.msra.mxu0 0
      %2220 = vmatprep.subr.bf16.mxu0 0
      %2221 = vmatpush1.bf16.msra.mxu0 0
      %2222 = vmatprep.subr.bf16.mxu0 0
      %2223 = vmatpush1.bf16.msra.mxu0 0
      %2224 = vmatprep.subr.bf16.mxu0 0
      %2225 = vmatpush1.bf16.msra.mxu0 0
      %2226 = vmatprep.subr.bf16.mxu0 0
      %2227 = vmatpush1.bf16.msra.mxu0 0
      %2228 = vmatprep.subr.bf16.mxu0 0
      %2229 = vmatpush1.bf16.msra.mxu0 0
      %2230 = vmatprep.subr.bf16.mxu0 0
      %2231 = vmatpush1.bf16.msra.mxu0 0
      %2232 = vmatprep.subr.bf16.mxu0 0
      %2233 = vmatpush1.bf16.msra.mxu0 0
      %2234 = vmatprep.subr.bf16.mxu0 0
      %2235 = vmatpush1.bf16.msra.mxu0 0
      %2236 = vmatprep.subr.bf16.mxu0 0
      %2237 = vmatpush1.bf16.msra.mxu0 0
      %2238 = vmatprep.subr.bf16.mxu0 0
      %2239 = vmatpush1.bf16.msra.mxu0 0
      %2240 = vmatprep.subr.bf16.mxu0 0
      %2241 = vmatpush1.bf16.msra.mxu0 0
      %2242 = vmatprep.subr.bf16.mxu0 0
      %2243 = vmatpush1.bf16.msra.mxu0 0
      %2244 = vmatprep.mubr.bf16.mxu0 0
      %2245 = vmatmul.mubr.bf16.gmra.mrb[0].mxu0 %v2210
      %v2246 = vpop.f32.mrb[0].mxu0
      %v2247 = vadd.f32 %v2195, %v2246
      %v2248 = vpop.f32.mrb[0].mxu0
      %v2249 = vpop.f32.mrb[0].mxu0
      %v2250 = vadd.f32 %v2195, %v2249
      %v2251 = vpop.f32.mrb[0].mxu0
      %2252 = vdwg.mxu0
      %v2254 = vlaneseq
      %v2255 = vshrl.u32 %v2254, 7
      %v2256 = vsub.s32 0, %v2255
      %v2257 = vrot.slane %v2182, %v2256
      %v2261 = vunpack.c.l.b16 %v1066
      %v2262 = vunpack.c.l.b16 %v1067
      %v2263 = vpack.c.b16 %v2262, %v2261
      %v2268 = vunpack.c.l.b16 %v2178
      %v2269 = vunpack.c.l.b16 %v2179
      %v2270 = vunpack.c.l.b16 %v2180
      %v2271 = vunpack.c.l.b16 %v2181
      %v2272 = vpack.c.b16 %v2269, %v2268
      %v2273 = vpack.c.b16 %v2271, %v2270
      %v2277 = vsel %vm1100, %v2263, 0
      %2279 = vmatprep.subr.bf16.mxu0 0
      %2280 = vmatpush1.bf16.msra.mxu0 %v2272
      %2281 = vmatprep.subr.bf16.mxu0 0
      %2282 = vmatpush1.bf16.msra.mxu0 %v2273
      %2283 = vmatprep.subr.bf16.mxu0 0
      %2284 = vmatpush1.bf16.msra.mxu0 0
      %2285 = vmatprep.subr.bf16.mxu0 0
      %2286 = vmatpush1.bf16.msra.mxu0 0
      %2287 = vmatprep.subr.bf16.mxu0 0
      %2288 = vmatpush1.bf16.msra.mxu0 0
      %2289 = vmatprep.subr.bf16.mxu0 0
      %2290 = vmatpush1.bf16.msra.mxu0 0
      %2291 = vmatprep.subr.bf16.mxu0 0
      %2292 = vmatpush1.bf16.msra.mxu0 0
      %2293 = vmatprep.subr.bf16.mxu0 0
      %2294 = vmatpush1.bf16.msra.mxu0 0
      %2295 = vmatprep.subr.bf16.mxu0 0
      %2296 = vmatpush1.bf16.msra.mxu0 0
      %2297 = vmatprep.subr.bf16.mxu0 0
      %2298 = vmatpush1.bf16.msra.mxu0 0
      %2299 = vmatprep.subr.bf16.mxu0 0
      %2300 = vmatpush1.bf16.msra.mxu0 0
      %2301 = vmatprep.subr.bf16.mxu0 0
      %2302 = vmatpush1.bf16.msra.mxu0 0
      %2303 = vmatprep.subr.bf16.mxu0 0
      %2304 = vmatpush1.bf16.msra.mxu0 0
      %2305 = vmatprep.subr.bf16.mxu0 0
      %2306 = vmatpush1.bf16.msra.mxu0 0
      %2307 = vmatprep.subr.bf16.mxu0 0
      %2308 = vmatpush1.bf16.msra.mxu0 0
      %2309 = vmatprep.subr.bf16.mxu0 0
      %2310 = vmatpush1.bf16.msra.mxu0 0
      %2311 = vmatprep.mubr.bf16.mxu0 0
      %2312 = vmatmul.mubr.bf16.gmra.mrb[0].mxu0 %v2277
      %v2313 = vpop.f32.mrb[0].mxu0
      %v2314 = vadd.f32 %v2257, %v2313
      %v2315 = vpop.f32.mrb[0].mxu0
      %v2316 = vpop.f32.mrb[0].mxu0
      %v2317 = vadd.f32 %v2257, %v2316
      %v2318 = vpop.f32.mrb[0].mxu0
      %2319 = vdwg.mxu0
      %v2320 = vmul.f32 %v2247, 0.35355338
      %v2321 = vmul.f32 %v2250, 0.35355338
      %v2322 = vpack.c.bf16 %v2320, %v2320
      %v2323 = vpack.c.bf16 %v2321, %v2321
      %v2324 = vpack.c.bf16 %v2314, %v2314
      %v2325 = vpack.c.bf16 %v2317, %v2317
      %v2327 = vsel %vm1154, %v2322, 0
      %v2330 = vsel %vm1154, %v2324, 0
      %2332 = vmatprep.subr.bf16.mxu0 0
      %2333 = vmatpush1.bf16.xpose.msra.mxu0 %v2330
      %2334 = vmatprep.subr.bf16.mxu0 0
      %2335 = vmatpush1.bf16.xpose.msra.mxu0 0
      %2336 = vmatprep.subr.bf16.mxu0 0
      %2337 = vmatpush1.bf16.xpose.msra.mxu0 0
      %2338 = vmatprep.subr.bf16.mxu0 0
      %2339 = vmatpush1.bf16.xpose.msra.mxu0 0
      %2340 = vmatprep.subr.bf16.mxu0 0
      %2341 = vmatpush1.bf16.xpose.msra.mxu0 0
      %2342 = vmatprep.subr.bf16.mxu0 0
      %2343 = vmatpush1.bf16.xpose.msra.mxu0 0
      %2344 = vmatprep.subr.bf16.mxu0 0
      %2345 = vmatpush1.bf16.xpose.msra.mxu0 0
      %2346 = vmatprep.subr.bf16.mxu0 0
      %2347 = vmatpush1.bf16.xpose.msra.mxu0 0
      %2348 = vmatprep.subr.bf16.mxu0 0
      %2349 = vmatpush1.bf16.xpose.msra.mxu0 0
      %2350 = vmatprep.subr.bf16.mxu0 0
      %2351 = vmatpush1.bf16.xpose.msra.mxu0 0
      %2352 = vmatprep.subr.bf16.mxu0 0
      %2353 = vmatpush1.bf16.xpose.msra.mxu0 0
      %2354 = vmatprep.subr.bf16.mxu0 0
      %2355 = vmatpush1.bf16.xpose.msra.mxu0 0
      %2356 = vmatprep.subr.bf16.mxu0 0
      %2357 = vmatpush1.bf16.xpose.msra.mxu0 0
      %2358 = vmatprep.subr.bf16.mxu0 0
      %2359 = vmatpush1.bf16.xpose.msra.mxu0 0
      %2360 = vmatprep.subr.bf16.mxu0 0
      %2361 = vmatpush1.bf16.xpose.msra.mxu0 0
      %2362 = vmatprep.subr.bf16.mxu0 0
      %2363 = vmatpush1.bf16.xpose.msra.mxu0 0
      %2364 = vmatprep.mubr.bf16.mxu0 0
      %2365 = vmatmul.mubr.bf16.gmra.mrb[0].mxu0 %v2327
      %v2366 = vpop.f32.mrb[0].mxu0
      %v2367 = vadd.f32 0.0, %v2366
      %v2368 = vpop.f32.mrb[0].mxu0
      %v2369 = vpop.f32.mrb[0].mxu0
      %v2370 = vpop.f32.mrb[0].mxu0
      %2371 = vdwg.mxu0
      %v2373 = vsel %vm1154, %v2323, 0
      %v2376 = vsel %vm1154, %v2325, 0
      %2378 = vmatprep.subr.bf16.mxu0 0
      %2379 = vmatpush1.bf16.xpose.msra.mxu0 %v2376
      %2380 = vmatprep.subr.bf16.mxu0 0
      %2381 = vmatpush1.bf16.xpose.msra.mxu0 0
      %2382 = vmatprep.subr.bf16.mxu0 0
      %2383 = vmatpush1.bf16.xpose.msra.mxu0 0
      %2384 = vmatprep.subr.bf16.mxu0 0
      %2385 = vmatpush1.bf16.xpose.msra.mxu0 0
      %2386 = vmatprep.subr.bf16.mxu0 0
      %2387 = vmatpush1.bf16.xpose.msra.mxu0 0
      %2388 = vmatprep.subr.bf16.mxu0 0
      %2389 = vmatpush1.bf16.xpose.msra.mxu0 0
      %2390 = vmatprep.subr.bf16.mxu0 0
      %2391 = vmatpush1.bf16.xpose.msra.mxu0 0
      %2392 = vmatprep.subr.bf16.mxu0 0
      %2393 = vmatpush1.bf16.xpose.msra.mxu0 0
      %2394 = vmatprep.subr.bf16.mxu0 0
      %2395 = vmatpush1.bf16.xpose.msra.mxu0 0
      %2396 = vmatprep.subr.bf16.mxu0 0
      %2397 = vmatpush1.bf16.xpose.msra.mxu0 0
      %2398 = vmatprep.subr.bf16.mxu0 0
      %2399 = vmatpush1.bf16.xpose.msra.mxu0 0
      %2400 = vmatprep.subr.bf16.mxu0 0
      %2401 = vmatpush1.bf16.xpose.msra.mxu0 0
      %2402 = vmatprep.subr.bf16.mxu0 0
      %2403 = vmatpush1.bf16.xpose.msra.mxu0 0
      %2404 = vmatprep.subr.bf16.mxu0 0
      %2405 = vmatpush1.bf16.xpose.msra.mxu0 0
      %2406 = vmatprep.subr.bf16.mxu0 0
      %2407 = vmatpush1.bf16.xpose.msra.mxu0 0
      %2408 = vmatprep.subr.bf16.mxu0 0
      %2409 = vmatpush1.bf16.xpose.msra.mxu0 0
      %2410 = vmatprep.mubr.bf16.mxu0 0
      %2411 = vmatmul.mubr.bf16.gmra.mrb[0].mxu0 %v2373
      %v2412 = vpop.f32.mrb[0].mxu0
      %v2413 = vadd.f32 0.0, %v2412
      %v2414 = vpop.f32.mrb[0].mxu0
      %v2415 = vpop.f32.mrb[0].mxu0
      %v2416 = vpop.f32.mrb[0].mxu0
      %2417 = vdwg.mxu0
      %v2418 = vsel %vm1154, %v2367, -inf
      %2419 = vmax.xlane.f32.xlu0 %v2418
      %v2420 = vpop.xlane.xlu0 %2419
      %v2421 = vsel %vm1154, %v2413, -inf
      %2422 = vmax.xlane.f32.xlu0 %v2421
      %v2423 = vpop.xlane.xlu0 %2422
      %v2424 = vsub.f32 %v2367, %v2420
      %v2425 = vsub.f32 %v2413, %v2423
      %v2426 = vmul.f32 %v2424, 1.442695
      %v2427 = vpow.pop %v2426
      %v2428 = vmul.f32 %v2425, 1.442695
      %v2429 = vpow.pop %v2428
      %v2430 = vsel %vm1154, %v2427, 0.0
      %2431 = vadd.xlane.f32.xlu0 %v2430
      %v2432 = vpop.xlane.xlu0 %2431
      %v2433 = vsel %vm1154, %v2429, 0.0
      %2434 = vadd.xlane.f32.xlu0 %v2433
      %v2435 = vpop.xlane.xlu0 %2434
      %v2436 = vrcp.pop %v2432
      %v2437 = vrcp.pop %v2435
      %v2438 = vmul.f32 %v2427, %v2436
      %v2439 = vmul.f32 %v2429, %v2437
      %v2440 = vpack.c.bf16 %v2438, %v2438
      %v2441 = vpack.c.bf16 %v2439, %v2439
      %2443 = vrot.lane.b32.xlu0 %v2324, 96
      %v2444 = vpop.permute.xlu0 %2443
      %v2446 = vsel %vm1154, %v2440, 0
      %v2449 = vsel %vm1279, %v2444, 0
      %2451 = vmatprep.subr.bf16.mxu0 0
      %2452 = vmatpush1.bf16.msra.mxu0 %v2449
      %2453 = vmatprep.subr.bf16.mxu0 0
      %2454 = vmatpush1.bf16.msra.mxu0 0
      %2455 = vmatprep.subr.bf16.mxu0 0
      %2456 = vmatpush1.bf16.msra.mxu0 0
      %2457 = vmatprep.subr.bf16.mxu0 0
      %2458 = vmatpush1.bf16.msra.mxu0 0
      %2459 = vmatprep.subr.bf16.mxu0 0
      %2460 = vmatpush1.bf16.msra.mxu0 0
      %2461 = vmatprep.subr.bf16.mxu0 0
      %2462 = vmatpush1.bf16.msra.mxu0 0
      %2463 = vmatprep.subr.bf16.mxu0 0
      %2464 = vmatpush1.bf16.msra.mxu0 0
      %2465 = vmatprep.subr.bf16.mxu0 0
      %2466 = vmatpush1.bf16.msra.mxu0 0
      %2467 = vmatprep.subr.bf16.mxu0 0
      %2468 = vmatpush1.bf16.msra.mxu0 0
      %2469 = vmatprep.subr.bf16.mxu0 0
      %2470 = vmatpush1.bf16.msra.mxu0 0
      %2471 = vmatprep.subr.bf16.mxu0 0
      %2472 = vmatpush1.bf16.msra.mxu0 0
      %2473 = vmatprep.subr.bf16.mxu0 0
      %2474 = vmatpush1.bf16.msra.mxu0 0
      %2475 = vmatprep.subr.bf16.mxu0 0
      %2476 = vmatpush1.bf16.msra.mxu0 0
      %2477 = vmatprep.subr.bf16.mxu0 0
      %2478 = vmatpush1.bf16.msra.mxu0 0
      %2479 = vmatprep.subr.bf16.mxu0 0
      %2480 = vmatpush1.bf16.msra.mxu0 0
      %2481 = vmatprep.subr.bf16.mxu0 0
      %2482 = vmatpush1.bf16.msra.mxu0 0
      %2483 = vmatprep.mubr.bf16.mxu0 0
      %2484 = vmatmul.mubr.bf16.gmra.mrb[0].mxu0 %v2446
      %v2485 = vpop.f32.mrb[0].mxu0
      %v2486 = vadd.f32 0.0, %v2485
      %v2487 = vpop.f32.mrb[0].mxu0
      %v2488 = vpop.f32.mrb[0].mxu0
      %v2489 = vpop.f32.mrb[0].mxu0
      %2490 = vdwg.mxu0
      %2492 = vrot.lane.b32.xlu0 %v2325, 96
      %v2493 = vpop.permute.xlu0 %2492
      %v2495 = vsel %vm1154, %v2441, 0
      %v2498 = vsel %vm1279, %v2493, 0
      %2500 = vmatprep.subr.bf16.mxu0 0
      %2501 = vmatpush1.bf16.msra.mxu0 %v2498
      %2502 = vmatprep.subr.bf16.mxu0 0
      %2503 = vmatpush1.bf16.msra.mxu0 0
      %2504 = vmatprep.subr.bf16.mxu0 0
      %2505 = vmatpush1.bf16.msra.mxu0 0
      %2506 = vmatprep.subr.bf16.mxu0 0
      %2507 = vmatpush1.bf16.msra.mxu0 0
      %2508 = vmatprep.subr.bf16.mxu0 0
      %2509 = vmatpush1.bf16.msra.mxu0 0
      %2510 = vmatprep.subr.bf16.mxu0 0
      %2511 = vmatpush1.bf16.msra.mxu0 0
      %2512 = vmatprep.subr.bf16.mxu0 0
      %2513 = vmatpush1.bf16.msra.mxu0 0
      %2514 = vmatprep.subr.bf16.mxu0 0
      %2515 = vmatpush1.bf16.msra.mxu0 0
      %2516 = vmatprep.subr.bf16.mxu0 0
      %2517 = vmatpush1.bf16.msra.mxu0 0
      %2518 = vmatprep.subr.bf16.mxu0 0
      %2519 = vmatpush1.bf16.msra.mxu0 0
      %2520 = vmatprep.subr.bf16.mxu0 0
      %2521 = vmatpush1.bf16.msra.mxu0 0
      %2522 = vmatprep.subr.bf16.mxu0 0
      %2523 = vmatpush1.bf16.msra.mxu0 0
      %2524 = vmatprep.subr.bf16.mxu0 0
      %2525 = vmatpush1.bf16.msra.mxu0 0
      %2526 = vmatprep.subr.bf16.mxu0 0
      %2527 = vmatpush1.bf16.msra.mxu0 0
      %2528 = vmatprep.subr.bf16.mxu0 0
      %2529 = vmatpush1.bf16.msra.mxu0 0
      %2530 = vmatprep.subr.bf16.mxu0 0
      %2531 = vmatpush1.bf16.msra.mxu0 0
      %2532 = vmatprep.mubr.bf16.mxu0 0
      %2533 = vmatmul.mubr.bf16.gmra.mrb[0].mxu0 %v2495
      %v2534 = vpop.f32.mrb[0].mxu0
      %v2535 = vadd.f32 0.0, %v2534
      %v2536 = vpop.f32.mrb[0].mxu0
      %v2537 = vpop.f32.mrb[0].mxu0
      %v2538 = vpop.f32.mrb[0].mxu0
      %2539 = vdwg.mxu0
      %2541 = vrot.lane.b32.xlu0 %v2322, 120
      %v2542 = vpop.permute.xlu0 %2541
      %2543 = vrot.lane.b32.xlu0 %v2324, 120
      %v2544 = vpop.permute.xlu0 %2543
      %v2546 = vsel %vm1154, %v2542, 0
      %v2549 = vsel %vm1154, %v2544, 0
      %2551 = vmatprep.subr.bf16.mxu0 0
      %2552 = vmatpush1.bf16.xpose.msra.mxu0 %v2549
      %2553 = vmatprep.subr.bf16.mxu0 0
      %2554 = vmatpush1.bf16.xpose.msra.mxu0 0
      %2555 = vmatprep.subr.bf16.mxu0 0
      %2556 = vmatpush1.bf16.xpose.msra.mxu0 0
      %2557 = vmatprep.subr.bf16.mxu0 0
      %2558 = vmatpush1.bf16.xpose.msra.mxu0 0
      %2559 = vmatprep.subr.bf16.mxu0 0
      %2560 = vmatpush1.bf16.xpose.msra.mxu0 0
      %2561 = vmatprep.subr.bf16.mxu0 0
      %2562 = vmatpush1.bf16.xpose.msra.mxu0 0
      %2563 = vmatprep.subr.bf16.mxu0 0
      %2564 = vmatpush1.bf16.xpose.msra.mxu0 0
      %2565 = vmatprep.subr.bf16.mxu0 0
      %2566 = vmatpush1.bf16.xpose.msra.mxu0 0
      %2567 = vmatprep.subr.bf16.mxu0 0
      %2568 = vmatpush1.bf16.xpose.msra.mxu0 0
      %2569 = vmatprep.subr.bf16.mxu0 0
      %2570 = vmatpush1.bf16.xpose.msra.mxu0 0
      %2571 = vmatprep.subr.bf16.mxu0 0
      %2572 = vmatpush1.bf16.xpose.msra.mxu0 0
      %2573 = vmatprep.subr.bf16.mxu0 0
      %2574 = vmatpush1.bf16.xpose.msra.mxu0 0
      %2575 = vmatprep.subr.bf16.mxu0 0
      %2576 = vmatpush1.bf16.xpose.msra.mxu0 0
      %2577 = vmatprep.subr.bf16.mxu0 0
      %2578 = vmatpush1.bf16.xpose.msra.mxu0 0
      %2579 = vmatprep.subr.bf16.mxu0 0
      %2580 = vmatpush1.bf16.xpose.msra.mxu0 0
      %2581 = vmatprep.subr.bf16.mxu0 0
      %2582 = vmatpush1.bf16.xpose.msra.mxu0 0
      %2583 = vmatprep.mubr.bf16.mxu0 0
      %2584 = vmatmul.mubr.bf16.gmra.mrb[0].mxu0 %v2546
      %v2585 = vpop.f32.mrb[0].mxu0
      %v2586 = vadd.f32 0.0, %v2585
      %v2587 = vpop.f32.mrb[0].mxu0
      %v2588 = vpop.f32.mrb[0].mxu0
      %v2589 = vpop.f32.mrb[0].mxu0
      %2590 = vdwg.mxu0
      %2592 = vrot.lane.b32.xlu0 %v2323, 120
      %v2593 = vpop.permute.xlu0 %2592
      %2594 = vrot.lane.b32.xlu0 %v2325, 120
      %v2595 = vpop.permute.xlu0 %2594
      %v2597 = vsel %vm1154, %v2593, 0
      %v2600 = vsel %vm1154, %v2595, 0
      %2602 = vmatprep.subr.bf16.mxu0 0
      %2603 = vmatpush1.bf16.xpose.msra.mxu0 %v2600
      %2604 = vmatprep.subr.bf16.mxu0 0
      %2605 = vmatpush1.bf16.xpose.msra.mxu0 0
      %2606 = vmatprep.subr.bf16.mxu0 0
      %2607 = vmatpush1.bf16.xpose.msra.mxu0 0
      %2608 = vmatprep.subr.bf16.mxu0 0
      %2609 = vmatpush1.bf16.xpose.msra.mxu0 0
      %2610 = vmatprep.subr.bf16.mxu0 0
      %2611 = vmatpush1.bf16.xpose.msra.mxu0 0
      %2612 = vmatprep.subr.bf16.mxu0 0
      %2613 = vmatpush1.bf16.xpose.msra.mxu0 0
      %2614 = vmatprep.subr.bf16.mxu0 0
      %2615 = vmatpush1.bf16.xpose.msra.mxu0 0
      %2616 = vmatprep.subr.bf16.mxu0 0
      %2617 = vmatpush1.bf16.xpose.msra.mxu0 0
      %2618 = vmatprep.subr.bf16.mxu0 0
      %2619 = vmatpush1.bf16.xpose.msra.mxu0 0
      %2620 = vmatprep.subr.bf16.mxu0 0
      %2621 = vmatpush1.bf16.xpose.msra.mxu0 0
      %2622 = vmatprep.subr.bf16.mxu0 0
      %2623 = vmatpush1.bf16.xpose.msra.mxu0 0
      %2624 = vmatprep.subr.bf16.mxu0 0
      %2625 = vmatpush1.bf16.xpose.msra.mxu0 0
      %2626 = vmatprep.subr.bf16.mxu0 0
      %2627 = vmatpush1.bf16.xpose.msra.mxu0 0
      %2628 = vmatprep.subr.bf16.mxu0 0
      %2629 = vmatpush1.bf16.xpose.msra.mxu0 0
      %2630 = vmatprep.subr.bf16.mxu0 0
      %2631 = vmatpush1.bf16.xpose.msra.mxu0 0
      %2632 = vmatprep.subr.bf16.mxu0 0
      %2633 = vmatpush1.bf16.xpose.msra.mxu0 0
      %2634 = vmatprep.mubr.bf16.mxu0 0
      %2635 = vmatmul.mubr.bf16.gmra.mrb[0].mxu0 %v2597
      %v2636 = vpop.f32.mrb[0].mxu0
      %v2637 = vadd.f32 0.0, %v2636
      %v2638 = vpop.f32.mrb[0].mxu0
      %v2639 = vpop.f32.mrb[0].mxu0
      %v2640 = vpop.f32.mrb[0].mxu0
      %2641 = vdwg.mxu0
      %v2642 = vsel %vm1154, %v2586, -inf
      %2643 = vmax.xlane.f32.xlu0 %v2642
      %v2644 = vpop.xlane.xlu0 %2643
      %v2645 = vsel %vm1154, %v2637, -inf
      %2646 = vmax.xlane.f32.xlu0 %v2645
      %v2647 = vpop.xlane.xlu0 %2646
      %v2648 = vsub.f32 %v2586, %v2644
      %v2649 = vsub.f32 %v2637, %v2647
      %v2650 = vmul.f32 %v2648, 1.442695
      %v2651 = vpow.pop %v2650
      %v2652 = vmul.f32 %v2649, 1.442695
      %v2653 = vpow.pop %v2652
      %v2654 = vsel %vm1154, %v2651, 0.0
      %2655 = vadd.xlane.f32.xlu0 %v2654
      %v2656 = vpop.xlane.xlu0 %2655
      %v2657 = vsel %vm1154, %v2653, 0.0
      %2658 = vadd.xlane.f32.xlu0 %v2657
      %v2659 = vpop.xlane.xlu0 %2658
      %v2660 = vrcp.pop %v2656
      %v2661 = vrcp.pop %v2659
      %v2662 = vmul.f32 %v2651, %v2660
      %v2663 = vmul.f32 %v2653, %v2661
      %v2664 = vpack.c.bf16 %v2662, %v2662
      %v2665 = vpack.c.bf16 %v2663, %v2663
      %2666 = vrot.lane.b32.xlu0 %v2324, 88
      %v2667 = vpop.permute.xlu0 %2666
      %v2669 = vsel %vm1154, %v2664, 0
      %v2672 = vsel %vm1279, %v2667, 0
      %2674 = vmatprep.subr.bf16.mxu0 0
      %2675 = vmatpush1.bf16.msra.mxu0 %v2672
      %2676 = vmatprep.subr.bf16.mxu0 0
      %2677 = vmatpush1.bf16.msra.mxu0 0
      %2678 = vmatprep.subr.bf16.mxu0 0
      %2679 = vmatpush1.bf16.msra.mxu0 0
      %2680 = vmatprep.subr.bf16.mxu0 0
      %2681 = vmatpush1.bf16.msra.mxu0 0
      %2682 = vmatprep.subr.bf16.mxu0 0
      %2683 = vmatpush1.bf16.msra.mxu0 0
      %2684 = vmatprep.subr.bf16.mxu0 0
      %2685 = vmatpush1.bf16.msra.mxu0 0
      %2686 = vmatprep.subr.bf16.mxu0 0
      %2687 = vmatpush1.bf16.msra.mxu0 0
      %2688 = vmatprep.subr.bf16.mxu0 0
      %2689 = vmatpush1.bf16.msra.mxu0 0
      %2690 = vmatprep.subr.bf16.mxu0 0
      %2691 = vmatpush1.bf16.msra.mxu0 0
      %2692 = vmatprep.subr.bf16.mxu0 0
      %2693 = vmatpush1.bf16.msra.mxu0 0
      %2694 = vmatprep.subr.bf16.mxu0 0
      %2695 = vmatpush1.bf16.msra.mxu0 0
      %2696 = vmatprep.subr.bf16.mxu0 0
      %2697 = vmatpush1.bf16.msra.mxu0 0
      %2698 = vmatprep.subr.bf16.mxu0 0
      %2699 = vmatpush1.bf16.msra.mxu0 0
      %2700 = vmatprep.subr.bf16.mxu0 0
      %2701 = vmatpush1.bf16.msra.mxu0 0
      %2702 = vmatprep.subr.bf16.mxu0 0
      %2703 = vmatpush1.bf16.msra.mxu0 0
      %2704 = vmatprep.subr.bf16.mxu0 0
      %2705 = vmatpush1.bf16.msra.mxu0 0
      %2706 = vmatprep.mubr.bf16.mxu0 0
      %2707 = vmatmul.mubr.bf16.gmra.mrb[0].mxu0 %v2669
      %v2708 = vpop.f32.mrb[0].mxu0
      %v2709 = vadd.f32 0.0, %v2708
      %v2710 = vpop.f32.mrb[0].mxu0
      %v2711 = vpop.f32.mrb[0].mxu0
      %v2712 = vpop.f32.mrb[0].mxu0
      %2713 = vdwg.mxu0
      %2714 = vrot.lane.b32.xlu0 %v2325, 88
      %v2715 = vpop.permute.xlu0 %2714
      %v2717 = vsel %vm1154, %v2665, 0
      %v2720 = vsel %vm1279, %v2715, 0
      %2722 = vmatprep.subr.bf16.mxu0 0
      %2723 = vmatpush1.bf16.msra.mxu0 %v2720
      %2724 = vmatprep.subr.bf16.mxu0 0
      %2725 = vmatpush1.bf16.msra.mxu0 0
      %2726 = vmatprep.subr.bf16.mxu0 0
      %2727 = vmatpush1.bf16.msra.mxu0 0
      %2728 = vmatprep.subr.bf16.mxu0 0
      %2729 = vmatpush1.bf16.msra.mxu0 0
      %2730 = vmatprep.subr.bf16.mxu0 0
      %2731 = vmatpush1.bf16.msra.mxu0 0
      %2732 = vmatprep.subr.bf16.mxu0 0
      %2733 = vmatpush1.bf16.msra.mxu0 0
      %2734 = vmatprep.subr.bf16.mxu0 0
      %2735 = vmatpush1.bf16.msra.mxu0 0
      %2736 = vmatprep.subr.bf16.mxu0 0
      %2737 = vmatpush1.bf16.msra.mxu0 0
      %2738 = vmatprep.subr.bf16.mxu0 0
      %2739 = vmatpush1.bf16.msra.mxu0 0
      %2740 = vmatprep.subr.bf16.mxu0 0
      %2741 = vmatpush1.bf16.msra.mxu0 0
      %2742 = vmatprep.subr.bf16.mxu0 0
      %2743 = vmatpush1.bf16.msra.mxu0 0
      %2744 = vmatprep.subr.bf16.mxu0 0
      %2745 = vmatpush1.bf16.msra.mxu0 0
      %2746 = vmatprep.subr.bf16.mxu0 0
      %2747 = vmatpush1.bf16.msra.mxu0 0
      %2748 = vmatprep.subr.bf16.mxu0 0
      %2749 = vmatpush1.bf16.msra.mxu0 0
      %2750 = vmatprep.subr.bf16.mxu0 0
      %2751 = vmatpush1.bf16.msra.mxu0 0
      %2752 = vmatprep.subr.bf16.mxu0 0
      %2753 = vmatpush1.bf16.msra.mxu0 0
      %2754 = vmatprep.mubr.bf16.mxu0 0
      %2755 = vmatmul.mubr.bf16.gmra.mrb[0].mxu0 %v2717
      %v2756 = vpop.f32.mrb[0].mxu0
      %v2757 = vadd.f32 0.0, %v2756
      %v2758 = vpop.f32.mrb[0].mxu0
      %v2759 = vpop.f32.mrb[0].mxu0
      %v2760 = vpop.f32.mrb[0].mxu0
      %2761 = vdwg.mxu0
      %2762 = vrot.lane.b32.xlu0 %v2322, 112
      %v2763 = vpop.permute.xlu0 %2762
      %2764 = vrot.lane.b32.xlu0 %v2324, 112
      %v2765 = vpop.permute.xlu0 %2764
      %v2767 = vsel %vm1154, %v2763, 0
      %v2770 = vsel %vm1154, %v2765, 0
      %2772 = vmatprep.subr.bf16.mxu0 0
      %2773 = vmatpush1.bf16.xpose.msra.mxu0 %v2770
      %2774 = vmatprep.subr.bf16.mxu0 0
      %2775 = vmatpush1.bf16.xpose.msra.mxu0 0
      %2776 = vmatprep.subr.bf16.mxu0 0
      %2777 = vmatpush1.bf16.xpose.msra.mxu0 0
      %2778 = vmatprep.subr.bf16.mxu0 0
      %2779 = vmatpush1.bf16.xpose.msra.mxu0 0
      %2780 = vmatprep.subr.bf16.mxu0 0
      %2781 = vmatpush1.bf16.xpose.msra.mxu0 0
      %2782 = vmatprep.subr.bf16.mxu0 0
      %2783 = vmatpush1.bf16.xpose.msra.mxu0 0
      %2784 = vmatprep.subr.bf16.mxu0 0
      %2785 = vmatpush1.bf16.xpose.msra.mxu0 0
      %2786 = vmatprep.subr.bf16.mxu0 0
      %2787 = vmatpush1.bf16.xpose.msra.mxu0 0
      %2788 = vmatprep.subr.bf16.mxu0 0
      %2789 = vmatpush1.bf16.xpose.msra.mxu0 0
      %2790 = vmatprep.subr.bf16.mxu0 0
      %2791 = vmatpush1.bf16.xpose.msra.mxu0 0
      %2792 = vmatprep.subr.bf16.mxu0 0
      %2793 = vmatpush1.bf16.xpose.msra.mxu0 0
      %2794 = vmatprep.subr.bf16.mxu0 0
      %2795 = vmatpush1.bf16.xpose.msra.mxu0 0
      %2796 = vmatprep.subr.bf16.mxu0 0
      %2797 = vmatpush1.bf16.xpose.msra.mxu0 0
      %2798 = vmatprep.subr.bf16.mxu0 0
      %2799 = vmatpush1.bf16.xpose.msra.mxu0 0
      %2800 = vmatprep.subr.bf16.mxu0 0
      %2801 = vmatpush1.bf16.xpose.msra.mxu0 0
      %2802 = vmatprep.subr.bf16.mxu0 0
      %2803 = vmatpush1.bf16.xpose.msra.mxu0 0
      %2804 = vmatprep.mubr.bf16.mxu0 0
      %2805 = vmatmul.mubr.bf16.gmra.mrb[0].mxu0 %v2767
      %v2806 = vpop.f32.mrb[0].mxu0
      %v2807 = vadd.f32 0.0, %v2806
      %v2808 = vpop.f32.mrb[0].mxu0
      %v2809 = vpop.f32.mrb[0].mxu0
      %v2810 = vpop.f32.mrb[0].mxu0
      %2811 = vdwg.mxu0
      %2812 = vrot.lane.b32.xlu0 %v2323, 112
      %v2813 = vpop.permute.xlu0 %2812
      %2814 = vrot.lane.b32.xlu0 %v2325, 112
      %v2815 = vpop.permute.xlu0 %2814
      %v2817 = vsel %vm1154, %v2813, 0
      %v2820 = vsel %vm1154, %v2815, 0
      %2822 = vmatprep.subr.bf16.mxu0 0
      %2823 = vmatpush1.bf16.xpose.msra.mxu0 %v2820
      %2824 = vmatprep.subr.bf16.mxu0 0
      %2825 = vmatpush1.bf16.xpose.msra.mxu0 0
      %2826 = vmatprep.subr.bf16.mxu0 0
      %2827 = vmatpush1.bf16.xpose.msra.mxu0 0
      %2828 = vmatprep.subr.bf16.mxu0 0
      %2829 = vmatpush1.bf16.xpose.msra.mxu0 0
      %2830 = vmatprep.subr.bf16.mxu0 0
      %2831 = vmatpush1.bf16.xpose.msra.mxu0 0
      %2832 = vmatprep.subr.bf16.mxu0 0
      %2833 = vmatpush1.bf16.xpose.msra.mxu0 0
      %2834 = vmatprep.subr.bf16.mxu0 0
      %2835 = vmatpush1.bf16.xpose.msra.mxu0 0
      %2836 = vmatprep.subr.bf16.mxu0 0
      %2837 = vmatpush1.bf16.xpose.msra.mxu0 0
      %2838 = vmatprep.subr.bf16.mxu0 0
      %2839 = vmatpush1.bf16.xpose.msra.mxu0 0
      %2840 = vmatprep.subr.bf16.mxu0 0
      %2841 = vmatpush1.bf16.xpose.msra.mxu0 0
      %2842 = vmatprep.subr.bf16.mxu0 0
      %2843 = vmatpush1.bf16.xpose.msra.mxu0 0
      %2844 = vmatprep.subr.bf16.mxu0 0
      %2845 = vmatpush1.bf16.xpose.msra.mxu0 0
      %2846 = vmatprep.subr.bf16.mxu0 0
      %2847 = vmatpush1.bf16.xpose.msra.mxu0 0
      %2848 = vmatprep.subr.bf16.mxu0 0
      %2849 = vmatpush1.bf16.xpose.msra.mxu0 0
      %2850 = vmatprep.subr.bf16.mxu0 0
      %2851 = vmatpush1.bf16.xpose.msra.mxu0 0
      %2852 = vmatprep.subr.bf16.mxu0 0
      %2853 = vmatpush1.bf16.xpose.msra.mxu0 0
      %2854 = vmatprep.mubr.bf16.mxu0 0
      %2855 = vmatmul.mubr.bf16.gmra.mrb[0].mxu0 %v2817
      %v2856 = vpop.f32.mrb[0].mxu0
      %v2857 = vadd.f32 0.0, %v2856
      %v2858 = vpop.f32.mrb[0].mxu0
      %v2859 = vpop.f32.mrb[0].mxu0
      %v2860 = vpop.f32.mrb[0].mxu0
      %2861 = vdwg.mxu0
      %v2862 = vsel %vm1154, %v2807, -inf
      %2863 = vmax.xlane.f32.xlu0 %v2862
      %v2864 = vpop.xlane.xlu0 %2863
      %v2865 = vsel %vm1154, %v2857, -inf
      %2866 = vmax.xlane.f32.xlu0 %v2865
      %v2867 = vpop.xlane.xlu0 %2866
      %v2868 = vsub.f32 %v2807, %v2864
      %v2869 = vsub.f32 %v2857, %v2867
      %v2870 = vmul.f32 %v2868, 1.442695
      %v2871 = vpow.pop %v2870
      %v2872 = vmul.f32 %v2869, 1.442695
      %v2873 = vpow.pop %v2872
      %v2874 = vsel %vm1154, %v2871, 0.0
      %2875 = vadd.xlane.f32.xlu0 %v2874
      %v2876 = vpop.xlane.xlu0 %2875
      %v2877 = vsel %vm1154, %v2873, 0.0
      %2878 = vadd.xlane.f32.xlu0 %v2877
      %v2879 = vpop.xlane.xlu0 %2878
      %v2880 = vrcp.pop %v2876
      %v2881 = vrcp.pop %v2879
      %v2882 = vmul.f32 %v2871, %v2880
      %v2883 = vmul.f32 %v2873, %v2881
      %v2884 = vpack.c.bf16 %v2882, %v2882
      %v2885 = vpack.c.bf16 %v2883, %v2883
      %2886 = vrot.lane.b32.xlu0 %v2324, 80
      %v2887 = vpop.permute.xlu0 %2886
      %v2889 = vsel %vm1154, %v2884, 0
      %v2892 = vsel %vm1279, %v2887, 0
      %2894 = vmatprep.subr.bf16.mxu0 0
      %2895 = vmatpush1.bf16.msra.mxu0 %v2892
      %2896 = vmatprep.subr.bf16.mxu0 0
      %2897 = vmatpush1.bf16.msra.mxu0 0
      %2898 = vmatprep.subr.bf16.mxu0 0
      %2899 = vmatpush1.bf16.msra.mxu0 0
      %2900 = vmatprep.subr.bf16.mxu0 0
      %2901 = vmatpush1.bf16.msra.mxu0 0
      %2902 = vmatprep.subr.bf16.mxu0 0
      %2903 = vmatpush1.bf16.msra.mxu0 0
      %2904 = vmatprep.subr.bf16.mxu0 0
      %2905 = vmatpush1.bf16.msra.mxu0 0
      %2906 = vmatprep.subr.bf16.mxu0 0
      %2907 = vmatpush1.bf16.msra.mxu0 0
      %2908 = vmatprep.subr.bf16.mxu0 0
      %2909 = vmatpush1.bf16.msra.mxu0 0
      %2910 = vmatprep.subr.bf16.mxu0 0
      %2911 = vmatpush1.bf16.msra.mxu0 0
      %2912 = vmatprep.subr.bf16.mxu0 0
      %2913 = vmatpush1.bf16.msra.mxu0 0
      %2914 = vmatprep.subr.bf16.mxu0 0
      %2915 = vmatpush1.bf16.msra.mxu0 0
      %2916 = vmatprep.subr.bf16.mxu0 0
      %2917 = vmatpush1.bf16.msra.mxu0 0
      %2918 = vmatprep.subr.bf16.mxu0 0
      %2919 = vmatpush1.bf16.msra.mxu0 0
      %2920 = vmatprep.subr.bf16.mxu0 0
      %2921 = vmatpush1.bf16.msra.mxu0 0
      %2922 = vmatprep.subr.bf16.mxu0 0
      %2923 = vmatpush1.bf16.msra.mxu0 0
      %2924 = vmatprep.subr.bf16.mxu0 0
      %2925 = vmatpush1.bf16.msra.mxu0 0
      %2926 = vmatprep.mubr.bf16.mxu0 0
      %2927 = vmatmul.mubr.bf16.gmra.mrb[0].mxu0 %v2889
      %v2928 = vpop.f32.mrb[0].mxu0
      %v2929 = vadd.f32 0.0, %v2928
      %v2930 = vpop.f32.mrb[0].mxu0
      %v2931 = vpop.f32.mrb[0].mxu0
      %v2932 = vpop.f32.mrb[0].mxu0
      %2933 = vdwg.mxu0
      %2934 = vrot.lane.b32.xlu0 %v2325, 80
      %v2935 = vpop.permute.xlu0 %2934
      %v2937 = vsel %vm1154, %v2885, 0
      %v2940 = vsel %vm1279, %v2935, 0
      %2942 = vmatprep.subr.bf16.mxu0 0
      %2943 = vmatpush1.bf16.msra.mxu0 %v2940
      %2944 = vmatprep.subr.bf16.mxu0 0
      %2945 = vmatpush1.bf16.msra.mxu0 0
      %2946 = vmatprep.subr.bf16.mxu0 0
      %2947 = vmatpush1.bf16.msra.mxu0 0
      %2948 = vmatprep.subr.bf16.mxu0 0
      %2949 = vmatpush1.bf16.msra.mxu0 0
      %2950 = vmatprep.subr.bf16.mxu0 0
      %2951 = vmatpush1.bf16.msra.mxu0 0
      %2952 = vmatprep.subr.bf16.mxu0 0
      %2953 = vmatpush1.bf16.msra.mxu0 0
      %2954 = vmatprep.subr.bf16.mxu0 0
      %2955 = vmatpush1.bf16.msra.mxu0 0
      %2956 = vmatprep.subr.bf16.mxu0 0
      %2957 = vmatpush1.bf16.msra.mxu0 0
      %2958 = vmatprep.subr.bf16.mxu0 0
      %2959 = vmatpush1.bf16.msra.mxu0 0
      %2960 = vmatprep.subr.bf16.mxu0 0
      %2961 = vmatpush1.bf16.msra.mxu0 0
      %2962 = vmatprep.subr.bf16.mxu0 0
      %2963 = vmatpush1.bf16.msra.mxu0 0
      %2964 = vmatprep.subr.bf16.mxu0 0
      %2965 = vmatpush1.bf16.msra.mxu0 0
      %2966 = vmatprep.subr.bf16.mxu0 0
      %2967 = vmatpush1.bf16.msra.mxu0 0
      %2968 = vmatprep.subr.bf16.mxu0 0
      %2969 = vmatpush1.bf16.msra.mxu0 0
      %2970 = vmatprep.subr.bf16.mxu0 0
      %2971 = vmatpush1.bf16.msra.mxu0 0
      %2972 = vmatprep.subr.bf16.mxu0 0
      %2973 = vmatpush1.bf16.msra.mxu0 0
      %2974 = vmatprep.mubr.bf16.mxu0 0
      %2975 = vmatmul.mubr.bf16.gmra.mrb[0].mxu0 %v2937
      %v2976 = vpop.f32.mrb[0].mxu0
      %v2977 = vadd.f32 0.0, %v2976
      %v2978 = vpop.f32.mrb[0].mxu0
      %v2979 = vpop.f32.mrb[0].mxu0
      %v2980 = vpop.f32.mrb[0].mxu0
      %2981 = vdwg.mxu0
      %2982 = vrot.lane.b32.xlu0 %v2322, 104
      %v2983 = vpop.permute.xlu0 %2982
      %2984 = vrot.lane.b32.xlu0 %v2324, 104
      %v2985 = vpop.permute.xlu0 %2984
      %v2987 = vsel %vm1154, %v2983, 0
      %v2990 = vsel %vm1154, %v2985, 0
      %2992 = vmatprep.subr.bf16.mxu0 0
      %2993 = vmatpush1.bf16.xpose.msra.mxu0 %v2990
      %2994 = vmatprep.subr.bf16.mxu0 0
      %2995 = vmatpush1.bf16.xpose.msra.mxu0 0
      %2996 = vmatprep.subr.bf16.mxu0 0
      %2997 = vmatpush1.bf16.xpose.msra.mxu0 0
      %2998 = vmatprep.subr.bf16.mxu0 0
      %2999 = vmatpush1.bf16.xpose.msra.mxu0 0
      %3000 = vmatprep.subr.bf16.mxu0 0
      %3001 = vmatpush1.bf16.xpose.msra.mxu0 0
      %3002 = vmatprep.subr.bf16.mxu0 0
      %3003 = vmatpush1.bf16.xpose.msra.mxu0 0
      %3004 = vmatprep.subr.bf16.mxu0 0
      %3005 = vmatpush1.bf16.xpose.msra.mxu0 0
      %3006 = vmatprep.subr.bf16.mxu0 0
      %3007 = vmatpush1.bf16.xpose.msra.mxu0 0
      %3008 = vmatprep.subr.bf16.mxu0 0
      %3009 = vmatpush1.bf16.xpose.msra.mxu0 0
      %3010 = vmatprep.subr.bf16.mxu0 0
      %3011 = vmatpush1.bf16.xpose.msra.mxu0 0
      %3012 = vmatprep.subr.bf16.mxu0 0
      %3013 = vmatpush1.bf16.xpose.msra.mxu0 0
      %3014 = vmatprep.subr.bf16.mxu0 0
      %3015 = vmatpush1.bf16.xpose.msra.mxu0 0
      %3016 = vmatprep.subr.bf16.mxu0 0
      %3017 = vmatpush1.bf16.xpose.msra.mxu0 0
      %3018 = vmatprep.subr.bf16.mxu0 0
      %3019 = vmatpush1.bf16.xpose.msra.mxu0 0
      %3020 = vmatprep.subr.bf16.mxu0 0
      %3021 = vmatpush1.bf16.xpose.msra.mxu0 0
      %3022 = vmatprep.subr.bf16.mxu0 0
      %3023 = vmatpush1.bf16.xpose.msra.mxu0 0
      %3024 = vmatprep.mubr.bf16.mxu0 0
      %3025 = vmatmul.mubr.bf16.gmra.mrb[0].mxu0 %v2987
      %v3026 = vpop.f32.mrb[0].mxu0
      %v3027 = vadd.f32 0.0, %v3026
      %v3028 = vpop.f32.mrb[0].mxu0
      %v3029 = vpop.f32.mrb[0].mxu0
      %v3030 = vpop.f32.mrb[0].mxu0
      %3031 = vdwg.mxu0
      %3032 = vrot.lane.b32.xlu0 %v2323, 104
      %v3033 = vpop.permute.xlu0 %3032
      %3034 = vrot.lane.b32.xlu0 %v2325, 104
      %v3035 = vpop.permute.xlu0 %3034
      %v3037 = vsel %vm1154, %v3033, 0
      %v3040 = vsel %vm1154, %v3035, 0
      %3042 = vmatprep.subr.bf16.mxu0 0
      %3043 = vmatpush1.bf16.xpose.msra.mxu0 %v3040
      %3044 = vmatprep.subr.bf16.mxu0 0
      %3045 = vmatpush1.bf16.xpose.msra.mxu0 0
      %3046 = vmatprep.subr.bf16.mxu0 0
      %3047 = vmatpush1.bf16.xpose.msra.mxu0 0
      %3048 = vmatprep.subr.bf16.mxu0 0
      %3049 = vmatpush1.bf16.xpose.msra.mxu0 0
      %3050 = vmatprep.subr.bf16.mxu0 0
      %3051 = vmatpush1.bf16.xpose.msra.mxu0 0
      %3052 = vmatprep.subr.bf16.mxu0 0
      %3053 = vmatpush1.bf16.xpose.msra.mxu0 0
      %3054 = vmatprep.subr.bf16.mxu0 0
      %3055 = vmatpush1.bf16.xpose.msra.mxu0 0
      %3056 = vmatprep.subr.bf16.mxu0 0
      %3057 = vmatpush1.bf16.xpose.msra.mxu0 0
      %3058 = vmatprep.subr.bf16.mxu0 0
      %3059 = vmatpush1.bf16.xpose.msra.mxu0 0
      %3060 = vmatprep.subr.bf16.mxu0 0
      %3061 = vmatpush1.bf16.xpose.msra.mxu0 0
      %3062 = vmatprep.subr.bf16.mxu0 0
      %3063 = vmatpush1.bf16.xpose.msra.mxu0 0
      %3064 = vmatprep.subr.bf16.mxu0 0
      %3065 = vmatpush1.bf16.xpose.msra.mxu0 0
      %3066 = vmatprep.subr.bf16.mxu0 0
      %3067 = vmatpush1.bf16.xpose.msra.mxu0 0
      %3068 = vmatprep.subr.bf16.mxu0 0
      %3069 = vmatpush1.bf16.xpose.msra.mxu0 0
      %3070 = vmatprep.subr.bf16.mxu0 0
      %3071 = vmatpush1.bf16.xpose.msra.mxu0 0
      %3072 = vmatprep.subr.bf16.mxu0 0
      %3073 = vmatpush1.bf16.xpose.msra.mxu0 0
      %3074 = vmatprep.mubr.bf16.mxu0 0
      %3075 = vmatmul.mubr.bf16.gmra.mrb[0].mxu0 %v3037
      %v3076 = vpop.f32.mrb[0].mxu0
      %v3077 = vadd.f32 0.0, %v3076
      %v3078 = vpop.f32.mrb[0].mxu0
      %v3079 = vpop.f32.mrb[0].mxu0
      %v3080 = vpop.f32.mrb[0].mxu0
      %3081 = vdwg.mxu0
      %v3082 = vsel %vm1154, %v3027, -inf
      %3083 = vmax.xlane.f32.xlu0 %v3082
      %v3084 = vpop.xlane.xlu0 %3083
      %v3085 = vsel %vm1154, %v3077, -inf
      %3086 = vmax.xlane.f32.xlu0 %v3085
      %v3087 = vpop.xlane.xlu0 %3086
      %v3088 = vsub.f32 %v3027, %v3084
      %v3089 = vsub.f32 %v3077, %v3087
      %v3090 = vmul.f32 %v3088, 1.442695
      %v3091 = vpow.pop %v3090
      %v3092 = vmul.f32 %v3089, 1.442695
      %v3093 = vpow.pop %v3092
      %v3094 = vsel %vm1154, %v3091, 0.0
      %3095 = vadd.xlane.f32.xlu0 %v3094
      %v3096 = vpop.xlane.xlu0 %3095
      %v3097 = vsel %vm1154, %v3093, 0.0
      %3098 = vadd.xlane.f32.xlu0 %v3097
      %v3099 = vpop.xlane.xlu0 %3098
      %v3100 = vrcp.pop %v3096
      %v3101 = vrcp.pop %v3099
      %v3102 = vmul.f32 %v3091, %v3100
      %v3103 = vmul.f32 %v3093, %v3101
      %v3104 = vpack.c.bf16 %v3102, %v3102
      %v3105 = vpack.c.bf16 %v3103, %v3103
      %3106 = vrot.lane.b32.xlu0 %v2324, 72
      %v3107 = vpop.permute.xlu0 %3106
      %v3109 = vsel %vm1154, %v3104, 0
      %v3112 = vsel %vm1279, %v3107, 0
      %3114 = vmatprep.subr.bf16.mxu0 0
      %3115 = vmatpush1.bf16.msra.mxu0 %v3112
      %3116 = vmatprep.subr.bf16.mxu0 0
      %3117 = vmatpush1.bf16.msra.mxu0 0
      %3118 = vmatprep.subr.bf16.mxu0 0
      %3119 = vmatpush1.bf16.msra.mxu0 0
      %3120 = vmatprep.subr.bf16.mxu0 0
      %3121 = vmatpush1.bf16.msra.mxu0 0
      %3122 = vmatprep.subr.bf16.mxu0 0
      %3123 = vmatpush1.bf16.msra.mxu0 0
      %3124 = vmatprep.subr.bf16.mxu0 0
      %3125 = vmatpush1.bf16.msra.mxu0 0
      %3126 = vmatprep.subr.bf16.mxu0 0
      %3127 = vmatpush1.bf16.msra.mxu0 0
      %3128 = vmatprep.subr.bf16.mxu0 0
      %3129 = vmatpush1.bf16.msra.mxu0 0
      %3130 = vmatprep.subr.bf16.mxu0 0
      %3131 = vmatpush1.bf16.msra.mxu0 0
      %3132 = vmatprep.subr.bf16.mxu0 0
      %3133 = vmatpush1.bf16.msra.mxu0 0
      %3134 = vmatprep.subr.bf16.mxu0 0
      %3135 = vmatpush1.bf16.msra.mxu0 0
      %3136 = vmatprep.subr.bf16.mxu0 0
      %3137 = vmatpush1.bf16.msra.mxu0 0
      %3138 = vmatprep.subr.bf16.mxu0 0
      %3139 = vmatpush1.bf16.msra.mxu0 0
      %3140 = vmatprep.subr.bf16.mxu0 0
      %3141 = vmatpush1.bf16.msra.mxu0 0
      %3142 = vmatprep.subr.bf16.mxu0 0
      %3143 = vmatpush1.bf16.msra.mxu0 0
      %3144 = vmatprep.subr.bf16.mxu0 0
      %3145 = vmatpush1.bf16.msra.mxu0 0
      %3146 = vmatprep.mubr.bf16.mxu0 0
      %3147 = vmatmul.mubr.bf16.gmra.mrb[0].mxu0 %v3109
      %v3148 = vpop.f32.mrb[0].mxu0
      %v3149 = vadd.f32 0.0, %v3148
      %v3150 = vpop.f32.mrb[0].mxu0
      %v3151 = vpop.f32.mrb[0].mxu0
      %v3152 = vpop.f32.mrb[0].mxu0
      %3153 = vdwg.mxu0
      %3154 = vrot.lane.b32.xlu0 %v2325, 72
      %v3155 = vpop.permute.xlu0 %3154
      %v3157 = vsel %vm1154, %v3105, 0
      %v3160 = vsel %vm1279, %v3155, 0
      %3162 = vmatprep.subr.bf16.mxu0 0
      %3163 = vmatpush1.bf16.msra.mxu0 %v3160
      %3164 = vmatprep.subr.bf16.mxu0 0
      %3165 = vmatpush1.bf16.msra.mxu0 0
      %3166 = vmatprep.subr.bf16.mxu0 0
      %3167 = vmatpush1.bf16.msra.mxu0 0
      %3168 = vmatprep.subr.bf16.mxu0 0
      %3169 = vmatpush1.bf16.msra.mxu0 0
      %3170 = vmatprep.subr.bf16.mxu0 0
      %3171 = vmatpush1.bf16.msra.mxu0 0
      %3172 = vmatprep.subr.bf16.mxu0 0
      %3173 = vmatpush1.bf16.msra.mxu0 0
      %3174 = vmatprep.subr.bf16.mxu0 0
      %3175 = vmatpush1.bf16.msra.mxu0 0
      %3176 = vmatprep.subr.bf16.mxu0 0
      %3177 = vmatpush1.bf16.msra.mxu0 0
      %3178 = vmatprep.subr.bf16.mxu0 0
      %3179 = vmatpush1.bf16.msra.mxu0 0
      %3180 = vmatprep.subr.bf16.mxu0 0
      %3181 = vmatpush1.bf16.msra.mxu0 0
      %3182 = vmatprep.subr.bf16.mxu0 0
      %3183 = vmatpush1.bf16.msra.mxu0 0
      %3184 = vmatprep.subr.bf16.mxu0 0
      %3185 = vmatpush1.bf16.msra.mxu0 0
      %3186 = vmatprep.subr.bf16.mxu0 0
      %3187 = vmatpush1.bf16.msra.mxu0 0
      %3188 = vmatprep.subr.bf16.mxu0 0
      %3189 = vmatpush1.bf16.msra.mxu0 0
      %3190 = vmatprep.subr.bf16.mxu0 0
      %3191 = vmatpush1.bf16.msra.mxu0 0
      %3192 = vmatprep.subr.bf16.mxu0 0
      %3193 = vmatpush1.bf16.msra.mxu0 0
      %3194 = vmatprep.mubr.bf16.mxu0 0
      %3195 = vmatmul.mubr.bf16.gmra.mrb[0].mxu0 %v3157
      %v3196 = vpop.f32.mrb[0].mxu0
      %v3197 = vadd.f32 0.0, %v3196
      %v3198 = vpop.f32.mrb[0].mxu0
      %v3199 = vpop.f32.mrb[0].mxu0
      %v3200 = vpop.f32.mrb[0].mxu0
      %3201 = vdwg.mxu0
      %3204 = vrot.lane.b32.xlu0 %v2709, 8
      %v3205 = vpop.permute.xlu0 %3204
      %3206 = vrot.lane.b32.xlu0 %v2757, 8
      %v3207 = vpop.permute.xlu0 %3206
      %3212 = vrot.lane.b32.xlu0 %v2929, 16
      %v3213 = vpop.permute.xlu0 %3212
      %3214 = vrot.lane.b32.xlu0 %v2977, 16
      %v3215 = vpop.permute.xlu0 %3214
      %3220 = vrot.lane.b32.xlu0 %v3149, 24
      %v3221 = vpop.permute.xlu0 %3220
      %3222 = vrot.lane.b32.xlu0 %v3197, 24
      %v3223 = vpop.permute.xlu0 %3222
      %v3226 = vsel %vm1154, %v2486, %v3205
      %v3227 = vsel %vm1154, %v2535, %v3207
      %v3228 = vsel %vm2059, %v3226, %v3213
      %v3229 = vsel %vm2059, %v3227, %v3215
      %v3230 = vsel %vm2062, %v3228, %v3221
      %v3231 = vsel %vm2062, %v3229, %v3223
      %v3232 = vpack.c.bf16 %v3231, %v3230
      %v3234 = vlaneseq
      %v3235 = vshrl.u32 %v3234, 7
      %v3236 = vsub.s32 0, %v3235
      %v3237 = vrot.slane %v2187, %v3236
      %v3243 = vunpack.c.l.b16 %v2183
      %v3244 = vunpack.c.l.b16 %v2184
      %v3245 = vunpack.c.l.b16 %v2185
      %v3246 = vunpack.c.l.b16 %v2186
      %v3247 = vpack.c.b16 %v3244, %v3243
      %v3248 = vpack.c.b16 %v3246, %v3245
      %v3252 = vsel %vm1100, %v3232, 0
      %3254 = vmatprep.subr.bf16.mxu0 0
      %3255 = vmatpush1.bf16.msra.mxu0 %v3247
      %3256 = vmatprep.subr.bf16.mxu0 0
      %3257 = vmatpush1.bf16.msra.mxu0 %v3248
      %3258 = vmatprep.subr.bf16.mxu0 0
      %3259 = vmatpush1.bf16.msra.mxu0 0
      %3260 = vmatprep.subr.bf16.mxu0 0
      %3261 = vmatpush1.bf16.msra.mxu0 0
      %3262 = vmatprep.subr.bf16.mxu0 0
      %3263 = vmatpush1.bf16.msra.mxu0 0
      %3264 = vmatprep.subr.bf16.mxu0 0
      %3265 = vmatpush1.bf16.msra.mxu0 0
      %3266 = vmatprep.subr.bf16.mxu0 0
      %3267 = vmatpush1.bf16.msra.mxu0 0
      %3268 = vmatprep.subr.bf16.mxu0 0
      %3269 = vmatpush1.bf16.msra.mxu0 0
      %3270 = vmatprep.subr.bf16.mxu0 0
      %3271 = vmatpush1.bf16.msra.mxu0 0
      %3272 = vmatprep.subr.bf16.mxu0 0
      %3273 = vmatpush1.bf16.msra.mxu0 0
      %3274 = vmatprep.subr.bf16.mxu0 0
      %3275 = vmatpush1.bf16.msra.mxu0 0
      %3276 = vmatprep.subr.bf16.mxu0 0
      %3277 = vmatpush1.bf16.msra.mxu0 0
      %3278 = vmatprep.subr.bf16.mxu0 0
      %3279 = vmatpush1.bf16.msra.mxu0 0
      %3280 = vmatprep.subr.bf16.mxu0 0
      %3281 = vmatpush1.bf16.msra.mxu0 0
      %3282 = vmatprep.subr.bf16.mxu0 0
      %3283 = vmatpush1.bf16.msra.mxu0 0
      %3284 = vmatprep.subr.bf16.mxu0 0
      %3285 = vmatpush1.bf16.msra.mxu0 0
      %3286 = vmatprep.mubr.bf16.mxu0 0
      %3287 = vmatmul.mubr.bf16.gmra.mrb[0].mxu0 %v3252
      %v3288 = vpop.f32.mrb[0].mxu0
      %v3289 = vadd.f32 %v3237, %v3288
      %v3290 = vpop.f32.mrb[0].mxu0
      %v3291 = vpop.f32.mrb[0].mxu0
      %v3292 = vadd.f32 %v3237, %v3291
      %v3293 = vpop.f32.mrb[0].mxu0
      %3294 = vdwg.mxu0
      %v3295 = vadd.f32 %v2171, %v3289
      %v3296 = vadd.f32 %v2172, %v3292
      %v3297 = vsel %vm1100, %v3295, 0.0
      %3298 = vadd.xlane.f32.xlu0 %v3297
      %v3299 = vpop.xlane.xlu0 %3298
      %v3300 = vsel %vm1100, %v3296, 0.0
      %3301 = vadd.xlane.f32.xlu0 %v3300
      %v3302 = vpop.xlane.xlu0 %3301
      %v3303 = vmul.f32 %v3299, %v2136
      %v3304 = vmul.f32 %v3302, %v2136
      %v3305 = vsub.f32 %v3295, %v3303
      %v3306 = vsub.f32 %v3296, %v3304
      %v3307 = vmul.f32 %v3305, %v3305
      %v3308 = vmul.f32 %v3306, %v3306
      %v3309 = vsel %vm1100, %v3307, 0.0
      %3310 = vadd.xlane.f32.xlu0 %v3309
      %v3311 = vpop.xlane.xlu0 %3310
      %v3312 = vsel %vm1100, %v3308, 0.0
      %3313 = vadd.xlane.f32.xlu0 %v3312
      %v3314 = vpop.xlane.xlu0 %3313
      %v3315 = vmul.f32 %v3311, %v2136
      %v3316 = vmul.f32 %v3314, %v2136
      %v3317 = vadd.f32 %v3315, 1e-05
      %v3318 = vadd.f32 %v3316, 1e-05
      %v3319 = vrsqrt.pop %v3317
      %v3320 = vrsqrt.pop %v3318
      %v3321 = vmul.f32 %v3305, %v3319
      %v3322 = vmul.f32 %v3306, %v3320
      %v3324 = vlaneseq
      %v3325 = vshrl.u32 %v3324, 7
      %v3326 = vsub.s32 0, %v3325
      %v3327 = vrot.slane %v2188, %v3326
      %v3329 = vmul.f32 %v3321, %v3327
      %v3330 = vmul.f32 %v3322, %v3327
      %v3332 = vlaneseq
      %v3333 = vshrl.u32 %v3332, 7
      %v3334 = vsub.s32 0, %v3333
      %v3335 = vrot.slane %v2189, %v3334
      %v3337 = vadd.f32 %v3329, %v3335
      %v3338 = vadd.f32 %v3330, %v3335
      %v3339 = vld [vmem:[%s1034] sm:$0xf]
      %v3340 = vld [vmem:[%s1034 + $0x4] sm:$0xf]
      %v3341 = vld [vmem:[%s1034 + $0x8] sm:$0xf]
      %v3342 = vld [vmem:[%s1034 + $0xc] sm:$0xf]
      %v3343 = vld [vmem:[%s1037] sm:$0x1]
      %v3344 = vld [vmem:[%s1042] sm:$0xf]
      %v3345 = vld [vmem:[%s1042 + $0x4] sm:$0xf]
      %v3346 = vld [vmem:[%s1042 + $0x8] sm:$0xf]
      %v3347 = vld [vmem:[%s1042 + $0xc] sm:$0xf]
      %v3348 = vld [vmem:[%s1042 + $0x10] sm:$0xf]
      %v3349 = vld [vmem:[%s1042 + $0x14] sm:$0xf]
      %v3350 = vld [vmem:[%s1042 + $0x18] sm:$0xf]
      %v3351 = vld [vmem:[%s1042 + $0x1c] sm:$0xf]
      %v3352 = vld [vmem:[%s1045] sm:$0x1]
      %v3353 = vld [vmem:[%s1048] sm:$0x1]
      %v3354 = vld [vmem:[%s1051] sm:$0x1]
      %v3355 = vpack.c.bf16 %v3338, %v3337
      %v3357 = vlaneseq
      %v3358 = vshrl.u32 %v3357, 7
      %v3359 = vsub.s32 0, %v3358
      %v3360 = vrot.slane %v3343, %v3359
      %v3366 = vunpack.c.l.b16 %v3339
      %v3367 = vunpack.c.l.b16 %v3340
      %v3368 = vunpack.c.l.b16 %v3341
      %v3369 = vunpack.c.l.b16 %v3342
      %v3370 = vpack.c.b16 %v3367, %v3366
      %v3371 = vpack.c.b16 %v3369, %v3368
      %v3375 = vsel %vm1100, %v3355, 0
      %3377 = vmatprep.subr.bf16.mxu0 0
      %3378 = vmatpush1.bf16.msra.mxu0 %v3370
      %3379 = vmatprep.subr.bf16.mxu0 0
      %3380 = vmatpush1.bf16.msra.mxu0 %v3371
      %3381 = vmatprep.subr.bf16.mxu0 0
      %3382 = vmatpush1.bf16.msra.mxu0 0
      %3383 = vmatprep.subr.bf16.mxu0 0
      %3384 = vmatpush1.bf16.msra.mxu0 0
      %3385 = vmatprep.subr.bf16.mxu0 0
      %3386 = vmatpush1.bf16.msra.mxu0 0
      %3387 = vmatprep.subr.bf16.mxu0 0
      %3388 = vmatpush1.bf16.msra.mxu0 0
      %3389 = vmatprep.subr.bf16.mxu0 0
      %3390 = vmatpush1.bf16.msra.mxu0 0
      %3391 = vmatprep.subr.bf16.mxu0 0
      %3392 = vmatpush1.bf16.msra.mxu0 0
      %3393 = vmatprep.subr.bf16.mxu0 0
      %3394 = vmatpush1.bf16.msra.mxu0 0
      %3395 = vmatprep.subr.bf16.mxu0 0
      %3396 = vmatpush1.bf16.msra.mxu0 0
      %3397 = vmatprep.subr.bf16.mxu0 0
      %3398 = vmatpush1.bf16.msra.mxu0 0
      %3399 = vmatprep.subr.bf16.mxu0 0
      %3400 = vmatpush1.bf16.msra.mxu0 0
      %3401 = vmatprep.subr.bf16.mxu0 0
      %3402 = vmatpush1.bf16.msra.mxu0 0
      %3403 = vmatprep.subr.bf16.mxu0 0
      %3404 = vmatpush1.bf16.msra.mxu0 0
      %3405 = vmatprep.subr.bf16.mxu0 0
      %3406 = vmatpush1.bf16.msra.mxu0 0
      %3407 = vmatprep.subr.bf16.mxu0 0
      %3408 = vmatpush1.bf16.msra.mxu0 0
      %3409 = vmatprep.mubr.bf16.mxu0 0
      %3410 = vmatmul.mubr.bf16.gmra.mrb[0].mxu0 %v3375
      %v3411 = vpop.f32.mrb[0].mxu0
      %v3412 = vadd.f32 %v3360, %v3411
      %v3413 = vpop.f32.mrb[0].mxu0
      %v3414 = vpop.f32.mrb[0].mxu0
      %v3415 = vadd.f32 %v3360, %v3414
      %v3416 = vpop.f32.mrb[0].mxu0
      %3417 = vdwg.mxu0
      %v3418 = vmax.f32 %v3412, 0.0
      %v3419 = vmax.f32 %v3415, 0.0
      %v3420 = vpack.c.bf16 %v3419, %v3418
      %v3422 = vlaneseq
      %v3423 = vshrl.u32 %v3422, 7
      %v3424 = vsub.s32 0, %v3423
      %v3425 = vrot.slane %v3352, %v3424
      %v3435 = vunpack.c.l.b16 %v3344
      %v3436 = vunpack.c.l.b16 %v3345
      %v3437 = vunpack.c.l.b16 %v3346
      %v3438 = vunpack.c.l.b16 %v3347
      %v3439 = vunpack.c.l.b16 %v3348
      %v3440 = vunpack.c.l.b16 %v3349
      %v3441 = vunpack.c.l.b16 %v3350
      %v3442 = vunpack.c.l.b16 %v3351
      %v3443 = vpack.c.b16 %v3436, %v3435
      %v3444 = vpack.c.b16 %v3438, %v3437
      %v3445 = vpack.c.b16 %v3440, %v3439
      %v3446 = vpack.c.b16 %v3442, %v3441
      %vm3451 = vcmask 523264
      %v3453 = vsel %vm3451, %v3420, 0
      %3455 = vmatprep.subr.bf16.mxu0 0
      %3456 = vmatpush1.bf16.msra.mxu0 %v3443
      %3457 = vmatprep.subr.bf16.mxu0 0
      %3458 = vmatpush1.bf16.msra.mxu0 %v3444
      %3459 = vmatprep.subr.bf16.mxu0 0
      %3460 = vmatpush1.bf16.msra.mxu0 %v3445
      %3461 = vmatprep.subr.bf16.mxu0 0
      %3462 = vmatpush1.bf16.msra.mxu0 %v3446
      %3463 = vmatprep.subr.bf16.mxu0 0
      %3464 = vmatpush1.bf16.msra.mxu0 0
      %3465 = vmatprep.subr.bf16.mxu0 0
      %3466 = vmatpush1.bf16.msra.mxu0 0
      %3467 = vmatprep.subr.bf16.mxu0 0
      %3468 = vmatpush1.bf16.msra.mxu0 0
      %3469 = vmatprep.subr.bf16.mxu0 0
      %3470 = vmatpush1.bf16.msra.mxu0 0
      %3471 = vmatprep.subr.bf16.mxu0 0
      %3472 = vmatpush1.bf16.msra.mxu0 0
      %3473 = vmatprep.subr.bf16.mxu0 0
      %3474 = vmatpush1.bf16.msra.mxu0 0
      %3475 = vmatprep.subr.bf16.mxu0 0
      %3476 = vmatpush1.bf16.msra.mxu0 0
      %3477 = vmatprep.subr.bf16.mxu0 0
      %3478 = vmatpush1.bf16.msra.mxu0 0
      %3479 = vmatprep.subr.bf16.mxu0 0
      %3480 = vmatpush1.bf16.msra.mxu0 0
      %3481 = vmatprep.subr.bf16.mxu0 0
      %3482 = vmatpush1.bf16.msra.mxu0 0
      %3483 = vmatprep.subr.bf16.mxu0 0
      %3484 = vmatpush1.bf16.msra.mxu0 0
      %3485 = vmatprep.subr.bf16.mxu0 0
      %3486 = vmatpush1.bf16.msra.mxu0 0
      %3487 = vmatprep.mubr.bf16.mxu0 0
      %3488 = vmatmul.mubr.bf16.gmra.mrb[0].mxu0 %v3453
      %v3489 = vpop.f32.mrb[0].mxu0
      %v3490 = vadd.f32 %v3425, %v3489
      %v3491 = vpop.f32.mrb[0].mxu0
      %v3492 = vpop.f32.mrb[0].mxu0
      %v3493 = vadd.f32 %v3425, %v3492
      %v3494 = vpop.f32.mrb[0].mxu0
      %3495 = vdwg.mxu0
      %v3496 = vadd.f32 %v3337, %v3490
      %v3497 = vadd.f32 %v3338, %v3493
      %v3498 = vsel %vm1100, %v3496, 0.0
      %3499 = vadd.xlane.f32.xlu0 %v3498
      %v3500 = vpop.xlane.xlu0 %3499
      %v3501 = vsel %vm1100, %v3497, 0.0
      %3502 = vadd.xlane.f32.xlu0 %v3501
      %v3503 = vpop.xlane.xlu0 %3502
      %v3504 = vmul.f32 %v3500, %v2136
      %v3505 = vmul.f32 %v3503, %v2136
      %v3506 = vsub.f32 %v3496, %v3504
      %v3507 = vsub.f32 %v3497, %v3505
      %v3508 = vmul.f32 %v3506, %v3506
      %v3509 = vmul.f32 %v3507, %v3507
      %v3510 = vsel %vm1100, %v3508, 0.0
      %3511 = vadd.xlane.f32.xlu0 %v3510
      %v3512 = vpop.xlane.xlu0 %3511
      %v3513 = vsel %vm1100, %v3509, 0.0
      %3514 = vadd.xlane.f32.xlu0 %v3513
      %v3515 = vpop.xlane.xlu0 %3514
      %v3516 = vmul.f32 %v3512, %v2136
      %v3517 = vmul.f32 %v3515, %v2136
      %v3518 = vadd.f32 %v3516, 1e-05
      %v3519 = vadd.f32 %v3517, 1e-05
      %v3520 = vrsqrt.pop %v3518
      %v3521 = vrsqrt.pop %v3519
      %v3522 = vmul.f32 %v3506, %v3520
      %v3523 = vmul.f32 %v3507, %v3521
      %v3525 = vlaneseq
      %v3526 = vshrl.u32 %v3525, 7
      %v3527 = vsub.s32 0, %v3526
      %v3528 = vrot.slane %v3353, %v3527
      %v3530 = vmul.f32 %v3522, %v3528
      %v3531 = vmul.f32 %v3523, %v3528
      %v3533 = vlaneseq
      %v3534 = vshrl.u32 %v3533, 7
      %v3535 = vsub.s32 0, %v3534
      %v3536 = vrot.slane %v3354, %v3535
      %v3538 = vadd.f32 %v3530, %v3536
      %v3539 = vadd.f32 %v3531, %v3536
      %3540 = vst.msk [vmem:[#allocation2] sm:$0xff] %vm1100, %v3538
      %3541 = vst.msk [vmem:[#allocation2 + $0x8] sm:$0xff] %vm1100, %v3539
      %p3542 = scmp.eq.s32.totalorder %s36, 1
      // Predicated region
      $region125: #{summarizer_transformer_forward.4} parent=119 // pred_check
        %p3543 = pneg %p3542
      $region126: #{summarizer_transformer_forward.4} parent=119 // pred_check_branch
        %3545 = sbr.rel (%p3543) target = $region128
      $region127: #{summarizer_transformer_forward.4} parent=119 // pred_region
        %v3546 = vld [vmem:[%s23] sm:$0x1]
        %v3547 = vld [vmem:[%s24] sm:$0x1]
        %v3548 = vsel %vm1100, %v3538, 0.0
        %3549 = vadd.xlane.f32.xlu0 %v3548
        %v3550 = vpop.xlane.xlu0 %3549
        %v3551 = vsel %vm1100, %v3539, 0.0
        %3552 = vadd.xlane.f32.xlu0 %v3551
        %v3553 = vpop.xlane.xlu0 %3552
        %v3554 = vmul.f32 %v3550, %v2136
        %v3555 = vmul.f32 %v3553, %v2136
        %v3556 = vsub.f32 %v3538, %v3554
        %v3557 = vsub.f32 %v3539, %v3555
        %v3558 = vmul.f32 %v3556, %v3556
        %v3559 = vmul.f32 %v3557, %v3557
        %v3560 = vsel %vm1100, %v3558, 0.0
        %3561 = vadd.xlane.f32.xlu0 %v3560
        %v3562 = vpop.xlane.xlu0 %3561
        %v3563 = vsel %vm1100, %v3559, 0.0
        %3564 = vadd.xlane.f32.xlu0 %v3563
        %v3565 = vpop.xlane.xlu0 %3564
        %v3566 = vmul.f32 %v3562, %v2136
        %v3567 = vmul.f32 %v3565, %v2136
        %v3568 = vadd.f32 %v3566, 1e-05
        %v3569 = vadd.f32 %v3567, 1e-05
        %v3570 = vrsqrt.pop %v3568
        %v3571 = vrsqrt.pop %v3569
        %v3572 = vmul.f32 %v3556, %v3570
        %v3573 = vmul.f32 %v3557, %v3571
        %v3575 = vlaneseq
        %v3576 = vshrl.u32 %v3575, 7
        %v3577 = vsub.s32 0, %v3576
        %v3578 = vrot.slane %v3546, %v3577
        %v3580 = vmul.f32 %v3572, %v3578
        %v3581 = vmul.f32 %v3573, %v3578
        %v3583 = vlaneseq
        %v3584 = vshrl.u32 %v3583, 7
        %v3585 = vsub.s32 0, %v3584
        %v3586 = vrot.slane %v3547, %v3585
        %v3588 = vadd.f32 %v3580, %v3586
        %v3589 = vadd.f32 %v3581, %v3586
        %v3590 = vpack.c.bf16 %v3589, %v3588
        %v3592 = vunpack.c.l.b16 %v3590
        %v3593 = vunpack.c.h.b16 %v3590
        %v3594 = vpack.c.b16 %v3592, %v3592
        %v3595 = vpack.c.b16 %v3593, %v3593
        %vm3598 = vcmask 257024
        %3599 = vst.msk [vmem:[%s25] sm:$0xf] %vm3598, %v3594
        %3600 = vst.msk [vmem:[%s25 + $0x4] sm:$0xf] %vm3598, %v3595
      $region128: #{summarizer_transformer_forward.4} parent=119 // pred_fallthru
        _
      // Predicated region
      $region129: #{summarizer_transformer_forward.4} parent=119 // pred_check
        %p3601 = pneg %p674
      $region130: #{summarizer_transformer_forward.4} parent=119 // pred_check_branch
        %3603 = sbr.rel (%p3601) target = $region132
      $region131: #{summarizer_transformer_forward.4} parent=119 // pred_region
        _
      $region132: #{summarizer_transformer_forward.4} parent=119 // pred_fallthru
        _
      // Predicated region
      $region133: #{summarizer_transformer_forward.4} parent=119 // pred_check
        %p3604 = pneg %p674
      $region134: #{summarizer_transformer_forward.4} parent=119 // pred_check_branch
        %3606 = sbr.rel (%p3604) target = $region136
      $region135: #{summarizer_transformer_forward.4} parent=119 // pred_region
        _
      $region136: #{summarizer_transformer_forward.4} parent=119 // pred_fallthru
        _
    $region120: #{summarizer_transformer_forward.4} parent=5 // pred_fallthru
      _
    %p3607 = scmp.le.s32.totalorder 2, %s31
    // Predicated region
    $region137: #{summarizer_transformer_forward.4} parent=5 // pred_check
      %p3608 = pneg %p3607
    $region138: #{summarizer_transformer_forward.4} parent=5 // pred_check_branch
      %3610 = sbr.rel (%p3608) target = $region140
    $region139: #{summarizer_transformer_forward.4} parent=5 // pred_region
      %s3611 = ssub.s32 %s31, 2
    $region140: #{summarizer_transformer_forward.4} parent=5 // pred_fallthru
      _
  $region6: #{summarizer_transformer_forward.4} parent=0 // loop_footer
    %s35 = sadd.s32 1, %s31
  $region7: #{summarizer_transformer_forward.4} parent=0 // loop_footer_branch
    %30 = sbr.rel target = $region3
  $region8: #{summarizer_transformer_forward.4} parent=0 // loop_exit
    _

</llo_original>
